<compile_context>
chip_gen: v5e
topology: v5e:2x2
jax: 0.10.0
libtpu: 0.0.40
codegen_flags: <defaults>
</compile_context>

<pallas_src>
import jax
import jax.numpy as jnp
from jax.experimental import pallas as pl
from jax.experimental.pallas import tpu as pltpu

SHAPE_PARAM = 10.0       # self.shape_param
COS_EPS = 1e-8           # F.cosine_similarity eps
_INV_SQRT2 = 0.7071067811865476

H_CORR = 258             # torch hidden width of sentiment_attitude_corr layer 1
H_CORR_PAD = 384         # zero-padded (multiple of 128) -- numerically identical


# ----------------------------- in-kernel math -----------------------------

def _erf(x):
    # Abramowitz & Stegun 7.1.26 (|err| < 1.5e-7), built only from ops with
    # guaranteed Mosaic lowerings (exp / mul / add / div / abs / where).
    a1, a2, a3, a4, a5 = 0.254829592, -0.284496736, 1.421413741, -1.453152027, 1.061405429
    p = 0.3275911
    ax = jnp.abs(x)
    t = 1.0 / (1.0 + p * ax)
    poly = ((((a5 * t + a4) * t + a3) * t + a2) * t + a1) * t
    y = 1.0 - poly * jnp.exp(-ax * ax)
    return jnp.where(x < 0.0, -y, y)


def _gelu(x):
    # exact (erf-based) GELU == torch.nn.GELU() default
    return 0.5 * x * (1.0 + _erf(x * _INV_SQRT2))


def _asinh(x):
    a = jnp.abs(x)
    r = jnp.log(a + jnp.sqrt(a * a + 1.0))
    return jnp.where(x < 0.0, -r, r)


# ------------------------------- fused kernel -------------------------------

def discerner_kernel(img_ref, txt_ref, probs_ref, lens_ref, att_ref,
                     # imagetextfeatures MLP
                     w1i_ref, w1t_ref, w1s_ref, b1_ref, w2_ref, b2_ref,
                     # sentiment GRU (3 -> 3)
                     wih_ref, whh_ref, bih_ref, bhh_ref,
                     # sentiment_attitude_corr MLP (padded to 384 hidden)
                     cw1h_ref, cw1a_ref, cb1_ref, cw2_ref, cb2_ref,
                     # discern MLP
                     dw1c_ref, dw1s_ref, db1_ref, dw2_ref, db2_ref,
                     out_ref):
    f32 = jnp.float32
    bf16 = jnp.bfloat16

    # ------------------ cosine similarity + imagetextfeatures ------------------
    img = img_ref[...]                       # (B, 512) f32
    txt = txt_ref[...]                       # (B, 512) f32
    dot = jnp.sum(img * txt, axis=-1, keepdims=True)
    n_img = jnp.maximum(jnp.sqrt(jnp.sum(img * img, axis=-1, keepdims=True)), COS_EPS)
    n_txt = jnp.maximum(jnp.sqrt(jnp.sum(txt * txt, axis=-1, keepdims=True)), COS_EPS)
    sim = dot / (n_img * n_txt)              # torch clamps each norm separately

    # concat([img, txt, sim]) @ W1  ==  img@W1[:512] + txt@W1[512:1024] + sim*W1[1024]
    # Large dots run bf16 x bf16 on the MXU with f32 accumulation.
    h = (jnp.dot(img.astype(bf16), w1i_ref[...], preferred_element_type=f32)
         + jnp.dot(txt.astype(bf16), w1t_ref[...], preferred_element_type=f32)
         + sim * w1s_ref[...]
         + b1_ref[...])
    h = _gelu(h)                                                           # (B, 768)
    clip_feat = _gelu(jnp.dot(h.astype(bf16), w2_ref[...],
                              preferred_element_type=f32) + b2_ref[...])   # (B, 512)

    # ------------- length-masked GRU + sentiment_attitude_corr MLP -------------
    probs = probs_ref[...]                   # (T, B, 3) time-major
    lens = lens_ref[...]                     # (B, 1) int32
    wih = wih_ref[...]                       # (3, 9)  gates [r | z | n]
    whh = whh_ref[...]                       # (3, 9)
    bih = bih_ref[...]                       # (1, 9)
    bhh = bhh_ref[...]                       # (1, 9)
    T, B, _ = probs_ref.shape

    # input gates for all timesteps at once -- hoisted out of the serial chain
    gi_all = (bih
              + probs[:, :, 0:1] * wih[0:1, :]
              + probs[:, :, 1:2] * wih[1:2, :]
              + probs[:, :, 2:3] * wih[2:3, :])           # (T, B, 9)

    h3 = jnp.zeros((B, 3), f32)
    for t in range(T):                       # T is small and static -> unrolled
        gi = gi_all[t]                       # (B, 9)
        gh = (bhh + h3[:, 0:1] * whh[0:1, :]
                  + h3[:, 1:2] * whh[1:2, :]
                  + h3[:, 2:3] * whh[2:3, :])
        r = jax.nn.sigmoid(gi[:, 0:3] + gh[:, 0:3])
        z = jax.nn.sigmoid(gi[:, 3:6] + gh[:, 3:6])
        n = jnp.tanh(gi[:, 6:9] + r * gh[:, 6:9])
        h_new = (1.0 - z) * n + z * h3
        # only advance rows that still have aspects left (= pack_padded semantics,
        # so after the loop h3 holds the output at step length-1 for every row)
        h3 = jnp.where(lens > t, h_new, h3)

    att = att_ref[...]                       # (B, 1)
    cw1h = cw1h_ref[...]                     # (3, 384)
    # concat([h, attitude]) @ W1  ==  h@W1[:3] + attitude*W1[3]
    hh = (cb1_ref[...]
          + h3[:, 0:1] * cw1h[0:1, :]
          + h3[:, 1:2] * cw1h[1:2, :]
          + h3[:, 2:3] * cw1h[2:3, :]
          + att * cw1a_ref[...])
    hh = _gelu(hh)                                                          # (B, 384)
    corr_feat = _gelu(jnp.dot(hh.astype(bf16), cw2_ref[...],
                              preferred_element_type=f32) + cb2_ref[...])   # (B, 512)

    # --------------------- discern MLP + asinh normalisation --------------------
    d = (jnp.dot(clip_feat.astype(bf16), dw1c_ref[...], preferred_element_type=f32)
         + jnp.dot(corr_feat.astype(bf16), dw1s_ref[...], preferred_element_type=f32)
         + db1_ref[...])
    d = _gelu(d)                                                            # (B, 512)
    # 512 -> 1 projection: VPU mul + lane reduce (avoids an N=1 MXU pass)
    score = jnp.sum(d * dw2_ref[...], axis=-1, keepdims=True) + db2_ref[...]
    out_ref[...] = SHAPE_PARAM * _asinh(score / SHAPE_PARAM)


# ------------------------------ wrapper ------------------------------------

_PARAM_ORDER = (
    "itf_w1_img", "itf_w1_txt", "itf_w1_sim", "itf_b1", "itf_w2", "itf_b2",
    "gru_wih", "gru_whh", "gru_bih", "gru_bhh",
    "corr_w1_h", "corr_w1_att", "corr_b1", "corr_w2", "corr_b2",
    "disc_w1_clip", "disc_w1_corr", "disc_b1", "disc_w2", "disc_b2",
)


def _pad_batch(x, b_pad):
    b = x.shape[0]
    if b == b_pad:
        return x
    return jnp.pad(x, [(0, b_pad - b)] + [(0, 0)] * (x.ndim - 1))


@jax.jit
def discerner_forward(params, image_features, text_features,
                      sentiment_probs, aspect_lengths, attitude):
    B, T = sentiment_probs.shape[0], sentiment_probs.shape[1]
    # fill all 8 sublanes of every vreg / MXU row tile
    B_pad = max(8, ((B + 7) // 8) * 8)

    probs_tm = jnp.transpose(_pad_batch(sentiment_probs, B_pad), (1, 0, 2))  # (T, B_pad, 3)
    data = (
        _pad_batch(image_features, B_pad),
        _pad_batch(text_features, B_pad),
        probs_tm,
        _pad_batch(aspect_lengths, B_pad),   # padded rows get length 0 -> h stays 0
        _pad_batch(attitude, B_pad),
    )
    weights = tuple(params[k] for k in _PARAM_ORDER)
    inputs = data + weights

    # advisory cost estimate (weights dominate the byte traffic at small B)
    flops = 2 * B_pad * (512 * 768 + 512 * 768 + 768 * 512
                         + H_CORR_PAD * 512 + 512 * 512 + 512 * 512 + 512)
    transcendentals = B_pad * (768 + 512 + H_CORR_PAD + 512 + T * 9 + 16)
    bytes_accessed = sum(int(x.size) * x.dtype.itemsize for x in inputs) + B_pad * 4

    vmem = pl.BlockSpec(memory_space=pltpu.MemorySpace.VMEM)
    out = pl.pallas_call(
        discerner_kernel,
        out_shape=jax.ShapeDtypeStruct((B_pad, 1), jnp.float32),
        in_specs=[vmem] * len(inputs),
        out_specs=vmem,
        cost_estimate=pl.CostEstimate(flops=int(flops),
                                      transcendentals=int(transcendentals),
                                      bytes_accessed=int(bytes_accessed)),
    )(*inputs)
    return out[:B]


# ------------------------------ params --------------------------------------

def init_params(key):
    def linear(k, fin, fout):
        kw, kb = jax.random.split(k)
        bound = 1.0 / (fin ** 0.5)
        w = jax.random.uniform(kw, (fin, fout), jnp.float32, -bound, bound)
        b = jax.random.uniform(kb, (1, fout), jnp.float32, -bound, bound)
        return w, b

    ks = jax.random.split(key, 7)
    itf_w1, itf_b1 = linear(ks[0], 1025, 768)
    itf_w2, itf_b2 = linear(ks[1], 768, 512)
    corr_w1, corr_b1 = linear(ks[2], 4, H_CORR)
    corr_w2, corr_b2 = linear(ks[3], H_CORR, 512)
    disc_w1, disc_b1 = linear(ks[4], 1024, 512)
    disc_w2, disc_b2 = linear(ks[5], 512, 1)

    # zero-pad the 258-wide corr hidden dim to 384: gelu(0)=0 and the padded rows
    # of corr_w2 are zero, so the padded network is numerically identical.
    pad_c = H_CORR_PAD - H_CORR
    corr_w1 = jnp.pad(corr_w1, ((0, 0), (0, pad_c)))
    corr_b1 = jnp.pad(corr_b1, ((0, 0), (0, pad_c)))
    corr_w2 = jnp.pad(corr_w2, ((0, pad_c), (0, 0)))

    # GRU(input_size=3, hidden_size=3); stored transposed so x @ W -> gates [r|z|n]
    gb = 1.0 / (3 ** 0.5)
    kg = jax.random.split(ks[6], 4)
    gru_wih = jax.random.uniform(kg[0], (3, 9), jnp.float32, -gb, gb)
    gru_whh = jax.random.uniform(kg[1], (3, 9), jnp.float32, -gb, gb)
    gru_bih = jax.random.uniform(kg[2], (1, 9), jnp.float32, -gb, gb)
    gru_bhh = jax.random.uniform(kg[3], (1, 9), jnp.float32, -gb, gb)

    bf16 = jnp.bfloat16   # large matrices stored + multiplied in bf16, f32 accumulate
    return dict(
        itf_w1_img=itf_w1[:512].astype(bf16),
        itf_w1_txt=itf_w1[512:1024].astype(bf16),
        itf_w1_sim=itf_w1[1024:1025],
        itf_b1=itf_b1,
        itf_w2=itf_w2.astype(bf16), itf_b2=itf_b2,
        gru_wih=gru_wih, gru_whh=gru_whh, gru_bih=gru_bih, gru_bhh=gru_bhh,
        corr_w1_h=corr_w1[:3], corr_w1_att=corr_w1[3:4],
        corr_b1=corr_b1, corr_w2=corr_w2.astype(bf16), corr_b2=corr_b2,
        disc_w1_clip=disc_w1[:512].astype(bf16),
        disc_w1_corr=disc_w1[512:].astype(bf16),
        disc_b1=disc_b1,
        disc_w2=disc_w2.T,        # (1, 512) f32 -- used as broadcast mul + lane reduce
        disc_b2=disc_b2,
    )


if __name__ == "__main__":
    key = jax.random.PRNGKey(0)
    B, T = 2, 5  # batch, max #aspects per statement
    k_img, k_txt, k_prob, k_att, k_param = jax.random.split(key, 5)

    # synthetic stand-ins for the pretrained upstream encoders
    image_features = jax.random.normal(k_img, (B, 512), jnp.float32)     # CLIP image features
    text_features = jax.random.normal(k_txt, (B, 512), jnp.float32)      # CLIP text features
    sentiment_probs = jax.random.normal(k_prob, (B, T, 3), jnp.float32)  # padded per-aspect logits
    aspect_lengths = jnp.array([[T], [3]], dtype=jnp.int32)              # #aspects per statement
    attitude = jax.random.uniform(k_att, (B, 1), jnp.float32, -1.0, 1.0)

    params = init_params(k_param)
    scores = discerner_forward(params, image_features, text_features,
                               sentiment_probs, aspect_lengths, attitude)
    jax.block_until_ready(scores)
    assert scores.shape == (B, 1) and scores.dtype == jnp.float32
    assert bool(jnp.all(jnp.isfinite(scores)))
    print("KERNEL_OK")
</pallas_src>

<mosaic_0001>
module attributes {stable_mosaic.version = 11 : i64} {
  func.func @discerner_kernel(%arg0: memref<8x512xf32, #tpu.memory_space<vmem>>, %arg1: memref<8x512xf32, #tpu.memory_space<vmem>>, %arg2: memref<5x8x3xf32, #tpu.memory_space<vmem>>, %arg3: memref<8x1xi32, #tpu.memory_space<vmem>>, %arg4: memref<8x1xf32, #tpu.memory_space<vmem>>, %arg5: memref<512x768xbf16, #tpu.memory_space<vmem>>, %arg6: memref<512x768xbf16, #tpu.memory_space<vmem>>, %arg7: memref<1x768xf32, #tpu.memory_space<vmem>>, %arg8: memref<1x768xf32, #tpu.memory_space<vmem>>, %arg9: memref<768x512xbf16, #tpu.memory_space<vmem>>, %arg10: memref<1x512xf32, #tpu.memory_space<vmem>>, %arg11: memref<3x9xf32, #tpu.memory_space<vmem>>, %arg12: memref<3x9xf32, #tpu.memory_space<vmem>>, %arg13: memref<1x9xf32, #tpu.memory_space<vmem>>, %arg14: memref<1x9xf32, #tpu.memory_space<vmem>>, %arg15: memref<3x384xf32, #tpu.memory_space<vmem>>, %arg16: memref<1x384xf32, #tpu.memory_space<vmem>>, %arg17: memref<1x384xf32, #tpu.memory_space<vmem>>, %arg18: memref<384x512xbf16, #tpu.memory_space<vmem>>, %arg19: memref<1x512xf32, #tpu.memory_space<vmem>>, %arg20: memref<512x512xbf16, #tpu.memory_space<vmem>>, %arg21: memref<512x512xbf16, #tpu.memory_space<vmem>>, %arg22: memref<1x512xf32, #tpu.memory_space<vmem>>, %arg23: memref<1x512xf32, #tpu.memory_space<vmem>>, %arg24: memref<1x1xf32, #tpu.memory_space<vmem>>, %arg25: memref<8x1xf32, #tpu.memory_space<vmem>>) attributes {dimension_semantics = [], scalar_prefetch = 0 : i64, scratch_operands = 0 : i64, tpu.core_type = #tpu.core_type<tc>} {
    %c0 = arith.constant 0 : index
    %c0_0 = arith.constant 0 : index
    %0 = vector.load %arg0[%c0, %c0_0] : memref<8x512xf32, #tpu.memory_space<vmem>>, vector<8x512xf32>
    %c0_1 = arith.constant 0 : index
    %c0_2 = arith.constant 0 : index
    %1 = vector.load %arg1[%c0_1, %c0_2] : memref<8x512xf32, #tpu.memory_space<vmem>>, vector<8x512xf32>
    %2 = arith.mulf %0, %1 : vector<8x512xf32>
    %cst = arith.constant dense<0.000000e+00> : vector<8xf32>
    %3 = vector.multi_reduction <add>, %2, %cst [1] : vector<8x512xf32> to vector<8xf32>
    %4 = vector.shape_cast %3 : vector<8xf32> to vector<8x1xf32>
    %5 = arith.mulf %0, %0 : vector<8x512xf32>
    %cst_3 = arith.constant dense<0.000000e+00> : vector<8xf32>
    %6 = vector.multi_reduction <add>, %5, %cst_3 [1] : vector<8x512xf32> to vector<8xf32>
    %7 = vector.shape_cast %6 : vector<8xf32> to vector<8x1xf32>
    %8 = math.sqrt %7 : vector<8x1xf32>
    %cst_4 = arith.constant 9.99999993E-9 : f32
    %9 = vector.broadcast %cst_4 : f32 to vector<8x1xf32>
    %10 = arith.maximumf %8, %9 : vector<8x1xf32>
    %11 = arith.mulf %1, %1 : vector<8x512xf32>
    %cst_5 = arith.constant dense<0.000000e+00> : vector<8xf32>
    %12 = vector.multi_reduction <add>, %11, %cst_5 [1] : vector<8x512xf32> to vector<8xf32>
    %13 = vector.shape_cast %12 : vector<8xf32> to vector<8x1xf32>
    %14 = math.sqrt %13 : vector<8x1xf32>
    %cst_6 = arith.constant 9.99999993E-9 : f32
    %15 = vector.broadcast %cst_6 : f32 to vector<8x1xf32>
    %16 = arith.maximumf %14, %15 : vector<8x1xf32>
    %17 = arith.mulf %10, %16 : vector<8x1xf32>
    %18 = arith.divf %4, %17 : vector<8x1xf32>
    %19 = arith.truncf %0 : vector<8x512xf32> to vector<8x512xbf16>
    %c0_7 = arith.constant 0 : index
    %c0_8 = arith.constant 0 : index
    %20 = vector.load %arg5[%c0_7, %c0_8] : memref<512x768xbf16, #tpu.memory_space<vmem>>, vector<512x768xbf16>
    %cst_9 = arith.constant dense<0.000000e+00> : vector<8x768xf32>
    %21 = tpu.matmul %19, %20, %cst_9 {dimension_numbers = #tpu.dot_dimension_numbers<[1], [0], [0], [1], [0, 0, 1, 1], [], []>} : vector<8x512xbf16>, vector<512x768xbf16>, vector<8x768xf32> -> vector<8x768xf32>
    %22 = arith.truncf %1 : vector<8x512xf32> to vector<8x512xbf16>
    %c0_10 = arith.constant 0 : index
    %c0_11 = arith.constant 0 : index
    %23 = vector.load %arg6[%c0_10, %c0_11] : memref<512x768xbf16, #tpu.memory_space<vmem>>, vector<512x768xbf16>
    %cst_12 = arith.constant dense<0.000000e+00> : vector<8x768xf32>
    %24 = tpu.matmul %22, %23, %cst_12 {dimension_numbers = #tpu.dot_dimension_numbers<[1], [0], [0], [1], [0, 0, 1, 1], [], []>} : vector<8x512xbf16>, vector<512x768xbf16>, vector<8x768xf32> -> vector<8x768xf32>
    %25 = arith.addf %21, %24 : vector<8x768xf32>
    %c0_13 = arith.constant 0 : index
    %c0_14 = arith.constant 0 : index
    %26 = vector.load %arg7[%c0_13, %c0_14] : memref<1x768xf32, #tpu.memory_space<vmem>>, vector<1x768xf32>
    %27 = vector.broadcast %18 : vector<8x1xf32> to vector<8x768xf32>
    %28 = vector.broadcast %26 : vector<1x768xf32> to vector<8x768xf32>
    %29 = arith.mulf %27, %28 : vector<8x768xf32>
    %30 = arith.addf %25, %29 : vector<8x768xf32>
    %c0_15 = arith.constant 0 : index
    %c0_16 = arith.constant 0 : index
    %31 = vector.load %arg8[%c0_15, %c0_16] : memref<1x768xf32, #tpu.memory_space<vmem>>, vector<1x768xf32>
    %32 = vector.broadcast %31 : vector<1x768xf32> to vector<8x768xf32>
    %33 = arith.addf %30, %32 : vector<8x768xf32>
    %cst_17 = arith.constant 5.000000e-01 : f32
    %34 = vector.broadcast %cst_17 : f32 to vector<8x768xf32>
    %35 = arith.mulf %34, %33 : vector<8x768xf32>
    %cst_18 = arith.constant 0.707106769 : f32
    %36 = vector.broadcast %cst_18 : f32 to vector<8x768xf32>
    %37 = arith.mulf %33, %36 : vector<8x768xf32>
    %38 = math.absf %37 : vector<8x768xf32>
    %cst_19 = arith.constant 0.327591091 : f32
    %39 = vector.broadcast %cst_19 : f32 to vector<8x768xf32>
    %40 = arith.mulf %39, %38 : vector<8x768xf32>
    %cst_20 = arith.constant 1.000000e+00 : f32
    %41 = vector.broadcast %cst_20 : f32 to vector<8x768xf32>
    %42 = arith.addf %41, %40 : vector<8x768xf32>
    %cst_21 = arith.constant 1.000000e+00 : f32
    %43 = vector.broadcast %cst_21 : f32 to vector<8x768xf32>
    %44 = arith.divf %43, %42 : vector<8x768xf32>
    %cst_22 = arith.constant 1.06140542 : f32
    %45 = vector.broadcast %cst_22 : f32 to vector<8x768xf32>
    %46 = arith.mulf %45, %44 : vector<8x768xf32>
    %cst_23 = arith.constant -1.45315206 : f32
    %47 = vector.broadcast %cst_23 : f32 to vector<8x768xf32>
    %48 = arith.addf %46, %47 : vector<8x768xf32>
    %49 = arith.mulf %48, %44 : vector<8x768xf32>
    %cst_24 = arith.constant 1.42141378 : f32
    %50 = vector.broadcast %cst_24 : f32 to vector<8x768xf32>
    %51 = arith.addf %49, %50 : vector<8x768xf32>
    %52 = arith.mulf %51, %44 : vector<8x768xf32>
    %cst_25 = arith.constant -0.284496725 : f32
    %53 = vector.broadcast %cst_25 : f32 to vector<8x768xf32>
    %54 = arith.addf %52, %53 : vector<8x768xf32>
    %55 = arith.mulf %54, %44 : vector<8x768xf32>
    %cst_26 = arith.constant 0.254829586 : f32
    %56 = vector.broadcast %cst_26 : f32 to vector<8x768xf32>
    %57 = arith.addf %55, %56 : vector<8x768xf32>
    %58 = arith.mulf %57, %44 : vector<8x768xf32>
    %cst_27 = arith.constant 0.000000e+00 : f32
    %59 = vector.broadcast %cst_27 : f32 to vector<8x768xf32>
    %60 = arith.subf %59, %38 : vector<8x768xf32>
    %61 = arith.mulf %60, %38 : vector<8x768xf32>
    %62 = math.exp %61 : vector<8x768xf32>
    %63 = arith.mulf %58, %62 : vector<8x768xf32>
    %cst_28 = arith.constant 1.000000e+00 : f32
    %64 = vector.broadcast %cst_28 : f32 to vector<8x768xf32>
    %65 = arith.subf %64, %63 : vector<8x768xf32>
    %cst_29 = arith.constant 0.000000e+00 : f32
    %66 = vector.broadcast %cst_29 : f32 to vector<8x768xf32>
    %67 = arith.cmpf olt, %37, %66 : vector<8x768xf32>
    %cst_30 = arith.constant 0.000000e+00 : f32
    %68 = vector.broadcast %cst_30 : f32 to vector<8x768xf32>
    %69 = arith.subf %68, %65 : vector<8x768xf32>
    %70 = arith.select %67, %69, %65 : vector<8x768xi1>, vector<8x768xf32>
    %cst_31 = arith.constant 1.000000e+00 : f32
    %71 = vector.broadcast %cst_31 : f32 to vector<8x768xf32>
    %72 = arith.addf %71, %70 : vector<8x768xf32>
    %73 = arith.mulf %35, %72 : vector<8x768xf32>
    %74 = arith.truncf %73 : vector<8x768xf32> to vector<8x768xbf16>
    %c0_32 = arith.constant 0 : index
    %c0_33 = arith.constant 0 : index
    %75 = vector.load %arg9[%c0_32, %c0_33] : memref<768x512xbf16, #tpu.memory_space<vmem>>, vector<768x512xbf16>
    %cst_34 = arith.constant dense<0.000000e+00> : vector<8x512xf32>
    %76 = tpu.matmul %74, %75, %cst_34 {dimension_numbers = #tpu.dot_dimension_numbers<[1], [0], [0], [1], [0, 0, 1, 1], [], []>} : vector<8x768xbf16>, vector<768x512xbf16>, vector<8x512xf32> -> vector<8x512xf32>
    %c0_35 = arith.constant 0 : index
    %c0_36 = arith.constant 0 : index
    %77 = vector.load %arg10[%c0_35, %c0_36] : memref<1x512xf32, #tpu.memory_space<vmem>>, vector<1x512xf32>
    %78 = vector.broadcast %77 : vector<1x512xf32> to vector<8x512xf32>
    %79 = arith.addf %76, %78 : vector<8x512xf32>
    %cst_37 = arith.constant 5.000000e-01 : f32
    %80 = vector.broadcast %cst_37 : f32 to vector<8x512xf32>
    %81 = arith.mulf %80, %79 : vector<8x512xf32>
    %cst_38 = arith.constant 0.707106769 : f32
    %82 = vector.broadcast %cst_38 : f32 to vector<8x512xf32>
    %83 = arith.mulf %79, %82 : vector<8x512xf32>
    %84 = math.absf %83 : vector<8x512xf32>
    %cst_39 = arith.constant 0.327591091 : f32
    %85 = vector.broadcast %cst_39 : f32 to vector<8x512xf32>
    %86 = arith.mulf %85, %84 : vector<8x512xf32>
    %cst_40 = arith.constant 1.000000e+00 : f32
    %87 = vector.broadcast %cst_40 : f32 to vector<8x512xf32>
    %88 = arith.addf %87, %86 : vector<8x512xf32>
    %cst_41 = arith.constant 1.000000e+00 : f32
    %89 = vector.broadcast %cst_41 : f32 to vector<8x512xf32>
    %90 = arith.divf %89, %88 : vector<8x512xf32>
    %cst_42 = arith.constant 1.06140542 : f32
    %91 = vector.broadcast %cst_42 : f32 to vector<8x512xf32>
    %92 = arith.mulf %91, %90 : vector<8x512xf32>
    %cst_43 = arith.constant -1.45315206 : f32
    %93 = vector.broadcast %cst_43 : f32 to vector<8x512xf32>
    %94 = arith.addf %92, %93 : vector<8x512xf32>
    %95 = arith.mulf %94, %90 : vector<8x512xf32>
    %cst_44 = arith.constant 1.42141378 : f32
    %96 = vector.broadcast %cst_44 : f32 to vector<8x512xf32>
    %97 = arith.addf %95, %96 : vector<8x512xf32>
    %98 = arith.mulf %97, %90 : vector<8x512xf32>
    %cst_45 = arith.constant -0.284496725 : f32
    %99 = vector.broadcast %cst_45 : f32 to vector<8x512xf32>
    %100 = arith.addf %98, %99 : vector<8x512xf32>
    %101 = arith.mulf %100, %90 : vector<8x512xf32>
    %cst_46 = arith.constant 0.254829586 : f32
    %102 = vector.broadcast %cst_46 : f32 to vector<8x512xf32>
    %103 = arith.addf %101, %102 : vector<8x512xf32>
    %104 = arith.mulf %103, %90 : vector<8x512xf32>
    %cst_47 = arith.constant 0.000000e+00 : f32
    %105 = vector.broadcast %cst_47 : f32 to vector<8x512xf32>
    %106 = arith.subf %105, %84 : vector<8x512xf32>
    %107 = arith.mulf %106, %84 : vector<8x512xf32>
    %108 = math.exp %107 : vector<8x512xf32>
    %109 = arith.mulf %104, %108 : vector<8x512xf32>
    %cst_48 = arith.constant 1.000000e+00 : f32
    %110 = vector.broadcast %cst_48 : f32 to vector<8x512xf32>
    %111 = arith.subf %110, %109 : vector<8x512xf32>
    %cst_49 = arith.constant 0.000000e+00 : f32
    %112 = vector.broadcast %cst_49 : f32 to vector<8x512xf32>
    %113 = arith.cmpf olt, %83, %112 : vector<8x512xf32>
    %cst_50 = arith.constant 0.000000e+00 : f32
    %114 = vector.broadcast %cst_50 : f32 to vector<8x512xf32>
    %115 = arith.subf %114, %111 : vector<8x512xf32>
    %116 = arith.select %113, %115, %111 : vector<8x512xi1>, vector<8x512xf32>
    %cst_51 = arith.constant 1.000000e+00 : f32
    %117 = vector.broadcast %cst_51 : f32 to vector<8x512xf32>
    %118 = arith.addf %117, %116 : vector<8x512xf32>
    %119 = arith.mulf %81, %118 : vector<8x512xf32>
    %c0_52 = arith.constant 0 : index
    %c0_53 = arith.constant 0 : index
    %c0_54 = arith.constant 0 : index
    %120 = vector.load %arg2[%c0_52, %c0_53, %c0_54] : memref<5x8x3xf32, #tpu.memory_space<vmem>>, vector<5x8x3xf32>
    %c0_55 = arith.constant 0 : index
    %c0_56 = arith.constant 0 : index
    %121 = vector.load %arg3[%c0_55, %c0_56] : memref<8x1xi32, #tpu.memory_space<vmem>>, vector<8x1xi32>
    %c0_57 = arith.constant 0 : index
    %c0_58 = arith.constant 0 : index
    %122 = vector.load %arg11[%c0_57, %c0_58] : memref<3x9xf32, #tpu.memory_space<vmem>>, vector<3x9xf32>
    %c0_59 = arith.constant 0 : index
    %c0_60 = arith.constant 0 : index
    %123 = vector.load %arg12[%c0_59, %c0_60] : memref<3x9xf32, #tpu.memory_space<vmem>>, vector<3x9xf32>
    %c0_61 = arith.constant 0 : index
    %c0_62 = arith.constant 0 : index
    %124 = vector.load %arg13[%c0_61, %c0_62] : memref<1x9xf32, #tpu.memory_space<vmem>>, vector<1x9xf32>
    %c0_63 = arith.constant 0 : index
    %c0_64 = arith.constant 0 : index
    %125 = vector.load %arg14[%c0_63, %c0_64] : memref<1x9xf32, #tpu.memory_space<vmem>>, vector<1x9xf32>
    %126 = vector.extract_strided_slice %120 {offsets = [0, 0, 0], sizes = [5, 8, 1], strides = [1, 1, 1]} : vector<5x8x3xf32> to vector<5x8x1xf32>
    %127 = vector.extract_strided_slice %122 {offsets = [0, 0], sizes = [1, 9], strides = [1, 1]} : vector<3x9xf32> to vector<1x9xf32>
    %128 = vector.shape_cast %127 : vector<1x9xf32> to vector<1x1x9xf32>
    %129 = vector.broadcast %126 : vector<5x8x1xf32> to vector<5x8x9xf32>
    %130 = vector.broadcast %128 : vector<1x1x9xf32> to vector<5x8x9xf32>
    %131 = arith.mulf %129, %130 : vector<5x8x9xf32>
    %132 = vector.shape_cast %124 : vector<1x9xf32> to vector<1x1x9xf32>
    %133 = vector.broadcast %132 : vector<1x1x9xf32> to vector<5x8x9xf32>
    %134 = arith.addf %133, %131 : vector<5x8x9xf32>
    %135 = vector.extract_strided_slice %120 {offsets = [0, 0, 1], sizes = [5, 8, 1], strides = [1, 1, 1]} : vector<5x8x3xf32> to vector<5x8x1xf32>
    %136 = vector.extract_strided_slice %122 {offsets = [1, 0], sizes = [1, 9], strides = [1, 1]} : vector<3x9xf32> to vector<1x9xf32>
    %137 = vector.shape_cast %136 : vector<1x9xf32> to vector<1x1x9xf32>
    %138 = vector.broadcast %135 : vector<5x8x1xf32> to vector<5x8x9xf32>
    %139 = vector.broadcast %137 : vector<1x1x9xf32> to vector<5x8x9xf32>
    %140 = arith.mulf %138, %139 : vector<5x8x9xf32>
    %141 = arith.addf %134, %140 : vector<5x8x9xf32>
    %142 = vector.extract_strided_slice %120 {offsets = [0, 0, 2], sizes = [5, 8, 1], strides = [1, 1, 1]} : vector<5x8x3xf32> to vector<5x8x1xf32>
    %143 = vector.extract_strided_slice %122 {offsets = [2, 0], sizes = [1, 9], strides = [1, 1]} : vector<3x9xf32> to vector<1x9xf32>
    %144 = vector.shape_cast %143 : vector<1x9xf32> to vector<1x1x9xf32>
    %145 = vector.broadcast %142 : vector<5x8x1xf32> to vector<5x8x9xf32>
    %146 = vector.broadcast %144 : vector<1x1x9xf32> to vector<5x8x9xf32>
    %147 = arith.mulf %145, %146 : vector<5x8x9xf32>
    %148 = arith.addf %141, %147 : vector<5x8x9xf32>
    %cst_65 = arith.constant 0.000000e+00 : f32
    %149 = vector.broadcast %cst_65 : f32 to vector<8x3xf32>
    %150 = vector.extract_strided_slice %148 {offsets = [0, 0, 0], sizes = [1, 8, 9], strides = [1, 1, 1]} : vector<5x8x9xf32> to vector<1x8x9xf32>
    %151 = vector.shape_cast %150 : vector<1x8x9xf32> to vector<8x9xf32>
    %152 = vector.extract_strided_slice %149 {offsets = [0, 0], sizes = [8, 1], strides = [1, 1]} : vector<8x3xf32> to vector<8x1xf32>
    %153 = vector.extract_strided_slice %123 {offsets = [0, 0], sizes = [1, 9], strides = [1, 1]} : vector<3x9xf32> to vector<1x9xf32>
    %154 = vector.broadcast %152 : vector<8x1xf32> to vector<8x9xf32>
    %155 = vector.broadcast %153 : vector<1x9xf32> to vector<8x9xf32>
    %156 = arith.mulf %154, %155 : vector<8x9xf32>
    %157 = vector.broadcast %125 : vector<1x9xf32> to vector<8x9xf32>
    %158 = arith.addf %157, %156 : vector<8x9xf32>
    %159 = vector.extract_strided_slice %149 {offsets = [0, 1], sizes = [8, 1], strides = [1, 1]} : vector<8x3xf32> to vector<8x1xf32>
    %160 = vector.extract_strided_slice %123 {offsets = [1, 0], sizes = [1, 9], strides = [1, 1]} : vector<3x9xf32> to vector<1x9xf32>
    %161 = vector.broadcast %159 : vector<8x1xf32> to vector<8x9xf32>
    %162 = vector.broadcast %160 : vector<1x9xf32> to vector<8x9xf32>
    %163 = arith.mulf %161, %162 : vector<8x9xf32>
    %164 = arith.addf %158, %163 : vector<8x9xf32>
    %165 = vector.extract_strided_slice %149 {offsets = [0, 2], sizes = [8, 1], strides = [1, 1]} : vector<8x3xf32> to vector<8x1xf32>
    %166 = vector.extract_strided_slice %123 {offsets = [2, 0], sizes = [1, 9], strides = [1, 1]} : vector<3x9xf32> to vector<1x9xf32>
    %167 = vector.broadcast %165 : vector<8x1xf32> to vector<8x9xf32>
    %168 = vector.broadcast %166 : vector<1x9xf32> to vector<8x9xf32>
    %169 = arith.mulf %167, %168 : vector<8x9xf32>
    %170 = arith.addf %164, %169 : vector<8x9xf32>
    %171 = vector.extract_strided_slice %151 {offsets = [0, 0], sizes = [8, 3], strides = [1, 1]} : vector<8x9xf32> to vector<8x3xf32>
    %172 = vector.extract_strided_slice %170 {offsets = [0, 0], sizes = [8, 3], strides = [1, 1]} : vector<8x9xf32> to vector<8x3xf32>
    %173 = arith.addf %171, %172 : vector<8x3xf32>
    %174 = arith.negf %173 : vector<8x3xf32>
    %175 = math.exp %174 : vector<8x3xf32>
    %cst_66 = arith.constant 1.000000e+00 : f32
    %176 = vector.broadcast %cst_66 : f32 to vector<8x3xf32>
    %177 = arith.addf %176, %175 : vector<8x3xf32>
    %178 = arith.divf %176, %177 : vector<8x3xf32>
    %179 = vector.extract_strided_slice %151 {offsets = [0, 3], sizes = [8, 3], strides = [1, 1]} : vector<8x9xf32> to vector<8x3xf32>
    %180 = vector.extract_strided_slice %170 {offsets = [0, 3], sizes = [8, 3], strides = [1, 1]} : vector<8x9xf32> to vector<8x3xf32>
    %181 = arith.addf %179, %180 : vector<8x3xf32>
    %182 = arith.negf %181 : vector<8x3xf32>
    %183 = math.exp %182 : vector<8x3xf32>
    %cst_67 = arith.constant 1.000000e+00 : f32
    %184 = vector.broadcast %cst_67 : f32 to vector<8x3xf32>
    %185 = arith.addf %184, %183 : vector<8x3xf32>
    %186 = arith.divf %184, %185 : vector<8x3xf32>
    %187 = vector.extract_strided_slice %151 {offsets = [0, 6], sizes = [8, 3], strides = [1, 1]} : vector<8x9xf32> to vector<8x3xf32>
    %188 = vector.extract_strided_slice %170 {offsets = [0, 6], sizes = [8, 3], strides = [1, 1]} : vector<8x9xf32> to vector<8x3xf32>
    %189 = arith.mulf %178, %188 : vector<8x3xf32>
    %190 = arith.addf %187, %189 : vector<8x3xf32>
    %191 = math.tanh %190 : vector<8x3xf32>
    %cst_68 = arith.constant 1.000000e+00 : f32
    %192 = vector.broadcast %cst_68 : f32 to vector<8x3xf32>
    %193 = arith.subf %192, %186 : vector<8x3xf32>
    %194 = arith.mulf %193, %191 : vector<8x3xf32>
    %195 = arith.mulf %186, %149 : vector<8x3xf32>
    %196 = arith.addf %194, %195 : vector<8x3xf32>
    %c0_i32 = arith.constant 0 : i32
    %197 = vector.broadcast %c0_i32 : i32 to vector<8x1xi32>
    %198 = arith.cmpi sgt, %121, %197 : vector<8x1xi32>
    %199 = vector.shape_cast %198 : vector<8x1xi1> to vector<8x1xi1>
    %200 = vector.broadcast %199 : vector<8x1xi1> to vector<8x3xi1>
    %201 = arith.select %200, %196, %149 : vector<8x3xi1>, vector<8x3xf32>
    %202 = vector.extract_strided_slice %148 {offsets = [1, 0, 0], sizes = [1, 8, 9], strides = [1, 1, 1]} : vector<5x8x9xf32> to vector<1x8x9xf32>
    %203 = vector.shape_cast %202 : vector<1x8x9xf32> to vector<8x9xf32>
    %204 = vector.extract_strided_slice %201 {offsets = [0, 0], sizes = [8, 1], strides = [1, 1]} : vector<8x3xf32> to vector<8x1xf32>
    %205 = vector.extract_strided_slice %123 {offsets = [0, 0], sizes = [1, 9], strides = [1, 1]} : vector<3x9xf32> to vector<1x9xf32>
    %206 = vector.broadcast %204 : vector<8x1xf32> to vector<8x9xf32>
    %207 = vector.broadcast %205 : vector<1x9xf32> to vector<8x9xf32>
    %208 = arith.mulf %206, %207 : vector<8x9xf32>
    %209 = vector.broadcast %125 : vector<1x9xf32> to vector<8x9xf32>
    %210 = arith.addf %209, %208 : vector<8x9xf32>
    %211 = vector.extract_strided_slice %201 {offsets = [0, 1], sizes = [8, 1], strides = [1, 1]} : vector<8x3xf32> to vector<8x1xf32>
    %212 = vector.extract_strided_slice %123 {offsets = [1, 0], sizes = [1, 9], strides = [1, 1]} : vector<3x9xf32> to vector<1x9xf32>
    %213 = vector.broadcast %211 : vector<8x1xf32> to vector<8x9xf32>
    %214 = vector.broadcast %212 : vector<1x9xf32> to vector<8x9xf32>
    %215 = arith.mulf %213, %214 : vector<8x9xf32>
    %216 = arith.addf %210, %215 : vector<8x9xf32>
    %217 = vector.extract_strided_slice %201 {offsets = [0, 2], sizes = [8, 1], strides = [1, 1]} : vector<8x3xf32> to vector<8x1xf32>
    %218 = vector.extract_strided_slice %123 {offsets = [2, 0], sizes = [1, 9], strides = [1, 1]} : vector<3x9xf32> to vector<1x9xf32>
    %219 = vector.broadcast %217 : vector<8x1xf32> to vector<8x9xf32>
    %220 = vector.broadcast %218 : vector<1x9xf32> to vector<8x9xf32>
    %221 = arith.mulf %219, %220 : vector<8x9xf32>
    %222 = arith.addf %216, %221 : vector<8x9xf32>
    %223 = vector.extract_strided_slice %203 {offsets = [0, 0], sizes = [8, 3], strides = [1, 1]} : vector<8x9xf32> to vector<8x3xf32>
    %224 = vector.extract_strided_slice %222 {offsets = [0, 0], sizes = [8, 3], strides = [1, 1]} : vector<8x9xf32> to vector<8x3xf32>
    %225 = arith.addf %223, %224 : vector<8x3xf32>
    %226 = arith.negf %225 : vector<8x3xf32>
    %227 = math.exp %226 : vector<8x3xf32>
    %cst_69 = arith.constant 1.000000e+00 : f32
    %228 = vector.broadcast %cst_69 : f32 to vector<8x3xf32>
    %229 = arith.addf %228, %227 : vector<8x3xf32>
    %230 = arith.divf %228, %229 : vector<8x3xf32>
    %231 = vector.extract_strided_slice %203 {offsets = [0, 3], sizes = [8, 3], strides = [1, 1]} : vector<8x9xf32> to vector<8x3xf32>
    %232 = vector.extract_strided_slice %222 {offsets = [0, 3], sizes = [8, 3], strides = [1, 1]} : vector<8x9xf32> to vector<8x3xf32>
    %233 = arith.addf %231, %232 : vector<8x3xf32>
    %234 = arith.negf %233 : vector<8x3xf32>
    %235 = math.exp %234 : vector<8x3xf32>
    %cst_70 = arith.constant 1.000000e+00 : f32
    %236 = vector.broadcast %cst_70 : f32 to vector<8x3xf32>
    %237 = arith.addf %236, %235 : vector<8x3xf32>
    %238 = arith.divf %236, %237 : vector<8x3xf32>
    %239 = vector.extract_strided_slice %203 {offsets = [0, 6], sizes = [8, 3], strides = [1, 1]} : vector<8x9xf32> to vector<8x3xf32>
    %240 = vector.extract_strided_slice %222 {offsets = [0, 6], sizes = [8, 3], strides = [1, 1]} : vector<8x9xf32> to vector<8x3xf32>
    %241 = arith.mulf %230, %240 : vector<8x3xf32>
    %242 = arith.addf %239, %241 : vector<8x3xf32>
    %243 = math.tanh %242 : vector<8x3xf32>
    %cst_71 = arith.constant 1.000000e+00 : f32
    %244 = vector.broadcast %cst_71 : f32 to vector<8x3xf32>
    %245 = arith.subf %244, %238 : vector<8x3xf32>
    %246 = arith.mulf %245, %243 : vector<8x3xf32>
    %247 = arith.mulf %238, %201 : vector<8x3xf32>
    %248 = arith.addf %246, %247 : vector<8x3xf32>
    %c1_i32 = arith.constant 1 : i32
    %249 = vector.broadcast %c1_i32 : i32 to vector<8x1xi32>
    %250 = arith.cmpi sgt, %121, %249 : vector<8x1xi32>
    %251 = vector.shape_cast %250 : vector<8x1xi1> to vector<8x1xi1>
    %252 = vector.broadcast %251 : vector<8x1xi1> to vector<8x3xi1>
    %253 = arith.select %252, %248, %201 : vector<8x3xi1>, vector<8x3xf32>
    %254 = vector.extract_strided_slice %148 {offsets = [2, 0, 0], sizes = [1, 8, 9], strides = [1, 1, 1]} : vector<5x8x9xf32> to vector<1x8x9xf32>
    %255 = vector.shape_cast %254 : vector<1x8x9xf32> to vector<8x9xf32>
    %256 = vector.extract_strided_slice %253 {offsets = [0, 0], sizes = [8, 1], strides = [1, 1]} : vector<8x3xf32> to vector<8x1xf32>
    %257 = vector.extract_strided_slice %123 {offsets = [0, 0], sizes = [1, 9], strides = [1, 1]} : vector<3x9xf32> to vector<1x9xf32>
    %258 = vector.broadcast %256 : vector<8x1xf32> to vector<8x9xf32>
    %259 = vector.broadcast %257 : vector<1x9xf32> to vector<8x9xf32>
    %260 = arith.mulf %258, %259 : vector<8x9xf32>
    %261 = vector.broadcast %125 : vector<1x9xf32> to vector<8x9xf32>
    %262 = arith.addf %261, %260 : vector<8x9xf32>
    %263 = vector.extract_strided_slice %253 {offsets = [0, 1], sizes = [8, 1], strides = [1, 1]} : vector<8x3xf32> to vector<8x1xf32>
    %264 = vector.extract_strided_slice %123 {offsets = [1, 0], sizes = [1, 9], strides = [1, 1]} : vector<3x9xf32> to vector<1x9xf32>
    %265 = vector.broadcast %263 : vector<8x1xf32> to vector<8x9xf32>
    %266 = vector.broadcast %264 : vector<1x9xf32> to vector<8x9xf32>
    %267 = arith.mulf %265, %266 : vector<8x9xf32>
    %268 = arith.addf %262, %267 : vector<8x9xf32>
    %269 = vector.extract_strided_slice %253 {offsets = [0, 2], sizes = [8, 1], strides = [1, 1]} : vector<8x3xf32> to vector<8x1xf32>
    %270 = vector.extract_strided_slice %123 {offsets = [2, 0], sizes = [1, 9], strides = [1, 1]} : vector<3x9xf32> to vector<1x9xf32>
    %271 = vector.broadcast %269 : vector<8x1xf32> to vector<8x9xf32>
    %272 = vector.broadcast %270 : vector<1x9xf32> to vector<8x9xf32>
    %273 = arith.mulf %271, %272 : vector<8x9xf32>
    %274 = arith.addf %268, %273 : vector<8x9xf32>
    %275 = vector.extract_strided_slice %255 {offsets = [0, 0], sizes = [8, 3], strides = [1, 1]} : vector<8x9xf32> to vector<8x3xf32>
    %276 = vector.extract_strided_slice %274 {offsets = [0, 0], sizes = [8, 3], strides = [1, 1]} : vector<8x9xf32> to vector<8x3xf32>
    %277 = arith.addf %275, %276 : vector<8x3xf32>
    %278 = arith.negf %277 : vector<8x3xf32>
    %279 = math.exp %278 : vector<8x3xf32>
    %cst_72 = arith.constant 1.000000e+00 : f32
    %280 = vector.broadcast %cst_72 : f32 to vector<8x3xf32>
    %281 = arith.addf %280, %279 : vector<8x3xf32>
    %282 = arith.divf %280, %281 : vector<8x3xf32>
    %283 = vector.extract_strided_slice %255 {offsets = [0, 3], sizes = [8, 3], strides = [1, 1]} : vector<8x9xf32> to vector<8x3xf32>
    %284 = vector.extract_strided_slice %274 {offsets = [0, 3], sizes = [8, 3], strides = [1, 1]} : vector<8x9xf32> to vector<8x3xf32>
    %285 = arith.addf %283, %284 : vector<8x3xf32>
    %286 = arith.negf %285 : vector<8x3xf32>
    %287 = math.exp %286 : vector<8x3xf32>
    %cst_73 = arith.constant 1.000000e+00 : f32
    %288 = vector.broadcast %cst_73 : f32 to vector<8x3xf32>
    %289 = arith.addf %288, %287 : vector<8x3xf32>
    %290 = arith.divf %288, %289 : vector<8x3xf32>
    %291 = vector.extract_strided_slice %255 {offsets = [0, 6], sizes = [8, 3], strides = [1, 1]} : vector<8x9xf32> to vector<8x3xf32>
    %292 = vector.extract_strided_slice %274 {offsets = [0, 6], sizes = [8, 3], strides = [1, 1]} : vector<8x9xf32> to vector<8x3xf32>
    %293 = arith.mulf %282, %292 : vector<8x3xf32>
    %294 = arith.addf %291, %293 : vector<8x3xf32>
    %295 = math.tanh %294 : vector<8x3xf32>
    %cst_74 = arith.constant 1.000000e+00 : f32
    %296 = vector.broadcast %cst_74 : f32 to vector<8x3xf32>
    %297 = arith.subf %296, %290 : vector<8x3xf32>
    %298 = arith.mulf %297, %295 : vector<8x3xf32>
    %299 = arith.mulf %290, %253 : vector<8x3xf32>
    %300 = arith.addf %298, %299 : vector<8x3xf32>
    %c2_i32 = arith.constant 2 : i32
    %301 = vector.broadcast %c2_i32 : i32 to vector<8x1xi32>
    %302 = arith.cmpi sgt, %121, %301 : vector<8x1xi32>
    %303 = vector.shape_cast %302 : vector<8x1xi1> to vector<8x1xi1>
    %304 = vector.broadcast %303 : vector<8x1xi1> to vector<8x3xi1>
    %305 = arith.select %304, %300, %253 : vector<8x3xi1>, vector<8x3xf32>
    %306 = vector.extract_strided_slice %148 {offsets = [3, 0, 0], sizes = [1, 8, 9], strides = [1, 1, 1]} : vector<5x8x9xf32> to vector<1x8x9xf32>
    %307 = vector.shape_cast %306 : vector<1x8x9xf32> to vector<8x9xf32>
    %308 = vector.extract_strided_slice %305 {offsets = [0, 0], sizes = [8, 1], strides = [1, 1]} : vector<8x3xf32> to vector<8x1xf32>
    %309 = vector.extract_strided_slice %123 {offsets = [0, 0], sizes = [1, 9], strides = [1, 1]} : vector<3x9xf32> to vector<1x9xf32>
    %310 = vector.broadcast %308 : vector<8x1xf32> to vector<8x9xf32>
    %311 = vector.broadcast %309 : vector<1x9xf32> to vector<8x9xf32>
    %312 = arith.mulf %310, %311 : vector<8x9xf32>
    %313 = vector.broadcast %125 : vector<1x9xf32> to vector<8x9xf32>
    %314 = arith.addf %313, %312 : vector<8x9xf32>
    %315 = vector.extract_strided_slice %305 {offsets = [0, 1], sizes = [8, 1], strides = [1, 1]} : vector<8x3xf32> to vector<8x1xf32>
    %316 = vector.extract_strided_slice %123 {offsets = [1, 0], sizes = [1, 9], strides = [1, 1]} : vector<3x9xf32> to vector<1x9xf32>
    %317 = vector.broadcast %315 : vector<8x1xf32> to vector<8x9xf32>
    %318 = vector.broadcast %316 : vector<1x9xf32> to vector<8x9xf32>
    %319 = arith.mulf %317, %318 : vector<8x9xf32>
    %320 = arith.addf %314, %319 : vector<8x9xf32>
    %321 = vector.extract_strided_slice %305 {offsets = [0, 2], sizes = [8, 1], strides = [1, 1]} : vector<8x3xf32> to vector<8x1xf32>
    %322 = vector.extract_strided_slice %123 {offsets = [2, 0], sizes = [1, 9], strides = [1, 1]} : vector<3x9xf32> to vector<1x9xf32>
    %323 = vector.broadcast %321 : vector<8x1xf32> to vector<8x9xf32>
    %324 = vector.broadcast %322 : vector<1x9xf32> to vector<8x9xf32>
    %325 = arith.mulf %323, %324 : vector<8x9xf32>
    %326 = arith.addf %320, %325 : vector<8x9xf32>
    %327 = vector.extract_strided_slice %307 {offsets = [0, 0], sizes = [8, 3], strides = [1, 1]} : vector<8x9xf32> to vector<8x3xf32>
    %328 = vector.extract_strided_slice %326 {offsets = [0, 0], sizes = [8, 3], strides = [1, 1]} : vector<8x9xf32> to vector<8x3xf32>
    %329 = arith.addf %327, %328 : vector<8x3xf32>
    %330 = arith.negf %329 : vector<8x3xf32>
    %331 = math.exp %330 : vector<8x3xf32>
    %cst_75 = arith.constant 1.000000e+00 : f32
    %332 = vector.broadcast %cst_75 : f32 to vector<8x3xf32>
    %333 = arith.addf %332, %331 : vector<8x3xf32>
    %334 = arith.divf %332, %333 : vector<8x3xf32>
    %335 = vector.extract_strided_slice %307 {offsets = [0, 3], sizes = [8, 3], strides = [1, 1]} : vector<8x9xf32> to vector<8x3xf32>
    %336 = vector.extract_strided_slice %326 {offsets = [0, 3], sizes = [8, 3], strides = [1, 1]} : vector<8x9xf32> to vector<8x3xf32>
    %337 = arith.addf %335, %336 : vector<8x3xf32>
    %338 = arith.negf %337 : vector<8x3xf32>
    %339 = math.exp %338 : vector<8x3xf32>
    %cst_76 = arith.constant 1.000000e+00 : f32
    %340 = vector.broadcast %cst_76 : f32 to vector<8x3xf32>
    %341 = arith.addf %340, %339 : vector<8x3xf32>
    %342 = arith.divf %340, %341 : vector<8x3xf32>
    %343 = vector.extract_strided_slice %307 {offsets = [0, 6], sizes = [8, 3], strides = [1, 1]} : vector<8x9xf32> to vector<8x3xf32>
    %344 = vector.extract_strided_slice %326 {offsets = [0, 6], sizes = [8, 3], strides = [1, 1]} : vector<8x9xf32> to vector<8x3xf32>
    %345 = arith.mulf %334, %344 : vector<8x3xf32>
    %346 = arith.addf %343, %345 : vector<8x3xf32>
    %347 = math.tanh %346 : vector<8x3xf32>
    %cst_77 = arith.constant 1.000000e+00 : f32
    %348 = vector.broadcast %cst_77 : f32 to vector<8x3xf32>
    %349 = arith.subf %348, %342 : vector<8x3xf32>
    %350 = arith.mulf %349, %347 : vector<8x3xf32>
    %351 = arith.mulf %342, %305 : vector<8x3xf32>
    %352 = arith.addf %350, %351 : vector<8x3xf32>
    %c3_i32 = arith.constant 3 : i32
    %353 = vector.broadcast %c3_i32 : i32 to vector<8x1xi32>
    %354 = arith.cmpi sgt, %121, %353 : vector<8x1xi32>
    %355 = vector.shape_cast %354 : vector<8x1xi1> to vector<8x1xi1>
    %356 = vector.broadcast %355 : vector<8x1xi1> to vector<8x3xi1>
    %357 = arith.select %356, %352, %305 : vector<8x3xi1>, vector<8x3xf32>
    %358 = vector.extract_strided_slice %148 {offsets = [4, 0, 0], sizes = [1, 8, 9], strides = [1, 1, 1]} : vector<5x8x9xf32> to vector<1x8x9xf32>
    %359 = vector.shape_cast %358 : vector<1x8x9xf32> to vector<8x9xf32>
    %360 = vector.extract_strided_slice %357 {offsets = [0, 0], sizes = [8, 1], strides = [1, 1]} : vector<8x3xf32> to vector<8x1xf32>
    %361 = vector.extract_strided_slice %123 {offsets = [0, 0], sizes = [1, 9], strides = [1, 1]} : vector<3x9xf32> to vector<1x9xf32>
    %362 = vector.broadcast %360 : vector<8x1xf32> to vector<8x9xf32>
    %363 = vector.broadcast %361 : vector<1x9xf32> to vector<8x9xf32>
    %364 = arith.mulf %362, %363 : vector<8x9xf32>
    %365 = vector.broadcast %125 : vector<1x9xf32> to vector<8x9xf32>
    %366 = arith.addf %365, %364 : vector<8x9xf32>
    %367 = vector.extract_strided_slice %357 {offsets = [0, 1], sizes = [8, 1], strides = [1, 1]} : vector<8x3xf32> to vector<8x1xf32>
    %368 = vector.extract_strided_slice %123 {offsets = [1, 0], sizes = [1, 9], strides = [1, 1]} : vector<3x9xf32> to vector<1x9xf32>
    %369 = vector.broadcast %367 : vector<8x1xf32> to vector<8x9xf32>
    %370 = vector.broadcast %368 : vector<1x9xf32> to vector<8x9xf32>
    %371 = arith.mulf %369, %370 : vector<8x9xf32>
    %372 = arith.addf %366, %371 : vector<8x9xf32>
    %373 = vector.extract_strided_slice %357 {offsets = [0, 2], sizes = [8, 1], strides = [1, 1]} : vector<8x3xf32> to vector<8x1xf32>
    %374 = vector.extract_strided_slice %123 {offsets = [2, 0], sizes = [1, 9], strides = [1, 1]} : vector<3x9xf32> to vector<1x9xf32>
    %375 = vector.broadcast %373 : vector<8x1xf32> to vector<8x9xf32>
    %376 = vector.broadcast %374 : vector<1x9xf32> to vector<8x9xf32>
    %377 = arith.mulf %375, %376 : vector<8x9xf32>
    %378 = arith.addf %372, %377 : vector<8x9xf32>
    %379 = vector.extract_strided_slice %359 {offsets = [0, 0], sizes = [8, 3], strides = [1, 1]} : vector<8x9xf32> to vector<8x3xf32>
    %380 = vector.extract_strided_slice %378 {offsets = [0, 0], sizes = [8, 3], strides = [1, 1]} : vector<8x9xf32> to vector<8x3xf32>
    %381 = arith.addf %379, %380 : vector<8x3xf32>
    %382 = arith.negf %381 : vector<8x3xf32>
    %383 = math.exp %382 : vector<8x3xf32>
    %cst_78 = arith.constant 1.000000e+00 : f32
    %384 = vector.broadcast %cst_78 : f32 to vector<8x3xf32>
    %385 = arith.addf %384, %383 : vector<8x3xf32>
    %386 = arith.divf %384, %385 : vector<8x3xf32>
    %387 = vector.extract_strided_slice %359 {offsets = [0, 3], sizes = [8, 3], strides = [1, 1]} : vector<8x9xf32> to vector<8x3xf32>
    %388 = vector.extract_strided_slice %378 {offsets = [0, 3], sizes = [8, 3], strides = [1, 1]} : vector<8x9xf32> to vector<8x3xf32>
    %389 = arith.addf %387, %388 : vector<8x3xf32>
    %390 = arith.negf %389 : vector<8x3xf32>
    %391 = math.exp %390 : vector<8x3xf32>
    %cst_79 = arith.constant 1.000000e+00 : f32
    %392 = vector.broadcast %cst_79 : f32 to vector<8x3xf32>
    %393 = arith.addf %392, %391 : vector<8x3xf32>
    %394 = arith.divf %392, %393 : vector<8x3xf32>
    %395 = vector.extract_strided_slice %359 {offsets = [0, 6], sizes = [8, 3], strides = [1, 1]} : vector<8x9xf32> to vector<8x3xf32>
    %396 = vector.extract_strided_slice %378 {offsets = [0, 6], sizes = [8, 3], strides = [1, 1]} : vector<8x9xf32> to vector<8x3xf32>
    %397 = arith.mulf %386, %396 : vector<8x3xf32>
    %398 = arith.addf %395, %397 : vector<8x3xf32>
    %399 = math.tanh %398 : vector<8x3xf32>
    %cst_80 = arith.constant 1.000000e+00 : f32
    %400 = vector.broadcast %cst_80 : f32 to vector<8x3xf32>
    %401 = arith.subf %400, %394 : vector<8x3xf32>
    %402 = arith.mulf %401, %399 : vector<8x3xf32>
    %403 = arith.mulf %394, %357 : vector<8x3xf32>
    %404 = arith.addf %402, %403 : vector<8x3xf32>
    %c4_i32 = arith.constant 4 : i32
    %405 = vector.broadcast %c4_i32 : i32 to vector<8x1xi32>
    %406 = arith.cmpi sgt, %121, %405 : vector<8x1xi32>
    %407 = vector.shape_cast %406 : vector<8x1xi1> to vector<8x1xi1>
    %408 = vector.broadcast %407 : vector<8x1xi1> to vector<8x3xi1>
    %409 = arith.select %408, %404, %357 : vector<8x3xi1>, vector<8x3xf32>
    %c0_81 = arith.constant 0 : index
    %c0_82 = arith.constant 0 : index
    %410 = vector.load %arg4[%c0_81, %c0_82] : memref<8x1xf32, #tpu.memory_space<vmem>>, vector<8x1xf32>
    %c0_83 = arith.constant 0 : index
    %c0_84 = arith.constant 0 : index
    %411 = vector.load %arg15[%c0_83, %c0_84] : memref<3x384xf32, #tpu.memory_space<vmem>>, vector<3x384xf32>
    %c0_85 = arith.constant 0 : index
    %c0_86 = arith.constant 0 : index
    %412 = vector.load %arg17[%c0_85, %c0_86] : memref<1x384xf32, #tpu.memory_space<vmem>>, vector<1x384xf32>
    %413 = vector.extract_strided_slice %409 {offsets = [0, 0], sizes = [8, 1], strides = [1, 1]} : vector<8x3xf32> to vector<8x1xf32>
    %414 = vector.extract_strided_slice %411 {offsets = [0, 0], sizes = [1, 384], strides = [1, 1]} : vector<3x384xf32> to vector<1x384xf32>
    %415 = vector.broadcast %413 : vector<8x1xf32> to vector<8x384xf32>
    %416 = vector.broadcast %414 : vector<1x384xf32> to vector<8x384xf32>
    %417 = arith.mulf %415, %416 : vector<8x384xf32>
    %418 = vector.broadcast %412 : vector<1x384xf32> to vector<8x384xf32>
    %419 = arith.addf %418, %417 : vector<8x384xf32>
    %420 = vector.extract_strided_slice %409 {offsets = [0, 1], sizes = [8, 1], strides = [1, 1]} : vector<8x3xf32> to vector<8x1xf32>
    %421 = vector.extract_strided_slice %411 {offsets = [1, 0], sizes = [1, 384], strides = [1, 1]} : vector<3x384xf32> to vector<1x384xf32>
    %422 = vector.broadcast %420 : vector<8x1xf32> to vector<8x384xf32>
    %423 = vector.broadcast %421 : vector<1x384xf32> to vector<8x384xf32>
    %424 = arith.mulf %422, %423 : vector<8x384xf32>
    %425 = arith.addf %419, %424 : vector<8x384xf32>
    %426 = vector.extract_strided_slice %409 {offsets = [0, 2], sizes = [8, 1], strides = [1, 1]} : vector<8x3xf32> to vector<8x1xf32>
    %427 = vector.extract_strided_slice %411 {offsets = [2, 0], sizes = [1, 384], strides = [1, 1]} : vector<3x384xf32> to vector<1x384xf32>
    %428 = vector.broadcast %426 : vector<8x1xf32> to vector<8x384xf32>
    %429 = vector.broadcast %427 : vector<1x384xf32> to vector<8x384xf32>
    %430 = arith.mulf %428, %429 : vector<8x384xf32>
    %431 = arith.addf %425, %430 : vector<8x384xf32>
    %c0_87 = arith.constant 0 : index
    %c0_88 = arith.constant 0 : index
    %432 = vector.load %arg16[%c0_87, %c0_88] : memref<1x384xf32, #tpu.memory_space<vmem>>, vector<1x384xf32>
    %433 = vector.broadcast %410 : vector<8x1xf32> to vector<8x384xf32>
    %434 = vector.broadcast %432 : vector<1x384xf32> to vector<8x384xf32>
    %435 = arith.mulf %433, %434 : vector<8x384xf32>
    %436 = arith.addf %431, %435 : vector<8x384xf32>
    %cst_89 = arith.constant 5.000000e-01 : f32
    %437 = vector.broadcast %cst_89 : f32 to vector<8x384xf32>
    %438 = arith.mulf %437, %436 : vector<8x384xf32>
    %cst_90 = arith.constant 0.707106769 : f32
    %439 = vector.broadcast %cst_90 : f32 to vector<8x384xf32>
    %440 = arith.mulf %436, %439 : vector<8x384xf32>
    %441 = math.absf %440 : vector<8x384xf32>
    %cst_91 = arith.constant 0.327591091 : f32
    %442 = vector.broadcast %cst_91 : f32 to vector<8x384xf32>
    %443 = arith.mulf %442, %441 : vector<8x384xf32>
    %cst_92 = arith.constant 1.000000e+00 : f32
    %444 = vector.broadcast %cst_92 : f32 to vector<8x384xf32>
    %445 = arith.addf %444, %443 : vector<8x384xf32>
    %cst_93 = arith.constant 1.000000e+00 : f32
    %446 = vector.broadcast %cst_93 : f32 to vector<8x384xf32>
    %447 = arith.divf %446, %445 : vector<8x384xf32>
    %cst_94 = arith.constant 1.06140542 : f32
    %448 = vector.broadcast %cst_94 : f32 to vector<8x384xf32>
    %449 = arith.mulf %448, %447 : vector<8x384xf32>
    %cst_95 = arith.constant -1.45315206 : f32
    %450 = vector.broadcast %cst_95 : f32 to vector<8x384xf32>
    %451 = arith.addf %449, %450 : vector<8x384xf32>
    %452 = arith.mulf %451, %447 : vector<8x384xf32>
    %cst_96 = arith.constant 1.42141378 : f32
    %453 = vector.broadcast %cst_96 : f32 to vector<8x384xf32>
    %454 = arith.addf %452, %453 : vector<8x384xf32>
    %455 = arith.mulf %454, %447 : vector<8x384xf32>
    %cst_97 = arith.constant -0.284496725 : f32
    %456 = vector.broadcast %cst_97 : f32 to vector<8x384xf32>
    %457 = arith.addf %455, %456 : vector<8x384xf32>
    %458 = arith.mulf %457, %447 : vector<8x384xf32>
    %cst_98 = arith.constant 0.254829586 : f32
    %459 = vector.broadcast %cst_98 : f32 to vector<8x384xf32>
    %460 = arith.addf %458, %459 : vector<8x384xf32>
    %461 = arith.mulf %460, %447 : vector<8x384xf32>
    %cst_99 = arith.constant 0.000000e+00 : f32
    %462 = vector.broadcast %cst_99 : f32 to vector<8x384xf32>
    %463 = arith.subf %462, %441 : vector<8x384xf32>
    %464 = arith.mulf %463, %441 : vector<8x384xf32>
    %465 = math.exp %464 : vector<8x384xf32>
    %466 = arith.mulf %461, %465 : vector<8x384xf32>
    %cst_100 = arith.constant 1.000000e+00 : f32
    %467 = vector.broadcast %cst_100 : f32 to vector<8x384xf32>
    %468 = arith.subf %467, %466 : vector<8x384xf32>
    %cst_101 = arith.constant 0.000000e+00 : f32
    %469 = vector.broadcast %cst_101 : f32 to vector<8x384xf32>
    %470 = arith.cmpf olt, %440, %469 : vector<8x384xf32>
    %cst_102 = arith.constant 0.000000e+00 : f32
    %471 = vector.broadcast %cst_102 : f32 to vector<8x384xf32>
    %472 = arith.subf %471, %468 : vector<8x384xf32>
    %473 = arith.select %470, %472, %468 : vector<8x384xi1>, vector<8x384xf32>
    %cst_103 = arith.constant 1.000000e+00 : f32
    %474 = vector.broadcast %cst_103 : f32 to vector<8x384xf32>
    %475 = arith.addf %474, %473 : vector<8x384xf32>
    %476 = arith.mulf %438, %475 : vector<8x384xf32>
    %477 = arith.truncf %476 : vector<8x384xf32> to vector<8x384xbf16>
    %c0_104 = arith.constant 0 : index
    %c0_105 = arith.constant 0 : index
    %478 = vector.load %arg18[%c0_104, %c0_105] : memref<384x512xbf16, #tpu.memory_space<vmem>>, vector<384x512xbf16>
    %cst_106 = arith.constant dense<0.000000e+00> : vector<8x512xf32>
    %479 = tpu.matmul %477, %478, %cst_106 {dimension_numbers = #tpu.dot_dimension_numbers<[1], [0], [0], [1], [0, 0, 1, 1], [], []>} : vector<8x384xbf16>, vector<384x512xbf16>, vector<8x512xf32> -> vector<8x512xf32>
    %c0_107 = arith.constant 0 : index
    %c0_108 = arith.constant 0 : index
    %480 = vector.load %arg19[%c0_107, %c0_108] : memref<1x512xf32, #tpu.memory_space<vmem>>, vector<1x512xf32>
    %481 = vector.broadcast %480 : vector<1x512xf32> to vector<8x512xf32>
    %482 = arith.addf %479, %481 : vector<8x512xf32>
    %cst_109 = arith.constant 5.000000e-01 : f32
    %483 = vector.broadcast %cst_109 : f32 to vector<8x512xf32>
    %484 = arith.mulf %483, %482 : vector<8x512xf32>
    %cst_110 = arith.constant 0.707106769 : f32
    %485 = vector.broadcast %cst_110 : f32 to vector<8x512xf32>
    %486 = arith.mulf %482, %485 : vector<8x512xf32>
    %487 = math.absf %486 : vector<8x512xf32>
    %cst_111 = arith.constant 0.327591091 : f32
    %488 = vector.broadcast %cst_111 : f32 to vector<8x512xf32>
    %489 = arith.mulf %488, %487 : vector<8x512xf32>
    %cst_112 = arith.constant 1.000000e+00 : f32
    %490 = vector.broadcast %cst_112 : f32 to vector<8x512xf32>
    %491 = arith.addf %490, %489 : vector<8x512xf32>
    %cst_113 = arith.constant 1.000000e+00 : f32
    %492 = vector.broadcast %cst_113 : f32 to vector<8x512xf32>
    %493 = arith.divf %492, %491 : vector<8x512xf32>
    %cst_114 = arith.constant 1.06140542 : f32
    %494 = vector.broadcast %cst_114 : f32 to vector<8x512xf32>
    %495 = arith.mulf %494, %493 : vector<8x512xf32>
    %cst_115 = arith.constant -1.45315206 : f32
    %496 = vector.broadcast %cst_115 : f32 to vector<8x512xf32>
    %497 = arith.addf %495, %496 : vector<8x512xf32>
    %498 = arith.mulf %497, %493 : vector<8x512xf32>
    %cst_116 = arith.constant 1.42141378 : f32
    %499 = vector.broadcast %cst_116 : f32 to vector<8x512xf32>
    %500 = arith.addf %498, %499 : vector<8x512xf32>
    %501 = arith.mulf %500, %493 : vector<8x512xf32>
    %cst_117 = arith.constant -0.284496725 : f32
    %502 = vector.broadcast %cst_117 : f32 to vector<8x512xf32>
    %503 = arith.addf %501, %502 : vector<8x512xf32>
    %504 = arith.mulf %503, %493 : vector<8x512xf32>
    %cst_118 = arith.constant 0.254829586 : f32
    %505 = vector.broadcast %cst_118 : f32 to vector<8x512xf32>
    %506 = arith.addf %504, %505 : vector<8x512xf32>
    %507 = arith.mulf %506, %493 : vector<8x512xf32>
    %cst_119 = arith.constant 0.000000e+00 : f32
    %508 = vector.broadcast %cst_119 : f32 to vector<8x512xf32>
    %509 = arith.subf %508, %487 : vector<8x512xf32>
    %510 = arith.mulf %509, %487 : vector<8x512xf32>
    %511 = math.exp %510 : vector<8x512xf32>
    %512 = arith.mulf %507, %511 : vector<8x512xf32>
    %cst_120 = arith.constant 1.000000e+00 : f32
    %513 = vector.broadcast %cst_120 : f32 to vector<8x512xf32>
    %514 = arith.subf %513, %512 : vector<8x512xf32>
    %cst_121 = arith.constant 0.000000e+00 : f32
    %515 = vector.broadcast %cst_121 : f32 to vector<8x512xf32>
    %516 = arith.cmpf olt, %486, %515 : vector<8x512xf32>
    %cst_122 = arith.constant 0.000000e+00 : f32
    %517 = vector.broadcast %cst_122 : f32 to vector<8x512xf32>
    %518 = arith.subf %517, %514 : vector<8x512xf32>
    %519 = arith.select %516, %518, %514 : vector<8x512xi1>, vector<8x512xf32>
    %cst_123 = arith.constant 1.000000e+00 : f32
    %520 = vector.broadcast %cst_123 : f32 to vector<8x512xf32>
    %521 = arith.addf %520, %519 : vector<8x512xf32>
    %522 = arith.mulf %484, %521 : vector<8x512xf32>
    %523 = arith.truncf %119 : vector<8x512xf32> to vector<8x512xbf16>
    %c0_124 = arith.constant 0 : index
    %c0_125 = arith.constant 0 : index
    %524 = vector.load %arg20[%c0_124, %c0_125] : memref<512x512xbf16, #tpu.memory_space<vmem>>, vector<512x512xbf16>
    %cst_126 = arith.constant dense<0.000000e+00> : vector<8x512xf32>
    %525 = tpu.matmul %523, %524, %cst_126 {dimension_numbers = #tpu.dot_dimension_numbers<[1], [0], [0], [1], [0, 0, 1, 1], [], []>} : vector<8x512xbf16>, vector<512x512xbf16>, vector<8x512xf32> -> vector<8x512xf32>
    %526 = arith.truncf %522 : vector<8x512xf32> to vector<8x512xbf16>
    %c0_127 = arith.constant 0 : index
    %c0_128 = arith.constant 0 : index
    %527 = vector.load %arg21[%c0_127, %c0_128] : memref<512x512xbf16, #tpu.memory_space<vmem>>, vector<512x512xbf16>
    %cst_129 = arith.constant dense<0.000000e+00> : vector<8x512xf32>
    %528 = tpu.matmul %526, %527, %cst_129 {dimension_numbers = #tpu.dot_dimension_numbers<[1], [0], [0], [1], [0, 0, 1, 1], [], []>} : vector<8x512xbf16>, vector<512x512xbf16>, vector<8x512xf32> -> vector<8x512xf32>
    %529 = arith.addf %525, %528 : vector<8x512xf32>
    %c0_130 = arith.constant 0 : index
    %c0_131 = arith.constant 0 : index
    %530 = vector.load %arg22[%c0_130, %c0_131] : memref<1x512xf32, #tpu.memory_space<vmem>>, vector<1x512xf32>
    %531 = vector.broadcast %530 : vector<1x512xf32> to vector<8x512xf32>
    %532 = arith.addf %529, %531 : vector<8x512xf32>
    %cst_132 = arith.constant 5.000000e-01 : f32
    %533 = vector.broadcast %cst_132 : f32 to vector<8x512xf32>
    %534 = arith.mulf %533, %532 : vector<8x512xf32>
    %cst_133 = arith.constant 0.707106769 : f32
    %535 = vector.broadcast %cst_133 : f32 to vector<8x512xf32>
    %536 = arith.mulf %532, %535 : vector<8x512xf32>
    %537 = math.absf %536 : vector<8x512xf32>
    %cst_134 = arith.constant 0.327591091 : f32
    %538 = vector.broadcast %cst_134 : f32 to vector<8x512xf32>
    %539 = arith.mulf %538, %537 : vector<8x512xf32>
    %cst_135 = arith.constant 1.000000e+00 : f32
    %540 = vector.broadcast %cst_135 : f32 to vector<8x512xf32>
    %541 = arith.addf %540, %539 : vector<8x512xf32>
    %cst_136 = arith.constant 1.000000e+00 : f32
    %542 = vector.broadcast %cst_136 : f32 to vector<8x512xf32>
    %543 = arith.divf %542, %541 : vector<8x512xf32>
    %cst_137 = arith.constant 1.06140542 : f32
    %544 = vector.broadcast %cst_137 : f32 to vector<8x512xf32>
    %545 = arith.mulf %544, %543 : vector<8x512xf32>
    %cst_138 = arith.constant -1.45315206 : f32
    %546 = vector.broadcast %cst_138 : f32 to vector<8x512xf32>
    %547 = arith.addf %545, %546 : vector<8x512xf32>
    %548 = arith.mulf %547, %543 : vector<8x512xf32>
    %cst_139 = arith.constant 1.42141378 : f32
    %549 = vector.broadcast %cst_139 : f32 to vector<8x512xf32>
    %550 = arith.addf %548, %549 : vector<8x512xf32>
    %551 = arith.mulf %550, %543 : vector<8x512xf32>
    %cst_140 = arith.constant -0.284496725 : f32
    %552 = vector.broadcast %cst_140 : f32 to vector<8x512xf32>
    %553 = arith.addf %551, %552 : vector<8x512xf32>
    %554 = arith.mulf %553, %543 : vector<8x512xf32>
    %cst_141 = arith.constant 0.254829586 : f32
    %555 = vector.broadcast %cst_141 : f32 to vector<8x512xf32>
    %556 = arith.addf %554, %555 : vector<8x512xf32>
    %557 = arith.mulf %556, %543 : vector<8x512xf32>
    %cst_142 = arith.constant 0.000000e+00 : f32
    %558 = vector.broadcast %cst_142 : f32 to vector<8x512xf32>
    %559 = arith.subf %558, %537 : vector<8x512xf32>
    %560 = arith.mulf %559, %537 : vector<8x512xf32>
    %561 = math.exp %560 : vector<8x512xf32>
    %562 = arith.mulf %557, %561 : vector<8x512xf32>
    %cst_143 = arith.constant 1.000000e+00 : f32
    %563 = vector.broadcast %cst_143 : f32 to vector<8x512xf32>
    %564 = arith.subf %563, %562 : vector<8x512xf32>
    %cst_144 = arith.constant 0.000000e+00 : f32
    %565 = vector.broadcast %cst_144 : f32 to vector<8x512xf32>
    %566 = arith.cmpf olt, %536, %565 : vector<8x512xf32>
    %cst_145 = arith.constant 0.000000e+00 : f32
    %567 = vector.broadcast %cst_145 : f32 to vector<8x512xf32>
    %568 = arith.subf %567, %564 : vector<8x512xf32>
    %569 = arith.select %566, %568, %564 : vector<8x512xi1>, vector<8x512xf32>
    %cst_146 = arith.constant 1.000000e+00 : f32
    %570 = vector.broadcast %cst_146 : f32 to vector<8x512xf32>
    %571 = arith.addf %570, %569 : vector<8x512xf32>
    %572 = arith.mulf %534, %571 : vector<8x512xf32>
    %c0_147 = arith.constant 0 : index
    %c0_148 = arith.constant 0 : index
    %573 = vector.load %arg23[%c0_147, %c0_148] : memref<1x512xf32, #tpu.memory_space<vmem>>, vector<1x512xf32>
    %574 = vector.broadcast %573 : vector<1x512xf32> to vector<8x512xf32>
    %575 = arith.mulf %572, %574 : vector<8x512xf32>
    %cst_149 = arith.constant dense<0.000000e+00> : vector<8xf32>
    %576 = vector.multi_reduction <add>, %575, %cst_149 [1] : vector<8x512xf32> to vector<8xf32>
    %577 = vector.shape_cast %576 : vector<8xf32> to vector<8x1xf32>
    %c0_150 = arith.constant 0 : index
    %c0_151 = arith.constant 0 : index
    %578 = vector.load %arg24[%c0_150, %c0_151] : memref<1x1xf32, #tpu.memory_space<vmem>>, vector<1x1xf32>
    %579 = vector.broadcast %578 : vector<1x1xf32> to vector<8x1xf32>
    %580 = arith.addf %577, %579 : vector<8x1xf32>
    %cst_152 = arith.constant 1.000000e+01 : f32
    %581 = vector.broadcast %cst_152 : f32 to vector<8x1xf32>
    %582 = arith.divf %580, %581 : vector<8x1xf32>
    %583 = math.absf %582 : vector<8x1xf32>
    %584 = arith.mulf %583, %583 : vector<8x1xf32>
    %cst_153 = arith.constant 1.000000e+00 : f32
    %585 = vector.broadcast %cst_153 : f32 to vector<8x1xf32>
    %586 = arith.addf %584, %585 : vector<8x1xf32>
    %587 = math.sqrt %586 : vector<8x1xf32>
    %588 = arith.addf %583, %587 : vector<8x1xf32>
    %589 = math.log %588 : vector<8x1xf32>
    %cst_154 = arith.constant 0.000000e+00 : f32
    %590 = vector.broadcast %cst_154 : f32 to vector<8x1xf32>
    %591 = arith.cmpf olt, %582, %590 : vector<8x1xf32>
    %cst_155 = arith.constant 0.000000e+00 : f32
    %592 = vector.broadcast %cst_155 : f32 to vector<8x1xf32>
    %593 = arith.subf %592, %589 : vector<8x1xf32>
    %594 = arith.select %591, %593, %589 : vector<8x1xi1>, vector<8x1xf32>
    %cst_156 = arith.constant 1.000000e+01 : f32
    %595 = vector.broadcast %cst_156 : f32 to vector<8x1xf32>
    %596 = arith.mulf %595, %594 : vector<8x1xf32>
    %c0_157 = arith.constant 0 : index
    %c0_158 = arith.constant 0 : index
    %597 = vector.load %arg25[%c0_157, %c0_158] : memref<8x1xf32, #tpu.memory_space<vmem>>, vector<8x1xf32>
    tpu.vector_store %arg25[%c0_157, %c0_158], %596 {strides = array<i32>} : memref<8x1xf32, #tpu.memory_space<vmem>>, vector<8x1xf32>,
    return
  }
}

</mosaic_0001>

<llo_original>
// kernel: discerner_forward.1
$region0: #{discerner_forward.1}
  #allocation0 [shape = 'u32[]', space=smem, size = 0x4, offset = 0x4, fixed_abs, tag = 'smem constant byte address 0x4 - core index']
  #allocation1 [shape = 'u32[72,128]{1,0:T(1,128)}', space=vmem, size = 0x9000, scoped, tag = 'internal scratch']
  #allocation2 [shape = 'f32[1,1]{1,0:T(1,128)S(1)}', space=vmem, size = 0x200, scoped, tag = 'scoped memory for discerner_forward.1']
  %s0 = inlined_call_operand.vmem [shape: f32[8,512], index: 0, kind: input, shape index: {}]
  %s1 = inlined_call_operand.vmem [shape: f32[8,512], index: 1, kind: input, shape index: {}]
  %s2 = inlined_call_operand.vmem [shape: f32[5,8,3], index: 2, kind: input, shape index: {}]
  %s3 = inlined_call_operand.vmem [shape: s32[8,1], index: 3, kind: input, shape index: {}]
  %s4 = inlined_call_operand.vmem [shape: f32[8,1], index: 4, kind: input, shape index: {}]
  %s5 = inlined_call_operand.hbm [shape: bf16[512,768], index: 5, kind: input, shape index: {}]
  %s6 = inlined_call_operand.hbm [shape: bf16[512,768], index: 6, kind: input, shape index: {}]
  %s7 = inlined_call_operand.vmem [shape: f32[1,768], index: 7, kind: input, shape index: {}]
  %s8 = inlined_call_operand.vmem [shape: f32[1,768], index: 8, kind: input, shape index: {}]
  %s9 = inlined_call_operand.hbm [shape: bf16[768,512], index: 9, kind: input, shape index: {}]
  %s10 = inlined_call_operand.vmem [shape: f32[1,512], index: 10, kind: input, shape index: {}]
  %s11 = inlined_call_operand.vmem [shape: f32[3,9], index: 11, kind: input, shape index: {}]
  %s12 = inlined_call_operand.vmem [shape: f32[3,9], index: 12, kind: input, shape index: {}]
  %s13 = inlined_call_operand.vmem [shape: f32[1,9], index: 13, kind: input, shape index: {}]
  %s14 = inlined_call_operand.vmem [shape: f32[1,9], index: 14, kind: input, shape index: {}]
  %s15 = inlined_call_operand.vmem [shape: f32[3,384], index: 15, kind: input, shape index: {}]
  %s16 = inlined_call_operand.vmem [shape: f32[1,384], index: 16, kind: input, shape index: {}]
  %s17 = inlined_call_operand.vmem [shape: f32[1,384], index: 17, kind: input, shape index: {}]
  %s18 = inlined_call_operand.hbm [shape: bf16[384,512], index: 18, kind: input, shape index: {}]
  %s19 = inlined_call_operand.vmem [shape: f32[1,512], index: 19, kind: input, shape index: {}]
  %s20 = inlined_call_operand.hbm [shape: bf16[512,512], index: 20, kind: input, shape index: {}]
  %s21 = inlined_call_operand.hbm [shape: bf16[512,512], index: 21, kind: input, shape index: {}]
  %s22 = inlined_call_operand.vmem [shape: f32[1,512], index: 22, kind: input, shape index: {}]
  %s23 = inlined_call_operand.vmem [shape: f32[1,512], index: 23, kind: input, shape index: {}]
  %s24 = inlined_call_operand.<no memory space> [shape: f32[1,1], index: 24, kind: input, shape index: {}]
  %s25 = inlined_call_operand.vmem [shape: f32[8,1], index: 25, kind: output, shape index: {}]
  %s26 = sld [smem:[#allocation0]]
  $region134: #{discerner_forward.1} parent=0
    _
  %s28 = ssub.s32 1, %s26
  %s29 = scalar_select 0, %s28, %s26
  %v30 = vstv %s24
  %31 = vst [vmem:[#allocation2] sm:$0x1] %v30
  $region1: #{discerner_forward.1} parent=0
    #allocation3 [shape = 'u8[786432]{0}', space=vmem, size = 0xc0000, scoped, tag = 'input window, operand 5, single buffered']
    #allocation4 [shape = 's32[1]{0}', space=sflag, size = 0x4, scoped, tag = 'scoped memory for discerner_forward.1']
    #allocation5 [shape = 'u8[786432]{0}', space=vmem, size = 0xc0000, scoped, tag = 'input window, operand 6, single buffered']
    #allocation6 [shape = 's32[1]{0}', space=sflag, size = 0x4, scoped, tag = 'scoped memory for discerner_forward.1']
    #allocation7 [shape = 'u8[786432]{0}', space=vmem, size = 0xc0000, scoped, tag = 'input window, operand 9, single buffered']
    #allocation8 [shape = 'u8[393216]{0}', space=vmem, size = 0x60000, scoped, tag = 'input window, operand 18, single buffered']
    #allocation9 [shape = 's32[1]{0}', space=sflag, size = 0x4, scoped, tag = 'scoped memory for discerner_forward.1']
    #allocation10 [shape = 'u8[524288]{0}', space=vmem, size = 0x80000, scoped, tag = 'input window, operand 20, single buffered']
    #allocation11 [shape = 'u8[524288]{0}', space=vmem, size = 0x80000, scoped, tag = 'input window, operand 21, single buffered']
    #allocation12 [shape = 's32[1]{0}', space=sflag, size = 0x4, scoped, tag = 'scoped memory for discerner_forward.1']
    %32 = vsyncpa [#allocation4], 0
    %33 = vsyncpa [#allocation6], 0
    %34 = vsyncpa [#allocation9], 0
    %35 = vsyncpa [#allocation12], 0
    // Predicated region
    $region2: #{discerner_forward.1} parent=1 // pred_check
      _
    $region3: #{discerner_forward.1} parent=1 // pred_check_branch
      %37 = sbr.rel (0) target = $region5
    $region4: #{discerner_forward.1} parent=1 // pred_region
      _
    $region5: #{discerner_forward.1} parent=1 // pred_fallthru
      _
    // Predicated region
    $region6: #{discerner_forward.1} parent=1 // pred_check
      _
    $region7: #{discerner_forward.1} parent=1 // pred_check_branch
      %39 = sbr.rel (0) target = $region9
    $region8: #{discerner_forward.1} parent=1 // pred_region
      _
    $region9: #{discerner_forward.1} parent=1 // pred_fallthru
      _
    // Predicated region
    $region10: #{discerner_forward.1} parent=1 // pred_check
      _
    $region11: #{discerner_forward.1} parent=1 // pred_check_branch
      %41 = sbr.rel (0) target = $region13
    $region12: #{discerner_forward.1} parent=1 // pred_region
      _
    $region13: #{discerner_forward.1} parent=1 // pred_fallthru
      _
    // Predicated region
    $region14: #{discerner_forward.1} parent=1 // pred_check
      _
    $region15: #{discerner_forward.1} parent=1 // pred_check_branch
      %43 = sbr.rel (0) target = $region17
    $region16: #{discerner_forward.1} parent=1 // pred_region
      _
    $region17: #{discerner_forward.1} parent=1 // pred_fallthru
      _
    // Predicated region
    $region18: #{discerner_forward.1} parent=1 // pred_check
      _
    $region19: #{discerner_forward.1} parent=1 // pred_check_branch
      %45 = sbr.rel (0) target = $region21
    $region20: #{discerner_forward.1} parent=1 // pred_region
      _
    $region21: #{discerner_forward.1} parent=1 // pred_fallthru
      _
    // Predicated region
    $region22: #{discerner_forward.1} parent=1 // pred_check
      _
    $region23: #{discerner_forward.1} parent=1 // pred_check_branch
      %47 = sbr.rel (0) target = $region25
    $region24: #{discerner_forward.1} parent=1 // pred_region
      %49 = vsyncadd [#allocation4], 0
      %s50 = sshll.u32 %s5, 4
      %s51 = int_to_ptr.hbm [resolvable:$true] %s50
      %s52 = sshll.u32 [#allocation3], 4
      %s53 = int_to_ptr.vmem [resolvable:$true] %s52
      %58 = dma.hbm_to_vmem [thread:$0]  %s51, 24576, %s53, [#allocation4], 384, 384, 24
    $region25: #{discerner_forward.1} parent=1 // pred_fallthru
      _
    // Predicated region
    $region26: #{discerner_forward.1} parent=1 // pred_check
      _
    $region27: #{discerner_forward.1} parent=1 // pred_check_branch
      %60 = sbr.rel (0) target = $region29
    $region28: #{discerner_forward.1} parent=1 // pred_region
      %62 = vsyncadd [#allocation6], 0
      %s63 = sshll.u32 %s6, 4
      %s64 = int_to_ptr.hbm [resolvable:$true] %s63
      %s65 = sshll.u32 [#allocation5], 4
      %s66 = int_to_ptr.vmem [resolvable:$true] %s65
      %71 = dma.hbm_to_vmem [thread:$0]  %s64, 24576, %s66, [#allocation6], 384, 384, 24
    $region29: #{discerner_forward.1} parent=1 // pred_fallthru
      _
    // Predicated region
    $region30: #{discerner_forward.1} parent=1 // pred_check
      _
    $region31: #{discerner_forward.1} parent=1 // pred_check_branch
      %73 = sbr.rel (0) target = $region33
    $region32: #{discerner_forward.1} parent=1 // pred_region
      _
    $region33: #{discerner_forward.1} parent=1 // pred_fallthru
      _
    // Predicated region
    $region34: #{discerner_forward.1} parent=1 // pred_check
      _
    $region35: #{discerner_forward.1} parent=1 // pred_check_branch
      %75 = sbr.rel (0) target = $region37
    $region36: #{discerner_forward.1} parent=1 // pred_region
      _
    $region37: #{discerner_forward.1} parent=1 // pred_fallthru
      _
    // Predicated region
    $region38: #{discerner_forward.1} parent=1 // pred_check
      _
    $region39: #{discerner_forward.1} parent=1 // pred_check_branch
      %77 = sbr.rel (0) target = $region41
    $region40: #{discerner_forward.1} parent=1 // pred_region
      %79 = vsyncadd [#allocation6], 0
      %s80 = sshll.u32 %s9, 4
      %s81 = int_to_ptr.hbm [resolvable:$true] %s80
      %s82 = sshll.u32 [#allocation7], 4
      %s83 = int_to_ptr.vmem [resolvable:$true] %s82
      %88 = dma.hbm_to_vmem [thread:$0]  %s81, 24576, %s83, [#allocation6], 256, 256, 16
    $region41: #{discerner_forward.1} parent=1 // pred_fallthru
      _
    // Predicated region
    $region42: #{discerner_forward.1} parent=1 // pred_check
      _
    $region43: #{discerner_forward.1} parent=1 // pred_check_branch
      %90 = sbr.rel (0) target = $region45
    $region44: #{discerner_forward.1} parent=1 // pred_region
      _
    $region45: #{discerner_forward.1} parent=1 // pred_fallthru
      _
    // Predicated region
    $region46: #{discerner_forward.1} parent=1 // pred_check
      _
    $region47: #{discerner_forward.1} parent=1 // pred_check_branch
      %92 = sbr.rel (0) target = $region49
    $region48: #{discerner_forward.1} parent=1 // pred_region
      _
    $region49: #{discerner_forward.1} parent=1 // pred_fallthru
      _
    // Predicated region
    $region50: #{discerner_forward.1} parent=1 // pred_check
      _
    $region51: #{discerner_forward.1} parent=1 // pred_check_branch
      %94 = sbr.rel (0) target = $region53
    $region52: #{discerner_forward.1} parent=1 // pred_region
      _
    $region53: #{discerner_forward.1} parent=1 // pred_fallthru
      _
    // Predicated region
    $region54: #{discerner_forward.1} parent=1 // pred_check
      _
    $region55: #{discerner_forward.1} parent=1 // pred_check_branch
      %96 = sbr.rel (0) target = $region57
    $region56: #{discerner_forward.1} parent=1 // pred_region
      _
    $region57: #{discerner_forward.1} parent=1 // pred_fallthru
      _
    // Predicated region
    $region58: #{discerner_forward.1} parent=1 // pred_check
      _
    $region59: #{discerner_forward.1} parent=1 // pred_check_branch
      %98 = sbr.rel (0) target = $region61
    $region60: #{discerner_forward.1} parent=1 // pred_region
      _
    $region61: #{discerner_forward.1} parent=1 // pred_fallthru
      _
    // Predicated region
    $region62: #{discerner_forward.1} parent=1 // pred_check
      _
    $region63: #{discerner_forward.1} parent=1 // pred_check_branch
      %100 = sbr.rel (0) target = $region65
    $region64: #{discerner_forward.1} parent=1 // pred_region
      _
    $region65: #{discerner_forward.1} parent=1 // pred_fallthru
      _
    // Predicated region
    $region66: #{discerner_forward.1} parent=1 // pred_check
      _
    $region67: #{discerner_forward.1} parent=1 // pred_check_branch
      %102 = sbr.rel (0) target = $region69
    $region68: #{discerner_forward.1} parent=1 // pred_region
      _
    $region69: #{discerner_forward.1} parent=1 // pred_fallthru
      _
    // Predicated region
    $region70: #{discerner_forward.1} parent=1 // pred_check
      _
    $region71: #{discerner_forward.1} parent=1 // pred_check_branch
      %104 = sbr.rel (0) target = $region73
    $region72: #{discerner_forward.1} parent=1 // pred_region
      _
    $region73: #{discerner_forward.1} parent=1 // pred_fallthru
      _
    // Predicated region
    $region74: #{discerner_forward.1} parent=1 // pred_check
      _
    $region75: #{discerner_forward.1} parent=1 // pred_check_branch
      %106 = sbr.rel (0) target = $region77
    $region76: #{discerner_forward.1} parent=1 // pred_region
      %108 = vsyncadd [#allocation9], 0
      %s109 = sshll.u32 %s18, 4
      %s110 = int_to_ptr.hbm [resolvable:$true] %s109
      %s111 = sshll.u32 [#allocation8], 4
      %s112 = int_to_ptr.vmem [resolvable:$true] %s111
      %117 = dma.hbm_to_vmem [thread:$0]  %s110, 12288, %s112, [#allocation9], 256, 256, 16
    $region77: #{discerner_forward.1} parent=1 // pred_fallthru
      _
    // Predicated region
    $region78: #{discerner_forward.1} parent=1 // pred_check
      _
    $region79: #{discerner_forward.1} parent=1 // pred_check_branch
      %119 = sbr.rel (0) target = $region81
    $region80: #{discerner_forward.1} parent=1 // pred_region
      _
    $region81: #{discerner_forward.1} parent=1 // pred_fallthru
      _
    // Predicated region
    $region82: #{discerner_forward.1} parent=1 // pred_check
      _
    $region83: #{discerner_forward.1} parent=1 // pred_check_branch
      %121 = sbr.rel (0) target = $region85
    $region84: #{discerner_forward.1} parent=1 // pred_region
      %123 = vsyncadd [#allocation9], 0
      %s124 = sshll.u32 %s20, 4
      %s125 = int_to_ptr.hbm [resolvable:$true] %s124
      %s126 = sshll.u32 [#allocation10], 4
      %s127 = int_to_ptr.vmem [resolvable:$true] %s126
      %132 = dma.hbm_to_vmem [thread:$0]  %s125, 16384, %s127, [#allocation9], 256, 256, 16
    $region85: #{discerner_forward.1} parent=1 // pred_fallthru
      _
    // Predicated region
    $region86: #{discerner_forward.1} parent=1 // pred_check
      _
    $region87: #{discerner_forward.1} parent=1 // pred_check_branch
      %134 = sbr.rel (0) target = $region89
    $region88: #{discerner_forward.1} parent=1 // pred_region
      %136 = vsyncadd [#allocation12], 0
      %s137 = sshll.u32 %s21, 4
      %s138 = int_to_ptr.hbm [resolvable:$true] %s137
      %s139 = sshll.u32 [#allocation11], 4
      %s140 = int_to_ptr.vmem [resolvable:$true] %s139
      %145 = dma.hbm_to_vmem [thread:$0]  %s138, 16384, %s140, [#allocation12], 256, 256, 16
    $region89: #{discerner_forward.1} parent=1 // pred_fallthru
      _
    // Predicated region
    $region90: #{discerner_forward.1} parent=1 // pred_check
      _
    $region91: #{discerner_forward.1} parent=1 // pred_check_branch
      %147 = sbr.rel (0) target = $region93
    $region92: #{discerner_forward.1} parent=1 // pred_region
      _
    $region93: #{discerner_forward.1} parent=1 // pred_fallthru
      _
    // Predicated region
    $region94: #{discerner_forward.1} parent=1 // pred_check
      _
    $region95: #{discerner_forward.1} parent=1 // pred_check_branch
      %149 = sbr.rel (0) target = $region97
    $region96: #{discerner_forward.1} parent=1 // pred_region
      _
    $region97: #{discerner_forward.1} parent=1 // pred_fallthru
      _
    // Predicated region
    $region98: #{discerner_forward.1} parent=1 // pred_check
      _
    $region99: #{discerner_forward.1} parent=1 // pred_check_branch
      %151 = sbr.rel (0) target = $region101
    $region100: #{discerner_forward.1} parent=1 // pred_region
      _
    $region101: #{discerner_forward.1} parent=1 // pred_fallthru
      _
    // Predicated region
    $region102: #{discerner_forward.1} parent=1 // pred_check
      _
    $region103: #{discerner_forward.1} parent=1 // pred_check_branch
      %153 = sbr.rel (0) target = $region105
    $region104: #{discerner_forward.1} parent=1 // pred_region
      %155 = dma.done [#allocation4], 24576
    $region105: #{discerner_forward.1} parent=1 // pred_fallthru
      _
    // Predicated region
    $region106: #{discerner_forward.1} parent=1 // pred_check
      _
    $region107: #{discerner_forward.1} parent=1 // pred_check_branch
      %157 = sbr.rel (0) target = $region109
    $region108: #{discerner_forward.1} parent=1 // pred_region
      %159 = dma.done [#allocation6], 24576
    $region109: #{discerner_forward.1} parent=1 // pred_fallthru
      _
    // Predicated region
    $region110: #{discerner_forward.1} parent=1 // pred_check
      _
    $region111: #{discerner_forward.1} parent=1 // pred_check_branch
      %161 = sbr.rel (0) target = $region113
    $region112: #{discerner_forward.1} parent=1 // pred_region
      %163 = dma.done [#allocation6], 24576
    $region113: #{discerner_forward.1} parent=1 // pred_fallthru
      _
    // Predicated region
    $region114: #{discerner_forward.1} parent=1 // pred_check
      _
    $region115: #{discerner_forward.1} parent=1 // pred_check_branch
      %165 = sbr.rel (0) target = $region117
    $region116: #{discerner_forward.1} parent=1 // pred_region
      %167 = dma.done [#allocation9], 12288
    $region117: #{discerner_forward.1} parent=1 // pred_fallthru
      _
    // Predicated region
    $region118: #{discerner_forward.1} parent=1 // pred_check
      _
    $region119: #{discerner_forward.1} parent=1 // pred_check_branch
      %169 = sbr.rel (0) target = $region121
    $region120: #{discerner_forward.1} parent=1 // pred_region
      %171 = dma.done [#allocation9], 16384
    $region121: #{discerner_forward.1} parent=1 // pred_fallthru
      _
    // Predicated region
    $region122: #{discerner_forward.1} parent=1 // pred_check
      _
    $region123: #{discerner_forward.1} parent=1 // pred_check_branch
      %173 = sbr.rel (0) target = $region125
    $region124: #{discerner_forward.1} parent=1 // pred_region
      %175 = dma.done [#allocation12], 16384
    $region125: #{discerner_forward.1} parent=1 // pred_fallthru
      _
    %v176 = vld [vmem:[%s0] sm:$0xff]
    %v177 = vld [vmem:[%s0 + $0x8] sm:$0xff]
    %v178 = vld [vmem:[%s0 + $0x10] sm:$0xff]
    %v179 = vld [vmem:[%s0 + $0x18] sm:$0xff]
    %v180 = vld [vmem:[%s1] sm:$0xff]
    %v181 = vld [vmem:[%s1 + $0x8] sm:$0xff]
    %v182 = vld [vmem:[%s1 + $0x10] sm:$0xff]
    %v183 = vld [vmem:[%s1 + $0x18] sm:$0xff]
    %v184 = vmul.f32 %v176, %v180
    %v185 = vmul.f32 %v177, %v181
    %v186 = vmul.f32 %v178, %v182
    %v187 = vmul.f32 %v179, %v183
    %v188 = vadd.f32 %v184, %v185
    %v189 = vadd.f32 %v188, %v186
    %v190 = vadd.f32 %v189, %v187
    %191 = vadd.xlane.f32.xlu0 %v190
    %v192 = vpop.xlane.xlu0 %191
    %v193 = vmul.f32 %v176, %v176
    %v194 = vmul.f32 %v177, %v177
    %v195 = vmul.f32 %v178, %v178
    %v196 = vmul.f32 %v179, %v179
    %v197 = vadd.f32 %v193, %v194
    %v198 = vadd.f32 %v197, %v195
    %v199 = vadd.f32 %v198, %v196
    %200 = vadd.xlane.f32.xlu0 %v199
    %v201 = vpop.xlane.xlu0 %200
    %v202 = vrsqrt.pop %v201
    %v203 = vmul.f32 %v202, %v201
    %v204 = vmul.f32 %v203, %v202
    %v205 = vmul.f32 0.5, %v204
    %v206 = vsub.f32 1.5, %v205
    %v207 = vmul.f32 %v202, %v206
    %v208 = vmul.f32 %v201, %v207
    %vm209 = vcmp.eq.f32.partialorder %v201, inf
    %v210 = vsel %vm209, %v201, %v208
    %vm211 = vcmp.eq.f32.partialorder %v201, 0.0
    %v212 = vand.u32 %v201, 2147483648
    %v213 = vsel %vm211, %v212, %v210
    %v214 = vmax.f32 %v213, 1e-08
    %v215 = vmul.f32 %v180, %v180
    %v216 = vmul.f32 %v181, %v181
    %v217 = vmul.f32 %v182, %v182
    %v218 = vmul.f32 %v183, %v183
    %v219 = vadd.f32 %v215, %v216
    %v220 = vadd.f32 %v219, %v217
    %v221 = vadd.f32 %v220, %v218
    %222 = vadd.xlane.f32.xlu0 %v221
    %v223 = vpop.xlane.xlu0 %222
    %v224 = vrsqrt.pop %v223
    %v225 = vmul.f32 %v224, %v223
    %v226 = vmul.f32 %v225, %v224
    %v227 = vmul.f32 0.5, %v226
    %v228 = vsub.f32 1.5, %v227
    %v229 = vmul.f32 %v224, %v228
    %v230 = vmul.f32 %v223, %v229
    %vm231 = vcmp.eq.f32.partialorder %v223, inf
    %v232 = vsel %vm231, %v223, %v230
    %vm233 = vcmp.eq.f32.partialorder %v223, 0.0
    %v234 = vand.u32 %v223, 2147483648
    %v235 = vsel %vm233, %v234, %v232
    %v236 = vmax.f32 %v235, 1e-08
    %v237 = vmul.f32 %v214, %v236
    %v238 = vrcp.pop %v237
    %v239 = vmul.f32 %v237, %v238
    %v240 = vsub.f32 1.0, %v239
    %v241 = vmul.f32 %v238, %v240
    %v242 = vadd.f32 %v238, %v241
    %vm243 = vweird.f32 %v237
    %vm244 = vweird.f32 %v238
    %vm245 = vmor %vm243, %vm244
    %v246 = vsel %vm245, %v238, %v242
    %v247 = vand.u32 2147483647, %v237
    %vm248 = vcmp.eq.f32.partialorder %v247, 8.507059e+37
    %v249 = vand.u32 %v237, 2147483648
    %v250 = vor.u32 1.1754944e-38, %v249
    %v251 = vsel %vm248, %v250, %v246
    %v252 = vmul.f32 %v192, %v251
    %v253 = vpack.c.bf16 %v176, %v176
    %v254 = vpack.c.bf16 %v177, %v177
    %v255 = vpack.c.bf16 %v178, %v178
    %v256 = vpack.c.bf16 %v179, %v179
    %v257 = vld [vmem:[#allocation3] sm:$0xff]
    %v258 = vld [vmem:[#allocation3 + $0x8] sm:$0xff]
    %v259 = vld [vmem:[#allocation3 + $0x10] sm:$0xff]
    %v260 = vld [vmem:[#allocation3 + $0x18] sm:$0xff]
    %v261 = vld [vmem:[#allocation3 + $0x20] sm:$0xff]
    %v262 = vld [vmem:[#allocation3 + $0x28] sm:$0xff]
    %v263 = vld [vmem:[#allocation3 + $0x30] sm:$0xff]
    %v264 = vld [vmem:[#allocation3 + $0x38] sm:$0xff]
    %v265 = vld [vmem:[#allocation3 + $0x40] sm:$0xff]
    %v266 = vld [vmem:[#allocation3 + $0x48] sm:$0xff]
    %v267 = vld [vmem:[#allocation3 + $0x50] sm:$0xff]
    %v268 = vld [vmem:[#allocation3 + $0x58] sm:$0xff]
    %v269 = vld [vmem:[#allocation3 + $0x60] sm:$0xff]
    %v270 = vld [vmem:[#allocation3 + $0x68] sm:$0xff]
    %v271 = vld [vmem:[#allocation3 + $0x70] sm:$0xff]
    %v272 = vld [vmem:[#allocation3 + $0x78] sm:$0xff]
    %v273 = vld [vmem:[#allocation3 + $0x80] sm:$0xff]
    %v274 = vld [vmem:[#allocation3 + $0x88] sm:$0xff]
    %v275 = vld [vmem:[#allocation3 + $0x90] sm:$0xff]
    %v276 = vld [vmem:[#allocation3 + $0x98] sm:$0xff]
    %v277 = vld [vmem:[#allocation3 + $0xa0] sm:$0xff]
    %v278 = vld [vmem:[#allocation3 + $0xa8] sm:$0xff]
    %v279 = vld [vmem:[#allocation3 + $0xb0] sm:$0xff]
    %v280 = vld [vmem:[#allocation3 + $0xb8] sm:$0xff]
    %v281 = vld [vmem:[#allocation3 + $0xc0] sm:$0xff]
    %v282 = vld [vmem:[#allocation3 + $0xc8] sm:$0xff]
    %v283 = vld [vmem:[#allocation3 + $0xd0] sm:$0xff]
    %v284 = vld [vmem:[#allocation3 + $0xd8] sm:$0xff]
    %v285 = vld [vmem:[#allocation3 + $0xe0] sm:$0xff]
    %v286 = vld [vmem:[#allocation3 + $0xe8] sm:$0xff]
    %v287 = vld [vmem:[#allocation3 + $0xf0] sm:$0xff]
    %v288 = vld [vmem:[#allocation3 + $0xf8] sm:$0xff]
    %v289 = vld [vmem:[#allocation3 + $0x100] sm:$0xff]
    %v290 = vld [vmem:[#allocation3 + $0x108] sm:$0xff]
    %v291 = vld [vmem:[#allocation3 + $0x110] sm:$0xff]
    %v292 = vld [vmem:[#allocation3 + $0x118] sm:$0xff]
    %v293 = vld [vmem:[#allocation3 + $0x120] sm:$0xff]
    %v294 = vld [vmem:[#allocation3 + $0x128] sm:$0xff]
    %v295 = vld [vmem:[#allocation3 + $0x130] sm:$0xff]
    %v296 = vld [vmem:[#allocation3 + $0x138] sm:$0xff]
    %v297 = vld [vmem:[#allocation3 + $0x140] sm:$0xff]
    %v298 = vld [vmem:[#allocation3 + $0x148] sm:$0xff]
    %v299 = vld [vmem:[#allocation3 + $0x150] sm:$0xff]
    %v300 = vld [vmem:[#allocation3 + $0x158] sm:$0xff]
    %v301 = vld [vmem:[#allocation3 + $0x160] sm:$0xff]
    %v302 = vld [vmem:[#allocation3 + $0x168] sm:$0xff]
    %v303 = vld [vmem:[#allocation3 + $0x170] sm:$0xff]
    %v304 = vld [vmem:[#allocation3 + $0x178] sm:$0xff]
    %v305 = vld [vmem:[#allocation3 + $0x180] sm:$0xff]
    %v306 = vld [vmem:[#allocation3 + $0x188] sm:$0xff]
    %v307 = vld [vmem:[#allocation3 + $0x190] sm:$0xff]
    %v308 = vld [vmem:[#allocation3 + $0x198] sm:$0xff]
    %v309 = vld [vmem:[#allocation3 + $0x1a0] sm:$0xff]
    %v310 = vld [vmem:[#allocation3 + $0x1a8] sm:$0xff]
    %v311 = vld [vmem:[#allocation3 + $0x1b0] sm:$0xff]
    %v312 = vld [vmem:[#allocation3 + $0x1b8] sm:$0xff]
    %v313 = vld [vmem:[#allocation3 + $0x1c0] sm:$0xff]
    %v314 = vld [vmem:[#allocation3 + $0x1c8] sm:$0xff]
    %v315 = vld [vmem:[#allocation3 + $0x1d0] sm:$0xff]
    %v316 = vld [vmem:[#allocation3 + $0x1d8] sm:$0xff]
    %v317 = vld [vmem:[#allocation3 + $0x1e0] sm:$0xff]
    %v318 = vld [vmem:[#allocation3 + $0x1e8] sm:$0xff]
    %v319 = vld [vmem:[#allocation3 + $0x1f0] sm:$0xff]
    %v320 = vld [vmem:[#allocation3 + $0x1f8] sm:$0xff]
    %v321 = vld [vmem:[#allocation3 + $0x200] sm:$0xff]
    %v322 = vld [vmem:[#allocation3 + $0x208] sm:$0xff]
    %v323 = vld [vmem:[#allocation3 + $0x210] sm:$0xff]
    %v324 = vld [vmem:[#allocation3 + $0x218] sm:$0xff]
    %v325 = vld [vmem:[#allocation3 + $0x220] sm:$0xff]
    %v326 = vld [vmem:[#allocation3 + $0x228] sm:$0xff]
    %v327 = vld [vmem:[#allocation3 + $0x230] sm:$0xff]
    %v328 = vld [vmem:[#allocation3 + $0x238] sm:$0xff]
    %v329 = vld [vmem:[#allocation3 + $0x240] sm:$0xff]
    %v330 = vld [vmem:[#allocation3 + $0x248] sm:$0xff]
    %v331 = vld [vmem:[#allocation3 + $0x250] sm:$0xff]
    %v332 = vld [vmem:[#allocation3 + $0x258] sm:$0xff]
    %v333 = vld [vmem:[#allocation3 + $0x260] sm:$0xff]
    %v334 = vld [vmem:[#allocation3 + $0x268] sm:$0xff]
    %v335 = vld [vmem:[#allocation3 + $0x270] sm:$0xff]
    %v336 = vld [vmem:[#allocation3 + $0x278] sm:$0xff]
    %v337 = vld [vmem:[#allocation3 + $0x280] sm:$0xff]
    %v338 = vld [vmem:[#allocation3 + $0x288] sm:$0xff]
    %v339 = vld [vmem:[#allocation3 + $0x290] sm:$0xff]
    %v340 = vld [vmem:[#allocation3 + $0x298] sm:$0xff]
    %v341 = vld [vmem:[#allocation3 + $0x2a0] sm:$0xff]
    %v342 = vld [vmem:[#allocation3 + $0x2a8] sm:$0xff]
    %v343 = vld [vmem:[#allocation3 + $0x2b0] sm:$0xff]
    %v344 = vld [vmem:[#allocation3 + $0x2b8] sm:$0xff]
    %v345 = vld [vmem:[#allocation3 + $0x2c0] sm:$0xff]
    %v346 = vld [vmem:[#allocation3 + $0x2c8] sm:$0xff]
    %v347 = vld [vmem:[#allocation3 + $0x2d0] sm:$0xff]
    %v348 = vld [vmem:[#allocation3 + $0x2d8] sm:$0xff]
    %v349 = vld [vmem:[#allocation3 + $0x2e0] sm:$0xff]
    %v350 = vld [vmem:[#allocation3 + $0x2e8] sm:$0xff]
    %v351 = vld [vmem:[#allocation3 + $0x2f0] sm:$0xff]
    %v352 = vld [vmem:[#allocation3 + $0x2f8] sm:$0xff]
    %v353 = vld [vmem:[#allocation3 + $0x300] sm:$0xff]
    %v354 = vld [vmem:[#allocation3 + $0x308] sm:$0xff]
    %v355 = vld [vmem:[#allocation3 + $0x310] sm:$0xff]
    %v356 = vld [vmem:[#allocation3 + $0x318] sm:$0xff]
    %v357 = vld [vmem:[#allocation3 + $0x320] sm:$0xff]
    %v358 = vld [vmem:[#allocation3 + $0x328] sm:$0xff]
    %v359 = vld [vmem:[#allocation3 + $0x330] sm:$0xff]
    %v360 = vld [vmem:[#allocation3 + $0x338] sm:$0xff]
    %v361 = vld [vmem:[#allocation3 + $0x340] sm:$0xff]
    %v362 = vld [vmem:[#allocation3 + $0x348] sm:$0xff]
    %v363 = vld [vmem:[#allocation3 + $0x350] sm:$0xff]
    %v364 = vld [vmem:[#allocation3 + $0x358] sm:$0xff]
    %v365 = vld [vmem:[#allocation3 + $0x360] sm:$0xff]
    %v366 = vld [vmem:[#allocation3 + $0x368] sm:$0xff]
    %v367 = vld [vmem:[#allocation3 + $0x370] sm:$0xff]
    %v368 = vld [vmem:[#allocation3 + $0x378] sm:$0xff]
    %v369 = vld [vmem:[#allocation3 + $0x380] sm:$0xff]
    %v370 = vld [vmem:[#allocation3 + $0x388] sm:$0xff]
    %v371 = vld [vmem:[#allocation3 + $0x390] sm:$0xff]
    %v372 = vld [vmem:[#allocation3 + $0x398] sm:$0xff]
    %v373 = vld [vmem:[#allocation3 + $0x3a0] sm:$0xff]
    %v374 = vld [vmem:[#allocation3 + $0x3a8] sm:$0xff]
    %v375 = vld [vmem:[#allocation3 + $0x3b0] sm:$0xff]
    %v376 = vld [vmem:[#allocation3 + $0x3b8] sm:$0xff]
    %v377 = vld [vmem:[#allocation3 + $0x3c0] sm:$0xff]
    %v378 = vld [vmem:[#allocation3 + $0x3c8] sm:$0xff]
    %v379 = vld [vmem:[#allocation3 + $0x3d0] sm:$0xff]
    %v380 = vld [vmem:[#allocation3 + $0x3d8] sm:$0xff]
    %v381 = vld [vmem:[#allocation3 + $0x3e0] sm:$0xff]
    %v382 = vld [vmem:[#allocation3 + $0x3e8] sm:$0xff]
    %v383 = vld [vmem:[#allocation3 + $0x3f0] sm:$0xff]
    %v384 = vld [vmem:[#allocation3 + $0x3f8] sm:$0xff]
    %v385 = vld [vmem:[#allocation3 + $0x400] sm:$0xff]
    %v386 = vld [vmem:[#allocation3 + $0x408] sm:$0xff]
    %v387 = vld [vmem:[#allocation3 + $0x410] sm:$0xff]
    %v388 = vld [vmem:[#allocation3 + $0x418] sm:$0xff]
    %v389 = vld [vmem:[#allocation3 + $0x420] sm:$0xff]
    %v390 = vld [vmem:[#allocation3 + $0x428] sm:$0xff]
    %v391 = vld [vmem:[#allocation3 + $0x430] sm:$0xff]
    %v392 = vld [vmem:[#allocation3 + $0x438] sm:$0xff]
    %v393 = vld [vmem:[#allocation3 + $0x440] sm:$0xff]
    %v394 = vld [vmem:[#allocation3 + $0x448] sm:$0xff]
    %v395 = vld [vmem:[#allocation3 + $0x450] sm:$0xff]
    %v396 = vld [vmem:[#allocation3 + $0x458] sm:$0xff]
    %v397 = vld [vmem:[#allocation3 + $0x460] sm:$0xff]
    %v398 = vld [vmem:[#allocation3 + $0x468] sm:$0xff]
    %v399 = vld [vmem:[#allocation3 + $0x470] sm:$0xff]
    %v400 = vld [vmem:[#allocation3 + $0x478] sm:$0xff]
    %v401 = vld [vmem:[#allocation3 + $0x480] sm:$0xff]
    %v402 = vld [vmem:[#allocation3 + $0x488] sm:$0xff]
    %v403 = vld [vmem:[#allocation3 + $0x490] sm:$0xff]
    %v404 = vld [vmem:[#allocation3 + $0x498] sm:$0xff]
    %v405 = vld [vmem:[#allocation3 + $0x4a0] sm:$0xff]
    %v406 = vld [vmem:[#allocation3 + $0x4a8] sm:$0xff]
    %v407 = vld [vmem:[#allocation3 + $0x4b0] sm:$0xff]
    %v408 = vld [vmem:[#allocation3 + $0x4b8] sm:$0xff]
    %v409 = vld [vmem:[#allocation3 + $0x4c0] sm:$0xff]
    %v410 = vld [vmem:[#allocation3 + $0x4c8] sm:$0xff]
    %v411 = vld [vmem:[#allocation3 + $0x4d0] sm:$0xff]
    %v412 = vld [vmem:[#allocation3 + $0x4d8] sm:$0xff]
    %v413 = vld [vmem:[#allocation3 + $0x4e0] sm:$0xff]
    %v414 = vld [vmem:[#allocation3 + $0x4e8] sm:$0xff]
    %v415 = vld [vmem:[#allocation3 + $0x4f0] sm:$0xff]
    %v416 = vld [vmem:[#allocation3 + $0x4f8] sm:$0xff]
    %v417 = vld [vmem:[#allocation3 + $0x500] sm:$0xff]
    %v418 = vld [vmem:[#allocation3 + $0x508] sm:$0xff]
    %v419 = vld [vmem:[#allocation3 + $0x510] sm:$0xff]
    %v420 = vld [vmem:[#allocation3 + $0x518] sm:$0xff]
    %v421 = vld [vmem:[#allocation3 + $0x520] sm:$0xff]
    %v422 = vld [vmem:[#allocation3 + $0x528] sm:$0xff]
    %v423 = vld [vmem:[#allocation3 + $0x530] sm:$0xff]
    %v424 = vld [vmem:[#allocation3 + $0x538] sm:$0xff]
    %v425 = vld [vmem:[#allocation3 + $0x540] sm:$0xff]
    %v426 = vld [vmem:[#allocation3 + $0x548] sm:$0xff]
    %v427 = vld [vmem:[#allocation3 + $0x550] sm:$0xff]
    %v428 = vld [vmem:[#allocation3 + $0x558] sm:$0xff]
    %v429 = vld [vmem:[#allocation3 + $0x560] sm:$0xff]
    %v430 = vld [vmem:[#allocation3 + $0x568] sm:$0xff]
    %v431 = vld [vmem:[#allocation3 + $0x570] sm:$0xff]
    %v432 = vld [vmem:[#allocation3 + $0x578] sm:$0xff]
    %v433 = vld [vmem:[#allocation3 + $0x580] sm:$0xff]
    %v434 = vld [vmem:[#allocation3 + $0x588] sm:$0xff]
    %v435 = vld [vmem:[#allocation3 + $0x590] sm:$0xff]
    %v436 = vld [vmem:[#allocation3 + $0x598] sm:$0xff]
    %v437 = vld [vmem:[#allocation3 + $0x5a0] sm:$0xff]
    %v438 = vld [vmem:[#allocation3 + $0x5a8] sm:$0xff]
    %v439 = vld [vmem:[#allocation3 + $0x5b0] sm:$0xff]
    %v440 = vld [vmem:[#allocation3 + $0x5b8] sm:$0xff]
    %v441 = vld [vmem:[#allocation3 + $0x5c0] sm:$0xff]
    %v442 = vld [vmem:[#allocation3 + $0x5c8] sm:$0xff]
    %v443 = vld [vmem:[#allocation3 + $0x5d0] sm:$0xff]
    %v444 = vld [vmem:[#allocation3 + $0x5d8] sm:$0xff]
    %v445 = vld [vmem:[#allocation3 + $0x5e0] sm:$0xff]
    %v446 = vld [vmem:[#allocation3 + $0x5e8] sm:$0xff]
    %v447 = vld [vmem:[#allocation3 + $0x5f0] sm:$0xff]
    %v448 = vld [vmem:[#allocation3 + $0x5f8] sm:$0xff]
    %v449 = vpack.c.bf16 %v180, %v180
    %v450 = vpack.c.bf16 %v181, %v181
    %v451 = vpack.c.bf16 %v182, %v182
    %v452 = vpack.c.bf16 %v183, %v183
    %v453 = vld [vmem:[#allocation5] sm:$0xff]
    %v454 = vld [vmem:[#allocation5 + $0x8] sm:$0xff]
    %v455 = vld [vmem:[#allocation5 + $0x10] sm:$0xff]
    %v456 = vld [vmem:[#allocation5 + $0x18] sm:$0xff]
    %v457 = vld [vmem:[#allocation5 + $0x20] sm:$0xff]
    %v458 = vld [vmem:[#allocation5 + $0x28] sm:$0xff]
    %v459 = vld [vmem:[#allocation5 + $0x30] sm:$0xff]
    %v460 = vld [vmem:[#allocation5 + $0x38] sm:$0xff]
    %v461 = vld [vmem:[#allocation5 + $0x40] sm:$0xff]
    %v462 = vld [vmem:[#allocation5 + $0x48] sm:$0xff]
    %v463 = vld [vmem:[#allocation5 + $0x50] sm:$0xff]
    %v464 = vld [vmem:[#allocation5 + $0x58] sm:$0xff]
    %v465 = vld [vmem:[#allocation5 + $0x60] sm:$0xff]
    %v466 = vld [vmem:[#allocation5 + $0x68] sm:$0xff]
    %v467 = vld [vmem:[#allocation5 + $0x70] sm:$0xff]
    %v468 = vld [vmem:[#allocation5 + $0x78] sm:$0xff]
    %v469 = vld [vmem:[#allocation5 + $0x80] sm:$0xff]
    %v470 = vld [vmem:[#allocation5 + $0x88] sm:$0xff]
    %v471 = vld [vmem:[#allocation5 + $0x90] sm:$0xff]
    %v472 = vld [vmem:[#allocation5 + $0x98] sm:$0xff]
    %v473 = vld [vmem:[#allocation5 + $0xa0] sm:$0xff]
    %v474 = vld [vmem:[#allocation5 + $0xa8] sm:$0xff]
    %v475 = vld [vmem:[#allocation5 + $0xb0] sm:$0xff]
    %v476 = vld [vmem:[#allocation5 + $0xb8] sm:$0xff]
    %v477 = vld [vmem:[#allocation5 + $0xc0] sm:$0xff]
    %v478 = vld [vmem:[#allocation5 + $0xc8] sm:$0xff]
    %v479 = vld [vmem:[#allocation5 + $0xd0] sm:$0xff]
    %v480 = vld [vmem:[#allocation5 + $0xd8] sm:$0xff]
    %v481 = vld [vmem:[#allocation5 + $0xe0] sm:$0xff]
    %v482 = vld [vmem:[#allocation5 + $0xe8] sm:$0xff]
    %v483 = vld [vmem:[#allocation5 + $0xf0] sm:$0xff]
    %v484 = vld [vmem:[#allocation5 + $0xf8] sm:$0xff]
    %v485 = vld [vmem:[#allocation5 + $0x100] sm:$0xff]
    %v486 = vld [vmem:[#allocation5 + $0x108] sm:$0xff]
    %v487 = vld [vmem:[#allocation5 + $0x110] sm:$0xff]
    %v488 = vld [vmem:[#allocation5 + $0x118] sm:$0xff]
    %v489 = vld [vmem:[#allocation5 + $0x120] sm:$0xff]
    %v490 = vld [vmem:[#allocation5 + $0x128] sm:$0xff]
    %v491 = vld [vmem:[#allocation5 + $0x130] sm:$0xff]
    %v492 = vld [vmem:[#allocation5 + $0x138] sm:$0xff]
    %v493 = vld [vmem:[#allocation5 + $0x140] sm:$0xff]
    %v494 = vld [vmem:[#allocation5 + $0x148] sm:$0xff]
    %v495 = vld [vmem:[#allocation5 + $0x150] sm:$0xff]
    %v496 = vld [vmem:[#allocation5 + $0x158] sm:$0xff]
    %v497 = vld [vmem:[#allocation5 + $0x160] sm:$0xff]
    %v498 = vld [vmem:[#allocation5 + $0x168] sm:$0xff]
    %v499 = vld [vmem:[#allocation5 + $0x170] sm:$0xff]
    %v500 = vld [vmem:[#allocation5 + $0x178] sm:$0xff]
    %v501 = vld [vmem:[#allocation5 + $0x180] sm:$0xff]
    %v502 = vld [vmem:[#allocation5 + $0x188] sm:$0xff]
    %v503 = vld [vmem:[#allocation5 + $0x190] sm:$0xff]
    %v504 = vld [vmem:[#allocation5 + $0x198] sm:$0xff]
    %v505 = vld [vmem:[#allocation5 + $0x1a0] sm:$0xff]
    %v506 = vld [vmem:[#allocation5 + $0x1a8] sm:$0xff]
    %v507 = vld [vmem:[#allocation5 + $0x1b0] sm:$0xff]
    %v508 = vld [vmem:[#allocation5 + $0x1b8] sm:$0xff]
    %v509 = vld [vmem:[#allocation5 + $0x1c0] sm:$0xff]
    %v510 = vld [vmem:[#allocation5 + $0x1c8] sm:$0xff]
    %v511 = vld [vmem:[#allocation5 + $0x1d0] sm:$0xff]
    %v512 = vld [vmem:[#allocation5 + $0x1d8] sm:$0xff]
    %v513 = vld [vmem:[#allocation5 + $0x1e0] sm:$0xff]
    %v514 = vld [vmem:[#allocation5 + $0x1e8] sm:$0xff]
    %v515 = vld [vmem:[#allocation5 + $0x1f0] sm:$0xff]
    %v516 = vld [vmem:[#allocation5 + $0x1f8] sm:$0xff]
    %v517 = vld [vmem:[#allocation5 + $0x200] sm:$0xff]
    %v518 = vld [vmem:[#allocation5 + $0x208] sm:$0xff]
    %v519 = vld [vmem:[#allocation5 + $0x210] sm:$0xff]
    %v520 = vld [vmem:[#allocation5 + $0x218] sm:$0xff]
    %v521 = vld [vmem:[#allocation5 + $0x220] sm:$0xff]
    %v522 = vld [vmem:[#allocation5 + $0x228] sm:$0xff]
    %v523 = vld [vmem:[#allocation5 + $0x230] sm:$0xff]
    %v524 = vld [vmem:[#allocation5 + $0x238] sm:$0xff]
    %v525 = vld [vmem:[#allocation5 + $0x240] sm:$0xff]
    %v526 = vld [vmem:[#allocation5 + $0x248] sm:$0xff]
    %v527 = vld [vmem:[#allocation5 + $0x250] sm:$0xff]
    %v528 = vld [vmem:[#allocation5 + $0x258] sm:$0xff]
    %v529 = vld [vmem:[#allocation5 + $0x260] sm:$0xff]
    %v530 = vld [vmem:[#allocation5 + $0x268] sm:$0xff]
    %v531 = vld [vmem:[#allocation5 + $0x270] sm:$0xff]
    %v532 = vld [vmem:[#allocation5 + $0x278] sm:$0xff]
    %v533 = vld [vmem:[#allocation5 + $0x280] sm:$0xff]
    %v534 = vld [vmem:[#allocation5 + $0x288] sm:$0xff]
    %v535 = vld [vmem:[#allocation5 + $0x290] sm:$0xff]
    %v536 = vld [vmem:[#allocation5 + $0x298] sm:$0xff]
    %v537 = vld [vmem:[#allocation5 + $0x2a0] sm:$0xff]
    %v538 = vld [vmem:[#allocation5 + $0x2a8] sm:$0xff]
    %v539 = vld [vmem:[#allocation5 + $0x2b0] sm:$0xff]
    %v540 = vld [vmem:[#allocation5 + $0x2b8] sm:$0xff]
    %v541 = vld [vmem:[#allocation5 + $0x2c0] sm:$0xff]
    %v542 = vld [vmem:[#allocation5 + $0x2c8] sm:$0xff]
    %v543 = vld [vmem:[#allocation5 + $0x2d0] sm:$0xff]
    %v544 = vld [vmem:[#allocation5 + $0x2d8] sm:$0xff]
    %v545 = vld [vmem:[#allocation5 + $0x2e0] sm:$0xff]
    %v546 = vld [vmem:[#allocation5 + $0x2e8] sm:$0xff]
    %v547 = vld [vmem:[#allocation5 + $0x2f0] sm:$0xff]
    %v548 = vld [vmem:[#allocation5 + $0x2f8] sm:$0xff]
    %v549 = vld [vmem:[#allocation5 + $0x300] sm:$0xff]
    %v550 = vld [vmem:[#allocation5 + $0x308] sm:$0xff]
    %v551 = vld [vmem:[#allocation5 + $0x310] sm:$0xff]
    %v552 = vld [vmem:[#allocation5 + $0x318] sm:$0xff]
    %v553 = vld [vmem:[#allocation5 + $0x320] sm:$0xff]
    %v554 = vld [vmem:[#allocation5 + $0x328] sm:$0xff]
    %v555 = vld [vmem:[#allocation5 + $0x330] sm:$0xff]
    %v556 = vld [vmem:[#allocation5 + $0x338] sm:$0xff]
    %v557 = vld [vmem:[#allocation5 + $0x340] sm:$0xff]
    %v558 = vld [vmem:[#allocation5 + $0x348] sm:$0xff]
    %v559 = vld [vmem:[#allocation5 + $0x350] sm:$0xff]
    %v560 = vld [vmem:[#allocation5 + $0x358] sm:$0xff]
    %v561 = vld [vmem:[#allocation5 + $0x360] sm:$0xff]
    %v562 = vld [vmem:[#allocation5 + $0x368] sm:$0xff]
    %v563 = vld [vmem:[#allocation5 + $0x370] sm:$0xff]
    %v564 = vld [vmem:[#allocation5 + $0x378] sm:$0xff]
    %v565 = vld [vmem:[#allocation5 + $0x380] sm:$0xff]
    %v566 = vld [vmem:[#allocation5 + $0x388] sm:$0xff]
    %v567 = vld [vmem:[#allocation5 + $0x390] sm:$0xff]
    %v568 = vld [vmem:[#allocation5 + $0x398] sm:$0xff]
    %v569 = vld [vmem:[#allocation5 + $0x3a0] sm:$0xff]
    %v570 = vld [vmem:[#allocation5 + $0x3a8] sm:$0xff]
    %v571 = vld [vmem:[#allocation5 + $0x3b0] sm:$0xff]
    %v572 = vld [vmem:[#allocation5 + $0x3b8] sm:$0xff]
    %v573 = vld [vmem:[#allocation5 + $0x3c0] sm:$0xff]
    %v574 = vld [vmem:[#allocation5 + $0x3c8] sm:$0xff]
    %v575 = vld [vmem:[#allocation5 + $0x3d0] sm:$0xff]
    %v576 = vld [vmem:[#allocation5 + $0x3d8] sm:$0xff]
    %v577 = vld [vmem:[#allocation5 + $0x3e0] sm:$0xff]
    %v578 = vld [vmem:[#allocation5 + $0x3e8] sm:$0xff]
    %v579 = vld [vmem:[#allocation5 + $0x3f0] sm:$0xff]
    %v580 = vld [vmem:[#allocation5 + $0x3f8] sm:$0xff]
    %v581 = vld [vmem:[#allocation5 + $0x400] sm:$0xff]
    %v582 = vld [vmem:[#allocation5 + $0x408] sm:$0xff]
    %v583 = vld [vmem:[#allocation5 + $0x410] sm:$0xff]
    %v584 = vld [vmem:[#allocation5 + $0x418] sm:$0xff]
    %v585 = vld [vmem:[#allocation5 + $0x420] sm:$0xff]
    %v586 = vld [vmem:[#allocation5 + $0x428] sm:$0xff]
    %v587 = vld [vmem:[#allocation5 + $0x430] sm:$0xff]
    %v588 = vld [vmem:[#allocation5 + $0x438] sm:$0xff]
    %v589 = vld [vmem:[#allocation5 + $0x440] sm:$0xff]
    %v590 = vld [vmem:[#allocation5 + $0x448] sm:$0xff]
    %v591 = vld [vmem:[#allocation5 + $0x450] sm:$0xff]
    %v592 = vld [vmem:[#allocation5 + $0x458] sm:$0xff]
    %v593 = vld [vmem:[#allocation5 + $0x460] sm:$0xff]
    %v594 = vld [vmem:[#allocation5 + $0x468] sm:$0xff]
    %v595 = vld [vmem:[#allocation5 + $0x470] sm:$0xff]
    %v596 = vld [vmem:[#allocation5 + $0x478] sm:$0xff]
    %v597 = vld [vmem:[#allocation5 + $0x480] sm:$0xff]
    %v598 = vld [vmem:[#allocation5 + $0x488] sm:$0xff]
    %v599 = vld [vmem:[#allocation5 + $0x490] sm:$0xff]
    %v600 = vld [vmem:[#allocation5 + $0x498] sm:$0xff]
    %v601 = vld [vmem:[#allocation5 + $0x4a0] sm:$0xff]
    %v602 = vld [vmem:[#allocation5 + $0x4a8] sm:$0xff]
    %v603 = vld [vmem:[#allocation5 + $0x4b0] sm:$0xff]
    %v604 = vld [vmem:[#allocation5 + $0x4b8] sm:$0xff]
    %v605 = vld [vmem:[#allocation5 + $0x4c0] sm:$0xff]
    %v606 = vld [vmem:[#allocation5 + $0x4c8] sm:$0xff]
    %v607 = vld [vmem:[#allocation5 + $0x4d0] sm:$0xff]
    %v608 = vld [vmem:[#allocation5 + $0x4d8] sm:$0xff]
    %v609 = vld [vmem:[#allocation5 + $0x4e0] sm:$0xff]
    %v610 = vld [vmem:[#allocation5 + $0x4e8] sm:$0xff]
    %v611 = vld [vmem:[#allocation5 + $0x4f0] sm:$0xff]
    %v612 = vld [vmem:[#allocation5 + $0x4f8] sm:$0xff]
    %v613 = vld [vmem:[#allocation5 + $0x500] sm:$0xff]
    %v614 = vld [vmem:[#allocation5 + $0x508] sm:$0xff]
    %v615 = vld [vmem:[#allocation5 + $0x510] sm:$0xff]
    %v616 = vld [vmem:[#allocation5 + $0x518] sm:$0xff]
    %v617 = vld [vmem:[#allocation5 + $0x520] sm:$0xff]
    %v618 = vld [vmem:[#allocation5 + $0x528] sm:$0xff]
    %v619 = vld [vmem:[#allocation5 + $0x530] sm:$0xff]
    %v620 = vld [vmem:[#allocation5 + $0x538] sm:$0xff]
    %v621 = vld [vmem:[#allocation5 + $0x540] sm:$0xff]
    %v622 = vld [vmem:[#allocation5 + $0x548] sm:$0xff]
    %v623 = vld [vmem:[#allocation5 + $0x550] sm:$0xff]
    %v624 = vld [vmem:[#allocation5 + $0x558] sm:$0xff]
    %v625 = vld [vmem:[#allocation5 + $0x560] sm:$0xff]
    %v626 = vld [vmem:[#allocation5 + $0x568] sm:$0xff]
    %v627 = vld [vmem:[#allocation5 + $0x570] sm:$0xff]
    %v628 = vld [vmem:[#allocation5 + $0x578] sm:$0xff]
    %v629 = vld [vmem:[#allocation5 + $0x580] sm:$0xff]
    %v630 = vld [vmem:[#allocation5 + $0x588] sm:$0xff]
    %v631 = vld [vmem:[#allocation5 + $0x590] sm:$0xff]
    %v632 = vld [vmem:[#allocation5 + $0x598] sm:$0xff]
    %v633 = vld [vmem:[#allocation5 + $0x5a0] sm:$0xff]
    %v634 = vld [vmem:[#allocation5 + $0x5a8] sm:$0xff]
    %v635 = vld [vmem:[#allocation5 + $0x5b0] sm:$0xff]
    %v636 = vld [vmem:[#allocation5 + $0x5b8] sm:$0xff]
    %v637 = vld [vmem:[#allocation5 + $0x5c0] sm:$0xff]
    %v638 = vld [vmem:[#allocation5 + $0x5c8] sm:$0xff]
    %v639 = vld [vmem:[#allocation5 + $0x5d0] sm:$0xff]
    %v640 = vld [vmem:[#allocation5 + $0x5d8] sm:$0xff]
    %v641 = vld [vmem:[#allocation5 + $0x5e0] sm:$0xff]
    %v642 = vld [vmem:[#allocation5 + $0x5e8] sm:$0xff]
    %v643 = vld [vmem:[#allocation5 + $0x5f0] sm:$0xff]
    %v644 = vld [vmem:[#allocation5 + $0x5f8] sm:$0xff]
    %v837 = vunpack.c.l.b16 %v453
    %v838 = vunpack.c.h.b16 %v453
    %v839 = vunpack.c.l.b16 %v454
    %v840 = vunpack.c.h.b16 %v454
    %v841 = vunpack.c.l.b16 %v455
    %v842 = vunpack.c.h.b16 %v455
    %v843 = vunpack.c.l.b16 %v456
    %v844 = vunpack.c.h.b16 %v456
    %v845 = vunpack.c.l.b16 %v457
    %v846 = vunpack.c.h.b16 %v457
    %v847 = vunpack.c.l.b16 %v458
    %v848 = vunpack.c.h.b16 %v458
    %v849 = vunpack.c.l.b16 %v459
    %v850 = vunpack.c.h.b16 %v459
    %v851 = vunpack.c.l.b16 %v460
    %v852 = vunpack.c.h.b16 %v460
    %v853 = vunpack.c.l.b16 %v461
    %v854 = vunpack.c.h.b16 %v461
    %v855 = vunpack.c.l.b16 %v462
    %v856 = vunpack.c.h.b16 %v462
    %v857 = vunpack.c.l.b16 %v463
    %v858 = vunpack.c.h.b16 %v463
    %v859 = vunpack.c.l.b16 %v464
    %v860 = vunpack.c.h.b16 %v464
    %v861 = vunpack.c.l.b16 %v465
    %v862 = vunpack.c.h.b16 %v465
    %v863 = vunpack.c.l.b16 %v466
    %v864 = vunpack.c.h.b16 %v466
    %v865 = vunpack.c.l.b16 %v467
    %v866 = vunpack.c.h.b16 %v467
    %v867 = vunpack.c.l.b16 %v468
    %v868 = vunpack.c.h.b16 %v468
    %v869 = vunpack.c.l.b16 %v469
    %v870 = vunpack.c.h.b16 %v469
    %v871 = vunpack.c.l.b16 %v470
    %v872 = vunpack.c.h.b16 %v470
    %v873 = vunpack.c.l.b16 %v471
    %v874 = vunpack.c.h.b16 %v471
    %v875 = vunpack.c.l.b16 %v472
    %v876 = vunpack.c.h.b16 %v472
    %v877 = vunpack.c.l.b16 %v473
    %v878 = vunpack.c.h.b16 %v473
    %v879 = vunpack.c.l.b16 %v474
    %v880 = vunpack.c.h.b16 %v474
    %v881 = vunpack.c.l.b16 %v475
    %v882 = vunpack.c.h.b16 %v475
    %v883 = vunpack.c.l.b16 %v476
    %v884 = vunpack.c.h.b16 %v476
    %v885 = vunpack.c.l.b16 %v477
    %v886 = vunpack.c.h.b16 %v477
    %v887 = vunpack.c.l.b16 %v478
    %v888 = vunpack.c.h.b16 %v478
    %v889 = vunpack.c.l.b16 %v479
    %v890 = vunpack.c.h.b16 %v479
    %v891 = vunpack.c.l.b16 %v480
    %v892 = vunpack.c.h.b16 %v480
    %v893 = vunpack.c.l.b16 %v481
    %v894 = vunpack.c.h.b16 %v481
    %v895 = vunpack.c.l.b16 %v482
    %v896 = vunpack.c.h.b16 %v482
    %v897 = vunpack.c.l.b16 %v483
    %v898 = vunpack.c.h.b16 %v483
    %v899 = vunpack.c.l.b16 %v484
    %v900 = vunpack.c.h.b16 %v484
    %v901 = vunpack.c.l.b16 %v485
    %v902 = vunpack.c.h.b16 %v485
    %v903 = vunpack.c.l.b16 %v486
    %v904 = vunpack.c.h.b16 %v486
    %v905 = vunpack.c.l.b16 %v487
    %v906 = vunpack.c.h.b16 %v487
    %v907 = vunpack.c.l.b16 %v488
    %v908 = vunpack.c.h.b16 %v488
    %v909 = vunpack.c.l.b16 %v489
    %v910 = vunpack.c.h.b16 %v489
    %v911 = vunpack.c.l.b16 %v490
    %v912 = vunpack.c.h.b16 %v490
    %v913 = vunpack.c.l.b16 %v491
    %v914 = vunpack.c.h.b16 %v491
    %v915 = vunpack.c.l.b16 %v492
    %v916 = vunpack.c.h.b16 %v492
    %v917 = vunpack.c.l.b16 %v493
    %v918 = vunpack.c.h.b16 %v493
    %v919 = vunpack.c.l.b16 %v494
    %v920 = vunpack.c.h.b16 %v494
    %v921 = vunpack.c.l.b16 %v495
    %v922 = vunpack.c.h.b16 %v495
    %v923 = vunpack.c.l.b16 %v496
    %v924 = vunpack.c.h.b16 %v496
    %v925 = vunpack.c.l.b16 %v497
    %v926 = vunpack.c.h.b16 %v497
    %v927 = vunpack.c.l.b16 %v498
    %v928 = vunpack.c.h.b16 %v498
    %v929 = vunpack.c.l.b16 %v499
    %v930 = vunpack.c.h.b16 %v499
    %v931 = vunpack.c.l.b16 %v500
    %v932 = vunpack.c.h.b16 %v500
    %v933 = vunpack.c.l.b16 %v501
    %v934 = vunpack.c.h.b16 %v501
    %v935 = vunpack.c.l.b16 %v502
    %v936 = vunpack.c.h.b16 %v502
    %v937 = vunpack.c.l.b16 %v503
    %v938 = vunpack.c.h.b16 %v503
    %v939 = vunpack.c.l.b16 %v504
    %v940 = vunpack.c.h.b16 %v504
    %v941 = vunpack.c.l.b16 %v505
    %v942 = vunpack.c.h.b16 %v505
    %v943 = vunpack.c.l.b16 %v506
    %v944 = vunpack.c.h.b16 %v506
    %v945 = vunpack.c.l.b16 %v507
    %v946 = vunpack.c.h.b16 %v507
    %v947 = vunpack.c.l.b16 %v508
    %v948 = vunpack.c.h.b16 %v508
    %v949 = vunpack.c.l.b16 %v509
    %v950 = vunpack.c.h.b16 %v509
    %v951 = vunpack.c.l.b16 %v510
    %v952 = vunpack.c.h.b16 %v510
    %v953 = vunpack.c.l.b16 %v511
    %v954 = vunpack.c.h.b16 %v511
    %v955 = vunpack.c.l.b16 %v512
    %v956 = vunpack.c.h.b16 %v512
    %v957 = vunpack.c.l.b16 %v513
    %v958 = vunpack.c.h.b16 %v513
    %v959 = vunpack.c.l.b16 %v514
    %v960 = vunpack.c.h.b16 %v514
    %v961 = vunpack.c.l.b16 %v515
    %v962 = vunpack.c.h.b16 %v515
    %v963 = vunpack.c.l.b16 %v516
    %v964 = vunpack.c.h.b16 %v516
    %v965 = vunpack.c.l.b16 %v517
    %v966 = vunpack.c.h.b16 %v517
    %v967 = vunpack.c.l.b16 %v518
    %v968 = vunpack.c.h.b16 %v518
    %v969 = vunpack.c.l.b16 %v519
    %v970 = vunpack.c.h.b16 %v519
    %v971 = vunpack.c.l.b16 %v520
    %v972 = vunpack.c.h.b16 %v520
    %v973 = vunpack.c.l.b16 %v521
    %v974 = vunpack.c.h.b16 %v521
    %v975 = vunpack.c.l.b16 %v522
    %v976 = vunpack.c.h.b16 %v522
    %v977 = vunpack.c.l.b16 %v523
    %v978 = vunpack.c.h.b16 %v523
    %v979 = vunpack.c.l.b16 %v524
    %v980 = vunpack.c.h.b16 %v524
    %v981 = vunpack.c.l.b16 %v525
    %v982 = vunpack.c.h.b16 %v525
    %v983 = vunpack.c.l.b16 %v526
    %v984 = vunpack.c.h.b16 %v526
    %v985 = vunpack.c.l.b16 %v527
    %v986 = vunpack.c.h.b16 %v527
    %v987 = vunpack.c.l.b16 %v528
    %v988 = vunpack.c.h.b16 %v528
    %v989 = vunpack.c.l.b16 %v529
    %v990 = vunpack.c.h.b16 %v529
    %v991 = vunpack.c.l.b16 %v530
    %v992 = vunpack.c.h.b16 %v530
    %v993 = vunpack.c.l.b16 %v531
    %v994 = vunpack.c.h.b16 %v531
    %v995 = vunpack.c.l.b16 %v532
    %v996 = vunpack.c.h.b16 %v532
    %v997 = vunpack.c.l.b16 %v533
    %v998 = vunpack.c.h.b16 %v533
    %v999 = vunpack.c.l.b16 %v534
    %v1000 = vunpack.c.h.b16 %v534
    %v1001 = vunpack.c.l.b16 %v535
    %v1002 = vunpack.c.h.b16 %v535
    %v1003 = vunpack.c.l.b16 %v536
    %v1004 = vunpack.c.h.b16 %v536
    %v1005 = vunpack.c.l.b16 %v537
    %v1006 = vunpack.c.h.b16 %v537
    %v1007 = vunpack.c.l.b16 %v538
    %v1008 = vunpack.c.h.b16 %v538
    %v1009 = vunpack.c.l.b16 %v539
    %v1010 = vunpack.c.h.b16 %v539
    %v1011 = vunpack.c.l.b16 %v540
    %v1012 = vunpack.c.h.b16 %v540
    %v1013 = vunpack.c.l.b16 %v541
    %v1014 = vunpack.c.h.b16 %v541
    %v1015 = vunpack.c.l.b16 %v542
    %v1016 = vunpack.c.h.b16 %v542
    %v1017 = vunpack.c.l.b16 %v543
    %v1018 = vunpack.c.h.b16 %v543
    %v1019 = vunpack.c.l.b16 %v544
    %v1020 = vunpack.c.h.b16 %v544
    %v1021 = vunpack.c.l.b16 %v545
    %v1022 = vunpack.c.h.b16 %v545
    %v1023 = vunpack.c.l.b16 %v546
    %v1024 = vunpack.c.h.b16 %v546
    %v1025 = vunpack.c.l.b16 %v547
    %v1026 = vunpack.c.h.b16 %v547
    %v1027 = vunpack.c.l.b16 %v548
    %v1028 = vunpack.c.h.b16 %v548
    %v1029 = vunpack.c.l.b16 %v549
    %v1030 = vunpack.c.h.b16 %v549
    %v1031 = vunpack.c.l.b16 %v550
    %v1032 = vunpack.c.h.b16 %v550
    %v1033 = vunpack.c.l.b16 %v551
    %v1034 = vunpack.c.h.b16 %v551
    %v1035 = vunpack.c.l.b16 %v552
    %v1036 = vunpack.c.h.b16 %v552
    %v1037 = vunpack.c.l.b16 %v553
    %v1038 = vunpack.c.h.b16 %v553
    %v1039 = vunpack.c.l.b16 %v554
    %v1040 = vunpack.c.h.b16 %v554
    %v1041 = vunpack.c.l.b16 %v555
    %v1042 = vunpack.c.h.b16 %v555
    %v1043 = vunpack.c.l.b16 %v556
    %v1044 = vunpack.c.h.b16 %v556
    %v1045 = vunpack.c.l.b16 %v557
    %v1046 = vunpack.c.h.b16 %v557
    %v1047 = vunpack.c.l.b16 %v558
    %v1048 = vunpack.c.h.b16 %v558
    %v1049 = vunpack.c.l.b16 %v559
    %v1050 = vunpack.c.h.b16 %v559
    %v1051 = vunpack.c.l.b16 %v560
    %v1052 = vunpack.c.h.b16 %v560
    %v1053 = vunpack.c.l.b16 %v561
    %v1054 = vunpack.c.h.b16 %v561
    %v1055 = vunpack.c.l.b16 %v562
    %v1056 = vunpack.c.h.b16 %v562
    %v1057 = vunpack.c.l.b16 %v563
    %v1058 = vunpack.c.h.b16 %v563
    %v1059 = vunpack.c.l.b16 %v564
    %v1060 = vunpack.c.h.b16 %v564
    %v1061 = vunpack.c.l.b16 %v565
    %v1062 = vunpack.c.h.b16 %v565
    %v1063 = vunpack.c.l.b16 %v566
    %v1064 = vunpack.c.h.b16 %v566
    %v1065 = vunpack.c.l.b16 %v567
    %v1066 = vunpack.c.h.b16 %v567
    %v1067 = vunpack.c.l.b16 %v568
    %v1068 = vunpack.c.h.b16 %v568
    %v1069 = vunpack.c.l.b16 %v569
    %v1070 = vunpack.c.h.b16 %v569
    %v1071 = vunpack.c.l.b16 %v570
    %v1072 = vunpack.c.h.b16 %v570
    %v1073 = vunpack.c.l.b16 %v571
    %v1074 = vunpack.c.h.b16 %v571
    %v1075 = vunpack.c.l.b16 %v572
    %v1076 = vunpack.c.h.b16 %v572
    %v1077 = vunpack.c.l.b16 %v573
    %v1078 = vunpack.c.h.b16 %v573
    %v1079 = vunpack.c.l.b16 %v574
    %v1080 = vunpack.c.h.b16 %v574
    %v1081 = vunpack.c.l.b16 %v575
    %v1082 = vunpack.c.h.b16 %v575
    %v1083 = vunpack.c.l.b16 %v576
    %v1084 = vunpack.c.h.b16 %v576
    %v1085 = vunpack.c.l.b16 %v577
    %v1086 = vunpack.c.h.b16 %v577
    %v1087 = vunpack.c.l.b16 %v578
    %v1088 = vunpack.c.h.b16 %v578
    %v1089 = vunpack.c.l.b16 %v579
    %v1090 = vunpack.c.h.b16 %v579
    %v1091 = vunpack.c.l.b16 %v580
    %v1092 = vunpack.c.h.b16 %v580
    %v1093 = vunpack.c.l.b16 %v581
    %v1094 = vunpack.c.h.b16 %v581
    %v1095 = vunpack.c.l.b16 %v582
    %v1096 = vunpack.c.h.b16 %v582
    %v1097 = vunpack.c.l.b16 %v583
    %v1098 = vunpack.c.h.b16 %v583
    %v1099 = vunpack.c.l.b16 %v584
    %v1100 = vunpack.c.h.b16 %v584
    %v1101 = vunpack.c.l.b16 %v585
    %v1102 = vunpack.c.h.b16 %v585
    %v1103 = vunpack.c.l.b16 %v586
    %v1104 = vunpack.c.h.b16 %v586
    %v1105 = vunpack.c.l.b16 %v587
    %v1106 = vunpack.c.h.b16 %v587
    %v1107 = vunpack.c.l.b16 %v588
    %v1108 = vunpack.c.h.b16 %v588
    %v1109 = vunpack.c.l.b16 %v589
    %v1110 = vunpack.c.h.b16 %v589
    %v1111 = vunpack.c.l.b16 %v590
    %v1112 = vunpack.c.h.b16 %v590
    %v1113 = vunpack.c.l.b16 %v591
    %v1114 = vunpack.c.h.b16 %v591
    %v1115 = vunpack.c.l.b16 %v592
    %v1116 = vunpack.c.h.b16 %v592
    %v1117 = vunpack.c.l.b16 %v593
    %v1118 = vunpack.c.h.b16 %v593
    %v1119 = vunpack.c.l.b16 %v594
    %v1120 = vunpack.c.h.b16 %v594
    %v1121 = vunpack.c.l.b16 %v595
    %v1122 = vunpack.c.h.b16 %v595
    %v1123 = vunpack.c.l.b16 %v596
    %v1124 = vunpack.c.h.b16 %v596
    %v1125 = vunpack.c.l.b16 %v597
    %v1126 = vunpack.c.h.b16 %v597
    %v1127 = vunpack.c.l.b16 %v598
    %v1128 = vunpack.c.h.b16 %v598
    %v1129 = vunpack.c.l.b16 %v599
    %v1130 = vunpack.c.h.b16 %v599
    %v1131 = vunpack.c.l.b16 %v600
    %v1132 = vunpack.c.h.b16 %v600
    %v1133 = vunpack.c.l.b16 %v601
    %v1134 = vunpack.c.h.b16 %v601
    %v1135 = vunpack.c.l.b16 %v602
    %v1136 = vunpack.c.h.b16 %v602
    %v1137 = vunpack.c.l.b16 %v603
    %v1138 = vunpack.c.h.b16 %v603
    %v1139 = vunpack.c.l.b16 %v604
    %v1140 = vunpack.c.h.b16 %v604
    %v1141 = vunpack.c.l.b16 %v605
    %v1142 = vunpack.c.h.b16 %v605
    %v1143 = vunpack.c.l.b16 %v606
    %v1144 = vunpack.c.h.b16 %v606
    %v1145 = vunpack.c.l.b16 %v607
    %v1146 = vunpack.c.h.b16 %v607
    %v1147 = vunpack.c.l.b16 %v608
    %v1148 = vunpack.c.h.b16 %v608
    %v1149 = vunpack.c.l.b16 %v609
    %v1150 = vunpack.c.h.b16 %v609
    %v1151 = vunpack.c.l.b16 %v610
    %v1152 = vunpack.c.h.b16 %v610
    %v1153 = vunpack.c.l.b16 %v611
    %v1154 = vunpack.c.h.b16 %v611
    %v1155 = vunpack.c.l.b16 %v612
    %v1156 = vunpack.c.h.b16 %v612
    %v1157 = vunpack.c.l.b16 %v613
    %v1158 = vunpack.c.h.b16 %v613
    %v1159 = vunpack.c.l.b16 %v614
    %v1160 = vunpack.c.h.b16 %v614
    %v1161 = vunpack.c.l.b16 %v615
    %v1162 = vunpack.c.h.b16 %v615
    %v1163 = vunpack.c.l.b16 %v616
    %v1164 = vunpack.c.h.b16 %v616
    %v1165 = vunpack.c.l.b16 %v617
    %v1166 = vunpack.c.h.b16 %v617
    %v1167 = vunpack.c.l.b16 %v618
    %v1168 = vunpack.c.h.b16 %v618
    %v1169 = vunpack.c.l.b16 %v619
    %v1170 = vunpack.c.h.b16 %v619
    %v1171 = vunpack.c.l.b16 %v620
    %v1172 = vunpack.c.h.b16 %v620
    %v1173 = vunpack.c.l.b16 %v621
    %v1174 = vunpack.c.h.b16 %v621
    %v1175 = vunpack.c.l.b16 %v622
    %v1176 = vunpack.c.h.b16 %v622
    %v1177 = vunpack.c.l.b16 %v623
    %v1178 = vunpack.c.h.b16 %v623
    %v1179 = vunpack.c.l.b16 %v624
    %v1180 = vunpack.c.h.b16 %v624
    %v1181 = vunpack.c.l.b16 %v625
    %v1182 = vunpack.c.h.b16 %v625
    %v1183 = vunpack.c.l.b16 %v626
    %v1184 = vunpack.c.h.b16 %v626
    %v1185 = vunpack.c.l.b16 %v627
    %v1186 = vunpack.c.h.b16 %v627
    %v1187 = vunpack.c.l.b16 %v628
    %v1188 = vunpack.c.h.b16 %v628
    %v1189 = vunpack.c.l.b16 %v629
    %v1190 = vunpack.c.h.b16 %v629
    %v1191 = vunpack.c.l.b16 %v630
    %v1192 = vunpack.c.h.b16 %v630
    %v1193 = vunpack.c.l.b16 %v631
    %v1194 = vunpack.c.h.b16 %v631
    %v1195 = vunpack.c.l.b16 %v632
    %v1196 = vunpack.c.h.b16 %v632
    %v1197 = vunpack.c.l.b16 %v633
    %v1198 = vunpack.c.h.b16 %v633
    %v1199 = vunpack.c.l.b16 %v634
    %v1200 = vunpack.c.h.b16 %v634
    %v1201 = vunpack.c.l.b16 %v635
    %v1202 = vunpack.c.h.b16 %v635
    %v1203 = vunpack.c.l.b16 %v636
    %v1204 = vunpack.c.h.b16 %v636
    %v1205 = vunpack.c.l.b16 %v637
    %v1206 = vunpack.c.h.b16 %v637
    %v1207 = vunpack.c.l.b16 %v638
    %v1208 = vunpack.c.h.b16 %v638
    %v1209 = vunpack.c.l.b16 %v639
    %v1210 = vunpack.c.h.b16 %v639
    %v1211 = vunpack.c.l.b16 %v640
    %v1212 = vunpack.c.h.b16 %v640
    %v1213 = vunpack.c.l.b16 %v641
    %v1214 = vunpack.c.h.b16 %v641
    %v1215 = vunpack.c.l.b16 %v642
    %v1216 = vunpack.c.h.b16 %v642
    %v1217 = vunpack.c.l.b16 %v643
    %v1218 = vunpack.c.h.b16 %v643
    %v1219 = vunpack.c.l.b16 %v644
    %v1220 = vunpack.c.h.b16 %v644
    %v1221 = vpack.c.b16 %v843, %v837
    %v1222 = vpack.c.b16 %v844, %v838
    %v1223 = vpack.c.b16 %v845, %v839
    %v1224 = vpack.c.b16 %v846, %v840
    %v1225 = vpack.c.b16 %v847, %v841
    %v1226 = vpack.c.b16 %v848, %v842
    %v1227 = vpack.c.b16 %v855, %v849
    %v1228 = vpack.c.b16 %v856, %v850
    %v1229 = vpack.c.b16 %v857, %v851
    %v1230 = vpack.c.b16 %v858, %v852
    %v1231 = vpack.c.b16 %v859, %v853
    %v1232 = vpack.c.b16 %v860, %v854
    %v1233 = vpack.c.b16 %v867, %v861
    %v1234 = vpack.c.b16 %v868, %v862
    %v1235 = vpack.c.b16 %v869, %v863
    %v1236 = vpack.c.b16 %v870, %v864
    %v1237 = vpack.c.b16 %v871, %v865
    %v1238 = vpack.c.b16 %v872, %v866
    %v1239 = vpack.c.b16 %v879, %v873
    %v1240 = vpack.c.b16 %v880, %v874
    %v1241 = vpack.c.b16 %v881, %v875
    %v1242 = vpack.c.b16 %v882, %v876
    %v1243 = vpack.c.b16 %v883, %v877
    %v1244 = vpack.c.b16 %v884, %v878
    %v1245 = vpack.c.b16 %v891, %v885
    %v1246 = vpack.c.b16 %v892, %v886
    %v1247 = vpack.c.b16 %v893, %v887
    %v1248 = vpack.c.b16 %v894, %v888
    %v1249 = vpack.c.b16 %v895, %v889
    %v1250 = vpack.c.b16 %v896, %v890
    %v1251 = vpack.c.b16 %v903, %v897
    %v1252 = vpack.c.b16 %v904, %v898
    %v1253 = vpack.c.b16 %v905, %v899
    %v1254 = vpack.c.b16 %v906, %v900
    %v1255 = vpack.c.b16 %v907, %v901
    %v1256 = vpack.c.b16 %v908, %v902
    %v1257 = vpack.c.b16 %v915, %v909
    %v1258 = vpack.c.b16 %v916, %v910
    %v1259 = vpack.c.b16 %v917, %v911
    %v1260 = vpack.c.b16 %v918, %v912
    %v1261 = vpack.c.b16 %v919, %v913
    %v1262 = vpack.c.b16 %v920, %v914
    %v1263 = vpack.c.b16 %v927, %v921
    %v1264 = vpack.c.b16 %v928, %v922
    %v1265 = vpack.c.b16 %v929, %v923
    %v1266 = vpack.c.b16 %v930, %v924
    %v1267 = vpack.c.b16 %v931, %v925
    %v1268 = vpack.c.b16 %v932, %v926
    %v1269 = vpack.c.b16 %v939, %v933
    %v1270 = vpack.c.b16 %v940, %v934
    %v1271 = vpack.c.b16 %v941, %v935
    %v1272 = vpack.c.b16 %v942, %v936
    %v1273 = vpack.c.b16 %v943, %v937
    %v1274 = vpack.c.b16 %v944, %v938
    %v1275 = vpack.c.b16 %v951, %v945
    %v1276 = vpack.c.b16 %v952, %v946
    %v1277 = vpack.c.b16 %v953, %v947
    %v1278 = vpack.c.b16 %v954, %v948
    %v1279 = vpack.c.b16 %v955, %v949
    %v1280 = vpack.c.b16 %v956, %v950
    %v1281 = vpack.c.b16 %v963, %v957
    %v1282 = vpack.c.b16 %v964, %v958
    %v1283 = vpack.c.b16 %v965, %v959
    %v1284 = vpack.c.b16 %v966, %v960
    %v1285 = vpack.c.b16 %v967, %v961
    %v1286 = vpack.c.b16 %v968, %v962
    %v1287 = vpack.c.b16 %v975, %v969
    %v1288 = vpack.c.b16 %v976, %v970
    %v1289 = vpack.c.b16 %v977, %v971
    %v1290 = vpack.c.b16 %v978, %v972
    %v1291 = vpack.c.b16 %v979, %v973
    %v1292 = vpack.c.b16 %v980, %v974
    %v1293 = vpack.c.b16 %v987, %v981
    %v1294 = vpack.c.b16 %v988, %v982
    %v1295 = vpack.c.b16 %v989, %v983
    %v1296 = vpack.c.b16 %v990, %v984
    %v1297 = vpack.c.b16 %v991, %v985
    %v1298 = vpack.c.b16 %v992, %v986
    %v1299 = vpack.c.b16 %v999, %v993
    %v1300 = vpack.c.b16 %v1000, %v994
    %v1301 = vpack.c.b16 %v1001, %v995
    %v1302 = vpack.c.b16 %v1002, %v996
    %v1303 = vpack.c.b16 %v1003, %v997
    %v1304 = vpack.c.b16 %v1004, %v998
    %v1305 = vpack.c.b16 %v1011, %v1005
    %v1306 = vpack.c.b16 %v1012, %v1006
    %v1307 = vpack.c.b16 %v1013, %v1007
    %v1308 = vpack.c.b16 %v1014, %v1008
    %v1309 = vpack.c.b16 %v1015, %v1009
    %v1310 = vpack.c.b16 %v1016, %v1010
    %v1311 = vpack.c.b16 %v1023, %v1017
    %v1312 = vpack.c.b16 %v1024, %v1018
    %v1313 = vpack.c.b16 %v1025, %v1019
    %v1314 = vpack.c.b16 %v1026, %v1020
    %v1315 = vpack.c.b16 %v1027, %v1021
    %v1316 = vpack.c.b16 %v1028, %v1022
    %v1317 = vpack.c.b16 %v1035, %v1029
    %v1318 = vpack.c.b16 %v1036, %v1030
    %v1319 = vpack.c.b16 %v1037, %v1031
    %v1320 = vpack.c.b16 %v1038, %v1032
    %v1321 = vpack.c.b16 %v1039, %v1033
    %v1322 = vpack.c.b16 %v1040, %v1034
    %v1323 = vpack.c.b16 %v1047, %v1041
    %v1324 = vpack.c.b16 %v1048, %v1042
    %v1325 = vpack.c.b16 %v1049, %v1043
    %v1326 = vpack.c.b16 %v1050, %v1044
    %v1327 = vpack.c.b16 %v1051, %v1045
    %v1328 = vpack.c.b16 %v1052, %v1046
    %v1329 = vpack.c.b16 %v1059, %v1053
    %v1330 = vpack.c.b16 %v1060, %v1054
    %v1331 = vpack.c.b16 %v1061, %v1055
    %v1332 = vpack.c.b16 %v1062, %v1056
    %v1333 = vpack.c.b16 %v1063, %v1057
    %v1334 = vpack.c.b16 %v1064, %v1058
    %v1335 = vpack.c.b16 %v1071, %v1065
    %v1336 = vpack.c.b16 %v1072, %v1066
    %v1337 = vpack.c.b16 %v1073, %v1067
    %v1338 = vpack.c.b16 %v1074, %v1068
    %v1339 = vpack.c.b16 %v1075, %v1069
    %v1340 = vpack.c.b16 %v1076, %v1070
    %v1341 = vpack.c.b16 %v1083, %v1077
    %v1342 = vpack.c.b16 %v1084, %v1078
    %v1343 = vpack.c.b16 %v1085, %v1079
    %v1344 = vpack.c.b16 %v1086, %v1080
    %v1345 = vpack.c.b16 %v1087, %v1081
    %v1346 = vpack.c.b16 %v1088, %v1082
    %v1347 = vpack.c.b16 %v1095, %v1089
    %v1348 = vpack.c.b16 %v1096, %v1090
    %v1349 = vpack.c.b16 %v1097, %v1091
    %v1350 = vpack.c.b16 %v1098, %v1092
    %v1351 = vpack.c.b16 %v1099, %v1093
    %v1352 = vpack.c.b16 %v1100, %v1094
    %v1353 = vpack.c.b16 %v1107, %v1101
    %v1354 = vpack.c.b16 %v1108, %v1102
    %v1355 = vpack.c.b16 %v1109, %v1103
    %v1356 = vpack.c.b16 %v1110, %v1104
    %v1357 = vpack.c.b16 %v1111, %v1105
    %v1358 = vpack.c.b16 %v1112, %v1106
    %v1359 = vpack.c.b16 %v1119, %v1113
    %v1360 = vpack.c.b16 %v1120, %v1114
    %v1361 = vpack.c.b16 %v1121, %v1115
    %v1362 = vpack.c.b16 %v1122, %v1116
    %v1363 = vpack.c.b16 %v1123, %v1117
    %v1364 = vpack.c.b16 %v1124, %v1118
    %v1365 = vpack.c.b16 %v1131, %v1125
    %v1366 = vpack.c.b16 %v1132, %v1126
    %v1367 = vpack.c.b16 %v1133, %v1127
    %v1368 = vpack.c.b16 %v1134, %v1128
    %v1369 = vpack.c.b16 %v1135, %v1129
    %v1370 = vpack.c.b16 %v1136, %v1130
    %v1371 = vpack.c.b16 %v1143, %v1137
    %v1372 = vpack.c.b16 %v1144, %v1138
    %v1373 = vpack.c.b16 %v1145, %v1139
    %v1374 = vpack.c.b16 %v1146, %v1140
    %v1375 = vpack.c.b16 %v1147, %v1141
    %v1376 = vpack.c.b16 %v1148, %v1142
    %v1377 = vpack.c.b16 %v1155, %v1149
    %v1378 = vpack.c.b16 %v1156, %v1150
    %v1379 = vpack.c.b16 %v1157, %v1151
    %v1380 = vpack.c.b16 %v1158, %v1152
    %v1381 = vpack.c.b16 %v1159, %v1153
    %v1382 = vpack.c.b16 %v1160, %v1154
    %v1383 = vpack.c.b16 %v1167, %v1161
    %v1384 = vpack.c.b16 %v1168, %v1162
    %v1385 = vpack.c.b16 %v1169, %v1163
    %v1386 = vpack.c.b16 %v1170, %v1164
    %v1387 = vpack.c.b16 %v1171, %v1165
    %v1388 = vpack.c.b16 %v1172, %v1166
    %v1389 = vpack.c.b16 %v1179, %v1173
    %v1390 = vpack.c.b16 %v1180, %v1174
    %v1391 = vpack.c.b16 %v1181, %v1175
    %v1392 = vpack.c.b16 %v1182, %v1176
    %v1393 = vpack.c.b16 %v1183, %v1177
    %v1394 = vpack.c.b16 %v1184, %v1178
    %v1395 = vpack.c.b16 %v1191, %v1185
    %v1396 = vpack.c.b16 %v1192, %v1186
    %v1397 = vpack.c.b16 %v1193, %v1187
    %v1398 = vpack.c.b16 %v1194, %v1188
    %v1399 = vpack.c.b16 %v1195, %v1189
    %v1400 = vpack.c.b16 %v1196, %v1190
    %v1401 = vpack.c.b16 %v1203, %v1197
    %v1402 = vpack.c.b16 %v1204, %v1198
    %v1403 = vpack.c.b16 %v1205, %v1199
    %v1404 = vpack.c.b16 %v1206, %v1200
    %v1405 = vpack.c.b16 %v1207, %v1201
    %v1406 = vpack.c.b16 %v1208, %v1202
    %v1407 = vpack.c.b16 %v1215, %v1209
    %v1408 = vpack.c.b16 %v1216, %v1210
    %v1409 = vpack.c.b16 %v1217, %v1211
    %v1410 = vpack.c.b16 %v1218, %v1212
    %v1411 = vpack.c.b16 %v1219, %v1213
    %v1412 = vpack.c.b16 %v1220, %v1214
    %1605 = vmatpush.bf16.msra.mxu0 %v1263
    %1606 = vmatpush.bf16.msra.mxu0 %v1257
    %1607 = vmatpush.bf16.msra.mxu0 %v1251
    %1608 = vmatpush.bf16.msra.mxu0 %v1245
    %1609 = vmatpush.bf16.msra.mxu0 %v1239
    %1610 = vmatpush.bf16.msra.mxu0 %v1233
    %1611 = vmatpush.bf16.msra.mxu0 %v1227
    %1612 = vmatpush.bf16.msra.mxu0 %v1221
    %1613 = vmatmul.bf16.gmra.mxu0 %v449
    %v1614 = vpop.f32.mrf.mxu0
    %v1615 = vadd.f32 0.0, %v1614
    %v1616 = vpop.f32.mrf.mxu0
    %1617 = vdwg.mxu0
    %1618 = vmatpush.bf16.msra.mxu0 %v1311
    %1619 = vmatpush.bf16.msra.mxu0 %v1305
    %1620 = vmatpush.bf16.msra.mxu0 %v1299
    %1621 = vmatpush.bf16.msra.mxu0 %v1293
    %1622 = vmatpush.bf16.msra.mxu0 %v1287
    %1623 = vmatpush.bf16.msra.mxu0 %v1281
    %1624 = vmatpush.bf16.msra.mxu0 %v1275
    %1625 = vmatpush.bf16.msra.mxu0 %v1269
    %1626 = vmatmul.bf16.gmra.mxu0 %v450
    %v1627 = vpop.f32.mrf.mxu0
    %v1628 = vadd.f32 %v1615, %v1627
    %v1629 = vpop.f32.mrf.mxu0
    %1630 = vdwg.mxu0
    %1631 = vmatpush.bf16.msra.mxu0 %v1359
    %1632 = vmatpush.bf16.msra.mxu0 %v1353
    %1633 = vmatpush.bf16.msra.mxu0 %v1347
    %1634 = vmatpush.bf16.msra.mxu0 %v1341
    %1635 = vmatpush.bf16.msra.mxu0 %v1335
    %1636 = vmatpush.bf16.msra.mxu0 %v1329
    %1637 = vmatpush.bf16.msra.mxu0 %v1323
    %1638 = vmatpush.bf16.msra.mxu0 %v1317
    %1639 = vmatmul.bf16.gmra.mxu0 %v451
    %v1640 = vpop.f32.mrf.mxu0
    %v1641 = vadd.f32 %v1628, %v1640
    %v1642 = vpop.f32.mrf.mxu0
    %1643 = vdwg.mxu0
    %1644 = vmatpush.bf16.msra.mxu0 %v1407
    %1645 = vmatpush.bf16.msra.mxu0 %v1401
    %1646 = vmatpush.bf16.msra.mxu0 %v1395
    %1647 = vmatpush.bf16.msra.mxu0 %v1389
    %1648 = vmatpush.bf16.msra.mxu0 %v1383
    %1649 = vmatpush.bf16.msra.mxu0 %v1377
    %1650 = vmatpush.bf16.msra.mxu0 %v1371
    %1651 = vmatpush.bf16.msra.mxu0 %v1365
    %1652 = vmatmul.bf16.gmra.mxu0 %v452
    %v1653 = vpop.f32.mrf.mxu0
    %v1654 = vadd.f32 %v1641, %v1653
    %v1655 = vpop.f32.mrf.mxu0
    %1656 = vdwg.mxu0
    %1657 = vmatpush.bf16.msra.mxu0 %v1264
    %1658 = vmatpush.bf16.msra.mxu0 %v1258
    %1659 = vmatpush.bf16.msra.mxu0 %v1252
    %1660 = vmatpush.bf16.msra.mxu0 %v1246
    %1661 = vmatpush.bf16.msra.mxu0 %v1240
    %1662 = vmatpush.bf16.msra.mxu0 %v1234
    %1663 = vmatpush.bf16.msra.mxu0 %v1228
    %1664 = vmatpush.bf16.msra.mxu0 %v1222
    %1665 = vmatmul.bf16.gmra.mxu0 %v449
    %v1666 = vpop.f32.mrf.mxu0
    %v1667 = vadd.f32 0.0, %v1666
    %v1668 = vpop.f32.mrf.mxu0
    %1669 = vdwg.mxu0
    %1670 = vmatpush.bf16.msra.mxu0 %v1312
    %1671 = vmatpush.bf16.msra.mxu0 %v1306
    %1672 = vmatpush.bf16.msra.mxu0 %v1300
    %1673 = vmatpush.bf16.msra.mxu0 %v1294
    %1674 = vmatpush.bf16.msra.mxu0 %v1288
    %1675 = vmatpush.bf16.msra.mxu0 %v1282
    %1676 = vmatpush.bf16.msra.mxu0 %v1276
    %1677 = vmatpush.bf16.msra.mxu0 %v1270
    %1678 = vmatmul.bf16.gmra.mxu0 %v450
    %v1679 = vpop.f32.mrf.mxu0
    %v1680 = vadd.f32 %v1667, %v1679
    %v1681 = vpop.f32.mrf.mxu0
    %1682 = vdwg.mxu0
    %1683 = vmatpush.bf16.msra.mxu0 %v1360
    %1684 = vmatpush.bf16.msra.mxu0 %v1354
    %1685 = vmatpush.bf16.msra.mxu0 %v1348
    %1686 = vmatpush.bf16.msra.mxu0 %v1342
    %1687 = vmatpush.bf16.msra.mxu0 %v1336
    %1688 = vmatpush.bf16.msra.mxu0 %v1330
    %1689 = vmatpush.bf16.msra.mxu0 %v1324
    %1690 = vmatpush.bf16.msra.mxu0 %v1318
    %1691 = vmatmul.bf16.gmra.mxu0 %v451
    %v1692 = vpop.f32.mrf.mxu0
    %v1693 = vadd.f32 %v1680, %v1692
    %v1694 = vpop.f32.mrf.mxu0
    %1695 = vdwg.mxu0
    %1696 = vmatpush.bf16.msra.mxu0 %v1408
    %1697 = vmatpush.bf16.msra.mxu0 %v1402
    %1698 = vmatpush.bf16.msra.mxu0 %v1396
    %1699 = vmatpush.bf16.msra.mxu0 %v1390
    %1700 = vmatpush.bf16.msra.mxu0 %v1384
    %1701 = vmatpush.bf16.msra.mxu0 %v1378
    %1702 = vmatpush.bf16.msra.mxu0 %v1372
    %1703 = vmatpush.bf16.msra.mxu0 %v1366
    %1704 = vmatmul.bf16.gmra.mxu0 %v452
    %v1705 = vpop.f32.mrf.mxu0
    %v1706 = vadd.f32 %v1693, %v1705
    %v1707 = vpop.f32.mrf.mxu0
    %1708 = vdwg.mxu0
    %1709 = vmatpush.bf16.msra.mxu0 %v1265
    %1710 = vmatpush.bf16.msra.mxu0 %v1259
    %1711 = vmatpush.bf16.msra.mxu0 %v1253
    %1712 = vmatpush.bf16.msra.mxu0 %v1247
    %1713 = vmatpush.bf16.msra.mxu0 %v1241
    %1714 = vmatpush.bf16.msra.mxu0 %v1235
    %1715 = vmatpush.bf16.msra.mxu0 %v1229
    %1716 = vmatpush.bf16.msra.mxu0 %v1223
    %1717 = vmatmul.bf16.gmra.mxu0 %v449
    %v1718 = vpop.f32.mrf.mxu0
    %v1719 = vadd.f32 0.0, %v1718
    %v1720 = vpop.f32.mrf.mxu0
    %1721 = vdwg.mxu0
    %1722 = vmatpush.bf16.msra.mxu0 %v1313
    %1723 = vmatpush.bf16.msra.mxu0 %v1307
    %1724 = vmatpush.bf16.msra.mxu0 %v1301
    %1725 = vmatpush.bf16.msra.mxu0 %v1295
    %1726 = vmatpush.bf16.msra.mxu0 %v1289
    %1727 = vmatpush.bf16.msra.mxu0 %v1283
    %1728 = vmatpush.bf16.msra.mxu0 %v1277
    %1729 = vmatpush.bf16.msra.mxu0 %v1271
    %1730 = vmatmul.bf16.gmra.mxu0 %v450
    %v1731 = vpop.f32.mrf.mxu0
    %v1732 = vadd.f32 %v1719, %v1731
    %v1733 = vpop.f32.mrf.mxu0
    %1734 = vdwg.mxu0
    %1735 = vmatpush.bf16.msra.mxu0 %v1361
    %1736 = vmatpush.bf16.msra.mxu0 %v1355
    %1737 = vmatpush.bf16.msra.mxu0 %v1349
    %1738 = vmatpush.bf16.msra.mxu0 %v1343
    %1739 = vmatpush.bf16.msra.mxu0 %v1337
    %1740 = vmatpush.bf16.msra.mxu0 %v1331
    %1741 = vmatpush.bf16.msra.mxu0 %v1325
    %1742 = vmatpush.bf16.msra.mxu0 %v1319
    %1743 = vmatmul.bf16.gmra.mxu0 %v451
    %v1744 = vpop.f32.mrf.mxu0
    %v1745 = vadd.f32 %v1732, %v1744
    %v1746 = vpop.f32.mrf.mxu0
    %1747 = vdwg.mxu0
    %1748 = vmatpush.bf16.msra.mxu0 %v1409
    %1749 = vmatpush.bf16.msra.mxu0 %v1403
    %1750 = vmatpush.bf16.msra.mxu0 %v1397
    %1751 = vmatpush.bf16.msra.mxu0 %v1391
    %1752 = vmatpush.bf16.msra.mxu0 %v1385
    %1753 = vmatpush.bf16.msra.mxu0 %v1379
    %1754 = vmatpush.bf16.msra.mxu0 %v1373
    %1755 = vmatpush.bf16.msra.mxu0 %v1367
    %1756 = vmatmul.bf16.gmra.mxu0 %v452
    %v1757 = vpop.f32.mrf.mxu0
    %v1758 = vadd.f32 %v1745, %v1757
    %v1759 = vpop.f32.mrf.mxu0
    %1760 = vdwg.mxu0
    %1761 = vmatpush.bf16.msra.mxu0 %v1266
    %1762 = vmatpush.bf16.msra.mxu0 %v1260
    %1763 = vmatpush.bf16.msra.mxu0 %v1254
    %1764 = vmatpush.bf16.msra.mxu0 %v1248
    %1765 = vmatpush.bf16.msra.mxu0 %v1242
    %1766 = vmatpush.bf16.msra.mxu0 %v1236
    %1767 = vmatpush.bf16.msra.mxu0 %v1230
    %1768 = vmatpush.bf16.msra.mxu0 %v1224
    %1769 = vmatmul.bf16.gmra.mxu0 %v449
    %v1770 = vpop.f32.mrf.mxu0
    %v1771 = vadd.f32 0.0, %v1770
    %v1772 = vpop.f32.mrf.mxu0
    %1773 = vdwg.mxu0
    %1774 = vmatpush.bf16.msra.mxu0 %v1314
    %1775 = vmatpush.bf16.msra.mxu0 %v1308
    %1776 = vmatpush.bf16.msra.mxu0 %v1302
    %1777 = vmatpush.bf16.msra.mxu0 %v1296
    %1778 = vmatpush.bf16.msra.mxu0 %v1290
    %1779 = vmatpush.bf16.msra.mxu0 %v1284
    %1780 = vmatpush.bf16.msra.mxu0 %v1278
    %1781 = vmatpush.bf16.msra.mxu0 %v1272
    %1782 = vmatmul.bf16.gmra.mxu0 %v450
    %v1783 = vpop.f32.mrf.mxu0
    %v1784 = vadd.f32 %v1771, %v1783
    %v1785 = vpop.f32.mrf.mxu0
    %1786 = vdwg.mxu0
    %1787 = vmatpush.bf16.msra.mxu0 %v1362
    %1788 = vmatpush.bf16.msra.mxu0 %v1356
    %1789 = vmatpush.bf16.msra.mxu0 %v1350
    %1790 = vmatpush.bf16.msra.mxu0 %v1344
    %1791 = vmatpush.bf16.msra.mxu0 %v1338
    %1792 = vmatpush.bf16.msra.mxu0 %v1332
    %1793 = vmatpush.bf16.msra.mxu0 %v1326
    %1794 = vmatpush.bf16.msra.mxu0 %v1320
    %1795 = vmatmul.bf16.gmra.mxu0 %v451
    %v1796 = vpop.f32.mrf.mxu0
    %v1797 = vadd.f32 %v1784, %v1796
    %v1798 = vpop.f32.mrf.mxu0
    %1799 = vdwg.mxu0
    %1800 = vmatpush.bf16.msra.mxu0 %v1410
    %1801 = vmatpush.bf16.msra.mxu0 %v1404
    %1802 = vmatpush.bf16.msra.mxu0 %v1398
    %1803 = vmatpush.bf16.msra.mxu0 %v1392
    %1804 = vmatpush.bf16.msra.mxu0 %v1386
    %1805 = vmatpush.bf16.msra.mxu0 %v1380
    %1806 = vmatpush.bf16.msra.mxu0 %v1374
    %1807 = vmatpush.bf16.msra.mxu0 %v1368
    %1808 = vmatmul.bf16.gmra.mxu0 %v452
    %v1809 = vpop.f32.mrf.mxu0
    %v1810 = vadd.f32 %v1797, %v1809
    %v1811 = vpop.f32.mrf.mxu0
    %1812 = vdwg.mxu0
    %1813 = vmatpush.bf16.msra.mxu0 %v1267
    %1814 = vmatpush.bf16.msra.mxu0 %v1261
    %1815 = vmatpush.bf16.msra.mxu0 %v1255
    %1816 = vmatpush.bf16.msra.mxu0 %v1249
    %1817 = vmatpush.bf16.msra.mxu0 %v1243
    %1818 = vmatpush.bf16.msra.mxu0 %v1237
    %1819 = vmatpush.bf16.msra.mxu0 %v1231
    %1820 = vmatpush.bf16.msra.mxu0 %v1225
    %1821 = vmatmul.bf16.gmra.mxu0 %v449
    %v1822 = vpop.f32.mrf.mxu0
    %v1823 = vadd.f32 0.0, %v1822
    %v1824 = vpop.f32.mrf.mxu0
    %1825 = vdwg.mxu0
    %1826 = vmatpush.bf16.msra.mxu0 %v1315
    %1827 = vmatpush.bf16.msra.mxu0 %v1309
    %1828 = vmatpush.bf16.msra.mxu0 %v1303
    %1829 = vmatpush.bf16.msra.mxu0 %v1297
    %1830 = vmatpush.bf16.msra.mxu0 %v1291
    %1831 = vmatpush.bf16.msra.mxu0 %v1285
    %1832 = vmatpush.bf16.msra.mxu0 %v1279
    %1833 = vmatpush.bf16.msra.mxu0 %v1273
    %1834 = vmatmul.bf16.gmra.mxu0 %v450
    %v1835 = vpop.f32.mrf.mxu0
    %v1836 = vadd.f32 %v1823, %v1835
    %v1837 = vpop.f32.mrf.mxu0
    %1838 = vdwg.mxu0
    %1839 = vmatpush.bf16.msra.mxu0 %v1363
    %1840 = vmatpush.bf16.msra.mxu0 %v1357
    %1841 = vmatpush.bf16.msra.mxu0 %v1351
    %1842 = vmatpush.bf16.msra.mxu0 %v1345
    %1843 = vmatpush.bf16.msra.mxu0 %v1339
    %1844 = vmatpush.bf16.msra.mxu0 %v1333
    %1845 = vmatpush.bf16.msra.mxu0 %v1327
    %1846 = vmatpush.bf16.msra.mxu0 %v1321
    %1847 = vmatmul.bf16.gmra.mxu0 %v451
    %v1848 = vpop.f32.mrf.mxu0
    %v1849 = vadd.f32 %v1836, %v1848
    %v1850 = vpop.f32.mrf.mxu0
    %1851 = vdwg.mxu0
    %1852 = vmatpush.bf16.msra.mxu0 %v1411
    %1853 = vmatpush.bf16.msra.mxu0 %v1405
    %1854 = vmatpush.bf16.msra.mxu0 %v1399
    %1855 = vmatpush.bf16.msra.mxu0 %v1393
    %1856 = vmatpush.bf16.msra.mxu0 %v1387
    %1857 = vmatpush.bf16.msra.mxu0 %v1381
    %1858 = vmatpush.bf16.msra.mxu0 %v1375
    %1859 = vmatpush.bf16.msra.mxu0 %v1369
    %1860 = vmatmul.bf16.gmra.mxu0 %v452
    %v1861 = vpop.f32.mrf.mxu0
    %v1862 = vadd.f32 %v1849, %v1861
    %v1863 = vpop.f32.mrf.mxu0
    %1864 = vdwg.mxu0
    %1865 = vmatpush.bf16.msra.mxu0 %v1268
    %1866 = vmatpush.bf16.msra.mxu0 %v1262
    %1867 = vmatpush.bf16.msra.mxu0 %v1256
    %1868 = vmatpush.bf16.msra.mxu0 %v1250
    %1869 = vmatpush.bf16.msra.mxu0 %v1244
    %1870 = vmatpush.bf16.msra.mxu0 %v1238
    %1871 = vmatpush.bf16.msra.mxu0 %v1232
    %1872 = vmatpush.bf16.msra.mxu0 %v1226
    %1873 = vmatmul.bf16.gmra.mxu0 %v449
    %v1874 = vpop.f32.mrf.mxu0
    %v1875 = vadd.f32 0.0, %v1874
    %v1876 = vpop.f32.mrf.mxu0
    %1877 = vdwg.mxu0
    %1878 = vmatpush.bf16.msra.mxu0 %v1316
    %1879 = vmatpush.bf16.msra.mxu0 %v1310
    %1880 = vmatpush.bf16.msra.mxu0 %v1304
    %1881 = vmatpush.bf16.msra.mxu0 %v1298
    %1882 = vmatpush.bf16.msra.mxu0 %v1292
    %1883 = vmatpush.bf16.msra.mxu0 %v1286
    %1884 = vmatpush.bf16.msra.mxu0 %v1280
    %1885 = vmatpush.bf16.msra.mxu0 %v1274
    %1886 = vmatmul.bf16.gmra.mxu0 %v450
    %v1887 = vpop.f32.mrf.mxu0
    %v1888 = vadd.f32 %v1875, %v1887
    %v1889 = vpop.f32.mrf.mxu0
    %1890 = vdwg.mxu0
    %1891 = vmatpush.bf16.msra.mxu0 %v1364
    %1892 = vmatpush.bf16.msra.mxu0 %v1358
    %1893 = vmatpush.bf16.msra.mxu0 %v1352
    %1894 = vmatpush.bf16.msra.mxu0 %v1346
    %1895 = vmatpush.bf16.msra.mxu0 %v1340
    %1896 = vmatpush.bf16.msra.mxu0 %v1334
    %1897 = vmatpush.bf16.msra.mxu0 %v1328
    %1898 = vmatpush.bf16.msra.mxu0 %v1322
    %1899 = vmatmul.bf16.gmra.mxu0 %v451
    %v1900 = vpop.f32.mrf.mxu0
    %v1901 = vadd.f32 %v1888, %v1900
    %v1902 = vpop.f32.mrf.mxu0
    %1903 = vdwg.mxu0
    %1904 = vmatpush.bf16.msra.mxu0 %v1412
    %1905 = vmatpush.bf16.msra.mxu0 %v1406
    %1906 = vmatpush.bf16.msra.mxu0 %v1400
    %1907 = vmatpush.bf16.msra.mxu0 %v1394
    %1908 = vmatpush.bf16.msra.mxu0 %v1388
    %1909 = vmatpush.bf16.msra.mxu0 %v1382
    %1910 = vmatpush.bf16.msra.mxu0 %v1376
    %1911 = vmatpush.bf16.msra.mxu0 %v1370
    %1912 = vmatmul.bf16.gmra.mxu0 %v452
    %v1913 = vpop.f32.mrf.mxu0
    %v1914 = vadd.f32 %v1901, %v1913
    %v1915 = vpop.f32.mrf.mxu0
    %1916 = vdwg.mxu0
    %v2109 = vunpack.c.l.b16 %v257
    %v2110 = vunpack.c.h.b16 %v257
    %v2111 = vunpack.c.l.b16 %v258
    %v2112 = vunpack.c.h.b16 %v258
    %v2113 = vunpack.c.l.b16 %v259
    %v2114 = vunpack.c.h.b16 %v259
    %v2115 = vunpack.c.l.b16 %v260
    %v2116 = vunpack.c.h.b16 %v260
    %v2117 = vunpack.c.l.b16 %v261
    %v2118 = vunpack.c.h.b16 %v261
    %v2119 = vunpack.c.l.b16 %v262
    %v2120 = vunpack.c.h.b16 %v262
    %v2121 = vunpack.c.l.b16 %v263
    %v2122 = vunpack.c.h.b16 %v263
    %v2123 = vunpack.c.l.b16 %v264
    %v2124 = vunpack.c.h.b16 %v264
    %v2125 = vunpack.c.l.b16 %v265
    %v2126 = vunpack.c.h.b16 %v265
    %v2127 = vunpack.c.l.b16 %v266
    %v2128 = vunpack.c.h.b16 %v266
    %v2129 = vunpack.c.l.b16 %v267
    %v2130 = vunpack.c.h.b16 %v267
    %v2131 = vunpack.c.l.b16 %v268
    %v2132 = vunpack.c.h.b16 %v268
    %v2133 = vunpack.c.l.b16 %v269
    %v2134 = vunpack.c.h.b16 %v269
    %v2135 = vunpack.c.l.b16 %v270
    %v2136 = vunpack.c.h.b16 %v270
    %v2137 = vunpack.c.l.b16 %v271
    %v2138 = vunpack.c.h.b16 %v271
    %v2139 = vunpack.c.l.b16 %v272
    %v2140 = vunpack.c.h.b16 %v272
    %v2141 = vunpack.c.l.b16 %v273
    %v2142 = vunpack.c.h.b16 %v273
    %v2143 = vunpack.c.l.b16 %v274
    %v2144 = vunpack.c.h.b16 %v274
    %v2145 = vunpack.c.l.b16 %v275
    %v2146 = vunpack.c.h.b16 %v275
    %v2147 = vunpack.c.l.b16 %v276
    %v2148 = vunpack.c.h.b16 %v276
    %v2149 = vunpack.c.l.b16 %v277
    %v2150 = vunpack.c.h.b16 %v277
    %v2151 = vunpack.c.l.b16 %v278
    %v2152 = vunpack.c.h.b16 %v278
    %v2153 = vunpack.c.l.b16 %v279
    %v2154 = vunpack.c.h.b16 %v279
    %v2155 = vunpack.c.l.b16 %v280
    %v2156 = vunpack.c.h.b16 %v280
    %v2157 = vunpack.c.l.b16 %v281
    %v2158 = vunpack.c.h.b16 %v281
    %v2159 = vunpack.c.l.b16 %v282
    %v2160 = vunpack.c.h.b16 %v282
    %v2161 = vunpack.c.l.b16 %v283
    %v2162 = vunpack.c.h.b16 %v283
    %v2163 = vunpack.c.l.b16 %v284
    %v2164 = vunpack.c.h.b16 %v284
    %v2165 = vunpack.c.l.b16 %v285
    %v2166 = vunpack.c.h.b16 %v285
    %v2167 = vunpack.c.l.b16 %v286
    %v2168 = vunpack.c.h.b16 %v286
    %v2169 = vunpack.c.l.b16 %v287
    %v2170 = vunpack.c.h.b16 %v287
    %v2171 = vunpack.c.l.b16 %v288
    %v2172 = vunpack.c.h.b16 %v288
    %v2173 = vunpack.c.l.b16 %v289
    %v2174 = vunpack.c.h.b16 %v289
    %v2175 = vunpack.c.l.b16 %v290
    %v2176 = vunpack.c.h.b16 %v290
    %v2177 = vunpack.c.l.b16 %v291
    %v2178 = vunpack.c.h.b16 %v291
    %v2179 = vunpack.c.l.b16 %v292
    %v2180 = vunpack.c.h.b16 %v292
    %v2181 = vunpack.c.l.b16 %v293
    %v2182 = vunpack.c.h.b16 %v293
    %v2183 = vunpack.c.l.b16 %v294
    %v2184 = vunpack.c.h.b16 %v294
    %v2185 = vunpack.c.l.b16 %v295
    %v2186 = vunpack.c.h.b16 %v295
    %v2187 = vunpack.c.l.b16 %v296
    %v2188 = vunpack.c.h.b16 %v296
    %v2189 = vunpack.c.l.b16 %v297
    %v2190 = vunpack.c.h.b16 %v297
    %v2191 = vunpack.c.l.b16 %v298
    %v2192 = vunpack.c.h.b16 %v298
    %v2193 = vunpack.c.l.b16 %v299
    %v2194 = vunpack.c.h.b16 %v299
    %v2195 = vunpack.c.l.b16 %v300
    %v2196 = vunpack.c.h.b16 %v300
    %v2197 = vunpack.c.l.b16 %v301
    %v2198 = vunpack.c.h.b16 %v301
    %v2199 = vunpack.c.l.b16 %v302
    %v2200 = vunpack.c.h.b16 %v302
    %v2201 = vunpack.c.l.b16 %v303
    %v2202 = vunpack.c.h.b16 %v303
    %v2203 = vunpack.c.l.b16 %v304
    %v2204 = vunpack.c.h.b16 %v304
    %v2205 = vunpack.c.l.b16 %v305
    %v2206 = vunpack.c.h.b16 %v305
    %v2207 = vunpack.c.l.b16 %v306
    %v2208 = vunpack.c.h.b16 %v306
    %v2209 = vunpack.c.l.b16 %v307
    %v2210 = vunpack.c.h.b16 %v307
    %v2211 = vunpack.c.l.b16 %v308
    %v2212 = vunpack.c.h.b16 %v308
    %v2213 = vunpack.c.l.b16 %v309
    %v2214 = vunpack.c.h.b16 %v309
    %v2215 = vunpack.c.l.b16 %v310
    %v2216 = vunpack.c.h.b16 %v310
    %v2217 = vunpack.c.l.b16 %v311
    %v2218 = vunpack.c.h.b16 %v311
    %v2219 = vunpack.c.l.b16 %v312
    %v2220 = vunpack.c.h.b16 %v312
    %v2221 = vunpack.c.l.b16 %v313
    %v2222 = vunpack.c.h.b16 %v313
    %v2223 = vunpack.c.l.b16 %v314
    %v2224 = vunpack.c.h.b16 %v314
    %v2225 = vunpack.c.l.b16 %v315
    %v2226 = vunpack.c.h.b16 %v315
    %v2227 = vunpack.c.l.b16 %v316
    %v2228 = vunpack.c.h.b16 %v316
    %v2229 = vunpack.c.l.b16 %v317
    %v2230 = vunpack.c.h.b16 %v317
    %v2231 = vunpack.c.l.b16 %v318
    %v2232 = vunpack.c.h.b16 %v318
    %v2233 = vunpack.c.l.b16 %v319
    %v2234 = vunpack.c.h.b16 %v319
    %v2235 = vunpack.c.l.b16 %v320
    %v2236 = vunpack.c.h.b16 %v320
    %v2237 = vunpack.c.l.b16 %v321
    %v2238 = vunpack.c.h.b16 %v321
    %v2239 = vunpack.c.l.b16 %v322
    %v2240 = vunpack.c.h.b16 %v322
    %v2241 = vunpack.c.l.b16 %v323
    %v2242 = vunpack.c.h.b16 %v323
    %v2243 = vunpack.c.l.b16 %v324
    %v2244 = vunpack.c.h.b16 %v324
    %v2245 = vunpack.c.l.b16 %v325
    %v2246 = vunpack.c.h.b16 %v325
    %v2247 = vunpack.c.l.b16 %v326
    %v2248 = vunpack.c.h.b16 %v326
    %v2249 = vunpack.c.l.b16 %v327
    %v2250 = vunpack.c.h.b16 %v327
    %v2251 = vunpack.c.l.b16 %v328
    %v2252 = vunpack.c.h.b16 %v328
    %v2253 = vunpack.c.l.b16 %v329
    %v2254 = vunpack.c.h.b16 %v329
    %v2255 = vunpack.c.l.b16 %v330
    %v2256 = vunpack.c.h.b16 %v330
    %v2257 = vunpack.c.l.b16 %v331
    %v2258 = vunpack.c.h.b16 %v331
    %v2259 = vunpack.c.l.b16 %v332
    %v2260 = vunpack.c.h.b16 %v332
    %v2261 = vunpack.c.l.b16 %v333
    %v2262 = vunpack.c.h.b16 %v333
    %v2263 = vunpack.c.l.b16 %v334
    %v2264 = vunpack.c.h.b16 %v334
    %v2265 = vunpack.c.l.b16 %v335
    %v2266 = vunpack.c.h.b16 %v335
    %v2267 = vunpack.c.l.b16 %v336
    %v2268 = vunpack.c.h.b16 %v336
    %v2269 = vunpack.c.l.b16 %v337
    %v2270 = vunpack.c.h.b16 %v337
    %v2271 = vunpack.c.l.b16 %v338
    %v2272 = vunpack.c.h.b16 %v338
    %v2273 = vunpack.c.l.b16 %v339
    %v2274 = vunpack.c.h.b16 %v339
    %v2275 = vunpack.c.l.b16 %v340
    %v2276 = vunpack.c.h.b16 %v340
    %v2277 = vunpack.c.l.b16 %v341
    %v2278 = vunpack.c.h.b16 %v341
    %v2279 = vunpack.c.l.b16 %v342
    %v2280 = vunpack.c.h.b16 %v342
    %v2281 = vunpack.c.l.b16 %v343
    %v2282 = vunpack.c.h.b16 %v343
    %v2283 = vunpack.c.l.b16 %v344
    %v2284 = vunpack.c.h.b16 %v344
    %v2285 = vunpack.c.l.b16 %v345
    %v2286 = vunpack.c.h.b16 %v345
    %v2287 = vunpack.c.l.b16 %v346
    %v2288 = vunpack.c.h.b16 %v346
    %v2289 = vunpack.c.l.b16 %v347
    %v2290 = vunpack.c.h.b16 %v347
    %v2291 = vunpack.c.l.b16 %v348
    %v2292 = vunpack.c.h.b16 %v348
    %v2293 = vunpack.c.l.b16 %v349
    %v2294 = vunpack.c.h.b16 %v349
    %v2295 = vunpack.c.l.b16 %v350
    %v2296 = vunpack.c.h.b16 %v350
    %v2297 = vunpack.c.l.b16 %v351
    %v2298 = vunpack.c.h.b16 %v351
    %v2299 = vunpack.c.l.b16 %v352
    %v2300 = vunpack.c.h.b16 %v352
    %v2301 = vunpack.c.l.b16 %v353
    %v2302 = vunpack.c.h.b16 %v353
    %v2303 = vunpack.c.l.b16 %v354
    %v2304 = vunpack.c.h.b16 %v354
    %v2305 = vunpack.c.l.b16 %v355
    %v2306 = vunpack.c.h.b16 %v355
    %v2307 = vunpack.c.l.b16 %v356
    %v2308 = vunpack.c.h.b16 %v356
    %v2309 = vunpack.c.l.b16 %v357
    %v2310 = vunpack.c.h.b16 %v357
    %v2311 = vunpack.c.l.b16 %v358
    %v2312 = vunpack.c.h.b16 %v358
    %v2313 = vunpack.c.l.b16 %v359
    %v2314 = vunpack.c.h.b16 %v359
    %v2315 = vunpack.c.l.b16 %v360
    %v2316 = vunpack.c.h.b16 %v360
    %v2317 = vunpack.c.l.b16 %v361
    %v2318 = vunpack.c.h.b16 %v361
    %v2319 = vunpack.c.l.b16 %v362
    %v2320 = vunpack.c.h.b16 %v362
    %v2321 = vunpack.c.l.b16 %v363
    %v2322 = vunpack.c.h.b16 %v363
    %v2323 = vunpack.c.l.b16 %v364
    %v2324 = vunpack.c.h.b16 %v364
    %v2325 = vunpack.c.l.b16 %v365
    %v2326 = vunpack.c.h.b16 %v365
    %v2327 = vunpack.c.l.b16 %v366
    %v2328 = vunpack.c.h.b16 %v366
    %v2329 = vunpack.c.l.b16 %v367
    %v2330 = vunpack.c.h.b16 %v367
    %v2331 = vunpack.c.l.b16 %v368
    %v2332 = vunpack.c.h.b16 %v368
    %v2333 = vunpack.c.l.b16 %v369
    %v2334 = vunpack.c.h.b16 %v369
    %v2335 = vunpack.c.l.b16 %v370
    %v2336 = vunpack.c.h.b16 %v370
    %v2337 = vunpack.c.l.b16 %v371
    %v2338 = vunpack.c.h.b16 %v371
    %v2339 = vunpack.c.l.b16 %v372
    %v2340 = vunpack.c.h.b16 %v372
    %v2341 = vunpack.c.l.b16 %v373
    %v2342 = vunpack.c.h.b16 %v373
    %v2343 = vunpack.c.l.b16 %v374
    %v2344 = vunpack.c.h.b16 %v374
    %v2345 = vunpack.c.l.b16 %v375
    %v2346 = vunpack.c.h.b16 %v375
    %v2347 = vunpack.c.l.b16 %v376
    %v2348 = vunpack.c.h.b16 %v376
    %v2349 = vunpack.c.l.b16 %v377
    %v2350 = vunpack.c.h.b16 %v377
    %v2351 = vunpack.c.l.b16 %v378
    %v2352 = vunpack.c.h.b16 %v378
    %v2353 = vunpack.c.l.b16 %v379
    %v2354 = vunpack.c.h.b16 %v379
    %v2355 = vunpack.c.l.b16 %v380
    %v2356 = vunpack.c.h.b16 %v380
    %v2357 = vunpack.c.l.b16 %v381
    %v2358 = vunpack.c.h.b16 %v381
    %v2359 = vunpack.c.l.b16 %v382
    %v2360 = vunpack.c.h.b16 %v382
    %v2361 = vunpack.c.l.b16 %v383
    %v2362 = vunpack.c.h.b16 %v383
    %v2363 = vunpack.c.l.b16 %v384
    %v2364 = vunpack.c.h.b16 %v384
    %v2365 = vunpack.c.l.b16 %v385
    %v2366 = vunpack.c.h.b16 %v385
    %v2367 = vunpack.c.l.b16 %v386
    %v2368 = vunpack.c.h.b16 %v386
    %v2369 = vunpack.c.l.b16 %v387
    %v2370 = vunpack.c.h.b16 %v387
    %v2371 = vunpack.c.l.b16 %v388
    %v2372 = vunpack.c.h.b16 %v388
    %v2373 = vunpack.c.l.b16 %v389
    %v2374 = vunpack.c.h.b16 %v389
    %v2375 = vunpack.c.l.b16 %v390
    %v2376 = vunpack.c.h.b16 %v390
    %v2377 = vunpack.c.l.b16 %v391
    %v2378 = vunpack.c.h.b16 %v391
    %v2379 = vunpack.c.l.b16 %v392
    %v2380 = vunpack.c.h.b16 %v392
    %v2381 = vunpack.c.l.b16 %v393
    %v2382 = vunpack.c.h.b16 %v393
    %v2383 = vunpack.c.l.b16 %v394
    %v2384 = vunpack.c.h.b16 %v394
    %v2385 = vunpack.c.l.b16 %v395
    %v2386 = vunpack.c.h.b16 %v395
    %v2387 = vunpack.c.l.b16 %v396
    %v2388 = vunpack.c.h.b16 %v396
    %v2389 = vunpack.c.l.b16 %v397
    %v2390 = vunpack.c.h.b16 %v397
    %v2391 = vunpack.c.l.b16 %v398
    %v2392 = vunpack.c.h.b16 %v398
    %v2393 = vunpack.c.l.b16 %v399
    %v2394 = vunpack.c.h.b16 %v399
    %v2395 = vunpack.c.l.b16 %v400
    %v2396 = vunpack.c.h.b16 %v400
    %v2397 = vunpack.c.l.b16 %v401
    %v2398 = vunpack.c.h.b16 %v401
    %v2399 = vunpack.c.l.b16 %v402
    %v2400 = vunpack.c.h.b16 %v402
    %v2401 = vunpack.c.l.b16 %v403
    %v2402 = vunpack.c.h.b16 %v403
    %v2403 = vunpack.c.l.b16 %v404
    %v2404 = vunpack.c.h.b16 %v404
    %v2405 = vunpack.c.l.b16 %v405
    %v2406 = vunpack.c.h.b16 %v405
    %v2407 = vunpack.c.l.b16 %v406
    %v2408 = vunpack.c.h.b16 %v406
    %v2409 = vunpack.c.l.b16 %v407
    %v2410 = vunpack.c.h.b16 %v407
    %v2411 = vunpack.c.l.b16 %v408
    %v2412 = vunpack.c.h.b16 %v408
    %v2413 = vunpack.c.l.b16 %v409
    %v2414 = vunpack.c.h.b16 %v409
    %v2415 = vunpack.c.l.b16 %v410
    %v2416 = vunpack.c.h.b16 %v410
    %v2417 = vunpack.c.l.b16 %v411
    %v2418 = vunpack.c.h.b16 %v411
    %v2419 = vunpack.c.l.b16 %v412
    %v2420 = vunpack.c.h.b16 %v412
    %v2421 = vunpack.c.l.b16 %v413
    %v2422 = vunpack.c.h.b16 %v413
    %v2423 = vunpack.c.l.b16 %v414
    %v2424 = vunpack.c.h.b16 %v414
    %v2425 = vunpack.c.l.b16 %v415
    %v2426 = vunpack.c.h.b16 %v415
    %v2427 = vunpack.c.l.b16 %v416
    %v2428 = vunpack.c.h.b16 %v416
    %v2429 = vunpack.c.l.b16 %v417
    %v2430 = vunpack.c.h.b16 %v417
    %v2431 = vunpack.c.l.b16 %v418
    %v2432 = vunpack.c.h.b16 %v418
    %v2433 = vunpack.c.l.b16 %v419
    %v2434 = vunpack.c.h.b16 %v419
    %v2435 = vunpack.c.l.b16 %v420
    %v2436 = vunpack.c.h.b16 %v420
    %v2437 = vunpack.c.l.b16 %v421
    %v2438 = vunpack.c.h.b16 %v421
    %v2439 = vunpack.c.l.b16 %v422
    %v2440 = vunpack.c.h.b16 %v422
    %v2441 = vunpack.c.l.b16 %v423
    %v2442 = vunpack.c.h.b16 %v423
    %v2443 = vunpack.c.l.b16 %v424
    %v2444 = vunpack.c.h.b16 %v424
    %v2445 = vunpack.c.l.b16 %v425
    %v2446 = vunpack.c.h.b16 %v425
    %v2447 = vunpack.c.l.b16 %v426
    %v2448 = vunpack.c.h.b16 %v426
    %v2449 = vunpack.c.l.b16 %v427
    %v2450 = vunpack.c.h.b16 %v427
    %v2451 = vunpack.c.l.b16 %v428
    %v2452 = vunpack.c.h.b16 %v428
    %v2453 = vunpack.c.l.b16 %v429
    %v2454 = vunpack.c.h.b16 %v429
    %v2455 = vunpack.c.l.b16 %v430
    %v2456 = vunpack.c.h.b16 %v430
    %v2457 = vunpack.c.l.b16 %v431
    %v2458 = vunpack.c.h.b16 %v431
    %v2459 = vunpack.c.l.b16 %v432
    %v2460 = vunpack.c.h.b16 %v432
    %v2461 = vunpack.c.l.b16 %v433
    %v2462 = vunpack.c.h.b16 %v433
    %v2463 = vunpack.c.l.b16 %v434
    %v2464 = vunpack.c.h.b16 %v434
    %v2465 = vunpack.c.l.b16 %v435
    %v2466 = vunpack.c.h.b16 %v435
    %v2467 = vunpack.c.l.b16 %v436
    %v2468 = vunpack.c.h.b16 %v436
    %v2469 = vunpack.c.l.b16 %v437
    %v2470 = vunpack.c.h.b16 %v437
    %v2471 = vunpack.c.l.b16 %v438
    %v2472 = vunpack.c.h.b16 %v438
    %v2473 = vunpack.c.l.b16 %v439
    %v2474 = vunpack.c.h.b16 %v439
    %v2475 = vunpack.c.l.b16 %v440
    %v2476 = vunpack.c.h.b16 %v440
    %v2477 = vunpack.c.l.b16 %v441
    %v2478 = vunpack.c.h.b16 %v441
    %v2479 = vunpack.c.l.b16 %v442
    %v2480 = vunpack.c.h.b16 %v442
    %v2481 = vunpack.c.l.b16 %v443
    %v2482 = vunpack.c.h.b16 %v443
    %v2483 = vunpack.c.l.b16 %v444
    %v2484 = vunpack.c.h.b16 %v444
    %v2485 = vunpack.c.l.b16 %v445
    %v2486 = vunpack.c.h.b16 %v445
    %v2487 = vunpack.c.l.b16 %v446
    %v2488 = vunpack.c.h.b16 %v446
    %v2489 = vunpack.c.l.b16 %v447
    %v2490 = vunpack.c.h.b16 %v447
    %v2491 = vunpack.c.l.b16 %v448
    %v2492 = vunpack.c.h.b16 %v448
    %v2493 = vpack.c.b16 %v2115, %v2109
    %v2494 = vpack.c.b16 %v2116, %v2110
    %v2495 = vpack.c.b16 %v2117, %v2111
    %v2496 = vpack.c.b16 %v2118, %v2112
    %v2497 = vpack.c.b16 %v2119, %v2113
    %v2498 = vpack.c.b16 %v2120, %v2114
    %v2499 = vpack.c.b16 %v2127, %v2121
    %v2500 = vpack.c.b16 %v2128, %v2122
    %v2501 = vpack.c.b16 %v2129, %v2123
    %v2502 = vpack.c.b16 %v2130, %v2124
    %v2503 = vpack.c.b16 %v2131, %v2125
    %v2504 = vpack.c.b16 %v2132, %v2126
    %v2505 = vpack.c.b16 %v2139, %v2133
    %v2506 = vpack.c.b16 %v2140, %v2134
    %v2507 = vpack.c.b16 %v2141, %v2135
    %v2508 = vpack.c.b16 %v2142, %v2136
    %v2509 = vpack.c.b16 %v2143, %v2137
    %v2510 = vpack.c.b16 %v2144, %v2138
    %v2511 = vpack.c.b16 %v2151, %v2145
    %v2512 = vpack.c.b16 %v2152, %v2146
    %v2513 = vpack.c.b16 %v2153, %v2147
    %v2514 = vpack.c.b16 %v2154, %v2148
    %v2515 = vpack.c.b16 %v2155, %v2149
    %v2516 = vpack.c.b16 %v2156, %v2150
    %v2517 = vpack.c.b16 %v2163, %v2157
    %v2518 = vpack.c.b16 %v2164, %v2158
    %v2519 = vpack.c.b16 %v2165, %v2159
    %v2520 = vpack.c.b16 %v2166, %v2160
    %v2521 = vpack.c.b16 %v2167, %v2161
    %v2522 = vpack.c.b16 %v2168, %v2162
    %v2523 = vpack.c.b16 %v2175, %v2169
    %v2524 = vpack.c.b16 %v2176, %v2170
    %v2525 = vpack.c.b16 %v2177, %v2171
    %v2526 = vpack.c.b16 %v2178, %v2172
    %v2527 = vpack.c.b16 %v2179, %v2173
    %v2528 = vpack.c.b16 %v2180, %v2174
    %v2529 = vpack.c.b16 %v2187, %v2181
    %v2530 = vpack.c.b16 %v2188, %v2182
    %v2531 = vpack.c.b16 %v2189, %v2183
    %v2532 = vpack.c.b16 %v2190, %v2184
    %v2533 = vpack.c.b16 %v2191, %v2185
    %v2534 = vpack.c.b16 %v2192, %v2186
    %v2535 = vpack.c.b16 %v2199, %v2193
    %v2536 = vpack.c.b16 %v2200, %v2194
    %v2537 = vpack.c.b16 %v2201, %v2195
    %v2538 = vpack.c.b16 %v2202, %v2196
    %v2539 = vpack.c.b16 %v2203, %v2197
    %v2540 = vpack.c.b16 %v2204, %v2198
    %v2541 = vpack.c.b16 %v2211, %v2205
    %v2542 = vpack.c.b16 %v2212, %v2206
    %v2543 = vpack.c.b16 %v2213, %v2207
    %v2544 = vpack.c.b16 %v2214, %v2208
    %v2545 = vpack.c.b16 %v2215, %v2209
    %v2546 = vpack.c.b16 %v2216, %v2210
    %v2547 = vpack.c.b16 %v2223, %v2217
    %v2548 = vpack.c.b16 %v2224, %v2218
    %v2549 = vpack.c.b16 %v2225, %v2219
    %v2550 = vpack.c.b16 %v2226, %v2220
    %v2551 = vpack.c.b16 %v2227, %v2221
    %v2552 = vpack.c.b16 %v2228, %v2222
    %v2553 = vpack.c.b16 %v2235, %v2229
    %v2554 = vpack.c.b16 %v2236, %v2230
    %v2555 = vpack.c.b16 %v2237, %v2231
    %v2556 = vpack.c.b16 %v2238, %v2232
    %v2557 = vpack.c.b16 %v2239, %v2233
    %v2558 = vpack.c.b16 %v2240, %v2234
    %v2559 = vpack.c.b16 %v2247, %v2241
    %v2560 = vpack.c.b16 %v2248, %v2242
    %v2561 = vpack.c.b16 %v2249, %v2243
    %v2562 = vpack.c.b16 %v2250, %v2244
    %v2563 = vpack.c.b16 %v2251, %v2245
    %v2564 = vpack.c.b16 %v2252, %v2246
    %v2565 = vpack.c.b16 %v2259, %v2253
    %v2566 = vpack.c.b16 %v2260, %v2254
    %v2567 = vpack.c.b16 %v2261, %v2255
    %v2568 = vpack.c.b16 %v2262, %v2256
    %v2569 = vpack.c.b16 %v2263, %v2257
    %v2570 = vpack.c.b16 %v2264, %v2258
    %v2571 = vpack.c.b16 %v2271, %v2265
    %v2572 = vpack.c.b16 %v2272, %v2266
    %v2573 = vpack.c.b16 %v2273, %v2267
    %v2574 = vpack.c.b16 %v2274, %v2268
    %v2575 = vpack.c.b16 %v2275, %v2269
    %v2576 = vpack.c.b16 %v2276, %v2270
    %v2577 = vpack.c.b16 %v2283, %v2277
    %v2578 = vpack.c.b16 %v2284, %v2278
    %v2579 = vpack.c.b16 %v2285, %v2279
    %v2580 = vpack.c.b16 %v2286, %v2280
    %v2581 = vpack.c.b16 %v2287, %v2281
    %v2582 = vpack.c.b16 %v2288, %v2282
    %v2583 = vpack.c.b16 %v2295, %v2289
    %v2584 = vpack.c.b16 %v2296, %v2290
    %v2585 = vpack.c.b16 %v2297, %v2291
    %v2586 = vpack.c.b16 %v2298, %v2292
    %v2587 = vpack.c.b16 %v2299, %v2293
    %v2588 = vpack.c.b16 %v2300, %v2294
    %v2589 = vpack.c.b16 %v2307, %v2301
    %v2590 = vpack.c.b16 %v2308, %v2302
    %v2591 = vpack.c.b16 %v2309, %v2303
    %v2592 = vpack.c.b16 %v2310, %v2304
    %v2593 = vpack.c.b16 %v2311, %v2305
    %v2594 = vpack.c.b16 %v2312, %v2306
    %v2595 = vpack.c.b16 %v2319, %v2313
    %v2596 = vpack.c.b16 %v2320, %v2314
    %v2597 = vpack.c.b16 %v2321, %v2315
    %v2598 = vpack.c.b16 %v2322, %v2316
    %v2599 = vpack.c.b16 %v2323, %v2317
    %v2600 = vpack.c.b16 %v2324, %v2318
    %v2601 = vpack.c.b16 %v2331, %v2325
    %v2602 = vpack.c.b16 %v2332, %v2326
    %v2603 = vpack.c.b16 %v2333, %v2327
    %v2604 = vpack.c.b16 %v2334, %v2328
    %v2605 = vpack.c.b16 %v2335, %v2329
    %v2606 = vpack.c.b16 %v2336, %v2330
    %v2607 = vpack.c.b16 %v2343, %v2337
    %v2608 = vpack.c.b16 %v2344, %v2338
    %v2609 = vpack.c.b16 %v2345, %v2339
    %v2610 = vpack.c.b16 %v2346, %v2340
    %v2611 = vpack.c.b16 %v2347, %v2341
    %v2612 = vpack.c.b16 %v2348, %v2342
    %v2613 = vpack.c.b16 %v2355, %v2349
    %v2614 = vpack.c.b16 %v2356, %v2350
    %v2615 = vpack.c.b16 %v2357, %v2351
    %v2616 = vpack.c.b16 %v2358, %v2352
    %v2617 = vpack.c.b16 %v2359, %v2353
    %v2618 = vpack.c.b16 %v2360, %v2354
    %v2619 = vpack.c.b16 %v2367, %v2361
    %v2620 = vpack.c.b16 %v2368, %v2362
    %v2621 = vpack.c.b16 %v2369, %v2363
    %v2622 = vpack.c.b16 %v2370, %v2364
    %v2623 = vpack.c.b16 %v2371, %v2365
    %v2624 = vpack.c.b16 %v2372, %v2366
    %v2625 = vpack.c.b16 %v2379, %v2373
    %v2626 = vpack.c.b16 %v2380, %v2374
    %v2627 = vpack.c.b16 %v2381, %v2375
    %v2628 = vpack.c.b16 %v2382, %v2376
    %v2629 = vpack.c.b16 %v2383, %v2377
    %v2630 = vpack.c.b16 %v2384, %v2378
    %v2631 = vpack.c.b16 %v2391, %v2385
    %v2632 = vpack.c.b16 %v2392, %v2386
    %v2633 = vpack.c.b16 %v2393, %v2387
    %v2634 = vpack.c.b16 %v2394, %v2388
    %v2635 = vpack.c.b16 %v2395, %v2389
    %v2636 = vpack.c.b16 %v2396, %v2390
    %v2637 = vpack.c.b16 %v2403, %v2397
    %v2638 = vpack.c.b16 %v2404, %v2398
    %v2639 = vpack.c.b16 %v2405, %v2399
    %v2640 = vpack.c.b16 %v2406, %v2400
    %v2641 = vpack.c.b16 %v2407, %v2401
    %v2642 = vpack.c.b16 %v2408, %v2402
    %v2643 = vpack.c.b16 %v2415, %v2409
    %v2644 = vpack.c.b16 %v2416, %v2410
    %v2645 = vpack.c.b16 %v2417, %v2411
    %v2646 = vpack.c.b16 %v2418, %v2412
    %v2647 = vpack.c.b16 %v2419, %v2413
    %v2648 = vpack.c.b16 %v2420, %v2414
    %v2649 = vpack.c.b16 %v2427, %v2421
    %v2650 = vpack.c.b16 %v2428, %v2422
    %v2651 = vpack.c.b16 %v2429, %v2423
    %v2652 = vpack.c.b16 %v2430, %v2424
    %v2653 = vpack.c.b16 %v2431, %v2425
    %v2654 = vpack.c.b16 %v2432, %v2426
    %v2655 = vpack.c.b16 %v2439, %v2433
    %v2656 = vpack.c.b16 %v2440, %v2434
    %v2657 = vpack.c.b16 %v2441, %v2435
    %v2658 = vpack.c.b16 %v2442, %v2436
    %v2659 = vpack.c.b16 %v2443, %v2437
    %v2660 = vpack.c.b16 %v2444, %v2438
    %v2661 = vpack.c.b16 %v2451, %v2445
    %v2662 = vpack.c.b16 %v2452, %v2446
    %v2663 = vpack.c.b16 %v2453, %v2447
    %v2664 = vpack.c.b16 %v2454, %v2448
    %v2665 = vpack.c.b16 %v2455, %v2449
    %v2666 = vpack.c.b16 %v2456, %v2450
    %v2667 = vpack.c.b16 %v2463, %v2457
    %v2668 = vpack.c.b16 %v2464, %v2458
    %v2669 = vpack.c.b16 %v2465, %v2459
    %v2670 = vpack.c.b16 %v2466, %v2460
    %v2671 = vpack.c.b16 %v2467, %v2461
    %v2672 = vpack.c.b16 %v2468, %v2462
    %v2673 = vpack.c.b16 %v2475, %v2469
    %v2674 = vpack.c.b16 %v2476, %v2470
    %v2675 = vpack.c.b16 %v2477, %v2471
    %v2676 = vpack.c.b16 %v2478, %v2472
    %v2677 = vpack.c.b16 %v2479, %v2473
    %v2678 = vpack.c.b16 %v2480, %v2474
    %v2679 = vpack.c.b16 %v2487, %v2481
    %v2680 = vpack.c.b16 %v2488, %v2482
    %v2681 = vpack.c.b16 %v2489, %v2483
    %v2682 = vpack.c.b16 %v2490, %v2484
    %v2683 = vpack.c.b16 %v2491, %v2485
    %v2684 = vpack.c.b16 %v2492, %v2486
    %2877 = vmatpush.bf16.msra.mxu0 %v2535
    %2878 = vmatpush.bf16.msra.mxu0 %v2529
    %2879 = vmatpush.bf16.msra.mxu0 %v2523
    %2880 = vmatpush.bf16.msra.mxu0 %v2517
    %2881 = vmatpush.bf16.msra.mxu0 %v2511
    %2882 = vmatpush.bf16.msra.mxu0 %v2505
    %2883 = vmatpush.bf16.msra.mxu0 %v2499
    %2884 = vmatpush.bf16.msra.mxu0 %v2493
    %2885 = vmatmul.bf16.gmra.mxu0 %v253
    %v2886 = vpop.f32.mrf.mxu0
    %v2887 = vadd.f32 %v1654, %v2886
    %v2888 = vpop.f32.mrf.mxu0
    %2889 = vdwg.mxu0
    %2890 = vmatpush.bf16.msra.mxu0 %v2583
    %2891 = vmatpush.bf16.msra.mxu0 %v2577
    %2892 = vmatpush.bf16.msra.mxu0 %v2571
    %2893 = vmatpush.bf16.msra.mxu0 %v2565
    %2894 = vmatpush.bf16.msra.mxu0 %v2559
    %2895 = vmatpush.bf16.msra.mxu0 %v2553
    %2896 = vmatpush.bf16.msra.mxu0 %v2547
    %2897 = vmatpush.bf16.msra.mxu0 %v2541
    %2898 = vmatmul.bf16.gmra.mxu0 %v254
    %v2899 = vpop.f32.mrf.mxu0
    %v2900 = vadd.f32 %v2887, %v2899
    %v2901 = vpop.f32.mrf.mxu0
    %2902 = vdwg.mxu0
    %2903 = vmatpush.bf16.msra.mxu0 %v2631
    %2904 = vmatpush.bf16.msra.mxu0 %v2625
    %2905 = vmatpush.bf16.msra.mxu0 %v2619
    %2906 = vmatpush.bf16.msra.mxu0 %v2613
    %2907 = vmatpush.bf16.msra.mxu0 %v2607
    %2908 = vmatpush.bf16.msra.mxu0 %v2601
    %2909 = vmatpush.bf16.msra.mxu0 %v2595
    %2910 = vmatpush.bf16.msra.mxu0 %v2589
    %2911 = vmatmul.bf16.gmra.mxu0 %v255
    %v2912 = vpop.f32.mrf.mxu0
    %v2913 = vadd.f32 %v2900, %v2912
    %v2914 = vpop.f32.mrf.mxu0
    %2915 = vdwg.mxu0
    %2916 = vmatpush.bf16.msra.mxu0 %v2679
    %2917 = vmatpush.bf16.msra.mxu0 %v2673
    %2918 = vmatpush.bf16.msra.mxu0 %v2667
    %2919 = vmatpush.bf16.msra.mxu0 %v2661
    %2920 = vmatpush.bf16.msra.mxu0 %v2655
    %2921 = vmatpush.bf16.msra.mxu0 %v2649
    %2922 = vmatpush.bf16.msra.mxu0 %v2643
    %2923 = vmatpush.bf16.msra.mxu0 %v2637
    %2924 = vmatmul.bf16.gmra.mxu0 %v256
    %v2925 = vpop.f32.mrf.mxu0
    %v2926 = vadd.f32 %v2913, %v2925
    %v2927 = vpop.f32.mrf.mxu0
    %2928 = vdwg.mxu0
    %2929 = vmatpush.bf16.msra.mxu0 %v2536
    %2930 = vmatpush.bf16.msra.mxu0 %v2530
    %2931 = vmatpush.bf16.msra.mxu0 %v2524
    %2932 = vmatpush.bf16.msra.mxu0 %v2518
    %2933 = vmatpush.bf16.msra.mxu0 %v2512
    %2934 = vmatpush.bf16.msra.mxu0 %v2506
    %2935 = vmatpush.bf16.msra.mxu0 %v2500
    %2936 = vmatpush.bf16.msra.mxu0 %v2494
    %2937 = vmatmul.bf16.gmra.mxu0 %v253
    %v2938 = vpop.f32.mrf.mxu0
    %v2939 = vadd.f32 %v1706, %v2938
    %v2940 = vpop.f32.mrf.mxu0
    %2941 = vdwg.mxu0
    %2942 = vmatpush.bf16.msra.mxu0 %v2584
    %2943 = vmatpush.bf16.msra.mxu0 %v2578
    %2944 = vmatpush.bf16.msra.mxu0 %v2572
    %2945 = vmatpush.bf16.msra.mxu0 %v2566
    %2946 = vmatpush.bf16.msra.mxu0 %v2560
    %2947 = vmatpush.bf16.msra.mxu0 %v2554
    %2948 = vmatpush.bf16.msra.mxu0 %v2548
    %2949 = vmatpush.bf16.msra.mxu0 %v2542
    %2950 = vmatmul.bf16.gmra.mxu0 %v254
    %v2951 = vpop.f32.mrf.mxu0
    %v2952 = vadd.f32 %v2939, %v2951
    %v2953 = vpop.f32.mrf.mxu0
    %2954 = vdwg.mxu0
    %2955 = vmatpush.bf16.msra.mxu0 %v2632
    %2956 = vmatpush.bf16.msra.mxu0 %v2626
    %2957 = vmatpush.bf16.msra.mxu0 %v2620
    %2958 = vmatpush.bf16.msra.mxu0 %v2614
    %2959 = vmatpush.bf16.msra.mxu0 %v2608
    %2960 = vmatpush.bf16.msra.mxu0 %v2602
    %2961 = vmatpush.bf16.msra.mxu0 %v2596
    %2962 = vmatpush.bf16.msra.mxu0 %v2590
    %2963 = vmatmul.bf16.gmra.mxu0 %v255
    %v2964 = vpop.f32.mrf.mxu0
    %v2965 = vadd.f32 %v2952, %v2964
    %v2966 = vpop.f32.mrf.mxu0
    %2967 = vdwg.mxu0
    %2968 = vmatpush.bf16.msra.mxu0 %v2680
    %2969 = vmatpush.bf16.msra.mxu0 %v2674
    %2970 = vmatpush.bf16.msra.mxu0 %v2668
    %2971 = vmatpush.bf16.msra.mxu0 %v2662
    %2972 = vmatpush.bf16.msra.mxu0 %v2656
    %2973 = vmatpush.bf16.msra.mxu0 %v2650
    %2974 = vmatpush.bf16.msra.mxu0 %v2644
    %2975 = vmatpush.bf16.msra.mxu0 %v2638
    %2976 = vmatmul.bf16.gmra.mxu0 %v256
    %v2977 = vpop.f32.mrf.mxu0
    %v2978 = vadd.f32 %v2965, %v2977
    %v2979 = vpop.f32.mrf.mxu0
    %2980 = vdwg.mxu0
    %2981 = vmatpush.bf16.msra.mxu0 %v2537
    %2982 = vmatpush.bf16.msra.mxu0 %v2531
    %2983 = vmatpush.bf16.msra.mxu0 %v2525
    %2984 = vmatpush.bf16.msra.mxu0 %v2519
    %2985 = vmatpush.bf16.msra.mxu0 %v2513
    %2986 = vmatpush.bf16.msra.mxu0 %v2507
    %2987 = vmatpush.bf16.msra.mxu0 %v2501
    %2988 = vmatpush.bf16.msra.mxu0 %v2495
    %2989 = vmatmul.bf16.gmra.mxu0 %v253
    %v2990 = vpop.f32.mrf.mxu0
    %v2991 = vadd.f32 %v1758, %v2990
    %v2992 = vpop.f32.mrf.mxu0
    %2993 = vdwg.mxu0
    %2994 = vmatpush.bf16.msra.mxu0 %v2585
    %2995 = vmatpush.bf16.msra.mxu0 %v2579
    %2996 = vmatpush.bf16.msra.mxu0 %v2573
    %2997 = vmatpush.bf16.msra.mxu0 %v2567
    %2998 = vmatpush.bf16.msra.mxu0 %v2561
    %2999 = vmatpush.bf16.msra.mxu0 %v2555
    %3000 = vmatpush.bf16.msra.mxu0 %v2549
    %3001 = vmatpush.bf16.msra.mxu0 %v2543
    %3002 = vmatmul.bf16.gmra.mxu0 %v254
    %v3003 = vpop.f32.mrf.mxu0
    %v3004 = vadd.f32 %v2991, %v3003
    %v3005 = vpop.f32.mrf.mxu0
    %3006 = vdwg.mxu0
    %3007 = vmatpush.bf16.msra.mxu0 %v2633
    %3008 = vmatpush.bf16.msra.mxu0 %v2627
    %3009 = vmatpush.bf16.msra.mxu0 %v2621
    %3010 = vmatpush.bf16.msra.mxu0 %v2615
    %3011 = vmatpush.bf16.msra.mxu0 %v2609
    %3012 = vmatpush.bf16.msra.mxu0 %v2603
    %3013 = vmatpush.bf16.msra.mxu0 %v2597
    %3014 = vmatpush.bf16.msra.mxu0 %v2591
    %3015 = vmatmul.bf16.gmra.mxu0 %v255
    %v3016 = vpop.f32.mrf.mxu0
    %v3017 = vadd.f32 %v3004, %v3016
    %v3018 = vpop.f32.mrf.mxu0
    %3019 = vdwg.mxu0
    %3020 = vmatpush.bf16.msra.mxu0 %v2681
    %3021 = vmatpush.bf16.msra.mxu0 %v2675
    %3022 = vmatpush.bf16.msra.mxu0 %v2669
    %3023 = vmatpush.bf16.msra.mxu0 %v2663
    %3024 = vmatpush.bf16.msra.mxu0 %v2657
    %3025 = vmatpush.bf16.msra.mxu0 %v2651
    %3026 = vmatpush.bf16.msra.mxu0 %v2645
    %3027 = vmatpush.bf16.msra.mxu0 %v2639
    %3028 = vmatmul.bf16.gmra.mxu0 %v256
    %v3029 = vpop.f32.mrf.mxu0
    %v3030 = vadd.f32 %v3017, %v3029
    %v3031 = vpop.f32.mrf.mxu0
    %3032 = vdwg.mxu0
    %3033 = vmatpush.bf16.msra.mxu0 %v2538
    %3034 = vmatpush.bf16.msra.mxu0 %v2532
    %3035 = vmatpush.bf16.msra.mxu0 %v2526
    %3036 = vmatpush.bf16.msra.mxu0 %v2520
    %3037 = vmatpush.bf16.msra.mxu0 %v2514
    %3038 = vmatpush.bf16.msra.mxu0 %v2508
    %3039 = vmatpush.bf16.msra.mxu0 %v2502
    %3040 = vmatpush.bf16.msra.mxu0 %v2496
    %3041 = vmatmul.bf16.gmra.mxu0 %v253
    %v3042 = vpop.f32.mrf.mxu0
    %v3043 = vadd.f32 %v1810, %v3042
    %v3044 = vpop.f32.mrf.mxu0
    %3045 = vdwg.mxu0
    %3046 = vmatpush.bf16.msra.mxu0 %v2586
    %3047 = vmatpush.bf16.msra.mxu0 %v2580
    %3048 = vmatpush.bf16.msra.mxu0 %v2574
    %3049 = vmatpush.bf16.msra.mxu0 %v2568
    %3050 = vmatpush.bf16.msra.mxu0 %v2562
    %3051 = vmatpush.bf16.msra.mxu0 %v2556
    %3052 = vmatpush.bf16.msra.mxu0 %v2550
    %3053 = vmatpush.bf16.msra.mxu0 %v2544
    %3054 = vmatmul.bf16.gmra.mxu0 %v254
    %v3055 = vpop.f32.mrf.mxu0
    %v3056 = vadd.f32 %v3043, %v3055
    %v3057 = vpop.f32.mrf.mxu0
    %3058 = vdwg.mxu0
    %3059 = vmatpush.bf16.msra.mxu0 %v2634
    %3060 = vmatpush.bf16.msra.mxu0 %v2628
    %3061 = vmatpush.bf16.msra.mxu0 %v2622
    %3062 = vmatpush.bf16.msra.mxu0 %v2616
    %3063 = vmatpush.bf16.msra.mxu0 %v2610
    %3064 = vmatpush.bf16.msra.mxu0 %v2604
    %3065 = vmatpush.bf16.msra.mxu0 %v2598
    %3066 = vmatpush.bf16.msra.mxu0 %v2592
    %3067 = vmatmul.bf16.gmra.mxu0 %v255
    %v3068 = vpop.f32.mrf.mxu0
    %v3069 = vadd.f32 %v3056, %v3068
    %v3070 = vpop.f32.mrf.mxu0
    %3071 = vdwg.mxu0
    %3072 = vmatpush.bf16.msra.mxu0 %v2682
    %3073 = vmatpush.bf16.msra.mxu0 %v2676
    %3074 = vmatpush.bf16.msra.mxu0 %v2670
    %3075 = vmatpush.bf16.msra.mxu0 %v2664
    %3076 = vmatpush.bf16.msra.mxu0 %v2658
    %3077 = vmatpush.bf16.msra.mxu0 %v2652
    %3078 = vmatpush.bf16.msra.mxu0 %v2646
    %3079 = vmatpush.bf16.msra.mxu0 %v2640
    %3080 = vmatmul.bf16.gmra.mxu0 %v256
    %v3081 = vpop.f32.mrf.mxu0
    %v3082 = vadd.f32 %v3069, %v3081
    %v3083 = vpop.f32.mrf.mxu0
    %3084 = vdwg.mxu0
    %3085 = vmatpush.bf16.msra.mxu0 %v2539
    %3086 = vmatpush.bf16.msra.mxu0 %v2533
    %3087 = vmatpush.bf16.msra.mxu0 %v2527
    %3088 = vmatpush.bf16.msra.mxu0 %v2521
    %3089 = vmatpush.bf16.msra.mxu0 %v2515
    %3090 = vmatpush.bf16.msra.mxu0 %v2509
    %3091 = vmatpush.bf16.msra.mxu0 %v2503
    %3092 = vmatpush.bf16.msra.mxu0 %v2497
    %3093 = vmatmul.bf16.gmra.mxu0 %v253
    %v3094 = vpop.f32.mrf.mxu0
    %v3095 = vadd.f32 %v1862, %v3094
    %v3096 = vpop.f32.mrf.mxu0
    %3097 = vdwg.mxu0
    %3098 = vmatpush.bf16.msra.mxu0 %v2587
    %3099 = vmatpush.bf16.msra.mxu0 %v2581
    %3100 = vmatpush.bf16.msra.mxu0 %v2575
    %3101 = vmatpush.bf16.msra.mxu0 %v2569
    %3102 = vmatpush.bf16.msra.mxu0 %v2563
    %3103 = vmatpush.bf16.msra.mxu0 %v2557
    %3104 = vmatpush.bf16.msra.mxu0 %v2551
    %3105 = vmatpush.bf16.msra.mxu0 %v2545
    %3106 = vmatmul.bf16.gmra.mxu0 %v254
    %v3107 = vpop.f32.mrf.mxu0
    %v3108 = vadd.f32 %v3095, %v3107
    %v3109 = vpop.f32.mrf.mxu0
    %3110 = vdwg.mxu0
    %3111 = vmatpush.bf16.msra.mxu0 %v2635
    %3112 = vmatpush.bf16.msra.mxu0 %v2629
    %3113 = vmatpush.bf16.msra.mxu0 %v2623
    %3114 = vmatpush.bf16.msra.mxu0 %v2617
    %3115 = vmatpush.bf16.msra.mxu0 %v2611
    %3116 = vmatpush.bf16.msra.mxu0 %v2605
    %3117 = vmatpush.bf16.msra.mxu0 %v2599
    %3118 = vmatpush.bf16.msra.mxu0 %v2593
    %3119 = vmatmul.bf16.gmra.mxu0 %v255
    %v3120 = vpop.f32.mrf.mxu0
    %v3121 = vadd.f32 %v3108, %v3120
    %v3122 = vpop.f32.mrf.mxu0
    %3123 = vdwg.mxu0
    %3124 = vmatpush.bf16.msra.mxu0 %v2683
    %3125 = vmatpush.bf16.msra.mxu0 %v2677
    %3126 = vmatpush.bf16.msra.mxu0 %v2671
    %3127 = vmatpush.bf16.msra.mxu0 %v2665
    %3128 = vmatpush.bf16.msra.mxu0 %v2659
    %3129 = vmatpush.bf16.msra.mxu0 %v2653
    %3130 = vmatpush.bf16.msra.mxu0 %v2647
    %3131 = vmatpush.bf16.msra.mxu0 %v2641
    %3132 = vmatmul.bf16.gmra.mxu0 %v256
    %v3133 = vpop.f32.mrf.mxu0
    %v3134 = vadd.f32 %v3121, %v3133
    %v3135 = vpop.f32.mrf.mxu0
    %3136 = vdwg.mxu0
    %3137 = vmatpush.bf16.msra.mxu0 %v2540
    %3138 = vmatpush.bf16.msra.mxu0 %v2534
    %3139 = vmatpush.bf16.msra.mxu0 %v2528
    %3140 = vmatpush.bf16.msra.mxu0 %v2522
    %3141 = vmatpush.bf16.msra.mxu0 %v2516
    %3142 = vmatpush.bf16.msra.mxu0 %v2510
    %3143 = vmatpush.bf16.msra.mxu0 %v2504
    %3144 = vmatpush.bf16.msra.mxu0 %v2498
    %3145 = vmatmul.bf16.gmra.mxu0 %v253
    %v3146 = vpop.f32.mrf.mxu0
    %v3147 = vadd.f32 %v1914, %v3146
    %v3148 = vpop.f32.mrf.mxu0
    %3149 = vdwg.mxu0
    %3150 = vmatpush.bf16.msra.mxu0 %v2588
    %3151 = vmatpush.bf16.msra.mxu0 %v2582
    %3152 = vmatpush.bf16.msra.mxu0 %v2576
    %3153 = vmatpush.bf16.msra.mxu0 %v2570
    %3154 = vmatpush.bf16.msra.mxu0 %v2564
    %3155 = vmatpush.bf16.msra.mxu0 %v2558
    %3156 = vmatpush.bf16.msra.mxu0 %v2552
    %3157 = vmatpush.bf16.msra.mxu0 %v2546
    %3158 = vmatmul.bf16.gmra.mxu0 %v254
    %v3159 = vpop.f32.mrf.mxu0
    %v3160 = vadd.f32 %v3147, %v3159
    %v3161 = vpop.f32.mrf.mxu0
    %3162 = vdwg.mxu0
    %3163 = vmatpush.bf16.msra.mxu0 %v2636
    %3164 = vmatpush.bf16.msra.mxu0 %v2630
    %3165 = vmatpush.bf16.msra.mxu0 %v2624
    %3166 = vmatpush.bf16.msra.mxu0 %v2618
    %3167 = vmatpush.bf16.msra.mxu0 %v2612
    %3168 = vmatpush.bf16.msra.mxu0 %v2606
    %3169 = vmatpush.bf16.msra.mxu0 %v2600
    %3170 = vmatpush.bf16.msra.mxu0 %v2594
    %3171 = vmatmul.bf16.gmra.mxu0 %v255
    %v3172 = vpop.f32.mrf.mxu0
    %v3173 = vadd.f32 %v3160, %v3172
    %v3174 = vpop.f32.mrf.mxu0
    %3175 = vdwg.mxu0
    %3176 = vmatpush.bf16.msra.mxu0 %v2684
    %3177 = vmatpush.bf16.msra.mxu0 %v2678
    %3178 = vmatpush.bf16.msra.mxu0 %v2672
    %3179 = vmatpush.bf16.msra.mxu0 %v2666
    %3180 = vmatpush.bf16.msra.mxu0 %v2660
    %3181 = vmatpush.bf16.msra.mxu0 %v2654
    %3182 = vmatpush.bf16.msra.mxu0 %v2648
    %3183 = vmatpush.bf16.msra.mxu0 %v2642
    %3184 = vmatmul.bf16.gmra.mxu0 %v256
    %v3185 = vpop.f32.mrf.mxu0
    %v3186 = vadd.f32 %v3173, %v3185
    %v3187 = vpop.f32.mrf.mxu0
    %3188 = vdwg.mxu0
    %v3189 = vld [vmem:[%s7] sm:$0x3f]
    %v3191 = vperm.slane %v3189, 0
    %v3192 = vperm.slane %v3189, 1
    %v3193 = vperm.slane %v3189, 2
    %v3194 = vperm.slane %v3189, 3
    %v3195 = vperm.slane %v3189, 4
    %v3196 = vperm.slane %v3189, 5
    %v3203 = vmul.f32 %v252, %v3191
    %v3204 = vmul.f32 %v252, %v3192
    %v3205 = vmul.f32 %v252, %v3193
    %v3206 = vmul.f32 %v252, %v3194
    %v3207 = vmul.f32 %v252, %v3195
    %v3208 = vmul.f32 %v252, %v3196
    %v3209 = vadd.f32 %v2926, %v3203
    %v3210 = vadd.f32 %v2978, %v3204
    %v3211 = vadd.f32 %v3030, %v3205
    %v3212 = vadd.f32 %v3082, %v3206
    %v3213 = vadd.f32 %v3134, %v3207
    %v3214 = vadd.f32 %v3186, %v3208
    %v3215 = vld [vmem:[%s8] sm:$0x3f]
    %v3217 = vperm.slane %v3215, 0
    %v3218 = vperm.slane %v3215, 1
    %v3219 = vperm.slane %v3215, 2
    %v3220 = vperm.slane %v3215, 3
    %v3221 = vperm.slane %v3215, 4
    %v3222 = vperm.slane %v3215, 5
    %v3229 = vadd.f32 %v3209, %v3217
    %v3230 = vadd.f32 %v3210, %v3218
    %v3231 = vadd.f32 %v3211, %v3219
    %v3232 = vadd.f32 %v3212, %v3220
    %v3233 = vadd.f32 %v3213, %v3221
    %v3234 = vadd.f32 %v3214, %v3222
    %v3235 = vmul.f32 %v3229, 0.5
    %v3236 = vmul.f32 %v3230, 0.5
    %v3237 = vmul.f32 %v3231, 0.5
    %v3238 = vmul.f32 %v3232, 0.5
    %v3239 = vmul.f32 %v3233, 0.5
    %v3240 = vmul.f32 %v3234, 0.5
    %v3241 = vmul.f32 %v3229, 0.70710677
    %v3242 = vmul.f32 %v3230, 0.70710677
    %v3243 = vmul.f32 %v3231, 0.70710677
    %v3244 = vmul.f32 %v3232, 0.70710677
    %v3245 = vmul.f32 %v3233, 0.70710677
    %v3246 = vmul.f32 %v3234, 0.70710677
    %v3247 = vand.u32 2147483647, %v3241
    %v3248 = vand.u32 2147483647, %v3242
    %v3249 = vand.u32 2147483647, %v3243
    %v3250 = vand.u32 2147483647, %v3244
    %v3251 = vand.u32 2147483647, %v3245
    %v3252 = vand.u32 2147483647, %v3246
    %v3253 = vmul.f32 %v3247, 0.3275911
    %v3254 = vmul.f32 %v3248, 0.3275911
    %v3255 = vmul.f32 %v3249, 0.3275911
    %v3256 = vmul.f32 %v3250, 0.3275911
    %v3257 = vmul.f32 %v3251, 0.3275911
    %v3258 = vmul.f32 %v3252, 0.3275911
    %v3259 = vadd.f32 %v3253, 1.0
    %v3260 = vadd.f32 %v3254, 1.0
    %v3261 = vadd.f32 %v3255, 1.0
    %v3262 = vadd.f32 %v3256, 1.0
    %v3263 = vadd.f32 %v3257, 1.0
    %v3264 = vadd.f32 %v3258, 1.0
    %v3265 = vrcp.pop %v3259
    %v3266 = vmul.f32 %v3259, %v3265
    %v3267 = vsub.f32 1.0, %v3266
    %v3268 = vmul.f32 %v3265, %v3267
    %v3269 = vadd.f32 %v3265, %v3268
    %vm3270 = vweird.f32 %v3259
    %vm3271 = vweird.f32 %v3265
    %vm3272 = vmor %vm3270, %vm3271
    %v3273 = vsel %vm3272, %v3265, %v3269
    %v3274 = vand.u32 2147483647, %v3259
    %vm3275 = vcmp.eq.f32.partialorder %v3274, 8.507059e+37
    %v3276 = vand.u32 %v3259, 2147483648
    %v3277 = vor.u32 1.1754944e-38, %v3276
    %v3278 = vsel %vm3275, %v3277, %v3273
    %v3279 = vmul.f32 1.0, %v3278
    %v3280 = vrcp.pop %v3260
    %v3281 = vmul.f32 %v3260, %v3280
    %v3282 = vsub.f32 1.0, %v3281
    %v3283 = vmul.f32 %v3280, %v3282
    %v3284 = vadd.f32 %v3280, %v3283
    %vm3285 = vweird.f32 %v3260
    %vm3286 = vweird.f32 %v3280
    %vm3287 = vmor %vm3285, %vm3286
    %v3288 = vsel %vm3287, %v3280, %v3284
    %v3289 = vand.u32 2147483647, %v3260
    %vm3290 = vcmp.eq.f32.partialorder %v3289, 8.507059e+37
    %v3291 = vand.u32 %v3260, 2147483648
    %v3292 = vor.u32 1.1754944e-38, %v3291
    %v3293 = vsel %vm3290, %v3292, %v3288
    %v3294 = vmul.f32 1.0, %v3293
    %v3295 = vrcp.pop %v3261
    %v3296 = vmul.f32 %v3261, %v3295
    %v3297 = vsub.f32 1.0, %v3296
    %v3298 = vmul.f32 %v3295, %v3297
    %v3299 = vadd.f32 %v3295, %v3298
    %vm3300 = vweird.f32 %v3261
    %vm3301 = vweird.f32 %v3295
    %vm3302 = vmor %vm3300, %vm3301
    %v3303 = vsel %vm3302, %v3295, %v3299
    %v3304 = vand.u32 2147483647, %v3261
    %vm3305 = vcmp.eq.f32.partialorder %v3304, 8.507059e+37
    %v3306 = vand.u32 %v3261, 2147483648
    %v3307 = vor.u32 1.1754944e-38, %v3306
    %v3308 = vsel %vm3305, %v3307, %v3303
    %v3309 = vmul.f32 1.0, %v3308
    %v3310 = vrcp.pop %v3262
    %v3311 = vmul.f32 %v3262, %v3310
    %v3312 = vsub.f32 1.0, %v3311
    %v3313 = vmul.f32 %v3310, %v3312
    %v3314 = vadd.f32 %v3310, %v3313
    %vm3315 = vweird.f32 %v3262
    %vm3316 = vweird.f32 %v3310
    %vm3317 = vmor %vm3315, %vm3316
    %v3318 = vsel %vm3317, %v3310, %v3314
    %v3319 = vand.u32 2147483647, %v3262
    %vm3320 = vcmp.eq.f32.partialorder %v3319, 8.507059e+37
    %v3321 = vand.u32 %v3262, 2147483648
    %v3322 = vor.u32 1.1754944e-38, %v3321
    %v3323 = vsel %vm3320, %v3322, %v3318
    %v3324 = vmul.f32 1.0, %v3323
    %v3325 = vrcp.pop %v3263
    %v3326 = vmul.f32 %v3263, %v3325
    %v3327 = vsub.f32 1.0, %v3326
    %v3328 = vmul.f32 %v3325, %v3327
    %v3329 = vadd.f32 %v3325, %v3328
    %vm3330 = vweird.f32 %v3263
    %vm3331 = vweird.f32 %v3325
    %vm3332 = vmor %vm3330, %vm3331
    %v3333 = vsel %vm3332, %v3325, %v3329
    %v3334 = vand.u32 2147483647, %v3263
    %vm3335 = vcmp.eq.f32.partialorder %v3334, 8.507059e+37
    %v3336 = vand.u32 %v3263, 2147483648
    %v3337 = vor.u32 1.1754944e-38, %v3336
    %v3338 = vsel %vm3335, %v3337, %v3333
    %v3339 = vmul.f32 1.0, %v3338
    %v3340 = vrcp.pop %v3264
    %v3341 = vmul.f32 %v3264, %v3340
    %v3342 = vsub.f32 1.0, %v3341
    %v3343 = vmul.f32 %v3340, %v3342
    %v3344 = vadd.f32 %v3340, %v3343
    %vm3345 = vweird.f32 %v3264
    %vm3346 = vweird.f32 %v3340
    %vm3347 = vmor %vm3345, %vm3346
    %v3348 = vsel %vm3347, %v3340, %v3344
    %v3349 = vand.u32 2147483647, %v3264
    %vm3350 = vcmp.eq.f32.partialorder %v3349, 8.507059e+37
    %v3351 = vand.u32 %v3264, 2147483648
    %v3352 = vor.u32 1.1754944e-38, %v3351
    %v3353 = vsel %vm3350, %v3352, %v3348
    %v3354 = vmul.f32 1.0, %v3353
    %v3355 = vmul.f32 %v3279, 1.0614054
    %v3356 = vmul.f32 %v3294, 1.0614054
    %v3357 = vmul.f32 %v3309, 1.0614054
    %v3358 = vmul.f32 %v3324, 1.0614054
    %v3359 = vmul.f32 %v3339, 1.0614054
    %v3360 = vmul.f32 %v3354, 1.0614054
    %v3361 = vadd.f32 %v3355, -1.4531521
    %v3362 = vadd.f32 %v3356, -1.4531521
    %v3363 = vadd.f32 %v3357, -1.4531521
    %v3364 = vadd.f32 %v3358, -1.4531521
    %v3365 = vadd.f32 %v3359, -1.4531521
    %v3366 = vadd.f32 %v3360, -1.4531521
    %v3367 = vmul.f32 %v3361, %v3279
    %v3368 = vmul.f32 %v3362, %v3294
    %v3369 = vmul.f32 %v3363, %v3309
    %v3370 = vmul.f32 %v3364, %v3324
    %v3371 = vmul.f32 %v3365, %v3339
    %v3372 = vmul.f32 %v3366, %v3354
    %v3373 = vadd.f32 %v3367, 1.4214138
    %v3374 = vadd.f32 %v3368, 1.4214138
    %v3375 = vadd.f32 %v3369, 1.4214138
    %v3376 = vadd.f32 %v3370, 1.4214138
    %v3377 = vadd.f32 %v3371, 1.4214138
    %v3378 = vadd.f32 %v3372, 1.4214138
    %v3379 = vmul.f32 %v3373, %v3279
    %v3380 = vmul.f32 %v3374, %v3294
    %v3381 = vmul.f32 %v3375, %v3309
    %v3382 = vmul.f32 %v3376, %v3324
    %v3383 = vmul.f32 %v3377, %v3339
    %v3384 = vmul.f32 %v3378, %v3354
    %v3385 = vadd.f32 %v3379, -0.28449672
    %v3386 = vadd.f32 %v3380, -0.28449672
    %v3387 = vadd.f32 %v3381, -0.28449672
    %v3388 = vadd.f32 %v3382, -0.28449672
    %v3389 = vadd.f32 %v3383, -0.28449672
    %v3390 = vadd.f32 %v3384, -0.28449672
    %v3391 = vmul.f32 %v3385, %v3279
    %v3392 = vmul.f32 %v3386, %v3294
    %v3393 = vmul.f32 %v3387, %v3309
    %v3394 = vmul.f32 %v3388, %v3324
    %v3395 = vmul.f32 %v3389, %v3339
    %v3396 = vmul.f32 %v3390, %v3354
    %v3397 = vadd.f32 %v3391, 0.2548296
    %v3398 = vadd.f32 %v3392, 0.2548296
    %v3399 = vadd.f32 %v3393, 0.2548296
    %v3400 = vadd.f32 %v3394, 0.2548296
    %v3401 = vadd.f32 %v3395, 0.2548296
    %v3402 = vadd.f32 %v3396, 0.2548296
    %v3403 = vmul.f32 %v3397, %v3279
    %v3404 = vmul.f32 %v3398, %v3294
    %v3405 = vmul.f32 %v3399, %v3309
    %v3406 = vmul.f32 %v3400, %v3324
    %v3407 = vmul.f32 %v3401, %v3339
    %v3408 = vmul.f32 %v3402, %v3354
    %v3409 = vsub.f32 0.0, %v3247
    %v3410 = vsub.f32 0.0, %v3248
    %v3411 = vsub.f32 0.0, %v3249
    %v3412 = vsub.f32 0.0, %v3250
    %v3413 = vsub.f32 0.0, %v3251
    %v3414 = vsub.f32 0.0, %v3252
    %v3415 = vmul.f32 %v3409, %v3247
    %v3416 = vmul.f32 %v3410, %v3248
    %v3417 = vmul.f32 %v3411, %v3249
    %v3418 = vmul.f32 %v3412, %v3250
    %v3419 = vmul.f32 %v3413, %v3251
    %v3420 = vmul.f32 %v3414, %v3252
    %v3421 = vmul.f32 %v3415, 1.442695
    %v3422 = vpow.pop %v3421
    %v3423 = vmul.f32 %v3416, 1.442695
    %v3424 = vpow.pop %v3423
    %v3425 = vmul.f32 %v3417, 1.442695
    %v3426 = vpow.pop %v3425
    %v3427 = vmul.f32 %v3418, 1.442695
    %v3428 = vpow.pop %v3427
    %v3429 = vmul.f32 %v3419, 1.442695
    %v3430 = vpow.pop %v3429
    %v3431 = vmul.f32 %v3420, 1.442695
    %v3432 = vpow.pop %v3431
    %v3433 = vmul.f32 %v3403, %v3422
    %v3434 = vmul.f32 %v3404, %v3424
    %v3435 = vmul.f32 %v3405, %v3426
    %v3436 = vmul.f32 %v3406, %v3428
    %v3437 = vmul.f32 %v3407, %v3430
    %v3438 = vmul.f32 %v3408, %v3432
    %v3439 = vsub.f32 1.0, %v3433
    %v3440 = vsub.f32 1.0, %v3434
    %v3441 = vsub.f32 1.0, %v3435
    %v3442 = vsub.f32 1.0, %v3436
    %v3443 = vsub.f32 1.0, %v3437
    %v3444 = vsub.f32 1.0, %v3438
    %vm3445 = vcmp.lt.f32.partialorder %v3241, 0.0
    %vm3446 = vcmp.lt.f32.partialorder %v3242, 0.0
    %vm3447 = vcmp.lt.f32.partialorder %v3243, 0.0
    %vm3448 = vcmp.lt.f32.partialorder %v3244, 0.0
    %vm3449 = vcmp.lt.f32.partialorder %v3245, 0.0
    %vm3450 = vcmp.lt.f32.partialorder %v3246, 0.0
    %v3451 = vsub.f32 0.0, %v3439
    %v3452 = vsub.f32 0.0, %v3440
    %v3453 = vsub.f32 0.0, %v3441
    %v3454 = vsub.f32 0.0, %v3442
    %v3455 = vsub.f32 0.0, %v3443
    %v3456 = vsub.f32 0.0, %v3444
    %v3457 = vsel %vm3445, %v3451, %v3439
    %v3458 = vsel %vm3446, %v3452, %v3440
    %v3459 = vsel %vm3447, %v3453, %v3441
    %v3460 = vsel %vm3448, %v3454, %v3442
    %v3461 = vsel %vm3449, %v3455, %v3443
    %v3462 = vsel %vm3450, %v3456, %v3444
    %v3463 = vadd.f32 %v3457, 1.0
    %v3464 = vadd.f32 %v3458, 1.0
    %v3465 = vadd.f32 %v3459, 1.0
    %v3466 = vadd.f32 %v3460, 1.0
    %v3467 = vadd.f32 %v3461, 1.0
    %v3468 = vadd.f32 %v3462, 1.0
    %v3469 = vmul.f32 %v3235, %v3463
    %v3470 = vmul.f32 %v3236, %v3464
    %v3471 = vmul.f32 %v3237, %v3465
    %v3472 = vmul.f32 %v3238, %v3466
    %v3473 = vmul.f32 %v3239, %v3467
    %v3474 = vmul.f32 %v3240, %v3468
    %v3475 = vpack.c.bf16 %v3469, %v3469
    %v3476 = vpack.c.bf16 %v3470, %v3470
    %v3477 = vpack.c.bf16 %v3471, %v3471
    %v3478 = vpack.c.bf16 %v3472, %v3472
    %v3479 = vpack.c.bf16 %v3473, %v3473
    %v3480 = vpack.c.bf16 %v3474, %v3474
    %v3481 = vld [vmem:[#allocation7] sm:$0xff]
    %v3482 = vld [vmem:[#allocation7 + $0x8] sm:$0xff]
    %v3483 = vld [vmem:[#allocation7 + $0x10] sm:$0xff]
    %v3484 = vld [vmem:[#allocation7 + $0x18] sm:$0xff]
    %v3485 = vld [vmem:[#allocation7 + $0x20] sm:$0xff]
    %v3486 = vld [vmem:[#allocation7 + $0x28] sm:$0xff]
    %v3487 = vld [vmem:[#allocation7 + $0x30] sm:$0xff]
    %v3488 = vld [vmem:[#allocation7 + $0x38] sm:$0xff]
    %v3489 = vld [vmem:[#allocation7 + $0x40] sm:$0xff]
    %v3490 = vld [vmem:[#allocation7 + $0x48] sm:$0xff]
    %v3491 = vld [vmem:[#allocation7 + $0x50] sm:$0xff]
    %v3492 = vld [vmem:[#allocation7 + $0x58] sm:$0xff]
    %v3493 = vld [vmem:[#allocation7 + $0x60] sm:$0xff]
    %v3494 = vld [vmem:[#allocation7 + $0x68] sm:$0xff]
    %v3495 = vld [vmem:[#allocation7 + $0x70] sm:$0xff]
    %v3496 = vld [vmem:[#allocation7 + $0x78] sm:$0xff]
    %v3497 = vld [vmem:[#allocation7 + $0x80] sm:$0xff]
    %v3498 = vld [vmem:[#allocation7 + $0x88] sm:$0xff]
    %v3499 = vld [vmem:[#allocation7 + $0x90] sm:$0xff]
    %v3500 = vld [vmem:[#allocation7 + $0x98] sm:$0xff]
    %v3501 = vld [vmem:[#allocation7 + $0xa0] sm:$0xff]
    %v3502 = vld [vmem:[#allocation7 + $0xa8] sm:$0xff]
    %v3503 = vld [vmem:[#allocation7 + $0xb0] sm:$0xff]
    %v3504 = vld [vmem:[#allocation7 + $0xb8] sm:$0xff]
    %v3505 = vld [vmem:[#allocation7 + $0xc0] sm:$0xff]
    %v3506 = vld [vmem:[#allocation7 + $0xc8] sm:$0xff]
    %v3507 = vld [vmem:[#allocation7 + $0xd0] sm:$0xff]
    %v3508 = vld [vmem:[#allocation7 + $0xd8] sm:$0xff]
    %v3509 = vld [vmem:[#allocation7 + $0xe0] sm:$0xff]
    %v3510 = vld [vmem:[#allocation7 + $0xe8] sm:$0xff]
    %v3511 = vld [vmem:[#allocation7 + $0xf0] sm:$0xff]
    %v3512 = vld [vmem:[#allocation7 + $0xf8] sm:$0xff]
    %v3513 = vld [vmem:[#allocation7 + $0x100] sm:$0xff]
    %v3514 = vld [vmem:[#allocation7 + $0x108] sm:$0xff]
    %v3515 = vld [vmem:[#allocation7 + $0x110] sm:$0xff]
    %v3516 = vld [vmem:[#allocation7 + $0x118] sm:$0xff]
    %v3517 = vld [vmem:[#allocation7 + $0x120] sm:$0xff]
    %v3518 = vld [vmem:[#allocation7 + $0x128] sm:$0xff]
    %v3519 = vld [vmem:[#allocation7 + $0x130] sm:$0xff]
    %v3520 = vld [vmem:[#allocation7 + $0x138] sm:$0xff]
    %v3521 = vld [vmem:[#allocation7 + $0x140] sm:$0xff]
    %v3522 = vld [vmem:[#allocation7 + $0x148] sm:$0xff]
    %v3523 = vld [vmem:[#allocation7 + $0x150] sm:$0xff]
    %v3524 = vld [vmem:[#allocation7 + $0x158] sm:$0xff]
    %v3525 = vld [vmem:[#allocation7 + $0x160] sm:$0xff]
    %v3526 = vld [vmem:[#allocation7 + $0x168] sm:$0xff]
    %v3527 = vld [vmem:[#allocation7 + $0x170] sm:$0xff]
    %v3528 = vld [vmem:[#allocation7 + $0x178] sm:$0xff]
    %v3529 = vld [vmem:[#allocation7 + $0x180] sm:$0xff]
    %v3530 = vld [vmem:[#allocation7 + $0x188] sm:$0xff]
    %v3531 = vld [vmem:[#allocation7 + $0x190] sm:$0xff]
    %v3532 = vld [vmem:[#allocation7 + $0x198] sm:$0xff]
    %v3533 = vld [vmem:[#allocation7 + $0x1a0] sm:$0xff]
    %v3534 = vld [vmem:[#allocation7 + $0x1a8] sm:$0xff]
    %v3535 = vld [vmem:[#allocation7 + $0x1b0] sm:$0xff]
    %v3536 = vld [vmem:[#allocation7 + $0x1b8] sm:$0xff]
    %v3537 = vld [vmem:[#allocation7 + $0x1c0] sm:$0xff]
    %v3538 = vld [vmem:[#allocation7 + $0x1c8] sm:$0xff]
    %v3539 = vld [vmem:[#allocation7 + $0x1d0] sm:$0xff]
    %v3540 = vld [vmem:[#allocation7 + $0x1d8] sm:$0xff]
    %v3541 = vld [vmem:[#allocation7 + $0x1e0] sm:$0xff]
    %v3542 = vld [vmem:[#allocation7 + $0x1e8] sm:$0xff]
    %v3543 = vld [vmem:[#allocation7 + $0x1f0] sm:$0xff]
    %v3544 = vld [vmem:[#allocation7 + $0x1f8] sm:$0xff]
    %v3545 = vld [vmem:[#allocation7 + $0x200] sm:$0xff]
    %v3546 = vld [vmem:[#allocation7 + $0x208] sm:$0xff]
    %v3547 = vld [vmem:[#allocation7 + $0x210] sm:$0xff]
    %v3548 = vld [vmem:[#allocation7 + $0x218] sm:$0xff]
    %v3549 = vld [vmem:[#allocation7 + $0x220] sm:$0xff]
    %v3550 = vld [vmem:[#allocation7 + $0x228] sm:$0xff]
    %v3551 = vld [vmem:[#allocation7 + $0x230] sm:$0xff]
    %v3552 = vld [vmem:[#allocation7 + $0x238] sm:$0xff]
    %v3553 = vld [vmem:[#allocation7 + $0x240] sm:$0xff]
    %v3554 = vld [vmem:[#allocation7 + $0x248] sm:$0xff]
    %v3555 = vld [vmem:[#allocation7 + $0x250] sm:$0xff]
    %v3556 = vld [vmem:[#allocation7 + $0x258] sm:$0xff]
    %v3557 = vld [vmem:[#allocation7 + $0x260] sm:$0xff]
    %v3558 = vld [vmem:[#allocation7 + $0x268] sm:$0xff]
    %v3559 = vld [vmem:[#allocation7 + $0x270] sm:$0xff]
    %v3560 = vld [vmem:[#allocation7 + $0x278] sm:$0xff]
    %v3561 = vld [vmem:[#allocation7 + $0x280] sm:$0xff]
    %v3562 = vld [vmem:[#allocation7 + $0x288] sm:$0xff]
    %v3563 = vld [vmem:[#allocation7 + $0x290] sm:$0xff]
    %v3564 = vld [vmem:[#allocation7 + $0x298] sm:$0xff]
    %v3565 = vld [vmem:[#allocation7 + $0x2a0] sm:$0xff]
    %v3566 = vld [vmem:[#allocation7 + $0x2a8] sm:$0xff]
    %v3567 = vld [vmem:[#allocation7 + $0x2b0] sm:$0xff]
    %v3568 = vld [vmem:[#allocation7 + $0x2b8] sm:$0xff]
    %v3569 = vld [vmem:[#allocation7 + $0x2c0] sm:$0xff]
    %v3570 = vld [vmem:[#allocation7 + $0x2c8] sm:$0xff]
    %v3571 = vld [vmem:[#allocation7 + $0x2d0] sm:$0xff]
    %v3572 = vld [vmem:[#allocation7 + $0x2d8] sm:$0xff]
    %v3573 = vld [vmem:[#allocation7 + $0x2e0] sm:$0xff]
    %v3574 = vld [vmem:[#allocation7 + $0x2e8] sm:$0xff]
    %v3575 = vld [vmem:[#allocation7 + $0x2f0] sm:$0xff]
    %v3576 = vld [vmem:[#allocation7 + $0x2f8] sm:$0xff]
    %v3577 = vld [vmem:[#allocation7 + $0x300] sm:$0xff]
    %v3578 = vld [vmem:[#allocation7 + $0x308] sm:$0xff]
    %v3579 = vld [vmem:[#allocation7 + $0x310] sm:$0xff]
    %v3580 = vld [vmem:[#allocation7 + $0x318] sm:$0xff]
    %v3581 = vld [vmem:[#allocation7 + $0x320] sm:$0xff]
    %v3582 = vld [vmem:[#allocation7 + $0x328] sm:$0xff]
    %v3583 = vld [vmem:[#allocation7 + $0x330] sm:$0xff]
    %v3584 = vld [vmem:[#allocation7 + $0x338] sm:$0xff]
    %v3585 = vld [vmem:[#allocation7 + $0x340] sm:$0xff]
    %v3586 = vld [vmem:[#allocation7 + $0x348] sm:$0xff]
    %v3587 = vld [vmem:[#allocation7 + $0x350] sm:$0xff]
    %v3588 = vld [vmem:[#allocation7 + $0x358] sm:$0xff]
    %v3589 = vld [vmem:[#allocation7 + $0x360] sm:$0xff]
    %v3590 = vld [vmem:[#allocation7 + $0x368] sm:$0xff]
    %v3591 = vld [vmem:[#allocation7 + $0x370] sm:$0xff]
    %v3592 = vld [vmem:[#allocation7 + $0x378] sm:$0xff]
    %v3593 = vld [vmem:[#allocation7 + $0x380] sm:$0xff]
    %v3594 = vld [vmem:[#allocation7 + $0x388] sm:$0xff]
    %v3595 = vld [vmem:[#allocation7 + $0x390] sm:$0xff]
    %v3596 = vld [vmem:[#allocation7 + $0x398] sm:$0xff]
    %v3597 = vld [vmem:[#allocation7 + $0x3a0] sm:$0xff]
    %v3598 = vld [vmem:[#allocation7 + $0x3a8] sm:$0xff]
    %v3599 = vld [vmem:[#allocation7 + $0x3b0] sm:$0xff]
    %v3600 = vld [vmem:[#allocation7 + $0x3b8] sm:$0xff]
    %v3601 = vld [vmem:[#allocation7 + $0x3c0] sm:$0xff]
    %v3602 = vld [vmem:[#allocation7 + $0x3c8] sm:$0xff]
    %v3603 = vld [vmem:[#allocation7 + $0x3d0] sm:$0xff]
    %v3604 = vld [vmem:[#allocation7 + $0x3d8] sm:$0xff]
    %v3605 = vld [vmem:[#allocation7 + $0x3e0] sm:$0xff]
    %v3606 = vld [vmem:[#allocation7 + $0x3e8] sm:$0xff]
    %v3607 = vld [vmem:[#allocation7 + $0x3f0] sm:$0xff]
    %v3608 = vld [vmem:[#allocation7 + $0x3f8] sm:$0xff]
    %v3609 = vld [vmem:[#allocation7 + $0x400] sm:$0xff]
    %v3610 = vld [vmem:[#allocation7 + $0x408] sm:$0xff]
    %v3611 = vld [vmem:[#allocation7 + $0x410] sm:$0xff]
    %v3612 = vld [vmem:[#allocation7 + $0x418] sm:$0xff]
    %v3613 = vld [vmem:[#allocation7 + $0x420] sm:$0xff]
    %v3614 = vld [vmem:[#allocation7 + $0x428] sm:$0xff]
    %v3615 = vld [vmem:[#allocation7 + $0x430] sm:$0xff]
    %v3616 = vld [vmem:[#allocation7 + $0x438] sm:$0xff]
    %v3617 = vld [vmem:[#allocation7 + $0x440] sm:$0xff]
    %v3618 = vld [vmem:[#allocation7 + $0x448] sm:$0xff]
    %v3619 = vld [vmem:[#allocation7 + $0x450] sm:$0xff]
    %v3620 = vld [vmem:[#allocation7 + $0x458] sm:$0xff]
    %v3621 = vld [vmem:[#allocation7 + $0x460] sm:$0xff]
    %v3622 = vld [vmem:[#allocation7 + $0x468] sm:$0xff]
    %v3623 = vld [vmem:[#allocation7 + $0x470] sm:$0xff]
    %v3624 = vld [vmem:[#allocation7 + $0x478] sm:$0xff]
    %v3625 = vld [vmem:[#allocation7 + $0x480] sm:$0xff]
    %v3626 = vld [vmem:[#allocation7 + $0x488] sm:$0xff]
    %v3627 = vld [vmem:[#allocation7 + $0x490] sm:$0xff]
    %v3628 = vld [vmem:[#allocation7 + $0x498] sm:$0xff]
    %v3629 = vld [vmem:[#allocation7 + $0x4a0] sm:$0xff]
    %v3630 = vld [vmem:[#allocation7 + $0x4a8] sm:$0xff]
    %v3631 = vld [vmem:[#allocation7 + $0x4b0] sm:$0xff]
    %v3632 = vld [vmem:[#allocation7 + $0x4b8] sm:$0xff]
    %v3633 = vld [vmem:[#allocation7 + $0x4c0] sm:$0xff]
    %v3634 = vld [vmem:[#allocation7 + $0x4c8] sm:$0xff]
    %v3635 = vld [vmem:[#allocation7 + $0x4d0] sm:$0xff]
    %v3636 = vld [vmem:[#allocation7 + $0x4d8] sm:$0xff]
    %v3637 = vld [vmem:[#allocation7 + $0x4e0] sm:$0xff]
    %v3638 = vld [vmem:[#allocation7 + $0x4e8] sm:$0xff]
    %v3639 = vld [vmem:[#allocation7 + $0x4f0] sm:$0xff]
    %v3640 = vld [vmem:[#allocation7 + $0x4f8] sm:$0xff]
    %v3641 = vld [vmem:[#allocation7 + $0x500] sm:$0xff]
    %v3642 = vld [vmem:[#allocation7 + $0x508] sm:$0xff]
    %v3643 = vld [vmem:[#allocation7 + $0x510] sm:$0xff]
    %v3644 = vld [vmem:[#allocation7 + $0x518] sm:$0xff]
    %v3645 = vld [vmem:[#allocation7 + $0x520] sm:$0xff]
    %v3646 = vld [vmem:[#allocation7 + $0x528] sm:$0xff]
    %v3647 = vld [vmem:[#allocation7 + $0x530] sm:$0xff]
    %v3648 = vld [vmem:[#allocation7 + $0x538] sm:$0xff]
    %v3649 = vld [vmem:[#allocation7 + $0x540] sm:$0xff]
    %v3650 = vld [vmem:[#allocation7 + $0x548] sm:$0xff]
    %v3651 = vld [vmem:[#allocation7 + $0x550] sm:$0xff]
    %v3652 = vld [vmem:[#allocation7 + $0x558] sm:$0xff]
    %v3653 = vld [vmem:[#allocation7 + $0x560] sm:$0xff]
    %v3654 = vld [vmem:[#allocation7 + $0x568] sm:$0xff]
    %v3655 = vld [vmem:[#allocation7 + $0x570] sm:$0xff]
    %v3656 = vld [vmem:[#allocation7 + $0x578] sm:$0xff]
    %v3657 = vld [vmem:[#allocation7 + $0x580] sm:$0xff]
    %v3658 = vld [vmem:[#allocation7 + $0x588] sm:$0xff]
    %v3659 = vld [vmem:[#allocation7 + $0x590] sm:$0xff]
    %v3660 = vld [vmem:[#allocation7 + $0x598] sm:$0xff]
    %v3661 = vld [vmem:[#allocation7 + $0x5a0] sm:$0xff]
    %v3662 = vld [vmem:[#allocation7 + $0x5a8] sm:$0xff]
    %v3663 = vld [vmem:[#allocation7 + $0x5b0] sm:$0xff]
    %v3664 = vld [vmem:[#allocation7 + $0x5b8] sm:$0xff]
    %v3665 = vld [vmem:[#allocation7 + $0x5c0] sm:$0xff]
    %v3666 = vld [vmem:[#allocation7 + $0x5c8] sm:$0xff]
    %v3667 = vld [vmem:[#allocation7 + $0x5d0] sm:$0xff]
    %v3668 = vld [vmem:[#allocation7 + $0x5d8] sm:$0xff]
    %v3669 = vld [vmem:[#allocation7 + $0x5e0] sm:$0xff]
    %v3670 = vld [vmem:[#allocation7 + $0x5e8] sm:$0xff]
    %v3671 = vld [vmem:[#allocation7 + $0x5f0] sm:$0xff]
    %v3672 = vld [vmem:[#allocation7 + $0x5f8] sm:$0xff]
    %v3673 = vld [vmem:[%s10] sm:$0xf]
    %v3675 = vperm.slane %v3673, 0
    %v3676 = vperm.slane %v3673, 1
    %v3677 = vperm.slane %v3673, 2
    %v3678 = vperm.slane %v3673, 3
    %v3875 = vunpack.c.l.b16 %v3481
    %v3876 = vunpack.c.h.b16 %v3481
    %v3877 = vunpack.c.l.b16 %v3482
    %v3878 = vunpack.c.h.b16 %v3482
    %v3879 = vunpack.c.l.b16 %v3483
    %v3880 = vunpack.c.h.b16 %v3483
    %v3881 = vunpack.c.l.b16 %v3484
    %v3882 = vunpack.c.h.b16 %v3484
    %v3883 = vunpack.c.l.b16 %v3485
    %v3884 = vunpack.c.h.b16 %v3485
    %v3885 = vunpack.c.l.b16 %v3486
    %v3886 = vunpack.c.h.b16 %v3486
    %v3887 = vunpack.c.l.b16 %v3487
    %v3888 = vunpack.c.h.b16 %v3487
    %v3889 = vunpack.c.l.b16 %v3488
    %v3890 = vunpack.c.h.b16 %v3488
    %v3891 = vunpack.c.l.b16 %v3489
    %v3892 = vunpack.c.h.b16 %v3489
    %v3893 = vunpack.c.l.b16 %v3490
    %v3894 = vunpack.c.h.b16 %v3490
    %v3895 = vunpack.c.l.b16 %v3491
    %v3896 = vunpack.c.h.b16 %v3491
    %v3897 = vunpack.c.l.b16 %v3492
    %v3898 = vunpack.c.h.b16 %v3492
    %v3899 = vunpack.c.l.b16 %v3493
    %v3900 = vunpack.c.h.b16 %v3493
    %v3901 = vunpack.c.l.b16 %v3494
    %v3902 = vunpack.c.h.b16 %v3494
    %v3903 = vunpack.c.l.b16 %v3495
    %v3904 = vunpack.c.h.b16 %v3495
    %v3905 = vunpack.c.l.b16 %v3496
    %v3906 = vunpack.c.h.b16 %v3496
    %v3907 = vunpack.c.l.b16 %v3497
    %v3908 = vunpack.c.h.b16 %v3497
    %v3909 = vunpack.c.l.b16 %v3498
    %v3910 = vunpack.c.h.b16 %v3498
    %v3911 = vunpack.c.l.b16 %v3499
    %v3912 = vunpack.c.h.b16 %v3499
    %v3913 = vunpack.c.l.b16 %v3500
    %v3914 = vunpack.c.h.b16 %v3500
    %v3915 = vunpack.c.l.b16 %v3501
    %v3916 = vunpack.c.h.b16 %v3501
    %v3917 = vunpack.c.l.b16 %v3502
    %v3918 = vunpack.c.h.b16 %v3502
    %v3919 = vunpack.c.l.b16 %v3503
    %v3920 = vunpack.c.h.b16 %v3503
    %v3921 = vunpack.c.l.b16 %v3504
    %v3922 = vunpack.c.h.b16 %v3504
    %v3923 = vunpack.c.l.b16 %v3505
    %v3924 = vunpack.c.h.b16 %v3505
    %v3925 = vunpack.c.l.b16 %v3506
    %v3926 = vunpack.c.h.b16 %v3506
    %v3927 = vunpack.c.l.b16 %v3507
    %v3928 = vunpack.c.h.b16 %v3507
    %v3929 = vunpack.c.l.b16 %v3508
    %v3930 = vunpack.c.h.b16 %v3508
    %v3931 = vunpack.c.l.b16 %v3509
    %v3932 = vunpack.c.h.b16 %v3509
    %v3933 = vunpack.c.l.b16 %v3510
    %v3934 = vunpack.c.h.b16 %v3510
    %v3935 = vunpack.c.l.b16 %v3511
    %v3936 = vunpack.c.h.b16 %v3511
    %v3937 = vunpack.c.l.b16 %v3512
    %v3938 = vunpack.c.h.b16 %v3512
    %v3939 = vunpack.c.l.b16 %v3513
    %v3940 = vunpack.c.h.b16 %v3513
    %v3941 = vunpack.c.l.b16 %v3514
    %v3942 = vunpack.c.h.b16 %v3514
    %v3943 = vunpack.c.l.b16 %v3515
    %v3944 = vunpack.c.h.b16 %v3515
    %v3945 = vunpack.c.l.b16 %v3516
    %v3946 = vunpack.c.h.b16 %v3516
    %v3947 = vunpack.c.l.b16 %v3517
    %v3948 = vunpack.c.h.b16 %v3517
    %v3949 = vunpack.c.l.b16 %v3518
    %v3950 = vunpack.c.h.b16 %v3518
    %v3951 = vunpack.c.l.b16 %v3519
    %v3952 = vunpack.c.h.b16 %v3519
    %v3953 = vunpack.c.l.b16 %v3520
    %v3954 = vunpack.c.h.b16 %v3520
    %v3955 = vunpack.c.l.b16 %v3521
    %v3956 = vunpack.c.h.b16 %v3521
    %v3957 = vunpack.c.l.b16 %v3522
    %v3958 = vunpack.c.h.b16 %v3522
    %v3959 = vunpack.c.l.b16 %v3523
    %v3960 = vunpack.c.h.b16 %v3523
    %v3961 = vunpack.c.l.b16 %v3524
    %v3962 = vunpack.c.h.b16 %v3524
    %v3963 = vunpack.c.l.b16 %v3525
    %v3964 = vunpack.c.h.b16 %v3525
    %v3965 = vunpack.c.l.b16 %v3526
    %v3966 = vunpack.c.h.b16 %v3526
    %v3967 = vunpack.c.l.b16 %v3527
    %v3968 = vunpack.c.h.b16 %v3527
    %v3969 = vunpack.c.l.b16 %v3528
    %v3970 = vunpack.c.h.b16 %v3528
    %v3971 = vunpack.c.l.b16 %v3529
    %v3972 = vunpack.c.h.b16 %v3529
    %v3973 = vunpack.c.l.b16 %v3530
    %v3974 = vunpack.c.h.b16 %v3530
    %v3975 = vunpack.c.l.b16 %v3531
    %v3976 = vunpack.c.h.b16 %v3531
    %v3977 = vunpack.c.l.b16 %v3532
    %v3978 = vunpack.c.h.b16 %v3532
    %v3979 = vunpack.c.l.b16 %v3533
    %v3980 = vunpack.c.h.b16 %v3533
    %v3981 = vunpack.c.l.b16 %v3534
    %v3982 = vunpack.c.h.b16 %v3534
    %v3983 = vunpack.c.l.b16 %v3535
    %v3984 = vunpack.c.h.b16 %v3535
    %v3985 = vunpack.c.l.b16 %v3536
    %v3986 = vunpack.c.h.b16 %v3536
    %v3987 = vunpack.c.l.b16 %v3537
    %v3988 = vunpack.c.h.b16 %v3537
    %v3989 = vunpack.c.l.b16 %v3538
    %v3990 = vunpack.c.h.b16 %v3538
    %v3991 = vunpack.c.l.b16 %v3539
    %v3992 = vunpack.c.h.b16 %v3539
    %v3993 = vunpack.c.l.b16 %v3540
    %v3994 = vunpack.c.h.b16 %v3540
    %v3995 = vunpack.c.l.b16 %v3541
    %v3996 = vunpack.c.h.b16 %v3541
    %v3997 = vunpack.c.l.b16 %v3542
    %v3998 = vunpack.c.h.b16 %v3542
    %v3999 = vunpack.c.l.b16 %v3543
    %v4000 = vunpack.c.h.b16 %v3543
    %v4001 = vunpack.c.l.b16 %v3544
    %v4002 = vunpack.c.h.b16 %v3544
    %v4003 = vunpack.c.l.b16 %v3545
    %v4004 = vunpack.c.h.b16 %v3545
    %v4005 = vunpack.c.l.b16 %v3546
    %v4006 = vunpack.c.h.b16 %v3546
    %v4007 = vunpack.c.l.b16 %v3547
    %v4008 = vunpack.c.h.b16 %v3547
    %v4009 = vunpack.c.l.b16 %v3548
    %v4010 = vunpack.c.h.b16 %v3548
    %v4011 = vunpack.c.l.b16 %v3549
    %v4012 = vunpack.c.h.b16 %v3549
    %v4013 = vunpack.c.l.b16 %v3550
    %v4014 = vunpack.c.h.b16 %v3550
    %v4015 = vunpack.c.l.b16 %v3551
    %v4016 = vunpack.c.h.b16 %v3551
    %v4017 = vunpack.c.l.b16 %v3552
    %v4018 = vunpack.c.h.b16 %v3552
    %v4019 = vunpack.c.l.b16 %v3553
    %v4020 = vunpack.c.h.b16 %v3553
    %v4021 = vunpack.c.l.b16 %v3554
    %v4022 = vunpack.c.h.b16 %v3554
    %v4023 = vunpack.c.l.b16 %v3555
    %v4024 = vunpack.c.h.b16 %v3555
    %v4025 = vunpack.c.l.b16 %v3556
    %v4026 = vunpack.c.h.b16 %v3556
    %v4027 = vunpack.c.l.b16 %v3557
    %v4028 = vunpack.c.h.b16 %v3557
    %v4029 = vunpack.c.l.b16 %v3558
    %v4030 = vunpack.c.h.b16 %v3558
    %v4031 = vunpack.c.l.b16 %v3559
    %v4032 = vunpack.c.h.b16 %v3559
    %v4033 = vunpack.c.l.b16 %v3560
    %v4034 = vunpack.c.h.b16 %v3560
    %v4035 = vunpack.c.l.b16 %v3561
    %v4036 = vunpack.c.h.b16 %v3561
    %v4037 = vunpack.c.l.b16 %v3562
    %v4038 = vunpack.c.h.b16 %v3562
    %v4039 = vunpack.c.l.b16 %v3563
    %v4040 = vunpack.c.h.b16 %v3563
    %v4041 = vunpack.c.l.b16 %v3564
    %v4042 = vunpack.c.h.b16 %v3564
    %v4043 = vunpack.c.l.b16 %v3565
    %v4044 = vunpack.c.h.b16 %v3565
    %v4045 = vunpack.c.l.b16 %v3566
    %v4046 = vunpack.c.h.b16 %v3566
    %v4047 = vunpack.c.l.b16 %v3567
    %v4048 = vunpack.c.h.b16 %v3567
    %v4049 = vunpack.c.l.b16 %v3568
    %v4050 = vunpack.c.h.b16 %v3568
    %v4051 = vunpack.c.l.b16 %v3569
    %v4052 = vunpack.c.h.b16 %v3569
    %v4053 = vunpack.c.l.b16 %v3570
    %v4054 = vunpack.c.h.b16 %v3570
    %v4055 = vunpack.c.l.b16 %v3571
    %v4056 = vunpack.c.h.b16 %v3571
    %v4057 = vunpack.c.l.b16 %v3572
    %v4058 = vunpack.c.h.b16 %v3572
    %v4059 = vunpack.c.l.b16 %v3573
    %v4060 = vunpack.c.h.b16 %v3573
    %v4061 = vunpack.c.l.b16 %v3574
    %v4062 = vunpack.c.h.b16 %v3574
    %v4063 = vunpack.c.l.b16 %v3575
    %v4064 = vunpack.c.h.b16 %v3575
    %v4065 = vunpack.c.l.b16 %v3576
    %v4066 = vunpack.c.h.b16 %v3576
    %v4067 = vunpack.c.l.b16 %v3577
    %v4068 = vunpack.c.h.b16 %v3577
    %v4069 = vunpack.c.l.b16 %v3578
    %v4070 = vunpack.c.h.b16 %v3578
    %v4071 = vunpack.c.l.b16 %v3579
    %v4072 = vunpack.c.h.b16 %v3579
    %v4073 = vunpack.c.l.b16 %v3580
    %v4074 = vunpack.c.h.b16 %v3580
    %v4075 = vunpack.c.l.b16 %v3581
    %v4076 = vunpack.c.h.b16 %v3581
    %v4077 = vunpack.c.l.b16 %v3582
    %v4078 = vunpack.c.h.b16 %v3582
    %v4079 = vunpack.c.l.b16 %v3583
    %v4080 = vunpack.c.h.b16 %v3583
    %v4081 = vunpack.c.l.b16 %v3584
    %v4082 = vunpack.c.h.b16 %v3584
    %v4083 = vunpack.c.l.b16 %v3585
    %v4084 = vunpack.c.h.b16 %v3585
    %v4085 = vunpack.c.l.b16 %v3586
    %v4086 = vunpack.c.h.b16 %v3586
    %v4087 = vunpack.c.l.b16 %v3587
    %v4088 = vunpack.c.h.b16 %v3587
    %v4089 = vunpack.c.l.b16 %v3588
    %v4090 = vunpack.c.h.b16 %v3588
    %v4091 = vunpack.c.l.b16 %v3589
    %v4092 = vunpack.c.h.b16 %v3589
    %v4093 = vunpack.c.l.b16 %v3590
    %v4094 = vunpack.c.h.b16 %v3590
    %v4095 = vunpack.c.l.b16 %v3591
    %v4096 = vunpack.c.h.b16 %v3591
    %v4097 = vunpack.c.l.b16 %v3592
    %v4098 = vunpack.c.h.b16 %v3592
    %v4099 = vunpack.c.l.b16 %v3593
    %v4100 = vunpack.c.h.b16 %v3593
    %v4101 = vunpack.c.l.b16 %v3594
    %v4102 = vunpack.c.h.b16 %v3594
    %v4103 = vunpack.c.l.b16 %v3595
    %v4104 = vunpack.c.h.b16 %v3595
    %v4105 = vunpack.c.l.b16 %v3596
    %v4106 = vunpack.c.h.b16 %v3596
    %v4107 = vunpack.c.l.b16 %v3597
    %v4108 = vunpack.c.h.b16 %v3597
    %v4109 = vunpack.c.l.b16 %v3598
    %v4110 = vunpack.c.h.b16 %v3598
    %v4111 = vunpack.c.l.b16 %v3599
    %v4112 = vunpack.c.h.b16 %v3599
    %v4113 = vunpack.c.l.b16 %v3600
    %v4114 = vunpack.c.h.b16 %v3600
    %v4115 = vunpack.c.l.b16 %v3601
    %v4116 = vunpack.c.h.b16 %v3601
    %v4117 = vunpack.c.l.b16 %v3602
    %v4118 = vunpack.c.h.b16 %v3602
    %v4119 = vunpack.c.l.b16 %v3603
    %v4120 = vunpack.c.h.b16 %v3603
    %v4121 = vunpack.c.l.b16 %v3604
    %v4122 = vunpack.c.h.b16 %v3604
    %v4123 = vunpack.c.l.b16 %v3605
    %v4124 = vunpack.c.h.b16 %v3605
    %v4125 = vunpack.c.l.b16 %v3606
    %v4126 = vunpack.c.h.b16 %v3606
    %v4127 = vunpack.c.l.b16 %v3607
    %v4128 = vunpack.c.h.b16 %v3607
    %v4129 = vunpack.c.l.b16 %v3608
    %v4130 = vunpack.c.h.b16 %v3608
    %v4131 = vunpack.c.l.b16 %v3609
    %v4132 = vunpack.c.h.b16 %v3609
    %v4133 = vunpack.c.l.b16 %v3610
    %v4134 = vunpack.c.h.b16 %v3610
    %v4135 = vunpack.c.l.b16 %v3611
    %v4136 = vunpack.c.h.b16 %v3611
    %v4137 = vunpack.c.l.b16 %v3612
    %v4138 = vunpack.c.h.b16 %v3612
    %v4139 = vunpack.c.l.b16 %v3613
    %v4140 = vunpack.c.h.b16 %v3613
    %v4141 = vunpack.c.l.b16 %v3614
    %v4142 = vunpack.c.h.b16 %v3614
    %v4143 = vunpack.c.l.b16 %v3615
    %v4144 = vunpack.c.h.b16 %v3615
    %v4145 = vunpack.c.l.b16 %v3616
    %v4146 = vunpack.c.h.b16 %v3616
    %v4147 = vunpack.c.l.b16 %v3617
    %v4148 = vunpack.c.h.b16 %v3617
    %v4149 = vunpack.c.l.b16 %v3618
    %v4150 = vunpack.c.h.b16 %v3618
    %v4151 = vunpack.c.l.b16 %v3619
    %v4152 = vunpack.c.h.b16 %v3619
    %v4153 = vunpack.c.l.b16 %v3620
    %v4154 = vunpack.c.h.b16 %v3620
    %v4155 = vunpack.c.l.b16 %v3621
    %v4156 = vunpack.c.h.b16 %v3621
    %v4157 = vunpack.c.l.b16 %v3622
    %v4158 = vunpack.c.h.b16 %v3622
    %v4159 = vunpack.c.l.b16 %v3623
    %v4160 = vunpack.c.h.b16 %v3623
    %v4161 = vunpack.c.l.b16 %v3624
    %v4162 = vunpack.c.h.b16 %v3624
    %v4163 = vunpack.c.l.b16 %v3625
    %v4164 = vunpack.c.h.b16 %v3625
    %v4165 = vunpack.c.l.b16 %v3626
    %v4166 = vunpack.c.h.b16 %v3626
    %v4167 = vunpack.c.l.b16 %v3627
    %v4168 = vunpack.c.h.b16 %v3627
    %v4169 = vunpack.c.l.b16 %v3628
    %v4170 = vunpack.c.h.b16 %v3628
    %v4171 = vunpack.c.l.b16 %v3629
    %v4172 = vunpack.c.h.b16 %v3629
    %v4173 = vunpack.c.l.b16 %v3630
    %v4174 = vunpack.c.h.b16 %v3630
    %v4175 = vunpack.c.l.b16 %v3631
    %v4176 = vunpack.c.h.b16 %v3631
    %v4177 = vunpack.c.l.b16 %v3632
    %v4178 = vunpack.c.h.b16 %v3632
    %v4179 = vunpack.c.l.b16 %v3633
    %v4180 = vunpack.c.h.b16 %v3633
    %v4181 = vunpack.c.l.b16 %v3634
    %v4182 = vunpack.c.h.b16 %v3634
    %v4183 = vunpack.c.l.b16 %v3635
    %v4184 = vunpack.c.h.b16 %v3635
    %v4185 = vunpack.c.l.b16 %v3636
    %v4186 = vunpack.c.h.b16 %v3636
    %v4187 = vunpack.c.l.b16 %v3637
    %v4188 = vunpack.c.h.b16 %v3637
    %v4189 = vunpack.c.l.b16 %v3638
    %v4190 = vunpack.c.h.b16 %v3638
    %v4191 = vunpack.c.l.b16 %v3639
    %v4192 = vunpack.c.h.b16 %v3639
    %v4193 = vunpack.c.l.b16 %v3640
    %v4194 = vunpack.c.h.b16 %v3640
    %v4195 = vunpack.c.l.b16 %v3641
    %v4196 = vunpack.c.h.b16 %v3641
    %v4197 = vunpack.c.l.b16 %v3642
    %v4198 = vunpack.c.h.b16 %v3642
    %v4199 = vunpack.c.l.b16 %v3643
    %v4200 = vunpack.c.h.b16 %v3643
    %v4201 = vunpack.c.l.b16 %v3644
    %v4202 = vunpack.c.h.b16 %v3644
    %v4203 = vunpack.c.l.b16 %v3645
    %v4204 = vunpack.c.h.b16 %v3645
    %v4205 = vunpack.c.l.b16 %v3646
    %v4206 = vunpack.c.h.b16 %v3646
    %v4207 = vunpack.c.l.b16 %v3647
    %v4208 = vunpack.c.h.b16 %v3647
    %v4209 = vunpack.c.l.b16 %v3648
    %v4210 = vunpack.c.h.b16 %v3648
    %v4211 = vunpack.c.l.b16 %v3649
    %v4212 = vunpack.c.h.b16 %v3649
    %v4213 = vunpack.c.l.b16 %v3650
    %v4214 = vunpack.c.h.b16 %v3650
    %v4215 = vunpack.c.l.b16 %v3651
    %v4216 = vunpack.c.h.b16 %v3651
    %v4217 = vunpack.c.l.b16 %v3652
    %v4218 = vunpack.c.h.b16 %v3652
    %v4219 = vunpack.c.l.b16 %v3653
    %v4220 = vunpack.c.h.b16 %v3653
    %v4221 = vunpack.c.l.b16 %v3654
    %v4222 = vunpack.c.h.b16 %v3654
    %v4223 = vunpack.c.l.b16 %v3655
    %v4224 = vunpack.c.h.b16 %v3655
    %v4225 = vunpack.c.l.b16 %v3656
    %v4226 = vunpack.c.h.b16 %v3656
    %v4227 = vunpack.c.l.b16 %v3657
    %v4228 = vunpack.c.h.b16 %v3657
    %v4229 = vunpack.c.l.b16 %v3658
    %v4230 = vunpack.c.h.b16 %v3658
    %v4231 = vunpack.c.l.b16 %v3659
    %v4232 = vunpack.c.h.b16 %v3659
    %v4233 = vunpack.c.l.b16 %v3660
    %v4234 = vunpack.c.h.b16 %v3660
    %v4235 = vunpack.c.l.b16 %v3661
    %v4236 = vunpack.c.h.b16 %v3661
    %v4237 = vunpack.c.l.b16 %v3662
    %v4238 = vunpack.c.h.b16 %v3662
    %v4239 = vunpack.c.l.b16 %v3663
    %v4240 = vunpack.c.h.b16 %v3663
    %v4241 = vunpack.c.l.b16 %v3664
    %v4242 = vunpack.c.h.b16 %v3664
    %v4243 = vunpack.c.l.b16 %v3665
    %v4244 = vunpack.c.h.b16 %v3665
    %v4245 = vunpack.c.l.b16 %v3666
    %v4246 = vunpack.c.h.b16 %v3666
    %v4247 = vunpack.c.l.b16 %v3667
    %v4248 = vunpack.c.h.b16 %v3667
    %v4249 = vunpack.c.l.b16 %v3668
    %v4250 = vunpack.c.h.b16 %v3668
    %v4251 = vunpack.c.l.b16 %v3669
    %v4252 = vunpack.c.h.b16 %v3669
    %v4253 = vunpack.c.l.b16 %v3670
    %v4254 = vunpack.c.h.b16 %v3670
    %v4255 = vunpack.c.l.b16 %v3671
    %v4256 = vunpack.c.h.b16 %v3671
    %v4257 = vunpack.c.l.b16 %v3672
    %v4258 = vunpack.c.h.b16 %v3672
    %v4259 = vpack.c.b16 %v3879, %v3875
    %v4260 = vpack.c.b16 %v3880, %v3876
    %v4261 = vpack.c.b16 %v3881, %v3877
    %v4262 = vpack.c.b16 %v3882, %v3878
    %v4263 = vpack.c.b16 %v3887, %v3883
    %v4264 = vpack.c.b16 %v3888, %v3884
    %v4265 = vpack.c.b16 %v3889, %v3885
    %v4266 = vpack.c.b16 %v3890, %v3886
    %v4267 = vpack.c.b16 %v3895, %v3891
    %v4268 = vpack.c.b16 %v3896, %v3892
    %v4269 = vpack.c.b16 %v3897, %v3893
    %v4270 = vpack.c.b16 %v3898, %v3894
    %v4271 = vpack.c.b16 %v3903, %v3899
    %v4272 = vpack.c.b16 %v3904, %v3900
    %v4273 = vpack.c.b16 %v3905, %v3901
    %v4274 = vpack.c.b16 %v3906, %v3902
    %v4275 = vpack.c.b16 %v3911, %v3907
    %v4276 = vpack.c.b16 %v3912, %v3908
    %v4277 = vpack.c.b16 %v3913, %v3909
    %v4278 = vpack.c.b16 %v3914, %v3910
    %v4279 = vpack.c.b16 %v3919, %v3915
    %v4280 = vpack.c.b16 %v3920, %v3916
    %v4281 = vpack.c.b16 %v3921, %v3917
    %v4282 = vpack.c.b16 %v3922, %v3918
    %v4283 = vpack.c.b16 %v3927, %v3923
    %v4284 = vpack.c.b16 %v3928, %v3924
    %v4285 = vpack.c.b16 %v3929, %v3925
    %v4286 = vpack.c.b16 %v3930, %v3926
    %v4287 = vpack.c.b16 %v3935, %v3931
    %v4288 = vpack.c.b16 %v3936, %v3932
    %v4289 = vpack.c.b16 %v3937, %v3933
    %v4290 = vpack.c.b16 %v3938, %v3934
    %v4291 = vpack.c.b16 %v3943, %v3939
    %v4292 = vpack.c.b16 %v3944, %v3940
    %v4293 = vpack.c.b16 %v3945, %v3941
    %v4294 = vpack.c.b16 %v3946, %v3942
    %v4295 = vpack.c.b16 %v3951, %v3947
    %v4296 = vpack.c.b16 %v3952, %v3948
    %v4297 = vpack.c.b16 %v3953, %v3949
    %v4298 = vpack.c.b16 %v3954, %v3950
    %v4299 = vpack.c.b16 %v3959, %v3955
    %v4300 = vpack.c.b16 %v3960, %v3956
    %v4301 = vpack.c.b16 %v3961, %v3957
    %v4302 = vpack.c.b16 %v3962, %v3958
    %v4303 = vpack.c.b16 %v3967, %v3963
    %v4304 = vpack.c.b16 %v3968, %v3964
    %v4305 = vpack.c.b16 %v3969, %v3965
    %v4306 = vpack.c.b16 %v3970, %v3966
    %v4307 = vpack.c.b16 %v3975, %v3971
    %v4308 = vpack.c.b16 %v3976, %v3972
    %v4309 = vpack.c.b16 %v3977, %v3973
    %v4310 = vpack.c.b16 %v3978, %v3974
    %v4311 = vpack.c.b16 %v3983, %v3979
    %v4312 = vpack.c.b16 %v3984, %v3980
    %v4313 = vpack.c.b16 %v3985, %v3981
    %v4314 = vpack.c.b16 %v3986, %v3982
    %v4315 = vpack.c.b16 %v3991, %v3987
    %v4316 = vpack.c.b16 %v3992, %v3988
    %v4317 = vpack.c.b16 %v3993, %v3989
    %v4318 = vpack.c.b16 %v3994, %v3990
    %v4319 = vpack.c.b16 %v3999, %v3995
    %v4320 = vpack.c.b16 %v4000, %v3996
    %v4321 = vpack.c.b16 %v4001, %v3997
    %v4322 = vpack.c.b16 %v4002, %v3998
    %v4323 = vpack.c.b16 %v4007, %v4003
    %v4324 = vpack.c.b16 %v4008, %v4004
    %v4325 = vpack.c.b16 %v4009, %v4005
    %v4326 = vpack.c.b16 %v4010, %v4006
    %v4327 = vpack.c.b16 %v4015, %v4011
    %v4328 = vpack.c.b16 %v4016, %v4012
    %v4329 = vpack.c.b16 %v4017, %v4013
    %v4330 = vpack.c.b16 %v4018, %v4014
    %v4331 = vpack.c.b16 %v4023, %v4019
    %v4332 = vpack.c.b16 %v4024, %v4020
    %v4333 = vpack.c.b16 %v4025, %v4021
    %v4334 = vpack.c.b16 %v4026, %v4022
    %v4335 = vpack.c.b16 %v4031, %v4027
    %v4336 = vpack.c.b16 %v4032, %v4028
    %v4337 = vpack.c.b16 %v4033, %v4029
    %v4338 = vpack.c.b16 %v4034, %v4030
    %v4339 = vpack.c.b16 %v4039, %v4035
    %v4340 = vpack.c.b16 %v4040, %v4036
    %v4341 = vpack.c.b16 %v4041, %v4037
    %v4342 = vpack.c.b16 %v4042, %v4038
    %v4343 = vpack.c.b16 %v4047, %v4043
    %v4344 = vpack.c.b16 %v4048, %v4044
    %v4345 = vpack.c.b16 %v4049, %v4045
    %v4346 = vpack.c.b16 %v4050, %v4046
    %v4347 = vpack.c.b16 %v4055, %v4051
    %v4348 = vpack.c.b16 %v4056, %v4052
    %v4349 = vpack.c.b16 %v4057, %v4053
    %v4350 = vpack.c.b16 %v4058, %v4054
    %v4351 = vpack.c.b16 %v4063, %v4059
    %v4352 = vpack.c.b16 %v4064, %v4060
    %v4353 = vpack.c.b16 %v4065, %v4061
    %v4354 = vpack.c.b16 %v4066, %v4062
    %v4355 = vpack.c.b16 %v4071, %v4067
    %v4356 = vpack.c.b16 %v4072, %v4068
    %v4357 = vpack.c.b16 %v4073, %v4069
    %v4358 = vpack.c.b16 %v4074, %v4070
    %v4359 = vpack.c.b16 %v4079, %v4075
    %v4360 = vpack.c.b16 %v4080, %v4076
    %v4361 = vpack.c.b16 %v4081, %v4077
    %v4362 = vpack.c.b16 %v4082, %v4078
    %v4363 = vpack.c.b16 %v4087, %v4083
    %v4364 = vpack.c.b16 %v4088, %v4084
    %v4365 = vpack.c.b16 %v4089, %v4085
    %v4366 = vpack.c.b16 %v4090, %v4086
    %v4367 = vpack.c.b16 %v4095, %v4091
    %v4368 = vpack.c.b16 %v4096, %v4092
    %v4369 = vpack.c.b16 %v4097, %v4093
    %v4370 = vpack.c.b16 %v4098, %v4094
    %v4371 = vpack.c.b16 %v4103, %v4099
    %v4372 = vpack.c.b16 %v4104, %v4100
    %v4373 = vpack.c.b16 %v4105, %v4101
    %v4374 = vpack.c.b16 %v4106, %v4102
    %v4375 = vpack.c.b16 %v4111, %v4107
    %v4376 = vpack.c.b16 %v4112, %v4108
    %v4377 = vpack.c.b16 %v4113, %v4109
    %v4378 = vpack.c.b16 %v4114, %v4110
    %v4379 = vpack.c.b16 %v4119, %v4115
    %v4380 = vpack.c.b16 %v4120, %v4116
    %v4381 = vpack.c.b16 %v4121, %v4117
    %v4382 = vpack.c.b16 %v4122, %v4118
    %v4383 = vpack.c.b16 %v4127, %v4123
    %v4384 = vpack.c.b16 %v4128, %v4124
    %v4385 = vpack.c.b16 %v4129, %v4125
    %v4386 = vpack.c.b16 %v4130, %v4126
    %v4387 = vpack.c.b16 %v4135, %v4131
    %v4388 = vpack.c.b16 %v4136, %v4132
    %v4389 = vpack.c.b16 %v4137, %v4133
    %v4390 = vpack.c.b16 %v4138, %v4134
    %v4391 = vpack.c.b16 %v4143, %v4139
    %v4392 = vpack.c.b16 %v4144, %v4140
    %v4393 = vpack.c.b16 %v4145, %v4141
    %v4394 = vpack.c.b16 %v4146, %v4142
    %v4395 = vpack.c.b16 %v4151, %v4147
    %v4396 = vpack.c.b16 %v4152, %v4148
    %v4397 = vpack.c.b16 %v4153, %v4149
    %v4398 = vpack.c.b16 %v4154, %v4150
    %v4399 = vpack.c.b16 %v4159, %v4155
    %v4400 = vpack.c.b16 %v4160, %v4156
    %v4401 = vpack.c.b16 %v4161, %v4157
    %v4402 = vpack.c.b16 %v4162, %v4158
    %v4403 = vpack.c.b16 %v4167, %v4163
    %v4404 = vpack.c.b16 %v4168, %v4164
    %v4405 = vpack.c.b16 %v4169, %v4165
    %v4406 = vpack.c.b16 %v4170, %v4166
    %v4407 = vpack.c.b16 %v4175, %v4171
    %v4408 = vpack.c.b16 %v4176, %v4172
    %v4409 = vpack.c.b16 %v4177, %v4173
    %v4410 = vpack.c.b16 %v4178, %v4174
    %v4411 = vpack.c.b16 %v4183, %v4179
    %v4412 = vpack.c.b16 %v4184, %v4180
    %v4413 = vpack.c.b16 %v4185, %v4181
    %v4414 = vpack.c.b16 %v4186, %v4182
    %v4415 = vpack.c.b16 %v4191, %v4187
    %v4416 = vpack.c.b16 %v4192, %v4188
    %v4417 = vpack.c.b16 %v4193, %v4189
    %v4418 = vpack.c.b16 %v4194, %v4190
    %v4419 = vpack.c.b16 %v4199, %v4195
    %v4420 = vpack.c.b16 %v4200, %v4196
    %v4421 = vpack.c.b16 %v4201, %v4197
    %v4422 = vpack.c.b16 %v4202, %v4198
    %v4423 = vpack.c.b16 %v4207, %v4203
    %v4424 = vpack.c.b16 %v4208, %v4204
    %v4425 = vpack.c.b16 %v4209, %v4205
    %v4426 = vpack.c.b16 %v4210, %v4206
    %v4427 = vpack.c.b16 %v4215, %v4211
    %v4428 = vpack.c.b16 %v4216, %v4212
    %v4429 = vpack.c.b16 %v4217, %v4213
    %v4430 = vpack.c.b16 %v4218, %v4214
    %v4431 = vpack.c.b16 %v4223, %v4219
    %v4432 = vpack.c.b16 %v4224, %v4220
    %v4433 = vpack.c.b16 %v4225, %v4221
    %v4434 = vpack.c.b16 %v4226, %v4222
    %v4435 = vpack.c.b16 %v4231, %v4227
    %v4436 = vpack.c.b16 %v4232, %v4228
    %v4437 = vpack.c.b16 %v4233, %v4229
    %v4438 = vpack.c.b16 %v4234, %v4230
    %v4439 = vpack.c.b16 %v4239, %v4235
    %v4440 = vpack.c.b16 %v4240, %v4236
    %v4441 = vpack.c.b16 %v4241, %v4237
    %v4442 = vpack.c.b16 %v4242, %v4238
    %v4443 = vpack.c.b16 %v4247, %v4243
    %v4444 = vpack.c.b16 %v4248, %v4244
    %v4445 = vpack.c.b16 %v4249, %v4245
    %v4446 = vpack.c.b16 %v4250, %v4246
    %v4447 = vpack.c.b16 %v4255, %v4251
    %v4448 = vpack.c.b16 %v4256, %v4252
    %v4449 = vpack.c.b16 %v4257, %v4253
    %v4450 = vpack.c.b16 %v4258, %v4254
    %4643 = vmatpush.bf16.msra.mxu0 %v4287
    %4644 = vmatpush.bf16.msra.mxu0 %v4283
    %4645 = vmatpush.bf16.msra.mxu0 %v4279
    %4646 = vmatpush.bf16.msra.mxu0 %v4275
    %4647 = vmatpush.bf16.msra.mxu0 %v4271
    %4648 = vmatpush.bf16.msra.mxu0 %v4267
    %4649 = vmatpush.bf16.msra.mxu0 %v4263
    %4650 = vmatpush.bf16.msra.mxu0 %v4259
    %4651 = vmatmul.bf16.gmra.mxu0 %v3475
    %v4652 = vpop.f32.mrf.mxu0
    %v4653 = vadd.f32 %v3675, %v4652
    %v4654 = vpop.f32.mrf.mxu0
    %4655 = vdwg.mxu0
    %4656 = vmatpush.bf16.msra.mxu0 %v4319
    %4657 = vmatpush.bf16.msra.mxu0 %v4315
    %4658 = vmatpush.bf16.msra.mxu0 %v4311
    %4659 = vmatpush.bf16.msra.mxu0 %v4307
    %4660 = vmatpush.bf16.msra.mxu0 %v4303
    %4661 = vmatpush.bf16.msra.mxu0 %v4299
    %4662 = vmatpush.bf16.msra.mxu0 %v4295
    %4663 = vmatpush.bf16.msra.mxu0 %v4291
    %4664 = vmatmul.bf16.gmra.mxu0 %v3476
    %v4665 = vpop.f32.mrf.mxu0
    %v4666 = vadd.f32 %v4653, %v4665
    %v4667 = vpop.f32.mrf.mxu0
    %4668 = vdwg.mxu0
    %4669 = vmatpush.bf16.msra.mxu0 %v4351
    %4670 = vmatpush.bf16.msra.mxu0 %v4347
    %4671 = vmatpush.bf16.msra.mxu0 %v4343
    %4672 = vmatpush.bf16.msra.mxu0 %v4339
    %4673 = vmatpush.bf16.msra.mxu0 %v4335
    %4674 = vmatpush.bf16.msra.mxu0 %v4331
    %4675 = vmatpush.bf16.msra.mxu0 %v4327
    %4676 = vmatpush.bf16.msra.mxu0 %v4323
    %4677 = vmatmul.bf16.gmra.mxu0 %v3477
    %v4678 = vpop.f32.mrf.mxu0
    %v4679 = vadd.f32 %v4666, %v4678
    %v4680 = vpop.f32.mrf.mxu0
    %4681 = vdwg.mxu0
    %4682 = vmatpush.bf16.msra.mxu0 %v4383
    %4683 = vmatpush.bf16.msra.mxu0 %v4379
    %4684 = vmatpush.bf16.msra.mxu0 %v4375
    %4685 = vmatpush.bf16.msra.mxu0 %v4371
    %4686 = vmatpush.bf16.msra.mxu0 %v4367
    %4687 = vmatpush.bf16.msra.mxu0 %v4363
    %4688 = vmatpush.bf16.msra.mxu0 %v4359
    %4689 = vmatpush.bf16.msra.mxu0 %v4355
    %4690 = vmatmul.bf16.gmra.mxu0 %v3478
    %v4691 = vpop.f32.mrf.mxu0
    %v4692 = vadd.f32 %v4679, %v4691
    %v4693 = vpop.f32.mrf.mxu0
    %4694 = vdwg.mxu0
    %4695 = vmatpush.bf16.msra.mxu0 %v4415
    %4696 = vmatpush.bf16.msra.mxu0 %v4411
    %4697 = vmatpush.bf16.msra.mxu0 %v4407
    %4698 = vmatpush.bf16.msra.mxu0 %v4403
    %4699 = vmatpush.bf16.msra.mxu0 %v4399
    %4700 = vmatpush.bf16.msra.mxu0 %v4395
    %4701 = vmatpush.bf16.msra.mxu0 %v4391
    %4702 = vmatpush.bf16.msra.mxu0 %v4387
    %4703 = vmatmul.bf16.gmra.mxu0 %v3479
    %v4704 = vpop.f32.mrf.mxu0
    %v4705 = vadd.f32 %v4692, %v4704
    %v4706 = vpop.f32.mrf.mxu0
    %4707 = vdwg.mxu0
    %4708 = vmatpush.bf16.msra.mxu0 %v4447
    %4709 = vmatpush.bf16.msra.mxu0 %v4443
    %4710 = vmatpush.bf16.msra.mxu0 %v4439
    %4711 = vmatpush.bf16.msra.mxu0 %v4435
    %4712 = vmatpush.bf16.msra.mxu0 %v4431
    %4713 = vmatpush.bf16.msra.mxu0 %v4427
    %4714 = vmatpush.bf16.msra.mxu0 %v4423
    %4715 = vmatpush.bf16.msra.mxu0 %v4419
    %4716 = vmatmul.bf16.gmra.mxu0 %v3480
    %v4717 = vpop.f32.mrf.mxu0
    %v4718 = vadd.f32 %v4705, %v4717
    %v4719 = vpop.f32.mrf.mxu0
    %4720 = vdwg.mxu0
    %4721 = vmatpush.bf16.msra.mxu0 %v4288
    %4722 = vmatpush.bf16.msra.mxu0 %v4284
    %4723 = vmatpush.bf16.msra.mxu0 %v4280
    %4724 = vmatpush.bf16.msra.mxu0 %v4276
    %4725 = vmatpush.bf16.msra.mxu0 %v4272
    %4726 = vmatpush.bf16.msra.mxu0 %v4268
    %4727 = vmatpush.bf16.msra.mxu0 %v4264
    %4728 = vmatpush.bf16.msra.mxu0 %v4260
    %4729 = vmatmul.bf16.gmra.mxu0 %v3475
    %v4730 = vpop.f32.mrf.mxu0
    %v4731 = vadd.f32 %v3676, %v4730
    %v4732 = vpop.f32.mrf.mxu0
    %4733 = vdwg.mxu0
    %4734 = vmatpush.bf16.msra.mxu0 %v4320
    %4735 = vmatpush.bf16.msra.mxu0 %v4316
    %4736 = vmatpush.bf16.msra.mxu0 %v4312
    %4737 = vmatpush.bf16.msra.mxu0 %v4308
    %4738 = vmatpush.bf16.msra.mxu0 %v4304
    %4739 = vmatpush.bf16.msra.mxu0 %v4300
    %4740 = vmatpush.bf16.msra.mxu0 %v4296
    %4741 = vmatpush.bf16.msra.mxu0 %v4292
    %4742 = vmatmul.bf16.gmra.mxu0 %v3476
    %v4743 = vpop.f32.mrf.mxu0
    %v4744 = vadd.f32 %v4731, %v4743
    %v4745 = vpop.f32.mrf.mxu0
    %4746 = vdwg.mxu0
    %4747 = vmatpush.bf16.msra.mxu0 %v4352
    %4748 = vmatpush.bf16.msra.mxu0 %v4348
    %4749 = vmatpush.bf16.msra.mxu0 %v4344
    %4750 = vmatpush.bf16.msra.mxu0 %v4340
    %4751 = vmatpush.bf16.msra.mxu0 %v4336
    %4752 = vmatpush.bf16.msra.mxu0 %v4332
    %4753 = vmatpush.bf16.msra.mxu0 %v4328
    %4754 = vmatpush.bf16.msra.mxu0 %v4324
    %4755 = vmatmul.bf16.gmra.mxu0 %v3477
    %v4756 = vpop.f32.mrf.mxu0
    %v4757 = vadd.f32 %v4744, %v4756
    %v4758 = vpop.f32.mrf.mxu0
    %4759 = vdwg.mxu0
    %4760 = vmatpush.bf16.msra.mxu0 %v4384
    %4761 = vmatpush.bf16.msra.mxu0 %v4380
    %4762 = vmatpush.bf16.msra.mxu0 %v4376
    %4763 = vmatpush.bf16.msra.mxu0 %v4372
    %4764 = vmatpush.bf16.msra.mxu0 %v4368
    %4765 = vmatpush.bf16.msra.mxu0 %v4364
    %4766 = vmatpush.bf16.msra.mxu0 %v4360
    %4767 = vmatpush.bf16.msra.mxu0 %v4356
    %4768 = vmatmul.bf16.gmra.mxu0 %v3478
    %v4769 = vpop.f32.mrf.mxu0
    %v4770 = vadd.f32 %v4757, %v4769
    %v4771 = vpop.f32.mrf.mxu0
    %4772 = vdwg.mxu0
    %4773 = vmatpush.bf16.msra.mxu0 %v4416
    %4774 = vmatpush.bf16.msra.mxu0 %v4412
    %4775 = vmatpush.bf16.msra.mxu0 %v4408
    %4776 = vmatpush.bf16.msra.mxu0 %v4404
    %4777 = vmatpush.bf16.msra.mxu0 %v4400
    %4778 = vmatpush.bf16.msra.mxu0 %v4396
    %4779 = vmatpush.bf16.msra.mxu0 %v4392
    %4780 = vmatpush.bf16.msra.mxu0 %v4388
    %4781 = vmatmul.bf16.gmra.mxu0 %v3479
    %v4782 = vpop.f32.mrf.mxu0
    %v4783 = vadd.f32 %v4770, %v4782
    %v4784 = vpop.f32.mrf.mxu0
    %4785 = vdwg.mxu0
    %4786 = vmatpush.bf16.msra.mxu0 %v4448
    %4787 = vmatpush.bf16.msra.mxu0 %v4444
    %4788 = vmatpush.bf16.msra.mxu0 %v4440
    %4789 = vmatpush.bf16.msra.mxu0 %v4436
    %4790 = vmatpush.bf16.msra.mxu0 %v4432
    %4791 = vmatpush.bf16.msra.mxu0 %v4428
    %4792 = vmatpush.bf16.msra.mxu0 %v4424
    %4793 = vmatpush.bf16.msra.mxu0 %v4420
    %4794 = vmatmul.bf16.gmra.mxu0 %v3480
    %v4795 = vpop.f32.mrf.mxu0
    %v4796 = vadd.f32 %v4783, %v4795
    %v4797 = vpop.f32.mrf.mxu0
    %4798 = vdwg.mxu0
    %4799 = vmatpush.bf16.msra.mxu0 %v4289
    %4800 = vmatpush.bf16.msra.mxu0 %v4285
    %4801 = vmatpush.bf16.msra.mxu0 %v4281
    %4802 = vmatpush.bf16.msra.mxu0 %v4277
    %4803 = vmatpush.bf16.msra.mxu0 %v4273
    %4804 = vmatpush.bf16.msra.mxu0 %v4269
    %4805 = vmatpush.bf16.msra.mxu0 %v4265
    %4806 = vmatpush.bf16.msra.mxu0 %v4261
    %4807 = vmatmul.bf16.gmra.mxu0 %v3475
    %v4808 = vpop.f32.mrf.mxu0
    %v4809 = vadd.f32 %v3677, %v4808
    %v4810 = vpop.f32.mrf.mxu0
    %4811 = vdwg.mxu0
    %4812 = vmatpush.bf16.msra.mxu0 %v4321
    %4813 = vmatpush.bf16.msra.mxu0 %v4317
    %4814 = vmatpush.bf16.msra.mxu0 %v4313
    %4815 = vmatpush.bf16.msra.mxu0 %v4309
    %4816 = vmatpush.bf16.msra.mxu0 %v4305
    %4817 = vmatpush.bf16.msra.mxu0 %v4301
    %4818 = vmatpush.bf16.msra.mxu0 %v4297
    %4819 = vmatpush.bf16.msra.mxu0 %v4293
    %4820 = vmatmul.bf16.gmra.mxu0 %v3476
    %v4821 = vpop.f32.mrf.mxu0
    %v4822 = vadd.f32 %v4809, %v4821
    %v4823 = vpop.f32.mrf.mxu0
    %4824 = vdwg.mxu0
    %4825 = vmatpush.bf16.msra.mxu0 %v4353
    %4826 = vmatpush.bf16.msra.mxu0 %v4349
    %4827 = vmatpush.bf16.msra.mxu0 %v4345
    %4828 = vmatpush.bf16.msra.mxu0 %v4341
    %4829 = vmatpush.bf16.msra.mxu0 %v4337
    %4830 = vmatpush.bf16.msra.mxu0 %v4333
    %4831 = vmatpush.bf16.msra.mxu0 %v4329
    %4832 = vmatpush.bf16.msra.mxu0 %v4325
    %4833 = vmatmul.bf16.gmra.mxu0 %v3477
    %v4834 = vpop.f32.mrf.mxu0
    %v4835 = vadd.f32 %v4822, %v4834
    %v4836 = vpop.f32.mrf.mxu0
    %4837 = vdwg.mxu0
    %4838 = vmatpush.bf16.msra.mxu0 %v4385
    %4839 = vmatpush.bf16.msra.mxu0 %v4381
    %4840 = vmatpush.bf16.msra.mxu0 %v4377
    %4841 = vmatpush.bf16.msra.mxu0 %v4373
    %4842 = vmatpush.bf16.msra.mxu0 %v4369
    %4843 = vmatpush.bf16.msra.mxu0 %v4365
    %4844 = vmatpush.bf16.msra.mxu0 %v4361
    %4845 = vmatpush.bf16.msra.mxu0 %v4357
    %4846 = vmatmul.bf16.gmra.mxu0 %v3478
    %v4847 = vpop.f32.mrf.mxu0
    %v4848 = vadd.f32 %v4835, %v4847
    %v4849 = vpop.f32.mrf.mxu0
    %4850 = vdwg.mxu0
    %4851 = vmatpush.bf16.msra.mxu0 %v4417
    %4852 = vmatpush.bf16.msra.mxu0 %v4413
    %4853 = vmatpush.bf16.msra.mxu0 %v4409
    %4854 = vmatpush.bf16.msra.mxu0 %v4405
    %4855 = vmatpush.bf16.msra.mxu0 %v4401
    %4856 = vmatpush.bf16.msra.mxu0 %v4397
    %4857 = vmatpush.bf16.msra.mxu0 %v4393
    %4858 = vmatpush.bf16.msra.mxu0 %v4389
    %4859 = vmatmul.bf16.gmra.mxu0 %v3479
    %v4860 = vpop.f32.mrf.mxu0
    %v4861 = vadd.f32 %v4848, %v4860
    %v4862 = vpop.f32.mrf.mxu0
    %4863 = vdwg.mxu0
    %4864 = vmatpush.bf16.msra.mxu0 %v4449
    %4865 = vmatpush.bf16.msra.mxu0 %v4445
    %4866 = vmatpush.bf16.msra.mxu0 %v4441
    %4867 = vmatpush.bf16.msra.mxu0 %v4437
    %4868 = vmatpush.bf16.msra.mxu0 %v4433
    %4869 = vmatpush.bf16.msra.mxu0 %v4429
    %4870 = vmatpush.bf16.msra.mxu0 %v4425
    %4871 = vmatpush.bf16.msra.mxu0 %v4421
    %4872 = vmatmul.bf16.gmra.mxu0 %v3480
    %v4873 = vpop.f32.mrf.mxu0
    %v4874 = vadd.f32 %v4861, %v4873
    %v4875 = vpop.f32.mrf.mxu0
    %4876 = vdwg.mxu0
    %4877 = vmatpush.bf16.msra.mxu0 %v4290
    %4878 = vmatpush.bf16.msra.mxu0 %v4286
    %4879 = vmatpush.bf16.msra.mxu0 %v4282
    %4880 = vmatpush.bf16.msra.mxu0 %v4278
    %4881 = vmatpush.bf16.msra.mxu0 %v4274
    %4882 = vmatpush.bf16.msra.mxu0 %v4270
    %4883 = vmatpush.bf16.msra.mxu0 %v4266
    %4884 = vmatpush.bf16.msra.mxu0 %v4262
    %4885 = vmatmul.bf16.gmra.mxu0 %v3475
    %v4886 = vpop.f32.mrf.mxu0
    %v4887 = vadd.f32 %v3678, %v4886
    %v4888 = vpop.f32.mrf.mxu0
    %4889 = vdwg.mxu0
    %4890 = vmatpush.bf16.msra.mxu0 %v4322
    %4891 = vmatpush.bf16.msra.mxu0 %v4318
    %4892 = vmatpush.bf16.msra.mxu0 %v4314
    %4893 = vmatpush.bf16.msra.mxu0 %v4310
    %4894 = vmatpush.bf16.msra.mxu0 %v4306
    %4895 = vmatpush.bf16.msra.mxu0 %v4302
    %4896 = vmatpush.bf16.msra.mxu0 %v4298
    %4897 = vmatpush.bf16.msra.mxu0 %v4294
    %4898 = vmatmul.bf16.gmra.mxu0 %v3476
    %v4899 = vpop.f32.mrf.mxu0
    %v4900 = vadd.f32 %v4887, %v4899
    %v4901 = vpop.f32.mrf.mxu0
    %4902 = vdwg.mxu0
    %4903 = vmatpush.bf16.msra.mxu0 %v4354
    %4904 = vmatpush.bf16.msra.mxu0 %v4350
    %4905 = vmatpush.bf16.msra.mxu0 %v4346
    %4906 = vmatpush.bf16.msra.mxu0 %v4342
    %4907 = vmatpush.bf16.msra.mxu0 %v4338
    %4908 = vmatpush.bf16.msra.mxu0 %v4334
    %4909 = vmatpush.bf16.msra.mxu0 %v4330
    %4910 = vmatpush.bf16.msra.mxu0 %v4326
    %4911 = vmatmul.bf16.gmra.mxu0 %v3477
    %v4912 = vpop.f32.mrf.mxu0
    %v4913 = vadd.f32 %v4900, %v4912
    %v4914 = vpop.f32.mrf.mxu0
    %4915 = vdwg.mxu0
    %4916 = vmatpush.bf16.msra.mxu0 %v4386
    %4917 = vmatpush.bf16.msra.mxu0 %v4382
    %4918 = vmatpush.bf16.msra.mxu0 %v4378
    %4919 = vmatpush.bf16.msra.mxu0 %v4374
    %4920 = vmatpush.bf16.msra.mxu0 %v4370
    %4921 = vmatpush.bf16.msra.mxu0 %v4366
    %4922 = vmatpush.bf16.msra.mxu0 %v4362
    %4923 = vmatpush.bf16.msra.mxu0 %v4358
    %4924 = vmatmul.bf16.gmra.mxu0 %v3478
    %v4925 = vpop.f32.mrf.mxu0
    %v4926 = vadd.f32 %v4913, %v4925
    %v4927 = vpop.f32.mrf.mxu0
    %4928 = vdwg.mxu0
    %4929 = vmatpush.bf16.msra.mxu0 %v4418
    %4930 = vmatpush.bf16.msra.mxu0 %v4414
    %4931 = vmatpush.bf16.msra.mxu0 %v4410
    %4932 = vmatpush.bf16.msra.mxu0 %v4406
    %4933 = vmatpush.bf16.msra.mxu0 %v4402
    %4934 = vmatpush.bf16.msra.mxu0 %v4398
    %4935 = vmatpush.bf16.msra.mxu0 %v4394
    %4936 = vmatpush.bf16.msra.mxu0 %v4390
    %4937 = vmatmul.bf16.gmra.mxu0 %v3479
    %v4938 = vpop.f32.mrf.mxu0
    %v4939 = vadd.f32 %v4926, %v4938
    %v4940 = vpop.f32.mrf.mxu0
    %4941 = vdwg.mxu0
    %4942 = vmatpush.bf16.msra.mxu0 %v4450
    %4943 = vmatpush.bf16.msra.mxu0 %v4446
    %4944 = vmatpush.bf16.msra.mxu0 %v4442
    %4945 = vmatpush.bf16.msra.mxu0 %v4438
    %4946 = vmatpush.bf16.msra.mxu0 %v4434
    %4947 = vmatpush.bf16.msra.mxu0 %v4430
    %4948 = vmatpush.bf16.msra.mxu0 %v4426
    %4949 = vmatpush.bf16.msra.mxu0 %v4422
    %4950 = vmatmul.bf16.gmra.mxu0 %v3480
    %v4951 = vpop.f32.mrf.mxu0
    %v4952 = vadd.f32 %v4939, %v4951
    %v4953 = vpop.f32.mrf.mxu0
    %4954 = vdwg.mxu0
    %v4955 = vmul.f32 %v4718, 0.5
    %v4956 = vmul.f32 %v4796, 0.5
    %v4957 = vmul.f32 %v4874, 0.5
    %v4958 = vmul.f32 %v4952, 0.5
    %v4959 = vmul.f32 %v4718, 0.70710677
    %v4960 = vmul.f32 %v4796, 0.70710677
    %v4961 = vmul.f32 %v4874, 0.70710677
    %v4962 = vmul.f32 %v4952, 0.70710677
    %v4963 = vand.u32 2147483647, %v4959
    %v4964 = vand.u32 2147483647, %v4960
    %v4965 = vand.u32 2147483647, %v4961
    %v4966 = vand.u32 2147483647, %v4962
    %v4967 = vmul.f32 %v4963, 0.3275911
    %v4968 = vmul.f32 %v4964, 0.3275911
    %v4969 = vmul.f32 %v4965, 0.3275911
    %v4970 = vmul.f32 %v4966, 0.3275911
    %v4971 = vadd.f32 %v4967, 1.0
    %v4972 = vadd.f32 %v4968, 1.0
    %v4973 = vadd.f32 %v4969, 1.0
    %v4974 = vadd.f32 %v4970, 1.0
    %v4975 = vrcp.pop %v4971
    %v4976 = vmul.f32 %v4971, %v4975
    %v4977 = vsub.f32 1.0, %v4976
    %v4978 = vmul.f32 %v4975, %v4977
    %v4979 = vadd.f32 %v4975, %v4978
    %vm4980 = vweird.f32 %v4971
    %vm4981 = vweird.f32 %v4975
    %vm4982 = vmor %vm4980, %vm4981
    %v4983 = vsel %vm4982, %v4975, %v4979
    %v4984 = vand.u32 2147483647, %v4971
    %vm4985 = vcmp.eq.f32.partialorder %v4984, 8.507059e+37
    %v4986 = vand.u32 %v4971, 2147483648
    %v4987 = vor.u32 1.1754944e-38, %v4986
    %v4988 = vsel %vm4985, %v4987, %v4983
    %v4989 = vmul.f32 1.0, %v4988
    %v4990 = vrcp.pop %v4972
    %v4991 = vmul.f32 %v4972, %v4990
    %v4992 = vsub.f32 1.0, %v4991
    %v4993 = vmul.f32 %v4990, %v4992
    %v4994 = vadd.f32 %v4990, %v4993
    %vm4995 = vweird.f32 %v4972
    %vm4996 = vweird.f32 %v4990
    %vm4997 = vmor %vm4995, %vm4996
    %v4998 = vsel %vm4997, %v4990, %v4994
    %v4999 = vand.u32 2147483647, %v4972
    %vm5000 = vcmp.eq.f32.partialorder %v4999, 8.507059e+37
    %v5001 = vand.u32 %v4972, 2147483648
    %v5002 = vor.u32 1.1754944e-38, %v5001
    %v5003 = vsel %vm5000, %v5002, %v4998
    %v5004 = vmul.f32 1.0, %v5003
    %v5005 = vrcp.pop %v4973
    %v5006 = vmul.f32 %v4973, %v5005
    %v5007 = vsub.f32 1.0, %v5006
    %v5008 = vmul.f32 %v5005, %v5007
    %v5009 = vadd.f32 %v5005, %v5008
    %vm5010 = vweird.f32 %v4973
    %vm5011 = vweird.f32 %v5005
    %vm5012 = vmor %vm5010, %vm5011
    %v5013 = vsel %vm5012, %v5005, %v5009
    %v5014 = vand.u32 2147483647, %v4973
    %vm5015 = vcmp.eq.f32.partialorder %v5014, 8.507059e+37
    %v5016 = vand.u32 %v4973, 2147483648
    %v5017 = vor.u32 1.1754944e-38, %v5016
    %v5018 = vsel %vm5015, %v5017, %v5013
    %v5019 = vmul.f32 1.0, %v5018
    %v5020 = vrcp.pop %v4974
    %v5021 = vmul.f32 %v4974, %v5020
    %v5022 = vsub.f32 1.0, %v5021
    %v5023 = vmul.f32 %v5020, %v5022
    %v5024 = vadd.f32 %v5020, %v5023
    %vm5025 = vweird.f32 %v4974
    %vm5026 = vweird.f32 %v5020
    %vm5027 = vmor %vm5025, %vm5026
    %v5028 = vsel %vm5027, %v5020, %v5024
    %v5029 = vand.u32 2147483647, %v4974
    %vm5030 = vcmp.eq.f32.partialorder %v5029, 8.507059e+37
    %v5031 = vand.u32 %v4974, 2147483648
    %v5032 = vor.u32 1.1754944e-38, %v5031
    %v5033 = vsel %vm5030, %v5032, %v5028
    %v5034 = vmul.f32 1.0, %v5033
    %v5035 = vmul.f32 %v4989, 1.0614054
    %v5036 = vmul.f32 %v5004, 1.0614054
    %v5037 = vmul.f32 %v5019, 1.0614054
    %v5038 = vmul.f32 %v5034, 1.0614054
    %v5039 = vadd.f32 %v5035, -1.4531521
    %v5040 = vadd.f32 %v5036, -1.4531521
    %v5041 = vadd.f32 %v5037, -1.4531521
    %v5042 = vadd.f32 %v5038, -1.4531521
    %v5043 = vmul.f32 %v5039, %v4989
    %v5044 = vmul.f32 %v5040, %v5004
    %v5045 = vmul.f32 %v5041, %v5019
    %v5046 = vmul.f32 %v5042, %v5034
    %v5047 = vadd.f32 %v5043, 1.4214138
    %v5048 = vadd.f32 %v5044, 1.4214138
    %v5049 = vadd.f32 %v5045, 1.4214138
    %v5050 = vadd.f32 %v5046, 1.4214138
    %v5051 = vmul.f32 %v5047, %v4989
    %v5052 = vmul.f32 %v5048, %v5004
    %v5053 = vmul.f32 %v5049, %v5019
    %v5054 = vmul.f32 %v5050, %v5034
    %v5055 = vadd.f32 %v5051, -0.28449672
    %v5056 = vadd.f32 %v5052, -0.28449672
    %v5057 = vadd.f32 %v5053, -0.28449672
    %v5058 = vadd.f32 %v5054, -0.28449672
    %v5059 = vmul.f32 %v5055, %v4989
    %v5060 = vmul.f32 %v5056, %v5004
    %v5061 = vmul.f32 %v5057, %v5019
    %v5062 = vmul.f32 %v5058, %v5034
    %v5063 = vadd.f32 %v5059, 0.2548296
    %v5064 = vadd.f32 %v5060, 0.2548296
    %v5065 = vadd.f32 %v5061, 0.2548296
    %v5066 = vadd.f32 %v5062, 0.2548296
    %v5067 = vmul.f32 %v5063, %v4989
    %v5068 = vmul.f32 %v5064, %v5004
    %v5069 = vmul.f32 %v5065, %v5019
    %v5070 = vmul.f32 %v5066, %v5034
    %v5071 = vsub.f32 0.0, %v4963
    %v5072 = vsub.f32 0.0, %v4964
    %v5073 = vsub.f32 0.0, %v4965
    %v5074 = vsub.f32 0.0, %v4966
    %v5075 = vmul.f32 %v5071, %v4963
    %v5076 = vmul.f32 %v5072, %v4964
    %v5077 = vmul.f32 %v5073, %v4965
    %v5078 = vmul.f32 %v5074, %v4966
    %v5079 = vmul.f32 %v5075, 1.442695
    %v5080 = vpow.pop %v5079
    %v5081 = vmul.f32 %v5076, 1.442695
    %v5082 = vpow.pop %v5081
    %v5083 = vmul.f32 %v5077, 1.442695
    %v5084 = vpow.pop %v5083
    %v5085 = vmul.f32 %v5078, 1.442695
    %v5086 = vpow.pop %v5085
    %v5087 = vmul.f32 %v5067, %v5080
    %v5088 = vmul.f32 %v5068, %v5082
    %v5089 = vmul.f32 %v5069, %v5084
    %v5090 = vmul.f32 %v5070, %v5086
    %v5091 = vsub.f32 1.0, %v5087
    %v5092 = vsub.f32 1.0, %v5088
    %v5093 = vsub.f32 1.0, %v5089
    %v5094 = vsub.f32 1.0, %v5090
    %vm5095 = vcmp.lt.f32.partialorder %v4959, 0.0
    %vm5096 = vcmp.lt.f32.partialorder %v4960, 0.0
    %vm5097 = vcmp.lt.f32.partialorder %v4961, 0.0
    %vm5098 = vcmp.lt.f32.partialorder %v4962, 0.0
    %v5099 = vsub.f32 0.0, %v5091
    %v5100 = vsub.f32 0.0, %v5092
    %v5101 = vsub.f32 0.0, %v5093
    %v5102 = vsub.f32 0.0, %v5094
    %v5103 = vsel %vm5095, %v5099, %v5091
    %v5104 = vsel %vm5096, %v5100, %v5092
    %v5105 = vsel %vm5097, %v5101, %v5093
    %v5106 = vsel %vm5098, %v5102, %v5094
    %v5107 = vadd.f32 %v5103, 1.0
    %v5108 = vadd.f32 %v5104, 1.0
    %v5109 = vadd.f32 %v5105, 1.0
    %v5110 = vadd.f32 %v5106, 1.0
    %v5111 = vmul.f32 %v4955, %v5107
    %v5112 = vmul.f32 %v4956, %v5108
    %v5113 = vmul.f32 %v4957, %v5109
    %v5114 = vmul.f32 %v4958, %v5110
    %v5115 = vld [vmem:[%s2] sm:$0xff]
    %v5116 = vld [vmem:[%s2 + $0x8] sm:$0xff]
    %v5117 = vld [vmem:[%s2 + $0x10] sm:$0xff]
    %v5118 = vld [vmem:[%s2 + $0x18] sm:$0xff]
    %v5119 = vld [vmem:[%s2 + $0x20] sm:$0xff]
    %v5120 = vld [vmem:[%s3] sm:$0xff]
    %v5121 = vld [vmem:[%s11] sm:$0x7]
    %v5122 = vld [vmem:[%s12] sm:$0x7]
    %v5123 = vld [vmem:[%s13] sm:$0x1]
    %v5124 = vld [vmem:[%s14] sm:$0x1]
    %5126 = vset.pattern.permute.xlu0 0
    %5127 = vperm.xlu0 %5126, %v5115
    %v5128 = vpop.permute.xlu0 %5127
    %5131 = vset.pattern.permute.xlu0 0
    %5132 = vperm.xlu0 %5131, %v5116
    %v5133 = vpop.permute.xlu0 %5132
    %5136 = vset.pattern.permute.xlu0 0
    %5137 = vperm.xlu0 %5136, %v5117
    %v5138 = vpop.permute.xlu0 %5137
    %5141 = vset.pattern.permute.xlu0 0
    %5142 = vperm.xlu0 %5141, %v5118
    %v5143 = vpop.permute.xlu0 %5142
    %5146 = vset.pattern.permute.xlu0 0
    %5147 = vperm.xlu0 %5146, %v5119
    %v5148 = vpop.permute.xlu0 %5147
    %v5150 = vperm.slane %v5121, 0
    %v5151 = vmul.f32 %v5128, %v5150
    %v5152 = vmul.f32 %v5133, %v5150
    %v5153 = vmul.f32 %v5138, %v5150
    %v5154 = vmul.f32 %v5143, %v5150
    %v5155 = vmul.f32 %v5148, %v5150
    %v5157 = vperm.slane %v5123, 0
    %v5159 = vadd.f32 %v5157, %v5151
    %v5160 = vadd.f32 %v5157, %v5152
    %v5161 = vadd.f32 %v5157, %v5153
    %v5162 = vadd.f32 %v5157, %v5154
    %v5163 = vadd.f32 %v5157, %v5155
    %5164 = vset.pattern.permute.xlu0 1
    %5165 = vperm.xlu0 %5164, %v5115
    %v5166 = vpop.permute.xlu0 %5165
    %5168 = vset.pattern.permute.xlu0 1
    %5169 = vperm.xlu0 %5168, %v5116
    %v5170 = vpop.permute.xlu0 %5169
    %5172 = vset.pattern.permute.xlu0 1
    %5173 = vperm.xlu0 %5172, %v5117
    %v5174 = vpop.permute.xlu0 %5173
    %5176 = vset.pattern.permute.xlu0 1
    %5177 = vperm.xlu0 %5176, %v5118
    %v5178 = vpop.permute.xlu0 %5177
    %5180 = vset.pattern.permute.xlu0 1
    %5181 = vperm.xlu0 %5180, %v5119
    %v5182 = vpop.permute.xlu0 %5181
    %v5184 = vperm.slane %v5121, 1
    %v5185 = vmul.f32 %v5166, %v5184
    %v5186 = vmul.f32 %v5170, %v5184
    %v5187 = vmul.f32 %v5174, %v5184
    %v5188 = vmul.f32 %v5178, %v5184
    %v5189 = vmul.f32 %v5182, %v5184
    %v5190 = vadd.f32 %v5159, %v5185
    %v5191 = vadd.f32 %v5160, %v5186
    %v5192 = vadd.f32 %v5161, %v5187
    %v5193 = vadd.f32 %v5162, %v5188
    %v5194 = vadd.f32 %v5163, %v5189
    %5195 = vset.pattern.permute.xlu0 2
    %5196 = vperm.xlu0 %5195, %v5115
    %v5197 = vpop.permute.xlu0 %5196
    %5199 = vset.pattern.permute.xlu0 2
    %5200 = vperm.xlu0 %5199, %v5116
    %v5201 = vpop.permute.xlu0 %5200
    %5203 = vset.pattern.permute.xlu0 2
    %5204 = vperm.xlu0 %5203, %v5117
    %v5205 = vpop.permute.xlu0 %5204
    %5207 = vset.pattern.permute.xlu0 2
    %5208 = vperm.xlu0 %5207, %v5118
    %v5209 = vpop.permute.xlu0 %5208
    %5211 = vset.pattern.permute.xlu0 2
    %5212 = vperm.xlu0 %5211, %v5119
    %v5213 = vpop.permute.xlu0 %5212
    %v5215 = vperm.slane %v5121, 2
    %v5216 = vmul.f32 %v5197, %v5215
    %v5217 = vmul.f32 %v5201, %v5215
    %v5218 = vmul.f32 %v5205, %v5215
    %v5219 = vmul.f32 %v5209, %v5215
    %v5220 = vmul.f32 %v5213, %v5215
    %v5221 = vadd.f32 %v5190, %v5216
    %v5222 = vadd.f32 %v5191, %v5217
    %v5223 = vadd.f32 %v5192, %v5218
    %v5224 = vadd.f32 %v5193, %v5219
    %v5225 = vadd.f32 %v5194, %v5220
    %v5226 = vperm.slane %v5122, 0
    %v5227 = vmul.f32 %v5226, 0.0
    %v5229 = vperm.slane %v5124, 0
    %v5231 = vadd.f32 %v5229, %v5227
    %v5232 = vperm.slane %v5122, 1
    %v5233 = vmul.f32 %v5232, 0.0
    %v5234 = vadd.f32 %v5231, %v5233
    %v5235 = vperm.slane %v5122, 2
    %v5236 = vmul.f32 %v5235, 0.0
    %v5237 = vadd.f32 %v5234, %v5236
    %v5238 = vadd.f32 %v5221, %v5237
    %v5239 = vxor.u32 %v5238, 2147483648
    %v5240 = vmul.f32 %v5239, 1.442695
    %v5241 = vpow.pop %v5240
    %v5242 = vadd.f32 %v5241, 1.0
    %v5243 = vrcp.pop %v5242
    %v5244 = vmul.f32 %v5242, %v5243
    %v5245 = vsub.f32 1.0, %v5244
    %v5246 = vmul.f32 %v5243, %v5245
    %v5247 = vadd.f32 %v5243, %v5246
    %vm5248 = vweird.f32 %v5242
    %vm5249 = vweird.f32 %v5243
    %vm5250 = vmor %vm5248, %vm5249
    %v5251 = vsel %vm5250, %v5243, %v5247
    %v5252 = vand.u32 2147483647, %v5242
    %vm5253 = vcmp.eq.f32.partialorder %v5252, 8.507059e+37
    %v5254 = vand.u32 %v5242, 2147483648
    %v5255 = vor.u32 1.1754944e-38, %v5254
    %v5256 = vsel %vm5253, %v5255, %v5251
    %v5257 = vmul.f32 1.0, %v5256
    %5259 = vrot.lane.b32.xlu0 %v5237, 122
    %v5260 = vpop.permute.xlu0 %5259
    %v5262 = vmul.f32 %v5257, %v5260
    %5264 = vrot.lane.b32.xlu0 %v5262, 6
    %v5265 = vpop.permute.xlu0 %5264
    %v5267 = vadd.f32 %v5221, %v5265
    %v5268 = vtanh.pop %v5267
    %v5269 = vsub.f32 1.0, %v5257
    %5271 = vrot.lane.b32.xlu0 %v5268, 125
    %v5272 = vpop.permute.xlu0 %5271
    %v5274 = vmul.f32 %v5269, %v5272
    %v5275 = vmul.f32 %v5257, 0.0
    %v5276 = vadd.f32 %v5274, %v5275
    %vm5277 = vcmp.gt.s32.totalorder %v5120, 0
    %v5278 = vsel %vm5277, 1, 0
    %5279 = vset.pattern.permute.xlu0 0
    %5280 = vperm.xlu0 %5279, %v5278
    %v5281 = vpop.permute.xlu0 %5280
    %vm5282 = vcmp.eq.s32.totalorder %v5281, 1
    %v5283 = vsel %vm5282, %v5276, 0.0
    %5285 = vset.pattern.permute.xlu0 3
    %5286 = vperm.xlu0 %5285, %v5283
    %v5287 = vpop.permute.xlu0 %5286
    %v5289 = vmul.f32 %v5287, %v5226
    %v5290 = vadd.f32 %v5229, %v5289
    %5291 = vset.pattern.permute.xlu0 4
    %5292 = vperm.xlu0 %5291, %v5283
    %v5293 = vpop.permute.xlu0 %5292
    %v5295 = vmul.f32 %v5293, %v5232
    %v5296 = vadd.f32 %v5290, %v5295
    %5297 = vset.pattern.permute.xlu0 5
    %5298 = vperm.xlu0 %5297, %v5283
    %v5299 = vpop.permute.xlu0 %5298
    %v5301 = vmul.f32 %v5299, %v5235
    %v5302 = vadd.f32 %v5296, %v5301
    %v5303 = vadd.f32 %v5222, %v5302
    %v5304 = vxor.u32 %v5303, 2147483648
    %v5305 = vmul.f32 %v5304, 1.442695
    %v5306 = vpow.pop %v5305
    %v5307 = vadd.f32 %v5306, 1.0
    %v5308 = vrcp.pop %v5307
    %v5309 = vmul.f32 %v5307, %v5308
    %v5310 = vsub.f32 1.0, %v5309
    %v5311 = vmul.f32 %v5308, %v5310
    %v5312 = vadd.f32 %v5308, %v5311
    %vm5313 = vweird.f32 %v5307
    %vm5314 = vweird.f32 %v5308
    %vm5315 = vmor %vm5313, %vm5314
    %v5316 = vsel %vm5315, %v5308, %v5312
    %v5317 = vand.u32 2147483647, %v5307
    %vm5318 = vcmp.eq.f32.partialorder %v5317, 8.507059e+37
    %v5319 = vand.u32 %v5307, 2147483648
    %v5320 = vor.u32 1.1754944e-38, %v5319
    %v5321 = vsel %vm5318, %v5320, %v5316
    %v5322 = vmul.f32 1.0, %v5321
    %5324 = vrot.lane.b32.xlu0 %v5302, 122
    %v5325 = vpop.permute.xlu0 %5324
    %v5327 = vmul.f32 %v5322, %v5325
    %5329 = vrot.lane.b32.xlu0 %v5327, 6
    %v5330 = vpop.permute.xlu0 %5329
    %v5332 = vadd.f32 %v5222, %v5330
    %v5333 = vtanh.pop %v5332
    %v5334 = vsub.f32 1.0, %v5322
    %5336 = vrot.lane.b32.xlu0 %v5333, 125
    %v5337 = vpop.permute.xlu0 %5336
    %v5339 = vmul.f32 %v5334, %v5337
    %v5340 = vmul.f32 %v5322, %v5283
    %v5341 = vadd.f32 %v5339, %v5340
    %vm5342 = vcmp.gt.s32.totalorder %v5120, 1
    %v5343 = vsel %vm5342, 1, 0
    %5344 = vset.pattern.permute.xlu0 0
    %5345 = vperm.xlu0 %5344, %v5343
    %v5346 = vpop.permute.xlu0 %5345
    %vm5347 = vcmp.eq.s32.totalorder %v5346, 1
    %v5348 = vsel %vm5347, %v5341, %v5283
    %5350 = vset.pattern.permute.xlu0 3
    %5351 = vperm.xlu0 %5350, %v5348
    %v5352 = vpop.permute.xlu0 %5351
    %v5354 = vmul.f32 %v5352, %v5226
    %v5355 = vadd.f32 %v5229, %v5354
    %5356 = vset.pattern.permute.xlu0 4
    %5357 = vperm.xlu0 %5356, %v5348
    %v5358 = vpop.permute.xlu0 %5357
    %v5360 = vmul.f32 %v5358, %v5232
    %v5361 = vadd.f32 %v5355, %v5360
    %5362 = vset.pattern.permute.xlu0 5
    %5363 = vperm.xlu0 %5362, %v5348
    %v5364 = vpop.permute.xlu0 %5363
    %v5366 = vmul.f32 %v5364, %v5235
    %v5367 = vadd.f32 %v5361, %v5366
    %v5368 = vadd.f32 %v5223, %v5367
    %v5369 = vxor.u32 %v5368, 2147483648
    %v5370 = vmul.f32 %v5369, 1.442695
    %v5371 = vpow.pop %v5370
    %v5372 = vadd.f32 %v5371, 1.0
    %v5373 = vrcp.pop %v5372
    %v5374 = vmul.f32 %v5372, %v5373
    %v5375 = vsub.f32 1.0, %v5374
    %v5376 = vmul.f32 %v5373, %v5375
    %v5377 = vadd.f32 %v5373, %v5376
    %vm5378 = vweird.f32 %v5372
    %vm5379 = vweird.f32 %v5373
    %vm5380 = vmor %vm5378, %vm5379
    %v5381 = vsel %vm5380, %v5373, %v5377
    %v5382 = vand.u32 2147483647, %v5372
    %vm5383 = vcmp.eq.f32.partialorder %v5382, 8.507059e+37
    %v5384 = vand.u32 %v5372, 2147483648
    %v5385 = vor.u32 1.1754944e-38, %v5384
    %v5386 = vsel %vm5383, %v5385, %v5381
    %v5387 = vmul.f32 1.0, %v5386
    %5389 = vrot.lane.b32.xlu0 %v5367, 122
    %v5390 = vpop.permute.xlu0 %5389
    %v5392 = vmul.f32 %v5387, %v5390
    %5394 = vrot.lane.b32.xlu0 %v5392, 6
    %v5395 = vpop.permute.xlu0 %5394
    %v5397 = vadd.f32 %v5223, %v5395
    %v5398 = vtanh.pop %v5397
    %v5399 = vsub.f32 1.0, %v5387
    %5401 = vrot.lane.b32.xlu0 %v5398, 125
    %v5402 = vpop.permute.xlu0 %5401
    %v5404 = vmul.f32 %v5399, %v5402
    %v5405 = vmul.f32 %v5387, %v5348
    %v5406 = vadd.f32 %v5404, %v5405
    %vm5407 = vcmp.gt.s32.totalorder %v5120, 2
    %v5408 = vsel %vm5407, 1, 0
    %5409 = vset.pattern.permute.xlu0 0
    %5410 = vperm.xlu0 %5409, %v5408
    %v5411 = vpop.permute.xlu0 %5410
    %vm5412 = vcmp.eq.s32.totalorder %v5411, 1
    %v5413 = vsel %vm5412, %v5406, %v5348
    %5415 = vset.pattern.permute.xlu0 3
    %5416 = vperm.xlu0 %5415, %v5413
    %v5417 = vpop.permute.xlu0 %5416
    %v5419 = vmul.f32 %v5417, %v5226
    %v5420 = vadd.f32 %v5229, %v5419
    %5421 = vset.pattern.permute.xlu0 4
    %5422 = vperm.xlu0 %5421, %v5413
    %v5423 = vpop.permute.xlu0 %5422
    %v5425 = vmul.f32 %v5423, %v5232
    %v5426 = vadd.f32 %v5420, %v5425
    %5427 = vset.pattern.permute.xlu0 5
    %5428 = vperm.xlu0 %5427, %v5413
    %v5429 = vpop.permute.xlu0 %5428
    %v5431 = vmul.f32 %v5429, %v5235
    %v5432 = vadd.f32 %v5426, %v5431
    %v5433 = vadd.f32 %v5224, %v5432
    %v5434 = vxor.u32 %v5433, 2147483648
    %v5435 = vmul.f32 %v5434, 1.442695
    %v5436 = vpow.pop %v5435
    %v5437 = vadd.f32 %v5436, 1.0
    %v5438 = vrcp.pop %v5437
    %v5439 = vmul.f32 %v5437, %v5438
    %v5440 = vsub.f32 1.0, %v5439
    %v5441 = vmul.f32 %v5438, %v5440
    %v5442 = vadd.f32 %v5438, %v5441
    %vm5443 = vweird.f32 %v5437
    %vm5444 = vweird.f32 %v5438
    %vm5445 = vmor %vm5443, %vm5444
    %v5446 = vsel %vm5445, %v5438, %v5442
    %v5447 = vand.u32 2147483647, %v5437
    %vm5448 = vcmp.eq.f32.partialorder %v5447, 8.507059e+37
    %v5449 = vand.u32 %v5437, 2147483648
    %v5450 = vor.u32 1.1754944e-38, %v5449
    %v5451 = vsel %vm5448, %v5450, %v5446
    %v5452 = vmul.f32 1.0, %v5451
    %5454 = vrot.lane.b32.xlu0 %v5432, 122
    %v5455 = vpop.permute.xlu0 %5454
    %v5457 = vmul.f32 %v5452, %v5455
    %5459 = vrot.lane.b32.xlu0 %v5457, 6
    %v5460 = vpop.permute.xlu0 %5459
    %v5462 = vadd.f32 %v5224, %v5460
    %v5463 = vtanh.pop %v5462
    %v5464 = vsub.f32 1.0, %v5452
    %5466 = vrot.lane.b32.xlu0 %v5463, 125
    %v5467 = vpop.permute.xlu0 %5466
    %v5469 = vmul.f32 %v5464, %v5467
    %v5470 = vmul.f32 %v5452, %v5413
    %v5471 = vadd.f32 %v5469, %v5470
    %vm5472 = vcmp.gt.s32.totalorder %v5120, 3
    %v5473 = vsel %vm5472, 1, 0
    %5474 = vset.pattern.permute.xlu0 0
    %5475 = vperm.xlu0 %5474, %v5473
    %v5476 = vpop.permute.xlu0 %5475
    %vm5477 = vcmp.eq.s32.totalorder %v5476, 1
    %v5478 = vsel %vm5477, %v5471, %v5413
    %5480 = vset.pattern.permute.xlu0 3
    %5481 = vperm.xlu0 %5480, %v5478
    %v5482 = vpop.permute.xlu0 %5481
    %v5484 = vmul.f32 %v5482, %v5226
    %v5485 = vadd.f32 %v5229, %v5484
    %5486 = vset.pattern.permute.xlu0 4
    %5487 = vperm.xlu0 %5486, %v5478
    %v5488 = vpop.permute.xlu0 %5487
    %v5490 = vmul.f32 %v5488, %v5232
    %v5491 = vadd.f32 %v5485, %v5490
    %5492 = vset.pattern.permute.xlu0 5
    %5493 = vperm.xlu0 %5492, %v5478
    %v5494 = vpop.permute.xlu0 %5493
    %v5496 = vmul.f32 %v5494, %v5235
    %v5497 = vadd.f32 %v5491, %v5496
    %v5498 = vadd.f32 %v5225, %v5497
    %v5499 = vxor.u32 %v5498, 2147483648
    %v5500 = vmul.f32 %v5499, 1.442695
    %v5501 = vpow.pop %v5500
    %v5502 = vadd.f32 %v5501, 1.0
    %v5503 = vrcp.pop %v5502
    %v5504 = vmul.f32 %v5502, %v5503
    %v5505 = vsub.f32 1.0, %v5504
    %v5506 = vmul.f32 %v5503, %v5505
    %v5507 = vadd.f32 %v5503, %v5506
    %vm5508 = vweird.f32 %v5502
    %vm5509 = vweird.f32 %v5503
    %vm5510 = vmor %vm5508, %vm5509
    %v5511 = vsel %vm5510, %v5503, %v5507
    %v5512 = vand.u32 2147483647, %v5502
    %vm5513 = vcmp.eq.f32.partialorder %v5512, 8.507059e+37
    %v5514 = vand.u32 %v5502, 2147483648
    %v5515 = vor.u32 1.1754944e-38, %v5514
    %v5516 = vsel %vm5513, %v5515, %v5511
    %v5517 = vmul.f32 1.0, %v5516
    %5519 = vrot.lane.b32.xlu0 %v5497, 122
    %v5520 = vpop.permute.xlu0 %5519
    %v5522 = vmul.f32 %v5517, %v5520
    %5524 = vrot.lane.b32.xlu0 %v5522, 6
    %v5525 = vpop.permute.xlu0 %5524
    %v5527 = vadd.f32 %v5225, %v5525
    %v5528 = vtanh.pop %v5527
    %v5529 = vsub.f32 1.0, %v5517
    %5531 = vrot.lane.b32.xlu0 %v5528, 125
    %v5532 = vpop.permute.xlu0 %5531
    %v5534 = vmul.f32 %v5529, %v5532
    %v5535 = vmul.f32 %v5517, %v5478
    %v5536 = vadd.f32 %v5534, %v5535
    %vm5537 = vcmp.gt.s32.totalorder %v5120, 4
    %v5538 = vsel %vm5537, 1, 0
    %5539 = vset.pattern.permute.xlu0 0
    %5540 = vperm.xlu0 %5539, %v5538
    %v5541 = vpop.permute.xlu0 %5540
    %vm5542 = vcmp.eq.s32.totalorder %v5541, 1
    %v5543 = vsel %vm5542, %v5536, %v5478
    %v5544 = vld [vmem:[%s4] sm:$0xff]
    %v5545 = vld [vmem:[%s15] sm:$0x77]
    %v5546 = vld [vmem:[%s15 + $0x8] sm:$0x7]
    %v5547 = vld [vmem:[%s17] sm:$0x7]
    %5549 = vset.pattern.permute.xlu0 3
    %5550 = vperm.xlu0 %5549, %v5543
    %v5551 = vpop.permute.xlu0 %5550
    %v5555 = vperm.slane %v5545, 0
    %v5556 = vperm.slane %v5545, 4
    %v5557 = vperm.slane %v5546, 0
    %v5561 = vperm.slane %v5555, 0
    %v5562 = vperm.slane %v5556, 0
    %v5563 = vperm.slane %v5557, 0
    %v5564 = vmul.f32 %v5551, %v5561
    %v5565 = vmul.f32 %v5551, %v5562
    %v5566 = vmul.f32 %v5551, %v5563
    %v5568 = vperm.slane %v5547, 0
    %v5569 = vperm.slane %v5547, 1
    %v5570 = vperm.slane %v5547, 2
    %v5574 = vadd.f32 %v5568, %v5564
    %v5575 = vadd.f32 %v5569, %v5565
    %v5576 = vadd.f32 %v5570, %v5566
    %5577 = vset.pattern.permute.xlu0 4
    %5578 = vperm.xlu0 %5577, %v5543
    %v5579 = vpop.permute.xlu0 %5578
    %v5581 = vperm.slane %v5545, 1
    %v5582 = vperm.slane %v5545, 5
    %v5583 = vperm.slane %v5546, 1
    %v5587 = vperm.slane %v5581, 1
    %v5588 = vperm.slane %v5582, 1
    %v5589 = vperm.slane %v5583, 1
    %v5590 = vmul.f32 %v5579, %v5587
    %v5591 = vmul.f32 %v5579, %v5588
    %v5592 = vmul.f32 %v5579, %v5589
    %v5593 = vadd.f32 %v5574, %v5590
    %v5594 = vadd.f32 %v5575, %v5591
    %v5595 = vadd.f32 %v5576, %v5592
    %5596 = vset.pattern.permute.xlu0 5
    %5597 = vperm.xlu0 %5596, %v5543
    %v5598 = vpop.permute.xlu0 %5597
    %v5600 = vperm.slane %v5545, 2
    %v5601 = vperm.slane %v5545, 6
    %v5602 = vperm.slane %v5546, 2
    %v5606 = vperm.slane %v5600, 2
    %v5607 = vperm.slane %v5601, 2
    %v5608 = vperm.slane %v5602, 2
    %v5609 = vmul.f32 %v5598, %v5606
    %v5610 = vmul.f32 %v5598, %v5607
    %v5611 = vmul.f32 %v5598, %v5608
    %v5612 = vadd.f32 %v5593, %v5609
    %v5613 = vadd.f32 %v5594, %v5610
    %v5614 = vadd.f32 %v5595, %v5611
    %v5615 = vld [vmem:[%s16] sm:$0x7]
    %5617 = vset.pattern.permute.xlu0 0
    %5618 = vperm.xlu0 %5617, %v5544
    %v5619 = vpop.permute.xlu0 %5618
    %v5622 = vperm.slane %v5615, 0
    %v5623 = vperm.slane %v5615, 1
    %v5624 = vperm.slane %v5615, 2
    %v5628 = vmul.f32 %v5619, %v5622
    %v5629 = vmul.f32 %v5619, %v5623
    %v5630 = vmul.f32 %v5619, %v5624
    %v5631 = vadd.f32 %v5612, %v5628
    %v5632 = vadd.f32 %v5613, %v5629
    %v5633 = vadd.f32 %v5614, %v5630
    %v5634 = vmul.f32 %v5631, 0.5
    %v5635 = vmul.f32 %v5632, 0.5
    %v5636 = vmul.f32 %v5633, 0.5
    %v5637 = vmul.f32 %v5631, 0.70710677
    %v5638 = vmul.f32 %v5632, 0.70710677
    %v5639 = vmul.f32 %v5633, 0.70710677
    %v5640 = vand.u32 2147483647, %v5637
    %v5641 = vand.u32 2147483647, %v5638
    %v5642 = vand.u32 2147483647, %v5639
    %v5643 = vmul.f32 %v5640, 0.3275911
    %v5644 = vmul.f32 %v5641, 0.3275911
    %v5645 = vmul.f32 %v5642, 0.3275911
    %v5646 = vadd.f32 %v5643, 1.0
    %v5647 = vadd.f32 %v5644, 1.0
    %v5648 = vadd.f32 %v5645, 1.0
    %v5649 = vrcp.pop %v5646
    %v5650 = vmul.f32 %v5646, %v5649
    %v5651 = vsub.f32 1.0, %v5650
    %v5652 = vmul.f32 %v5649, %v5651
    %v5653 = vadd.f32 %v5649, %v5652
    %vm5654 = vweird.f32 %v5646
    %vm5655 = vweird.f32 %v5649
    %vm5656 = vmor %vm5654, %vm5655
    %v5657 = vsel %vm5656, %v5649, %v5653
    %v5658 = vand.u32 2147483647, %v5646
    %vm5659 = vcmp.eq.f32.partialorder %v5658, 8.507059e+37
    %v5660 = vand.u32 %v5646, 2147483648
    %v5661 = vor.u32 1.1754944e-38, %v5660
    %v5662 = vsel %vm5659, %v5661, %v5657
    %v5663 = vmul.f32 1.0, %v5662
    %v5664 = vrcp.pop %v5647
    %v5665 = vmul.f32 %v5647, %v5664
    %v5666 = vsub.f32 1.0, %v5665
    %v5667 = vmul.f32 %v5664, %v5666
    %v5668 = vadd.f32 %v5664, %v5667
    %vm5669 = vweird.f32 %v5647
    %vm5670 = vweird.f32 %v5664
    %vm5671 = vmor %vm5669, %vm5670
    %v5672 = vsel %vm5671, %v5664, %v5668
    %v5673 = vand.u32 2147483647, %v5647
    %vm5674 = vcmp.eq.f32.partialorder %v5673, 8.507059e+37
    %v5675 = vand.u32 %v5647, 2147483648
    %v5676 = vor.u32 1.1754944e-38, %v5675
    %v5677 = vsel %vm5674, %v5676, %v5672
    %v5678 = vmul.f32 1.0, %v5677
    %v5679 = vrcp.pop %v5648
    %v5680 = vmul.f32 %v5648, %v5679
    %v5681 = vsub.f32 1.0, %v5680
    %v5682 = vmul.f32 %v5679, %v5681
    %v5683 = vadd.f32 %v5679, %v5682
    %vm5684 = vweird.f32 %v5648
    %vm5685 = vweird.f32 %v5679
    %vm5686 = vmor %vm5684, %vm5685
    %v5687 = vsel %vm5686, %v5679, %v5683
    %v5688 = vand.u32 2147483647, %v5648
    %vm5689 = vcmp.eq.f32.partialorder %v5688, 8.507059e+37
    %v5690 = vand.u32 %v5648, 2147483648
    %v5691 = vor.u32 1.1754944e-38, %v5690
    %v5692 = vsel %vm5689, %v5691, %v5687
    %v5693 = vmul.f32 1.0, %v5692
    %v5694 = vmul.f32 %v5663, 1.0614054
    %v5695 = vmul.f32 %v5678, 1.0614054
    %v5696 = vmul.f32 %v5693, 1.0614054
    %v5697 = vadd.f32 %v5694, -1.4531521
    %v5698 = vadd.f32 %v5695, -1.4531521
    %v5699 = vadd.f32 %v5696, -1.4531521
    %v5700 = vmul.f32 %v5697, %v5663
    %v5701 = vmul.f32 %v5698, %v5678
    %v5702 = vmul.f32 %v5699, %v5693
    %v5703 = vadd.f32 %v5700, 1.4214138
    %v5704 = vadd.f32 %v5701, 1.4214138
    %v5705 = vadd.f32 %v5702, 1.4214138
    %v5706 = vmul.f32 %v5703, %v5663
    %v5707 = vmul.f32 %v5704, %v5678
    %v5708 = vmul.f32 %v5705, %v5693
    %v5709 = vadd.f32 %v5706, -0.28449672
    %v5710 = vadd.f32 %v5707, -0.28449672
    %v5711 = vadd.f32 %v5708, -0.28449672
    %v5712 = vmul.f32 %v5709, %v5663
    %v5713 = vmul.f32 %v5710, %v5678
    %v5714 = vmul.f32 %v5711, %v5693
    %v5715 = vadd.f32 %v5712, 0.2548296
    %v5716 = vadd.f32 %v5713, 0.2548296
    %v5717 = vadd.f32 %v5714, 0.2548296
    %v5718 = vmul.f32 %v5715, %v5663
    %v5719 = vmul.f32 %v5716, %v5678
    %v5720 = vmul.f32 %v5717, %v5693
    %v5721 = vsub.f32 0.0, %v5640
    %v5722 = vsub.f32 0.0, %v5641
    %v5723 = vsub.f32 0.0, %v5642
    %v5724 = vmul.f32 %v5721, %v5640
    %v5725 = vmul.f32 %v5722, %v5641
    %v5726 = vmul.f32 %v5723, %v5642
    %v5727 = vmul.f32 %v5724, 1.442695
    %v5728 = vpow.pop %v5727
    %v5729 = vmul.f32 %v5725, 1.442695
    %v5730 = vpow.pop %v5729
    %v5731 = vmul.f32 %v5726, 1.442695
    %v5732 = vpow.pop %v5731
    %v5733 = vmul.f32 %v5718, %v5728
    %v5734 = vmul.f32 %v5719, %v5730
    %v5735 = vmul.f32 %v5720, %v5732
    %v5736 = vsub.f32 1.0, %v5733
    %v5737 = vsub.f32 1.0, %v5734
    %v5738 = vsub.f32 1.0, %v5735
    %vm5739 = vcmp.lt.f32.partialorder %v5637, 0.0
    %vm5740 = vcmp.lt.f32.partialorder %v5638, 0.0
    %vm5741 = vcmp.lt.f32.partialorder %v5639, 0.0
    %v5742 = vsub.f32 0.0, %v5736
    %v5743 = vsub.f32 0.0, %v5737
    %v5744 = vsub.f32 0.0, %v5738
    %v5745 = vsel %vm5739, %v5742, %v5736
    %v5746 = vsel %vm5740, %v5743, %v5737
    %v5747 = vsel %vm5741, %v5744, %v5738
    %v5748 = vadd.f32 %v5745, 1.0
    %v5749 = vadd.f32 %v5746, 1.0
    %v5750 = vadd.f32 %v5747, 1.0
    %v5751 = vmul.f32 %v5634, %v5748
    %v5752 = vmul.f32 %v5635, %v5749
    %v5753 = vmul.f32 %v5636, %v5750
    %v5754 = vpack.c.bf16 %v5751, %v5751
    %v5755 = vpack.c.bf16 %v5752, %v5752
    %v5756 = vpack.c.bf16 %v5753, %v5753
    %v5757 = vld [vmem:[#allocation8] sm:$0xff]
    %v5758 = vld [vmem:[#allocation8 + $0x8] sm:$0xff]
    %v5759 = vld [vmem:[#allocation8 + $0x10] sm:$0xff]
    %v5760 = vld [vmem:[#allocation8 + $0x18] sm:$0xff]
    %v5761 = vld [vmem:[#allocation8 + $0x20] sm:$0xff]
    %v5762 = vld [vmem:[#allocation8 + $0x28] sm:$0xff]
    %v5763 = vld [vmem:[#allocation8 + $0x30] sm:$0xff]
    %v5764 = vld [vmem:[#allocation8 + $0x38] sm:$0xff]
    %v5765 = vld [vmem:[#allocation8 + $0x40] sm:$0xff]
    %v5766 = vld [vmem:[#allocation8 + $0x48] sm:$0xff]
    %v5767 = vld [vmem:[#allocation8 + $0x50] sm:$0xff]
    %v5768 = vld [vmem:[#allocation8 + $0x58] sm:$0xff]
    %v5769 = vld [vmem:[#allocation8 + $0x60] sm:$0xff]
    %v5770 = vld [vmem:[#allocation8 + $0x68] sm:$0xff]
    %v5771 = vld [vmem:[#allocation8 + $0x70] sm:$0xff]
    %v5772 = vld [vmem:[#allocation8 + $0x78] sm:$0xff]
    %v5773 = vld [vmem:[#allocation8 + $0x80] sm:$0xff]
    %v5774 = vld [vmem:[#allocation8 + $0x88] sm:$0xff]
    %v5775 = vld [vmem:[#allocation8 + $0x90] sm:$0xff]
    %v5776 = vld [vmem:[#allocation8 + $0x98] sm:$0xff]
    %v5777 = vld [vmem:[#allocation8 + $0xa0] sm:$0xff]
    %v5778 = vld [vmem:[#allocation8 + $0xa8] sm:$0xff]
    %v5779 = vld [vmem:[#allocation8 + $0xb0] sm:$0xff]
    %v5780 = vld [vmem:[#allocation8 + $0xb8] sm:$0xff]
    %v5781 = vld [vmem:[#allocation8 + $0xc0] sm:$0xff]
    %v5782 = vld [vmem:[#allocation8 + $0xc8] sm:$0xff]
    %v5783 = vld [vmem:[#allocation8 + $0xd0] sm:$0xff]
    %v5784 = vld [vmem:[#allocation8 + $0xd8] sm:$0xff]
    %v5785 = vld [vmem:[#allocation8 + $0xe0] sm:$0xff]
    %v5786 = vld [vmem:[#allocation8 + $0xe8] sm:$0xff]
    %v5787 = vld [vmem:[#allocation8 + $0xf0] sm:$0xff]
    %v5788 = vld [vmem:[#allocation8 + $0xf8] sm:$0xff]
    %v5789 = vld [vmem:[#allocation8 + $0x100] sm:$0xff]
    %v5790 = vld [vmem:[#allocation8 + $0x108] sm:$0xff]
    %v5791 = vld [vmem:[#allocation8 + $0x110] sm:$0xff]
    %v5792 = vld [vmem:[#allocation8 + $0x118] sm:$0xff]
    %v5793 = vld [vmem:[#allocation8 + $0x120] sm:$0xff]
    %v5794 = vld [vmem:[#allocation8 + $0x128] sm:$0xff]
    %v5795 = vld [vmem:[#allocation8 + $0x130] sm:$0xff]
    %v5796 = vld [vmem:[#allocation8 + $0x138] sm:$0xff]
    %v5797 = vld [vmem:[#allocation8 + $0x140] sm:$0xff]
    %v5798 = vld [vmem:[#allocation8 + $0x148] sm:$0xff]
    %v5799 = vld [vmem:[#allocation8 + $0x150] sm:$0xff]
    %v5800 = vld [vmem:[#allocation8 + $0x158] sm:$0xff]
    %v5801 = vld [vmem:[#allocation8 + $0x160] sm:$0xff]
    %v5802 = vld [vmem:[#allocation8 + $0x168] sm:$0xff]
    %v5803 = vld [vmem:[#allocation8 + $0x170] sm:$0xff]
    %v5804 = vld [vmem:[#allocation8 + $0x178] sm:$0xff]
    %v5805 = vld [vmem:[#allocation8 + $0x180] sm:$0xff]
    %v5806 = vld [vmem:[#allocation8 + $0x188] sm:$0xff]
    %v5807 = vld [vmem:[#allocation8 + $0x190] sm:$0xff]
    %v5808 = vld [vmem:[#allocation8 + $0x198] sm:$0xff]
    %v5809 = vld [vmem:[#allocation8 + $0x1a0] sm:$0xff]
    %v5810 = vld [vmem:[#allocation8 + $0x1a8] sm:$0xff]
    %v5811 = vld [vmem:[#allocation8 + $0x1b0] sm:$0xff]
    %v5812 = vld [vmem:[#allocation8 + $0x1b8] sm:$0xff]
    %v5813 = vld [vmem:[#allocation8 + $0x1c0] sm:$0xff]
    %v5814 = vld [vmem:[#allocation8 + $0x1c8] sm:$0xff]
    %v5815 = vld [vmem:[#allocation8 + $0x1d0] sm:$0xff]
    %v5816 = vld [vmem:[#allocation8 + $0x1d8] sm:$0xff]
    %v5817 = vld [vmem:[#allocation8 + $0x1e0] sm:$0xff]
    %v5818 = vld [vmem:[#allocation8 + $0x1e8] sm:$0xff]
    %v5819 = vld [vmem:[#allocation8 + $0x1f0] sm:$0xff]
    %v5820 = vld [vmem:[#allocation8 + $0x1f8] sm:$0xff]
    %v5821 = vld [vmem:[#allocation8 + $0x200] sm:$0xff]
    %v5822 = vld [vmem:[#allocation8 + $0x208] sm:$0xff]
    %v5823 = vld [vmem:[#allocation8 + $0x210] sm:$0xff]
    %v5824 = vld [vmem:[#allocation8 + $0x218] sm:$0xff]
    %v5825 = vld [vmem:[#allocation8 + $0x220] sm:$0xff]
    %v5826 = vld [vmem:[#allocation8 + $0x228] sm:$0xff]
    %v5827 = vld [vmem:[#allocation8 + $0x230] sm:$0xff]
    %v5828 = vld [vmem:[#allocation8 + $0x238] sm:$0xff]
    %v5829 = vld [vmem:[#allocation8 + $0x240] sm:$0xff]
    %v5830 = vld [vmem:[#allocation8 + $0x248] sm:$0xff]
    %v5831 = vld [vmem:[#allocation8 + $0x250] sm:$0xff]
    %v5832 = vld [vmem:[#allocation8 + $0x258] sm:$0xff]
    %v5833 = vld [vmem:[#allocation8 + $0x260] sm:$0xff]
    %v5834 = vld [vmem:[#allocation8 + $0x268] sm:$0xff]
    %v5835 = vld [vmem:[#allocation8 + $0x270] sm:$0xff]
    %v5836 = vld [vmem:[#allocation8 + $0x278] sm:$0xff]
    %v5837 = vld [vmem:[#allocation8 + $0x280] sm:$0xff]
    %v5838 = vld [vmem:[#allocation8 + $0x288] sm:$0xff]
    %v5839 = vld [vmem:[#allocation8 + $0x290] sm:$0xff]
    %v5840 = vld [vmem:[#allocation8 + $0x298] sm:$0xff]
    %v5841 = vld [vmem:[#allocation8 + $0x2a0] sm:$0xff]
    %v5842 = vld [vmem:[#allocation8 + $0x2a8] sm:$0xff]
    %v5843 = vld [vmem:[#allocation8 + $0x2b0] sm:$0xff]
    %v5844 = vld [vmem:[#allocation8 + $0x2b8] sm:$0xff]
    %v5845 = vld [vmem:[#allocation8 + $0x2c0] sm:$0xff]
    %v5846 = vld [vmem:[#allocation8 + $0x2c8] sm:$0xff]
    %v5847 = vld [vmem:[#allocation8 + $0x2d0] sm:$0xff]
    %v5848 = vld [vmem:[#allocation8 + $0x2d8] sm:$0xff]
    %v5849 = vld [vmem:[#allocation8 + $0x2e0] sm:$0xff]
    %v5850 = vld [vmem:[#allocation8 + $0x2e8] sm:$0xff]
    %v5851 = vld [vmem:[#allocation8 + $0x2f0] sm:$0xff]
    %v5852 = vld [vmem:[#allocation8 + $0x2f8] sm:$0xff]
    %v5853 = vld [vmem:[%s19] sm:$0xf]
    %v5855 = vperm.slane %v5853, 0
    %v5856 = vperm.slane %v5853, 1
    %v5857 = vperm.slane %v5853, 2
    %v5858 = vperm.slane %v5853, 3
    %v5959 = vunpack.c.l.b16 %v5757
    %v5960 = vunpack.c.h.b16 %v5757
    %v5961 = vunpack.c.l.b16 %v5758
    %v5962 = vunpack.c.h.b16 %v5758
    %v5963 = vunpack.c.l.b16 %v5759
    %v5964 = vunpack.c.h.b16 %v5759
    %v5965 = vunpack.c.l.b16 %v5760
    %v5966 = vunpack.c.h.b16 %v5760
    %v5967 = vunpack.c.l.b16 %v5761
    %v5968 = vunpack.c.h.b16 %v5761
    %v5969 = vunpack.c.l.b16 %v5762
    %v5970 = vunpack.c.h.b16 %v5762
    %v5971 = vunpack.c.l.b16 %v5763
    %v5972 = vunpack.c.h.b16 %v5763
    %v5973 = vunpack.c.l.b16 %v5764
    %v5974 = vunpack.c.h.b16 %v5764
    %v5975 = vunpack.c.l.b16 %v5765
    %v5976 = vunpack.c.h.b16 %v5765
    %v5977 = vunpack.c.l.b16 %v5766
    %v5978 = vunpack.c.h.b16 %v5766
    %v5979 = vunpack.c.l.b16 %v5767
    %v5980 = vunpack.c.h.b16 %v5767
    %v5981 = vunpack.c.l.b16 %v5768
    %v5982 = vunpack.c.h.b16 %v5768
    %v5983 = vunpack.c.l.b16 %v5769
    %v5984 = vunpack.c.h.b16 %v5769
    %v5985 = vunpack.c.l.b16 %v5770
    %v5986 = vunpack.c.h.b16 %v5770
    %v5987 = vunpack.c.l.b16 %v5771
    %v5988 = vunpack.c.h.b16 %v5771
    %v5989 = vunpack.c.l.b16 %v5772
    %v5990 = vunpack.c.h.b16 %v5772
    %v5991 = vunpack.c.l.b16 %v5773
    %v5992 = vunpack.c.h.b16 %v5773
    %v5993 = vunpack.c.l.b16 %v5774
    %v5994 = vunpack.c.h.b16 %v5774
    %v5995 = vunpack.c.l.b16 %v5775
    %v5996 = vunpack.c.h.b16 %v5775
    %v5997 = vunpack.c.l.b16 %v5776
    %v5998 = vunpack.c.h.b16 %v5776
    %v5999 = vunpack.c.l.b16 %v5777
    %v6000 = vunpack.c.h.b16 %v5777
    %v6001 = vunpack.c.l.b16 %v5778
    %v6002 = vunpack.c.h.b16 %v5778
    %v6003 = vunpack.c.l.b16 %v5779
    %v6004 = vunpack.c.h.b16 %v5779
    %v6005 = vunpack.c.l.b16 %v5780
    %v6006 = vunpack.c.h.b16 %v5780
    %v6007 = vunpack.c.l.b16 %v5781
    %v6008 = vunpack.c.h.b16 %v5781
    %v6009 = vunpack.c.l.b16 %v5782
    %v6010 = vunpack.c.h.b16 %v5782
    %v6011 = vunpack.c.l.b16 %v5783
    %v6012 = vunpack.c.h.b16 %v5783
    %v6013 = vunpack.c.l.b16 %v5784
    %v6014 = vunpack.c.h.b16 %v5784
    %v6015 = vunpack.c.l.b16 %v5785
    %v6016 = vunpack.c.h.b16 %v5785
    %v6017 = vunpack.c.l.b16 %v5786
    %v6018 = vunpack.c.h.b16 %v5786
    %v6019 = vunpack.c.l.b16 %v5787
    %v6020 = vunpack.c.h.b16 %v5787
    %v6021 = vunpack.c.l.b16 %v5788
    %v6022 = vunpack.c.h.b16 %v5788
    %v6023 = vunpack.c.l.b16 %v5789
    %v6024 = vunpack.c.h.b16 %v5789
    %v6025 = vunpack.c.l.b16 %v5790
    %v6026 = vunpack.c.h.b16 %v5790
    %v6027 = vunpack.c.l.b16 %v5791
    %v6028 = vunpack.c.h.b16 %v5791
    %v6029 = vunpack.c.l.b16 %v5792
    %v6030 = vunpack.c.h.b16 %v5792
    %v6031 = vunpack.c.l.b16 %v5793
    %v6032 = vunpack.c.h.b16 %v5793
    %v6033 = vunpack.c.l.b16 %v5794
    %v6034 = vunpack.c.h.b16 %v5794
    %v6035 = vunpack.c.l.b16 %v5795
    %v6036 = vunpack.c.h.b16 %v5795
    %v6037 = vunpack.c.l.b16 %v5796
    %v6038 = vunpack.c.h.b16 %v5796
    %v6039 = vunpack.c.l.b16 %v5797
    %v6040 = vunpack.c.h.b16 %v5797
    %v6041 = vunpack.c.l.b16 %v5798
    %v6042 = vunpack.c.h.b16 %v5798
    %v6043 = vunpack.c.l.b16 %v5799
    %v6044 = vunpack.c.h.b16 %v5799
    %v6045 = vunpack.c.l.b16 %v5800
    %v6046 = vunpack.c.h.b16 %v5800
    %v6047 = vunpack.c.l.b16 %v5801
    %v6048 = vunpack.c.h.b16 %v5801
    %v6049 = vunpack.c.l.b16 %v5802
    %v6050 = vunpack.c.h.b16 %v5802
    %v6051 = vunpack.c.l.b16 %v5803
    %v6052 = vunpack.c.h.b16 %v5803
    %v6053 = vunpack.c.l.b16 %v5804
    %v6054 = vunpack.c.h.b16 %v5804
    %v6055 = vunpack.c.l.b16 %v5805
    %v6056 = vunpack.c.h.b16 %v5805
    %v6057 = vunpack.c.l.b16 %v5806
    %v6058 = vunpack.c.h.b16 %v5806
    %v6059 = vunpack.c.l.b16 %v5807
    %v6060 = vunpack.c.h.b16 %v5807
    %v6061 = vunpack.c.l.b16 %v5808
    %v6062 = vunpack.c.h.b16 %v5808
    %v6063 = vunpack.c.l.b16 %v5809
    %v6064 = vunpack.c.h.b16 %v5809
    %v6065 = vunpack.c.l.b16 %v5810
    %v6066 = vunpack.c.h.b16 %v5810
    %v6067 = vunpack.c.l.b16 %v5811
    %v6068 = vunpack.c.h.b16 %v5811
    %v6069 = vunpack.c.l.b16 %v5812
    %v6070 = vunpack.c.h.b16 %v5812
    %v6071 = vunpack.c.l.b16 %v5813
    %v6072 = vunpack.c.h.b16 %v5813
    %v6073 = vunpack.c.l.b16 %v5814
    %v6074 = vunpack.c.h.b16 %v5814
    %v6075 = vunpack.c.l.b16 %v5815
    %v6076 = vunpack.c.h.b16 %v5815
    %v6077 = vunpack.c.l.b16 %v5816
    %v6078 = vunpack.c.h.b16 %v5816
    %v6079 = vunpack.c.l.b16 %v5817
    %v6080 = vunpack.c.h.b16 %v5817
    %v6081 = vunpack.c.l.b16 %v5818
    %v6082 = vunpack.c.h.b16 %v5818
    %v6083 = vunpack.c.l.b16 %v5819
    %v6084 = vunpack.c.h.b16 %v5819
    %v6085 = vunpack.c.l.b16 %v5820
    %v6086 = vunpack.c.h.b16 %v5820
    %v6087 = vunpack.c.l.b16 %v5821
    %v6088 = vunpack.c.h.b16 %v5821
    %v6089 = vunpack.c.l.b16 %v5822
    %v6090 = vunpack.c.h.b16 %v5822
    %v6091 = vunpack.c.l.b16 %v5823
    %v6092 = vunpack.c.h.b16 %v5823
    %v6093 = vunpack.c.l.b16 %v5824
    %v6094 = vunpack.c.h.b16 %v5824
    %v6095 = vunpack.c.l.b16 %v5825
    %v6096 = vunpack.c.h.b16 %v5825
    %v6097 = vunpack.c.l.b16 %v5826
    %v6098 = vunpack.c.h.b16 %v5826
    %v6099 = vunpack.c.l.b16 %v5827
    %v6100 = vunpack.c.h.b16 %v5827
    %v6101 = vunpack.c.l.b16 %v5828
    %v6102 = vunpack.c.h.b16 %v5828
    %v6103 = vunpack.c.l.b16 %v5829
    %v6104 = vunpack.c.h.b16 %v5829
    %v6105 = vunpack.c.l.b16 %v5830
    %v6106 = vunpack.c.h.b16 %v5830
    %v6107 = vunpack.c.l.b16 %v5831
    %v6108 = vunpack.c.h.b16 %v5831
    %v6109 = vunpack.c.l.b16 %v5832
    %v6110 = vunpack.c.h.b16 %v5832
    %v6111 = vunpack.c.l.b16 %v5833
    %v6112 = vunpack.c.h.b16 %v5833
    %v6113 = vunpack.c.l.b16 %v5834
    %v6114 = vunpack.c.h.b16 %v5834
    %v6115 = vunpack.c.l.b16 %v5835
    %v6116 = vunpack.c.h.b16 %v5835
    %v6117 = vunpack.c.l.b16 %v5836
    %v6118 = vunpack.c.h.b16 %v5836
    %v6119 = vunpack.c.l.b16 %v5837
    %v6120 = vunpack.c.h.b16 %v5837
    %v6121 = vunpack.c.l.b16 %v5838
    %v6122 = vunpack.c.h.b16 %v5838
    %v6123 = vunpack.c.l.b16 %v5839
    %v6124 = vunpack.c.h.b16 %v5839
    %v6125 = vunpack.c.l.b16 %v5840
    %v6126 = vunpack.c.h.b16 %v5840
    %v6127 = vunpack.c.l.b16 %v5841
    %v6128 = vunpack.c.h.b16 %v5841
    %v6129 = vunpack.c.l.b16 %v5842
    %v6130 = vunpack.c.h.b16 %v5842
    %v6131 = vunpack.c.l.b16 %v5843
    %v6132 = vunpack.c.h.b16 %v5843
    %v6133 = vunpack.c.l.b16 %v5844
    %v6134 = vunpack.c.h.b16 %v5844
    %v6135 = vunpack.c.l.b16 %v5845
    %v6136 = vunpack.c.h.b16 %v5845
    %v6137 = vunpack.c.l.b16 %v5846
    %v6138 = vunpack.c.h.b16 %v5846
    %v6139 = vunpack.c.l.b16 %v5847
    %v6140 = vunpack.c.h.b16 %v5847
    %v6141 = vunpack.c.l.b16 %v5848
    %v6142 = vunpack.c.h.b16 %v5848
    %v6143 = vunpack.c.l.b16 %v5849
    %v6144 = vunpack.c.h.b16 %v5849
    %v6145 = vunpack.c.l.b16 %v5850
    %v6146 = vunpack.c.h.b16 %v5850
    %v6147 = vunpack.c.l.b16 %v5851
    %v6148 = vunpack.c.h.b16 %v5851
    %v6149 = vunpack.c.l.b16 %v5852
    %v6150 = vunpack.c.h.b16 %v5852
    %v6151 = vpack.c.b16 %v5963, %v5959
    %v6152 = vpack.c.b16 %v5964, %v5960
    %v6153 = vpack.c.b16 %v5965, %v5961
    %v6154 = vpack.c.b16 %v5966, %v5962
    %v6155 = vpack.c.b16 %v5971, %v5967
    %v6156 = vpack.c.b16 %v5972, %v5968
    %v6157 = vpack.c.b16 %v5973, %v5969
    %v6158 = vpack.c.b16 %v5974, %v5970
    %v6159 = vpack.c.b16 %v5979, %v5975
    %v6160 = vpack.c.b16 %v5980, %v5976
    %v6161 = vpack.c.b16 %v5981, %v5977
    %v6162 = vpack.c.b16 %v5982, %v5978
    %v6163 = vpack.c.b16 %v5987, %v5983
    %v6164 = vpack.c.b16 %v5988, %v5984
    %v6165 = vpack.c.b16 %v5989, %v5985
    %v6166 = vpack.c.b16 %v5990, %v5986
    %v6167 = vpack.c.b16 %v5995, %v5991
    %v6168 = vpack.c.b16 %v5996, %v5992
    %v6169 = vpack.c.b16 %v5997, %v5993
    %v6170 = vpack.c.b16 %v5998, %v5994
    %v6171 = vpack.c.b16 %v6003, %v5999
    %v6172 = vpack.c.b16 %v6004, %v6000
    %v6173 = vpack.c.b16 %v6005, %v6001
    %v6174 = vpack.c.b16 %v6006, %v6002
    %v6175 = vpack.c.b16 %v6011, %v6007
    %v6176 = vpack.c.b16 %v6012, %v6008
    %v6177 = vpack.c.b16 %v6013, %v6009
    %v6178 = vpack.c.b16 %v6014, %v6010
    %v6179 = vpack.c.b16 %v6019, %v6015
    %v6180 = vpack.c.b16 %v6020, %v6016
    %v6181 = vpack.c.b16 %v6021, %v6017
    %v6182 = vpack.c.b16 %v6022, %v6018
    %v6183 = vpack.c.b16 %v6027, %v6023
    %v6184 = vpack.c.b16 %v6028, %v6024
    %v6185 = vpack.c.b16 %v6029, %v6025
    %v6186 = vpack.c.b16 %v6030, %v6026
    %v6187 = vpack.c.b16 %v6035, %v6031
    %v6188 = vpack.c.b16 %v6036, %v6032
    %v6189 = vpack.c.b16 %v6037, %v6033
    %v6190 = vpack.c.b16 %v6038, %v6034
    %v6191 = vpack.c.b16 %v6043, %v6039
    %v6192 = vpack.c.b16 %v6044, %v6040
    %v6193 = vpack.c.b16 %v6045, %v6041
    %v6194 = vpack.c.b16 %v6046, %v6042
    %v6195 = vpack.c.b16 %v6051, %v6047
    %v6196 = vpack.c.b16 %v6052, %v6048
    %v6197 = vpack.c.b16 %v6053, %v6049
    %v6198 = vpack.c.b16 %v6054, %v6050
    %v6199 = vpack.c.b16 %v6059, %v6055
    %v6200 = vpack.c.b16 %v6060, %v6056
    %v6201 = vpack.c.b16 %v6061, %v6057
    %v6202 = vpack.c.b16 %v6062, %v6058
    %v6203 = vpack.c.b16 %v6067, %v6063
    %v6204 = vpack.c.b16 %v6068, %v6064
    %v6205 = vpack.c.b16 %v6069, %v6065
    %v6206 = vpack.c.b16 %v6070, %v6066
    %v6207 = vpack.c.b16 %v6075, %v6071
    %v6208 = vpack.c.b16 %v6076, %v6072
    %v6209 = vpack.c.b16 %v6077, %v6073
    %v6210 = vpack.c.b16 %v6078, %v6074
    %v6211 = vpack.c.b16 %v6083, %v6079
    %v6212 = vpack.c.b16 %v6084, %v6080
    %v6213 = vpack.c.b16 %v6085, %v6081
    %v6214 = vpack.c.b16 %v6086, %v6082
    %v6215 = vpack.c.b16 %v6091, %v6087
    %v6216 = vpack.c.b16 %v6092, %v6088
    %v6217 = vpack.c.b16 %v6093, %v6089
    %v6218 = vpack.c.b16 %v6094, %v6090
    %v6219 = vpack.c.b16 %v6099, %v6095
    %v6220 = vpack.c.b16 %v6100, %v6096
    %v6221 = vpack.c.b16 %v6101, %v6097
    %v6222 = vpack.c.b16 %v6102, %v6098
    %v6223 = vpack.c.b16 %v6107, %v6103
    %v6224 = vpack.c.b16 %v6108, %v6104
    %v6225 = vpack.c.b16 %v6109, %v6105
    %v6226 = vpack.c.b16 %v6110, %v6106
    %v6227 = vpack.c.b16 %v6115, %v6111
    %v6228 = vpack.c.b16 %v6116, %v6112
    %v6229 = vpack.c.b16 %v6117, %v6113
    %v6230 = vpack.c.b16 %v6118, %v6114
    %v6231 = vpack.c.b16 %v6123, %v6119
    %v6232 = vpack.c.b16 %v6124, %v6120
    %v6233 = vpack.c.b16 %v6125, %v6121
    %v6234 = vpack.c.b16 %v6126, %v6122
    %v6235 = vpack.c.b16 %v6131, %v6127
    %v6236 = vpack.c.b16 %v6132, %v6128
    %v6237 = vpack.c.b16 %v6133, %v6129
    %v6238 = vpack.c.b16 %v6134, %v6130
    %v6239 = vpack.c.b16 %v6139, %v6135
    %v6240 = vpack.c.b16 %v6140, %v6136
    %v6241 = vpack.c.b16 %v6141, %v6137
    %v6242 = vpack.c.b16 %v6142, %v6138
    %v6243 = vpack.c.b16 %v6147, %v6143
    %v6244 = vpack.c.b16 %v6148, %v6144
    %v6245 = vpack.c.b16 %v6149, %v6145
    %v6246 = vpack.c.b16 %v6150, %v6146
    %6343 = vmatpush.bf16.msra.mxu0 %v6179
    %6344 = vmatpush.bf16.msra.mxu0 %v6175
    %6345 = vmatpush.bf16.msra.mxu0 %v6171
    %6346 = vmatpush.bf16.msra.mxu0 %v6167
    %6347 = vmatpush.bf16.msra.mxu0 %v6163
    %6348 = vmatpush.bf16.msra.mxu0 %v6159
    %6349 = vmatpush.bf16.msra.mxu0 %v6155
    %6350 = vmatpush.bf16.msra.mxu0 %v6151
    %6351 = vmatmul.bf16.gmra.mxu0 %v5754
    %v6352 = vpop.f32.mrf.mxu0
    %v6353 = vadd.f32 %v5855, %v6352
    %v6354 = vpop.f32.mrf.mxu0
    %6355 = vdwg.mxu0
    %6356 = vmatpush.bf16.msra.mxu0 %v6211
    %6357 = vmatpush.bf16.msra.mxu0 %v6207
    %6358 = vmatpush.bf16.msra.mxu0 %v6203
    %6359 = vmatpush.bf16.msra.mxu0 %v6199
    %6360 = vmatpush.bf16.msra.mxu0 %v6195
    %6361 = vmatpush.bf16.msra.mxu0 %v6191
    %6362 = vmatpush.bf16.msra.mxu0 %v6187
    %6363 = vmatpush.bf16.msra.mxu0 %v6183
    %6364 = vmatmul.bf16.gmra.mxu0 %v5755
    %v6365 = vpop.f32.mrf.mxu0
    %v6366 = vadd.f32 %v6353, %v6365
    %v6367 = vpop.f32.mrf.mxu0
    %6368 = vdwg.mxu0
    %6369 = vmatpush.bf16.msra.mxu0 %v6243
    %6370 = vmatpush.bf16.msra.mxu0 %v6239
    %6371 = vmatpush.bf16.msra.mxu0 %v6235
    %6372 = vmatpush.bf16.msra.mxu0 %v6231
    %6373 = vmatpush.bf16.msra.mxu0 %v6227
    %6374 = vmatpush.bf16.msra.mxu0 %v6223
    %6375 = vmatpush.bf16.msra.mxu0 %v6219
    %6376 = vmatpush.bf16.msra.mxu0 %v6215
    %6377 = vmatmul.bf16.gmra.mxu0 %v5756
    %v6378 = vpop.f32.mrf.mxu0
    %v6379 = vadd.f32 %v6366, %v6378
    %v6380 = vpop.f32.mrf.mxu0
    %6381 = vdwg.mxu0
    %6382 = vmatpush.bf16.msra.mxu0 %v6180
    %6383 = vmatpush.bf16.msra.mxu0 %v6176
    %6384 = vmatpush.bf16.msra.mxu0 %v6172
    %6385 = vmatpush.bf16.msra.mxu0 %v6168
    %6386 = vmatpush.bf16.msra.mxu0 %v6164
    %6387 = vmatpush.bf16.msra.mxu0 %v6160
    %6388 = vmatpush.bf16.msra.mxu0 %v6156
    %6389 = vmatpush.bf16.msra.mxu0 %v6152
    %6390 = vmatmul.bf16.gmra.mxu0 %v5754
    %v6391 = vpop.f32.mrf.mxu0
    %v6392 = vadd.f32 %v5856, %v6391
    %v6393 = vpop.f32.mrf.mxu0
    %6394 = vdwg.mxu0
    %6395 = vmatpush.bf16.msra.mxu0 %v6212
    %6396 = vmatpush.bf16.msra.mxu0 %v6208
    %6397 = vmatpush.bf16.msra.mxu0 %v6204
    %6398 = vmatpush.bf16.msra.mxu0 %v6200
    %6399 = vmatpush.bf16.msra.mxu0 %v6196
    %6400 = vmatpush.bf16.msra.mxu0 %v6192
    %6401 = vmatpush.bf16.msra.mxu0 %v6188
    %6402 = vmatpush.bf16.msra.mxu0 %v6184
    %6403 = vmatmul.bf16.gmra.mxu0 %v5755
    %v6404 = vpop.f32.mrf.mxu0
    %v6405 = vadd.f32 %v6392, %v6404
    %v6406 = vpop.f32.mrf.mxu0
    %6407 = vdwg.mxu0
    %6408 = vmatpush.bf16.msra.mxu0 %v6244
    %6409 = vmatpush.bf16.msra.mxu0 %v6240
    %6410 = vmatpush.bf16.msra.mxu0 %v6236
    %6411 = vmatpush.bf16.msra.mxu0 %v6232
    %6412 = vmatpush.bf16.msra.mxu0 %v6228
    %6413 = vmatpush.bf16.msra.mxu0 %v6224
    %6414 = vmatpush.bf16.msra.mxu0 %v6220
    %6415 = vmatpush.bf16.msra.mxu0 %v6216
    %6416 = vmatmul.bf16.gmra.mxu0 %v5756
    %v6417 = vpop.f32.mrf.mxu0
    %v6418 = vadd.f32 %v6405, %v6417
    %v6419 = vpop.f32.mrf.mxu0
    %6420 = vdwg.mxu0
    %6421 = vmatpush.bf16.msra.mxu0 %v6181
    %6422 = vmatpush.bf16.msra.mxu0 %v6177
    %6423 = vmatpush.bf16.msra.mxu0 %v6173
    %6424 = vmatpush.bf16.msra.mxu0 %v6169
    %6425 = vmatpush.bf16.msra.mxu0 %v6165
    %6426 = vmatpush.bf16.msra.mxu0 %v6161
    %6427 = vmatpush.bf16.msra.mxu0 %v6157
    %6428 = vmatpush.bf16.msra.mxu0 %v6153
    %6429 = vmatmul.bf16.gmra.mxu0 %v5754
    %v6430 = vpop.f32.mrf.mxu0
    %v6431 = vadd.f32 %v5857, %v6430
    %v6432 = vpop.f32.mrf.mxu0
    %6433 = vdwg.mxu0
    %6434 = vmatpush.bf16.msra.mxu0 %v6213
    %6435 = vmatpush.bf16.msra.mxu0 %v6209
    %6436 = vmatpush.bf16.msra.mxu0 %v6205
    %6437 = vmatpush.bf16.msra.mxu0 %v6201
    %6438 = vmatpush.bf16.msra.mxu0 %v6197
    %6439 = vmatpush.bf16.msra.mxu0 %v6193
    %6440 = vmatpush.bf16.msra.mxu0 %v6189
    %6441 = vmatpush.bf16.msra.mxu0 %v6185
    %6442 = vmatmul.bf16.gmra.mxu0 %v5755
    %v6443 = vpop.f32.mrf.mxu0
    %v6444 = vadd.f32 %v6431, %v6443
    %v6445 = vpop.f32.mrf.mxu0
    %6446 = vdwg.mxu0
    %6447 = vmatpush.bf16.msra.mxu0 %v6245
    %6448 = vmatpush.bf16.msra.mxu0 %v6241
    %6449 = vmatpush.bf16.msra.mxu0 %v6237
    %6450 = vmatpush.bf16.msra.mxu0 %v6233
    %6451 = vmatpush.bf16.msra.mxu0 %v6229
    %6452 = vmatpush.bf16.msra.mxu0 %v6225
    %6453 = vmatpush.bf16.msra.mxu0 %v6221
    %6454 = vmatpush.bf16.msra.mxu0 %v6217
    %6455 = vmatmul.bf16.gmra.mxu0 %v5756
    %v6456 = vpop.f32.mrf.mxu0
    %v6457 = vadd.f32 %v6444, %v6456
    %v6458 = vpop.f32.mrf.mxu0
    %6459 = vdwg.mxu0
    %6460 = vmatpush.bf16.msra.mxu0 %v6182
    %6461 = vmatpush.bf16.msra.mxu0 %v6178
    %6462 = vmatpush.bf16.msra.mxu0 %v6174
    %6463 = vmatpush.bf16.msra.mxu0 %v6170
    %6464 = vmatpush.bf16.msra.mxu0 %v6166
    %6465 = vmatpush.bf16.msra.mxu0 %v6162
    %6466 = vmatpush.bf16.msra.mxu0 %v6158
    %6467 = vmatpush.bf16.msra.mxu0 %v6154
    %6468 = vmatmul.bf16.gmra.mxu0 %v5754
    %v6469 = vpop.f32.mrf.mxu0
    %v6470 = vadd.f32 %v5858, %v6469
    %v6471 = vpop.f32.mrf.mxu0
    %6472 = vdwg.mxu0
    %6473 = vmatpush.bf16.msra.mxu0 %v6214
    %6474 = vmatpush.bf16.msra.mxu0 %v6210
    %6475 = vmatpush.bf16.msra.mxu0 %v6206
    %6476 = vmatpush.bf16.msra.mxu0 %v6202
    %6477 = vmatpush.bf16.msra.mxu0 %v6198
    %6478 = vmatpush.bf16.msra.mxu0 %v6194
    %6479 = vmatpush.bf16.msra.mxu0 %v6190
    %6480 = vmatpush.bf16.msra.mxu0 %v6186
    %6481 = vmatmul.bf16.gmra.mxu0 %v5755
    %v6482 = vpop.f32.mrf.mxu0
    %v6483 = vadd.f32 %v6470, %v6482
    %v6484 = vpop.f32.mrf.mxu0
    %6485 = vdwg.mxu0
    %6486 = vmatpush.bf16.msra.mxu0 %v6246
    %6487 = vmatpush.bf16.msra.mxu0 %v6242
    %6488 = vmatpush.bf16.msra.mxu0 %v6238
    %6489 = vmatpush.bf16.msra.mxu0 %v6234
    %6490 = vmatpush.bf16.msra.mxu0 %v6230
    %6491 = vmatpush.bf16.msra.mxu0 %v6226
    %6492 = vmatpush.bf16.msra.mxu0 %v6222
    %6493 = vmatpush.bf16.msra.mxu0 %v6218
    %6494 = vmatmul.bf16.gmra.mxu0 %v5756
    %v6495 = vpop.f32.mrf.mxu0
    %v6496 = vadd.f32 %v6483, %v6495
    %v6497 = vpop.f32.mrf.mxu0
    %6498 = vdwg.mxu0
    %v6499 = vmul.f32 %v6379, 0.5
    %v6500 = vmul.f32 %v6418, 0.5
    %v6501 = vmul.f32 %v6457, 0.5
    %v6502 = vmul.f32 %v6496, 0.5
    %v6503 = vmul.f32 %v6379, 0.70710677
    %v6504 = vmul.f32 %v6418, 0.70710677
    %v6505 = vmul.f32 %v6457, 0.70710677
    %v6506 = vmul.f32 %v6496, 0.70710677
    %v6507 = vand.u32 2147483647, %v6503
    %v6508 = vand.u32 2147483647, %v6504
    %v6509 = vand.u32 2147483647, %v6505
    %v6510 = vand.u32 2147483647, %v6506
    %v6511 = vmul.f32 %v6507, 0.3275911
    %v6512 = vmul.f32 %v6508, 0.3275911
    %v6513 = vmul.f32 %v6509, 0.3275911
    %v6514 = vmul.f32 %v6510, 0.3275911
    %v6515 = vadd.f32 %v6511, 1.0
    %v6516 = vadd.f32 %v6512, 1.0
    %v6517 = vadd.f32 %v6513, 1.0
    %v6518 = vadd.f32 %v6514, 1.0
    %v6519 = vrcp.pop %v6515
    %v6520 = vmul.f32 %v6515, %v6519
    %v6521 = vsub.f32 1.0, %v6520
    %v6522 = vmul.f32 %v6519, %v6521
    %v6523 = vadd.f32 %v6519, %v6522
    %vm6524 = vweird.f32 %v6515
    %vm6525 = vweird.f32 %v6519
    %vm6526 = vmor %vm6524, %vm6525
    %v6527 = vsel %vm6526, %v6519, %v6523
    %v6528 = vand.u32 2147483647, %v6515
    %vm6529 = vcmp.eq.f32.partialorder %v6528, 8.507059e+37
    %v6530 = vand.u32 %v6515, 2147483648
    %v6531 = vor.u32 1.1754944e-38, %v6530
    %v6532 = vsel %vm6529, %v6531, %v6527
    %v6533 = vmul.f32 1.0, %v6532
    %v6534 = vrcp.pop %v6516
    %v6535 = vmul.f32 %v6516, %v6534
    %v6536 = vsub.f32 1.0, %v6535
    %v6537 = vmul.f32 %v6534, %v6536
    %v6538 = vadd.f32 %v6534, %v6537
    %vm6539 = vweird.f32 %v6516
    %vm6540 = vweird.f32 %v6534
    %vm6541 = vmor %vm6539, %vm6540
    %v6542 = vsel %vm6541, %v6534, %v6538
    %v6543 = vand.u32 2147483647, %v6516
    %vm6544 = vcmp.eq.f32.partialorder %v6543, 8.507059e+37
    %v6545 = vand.u32 %v6516, 2147483648
    %v6546 = vor.u32 1.1754944e-38, %v6545
    %v6547 = vsel %vm6544, %v6546, %v6542
    %v6548 = vmul.f32 1.0, %v6547
    %v6549 = vrcp.pop %v6517
    %v6550 = vmul.f32 %v6517, %v6549
    %v6551 = vsub.f32 1.0, %v6550
    %v6552 = vmul.f32 %v6549, %v6551
    %v6553 = vadd.f32 %v6549, %v6552
    %vm6554 = vweird.f32 %v6517
    %vm6555 = vweird.f32 %v6549
    %vm6556 = vmor %vm6554, %vm6555
    %v6557 = vsel %vm6556, %v6549, %v6553
    %v6558 = vand.u32 2147483647, %v6517
    %vm6559 = vcmp.eq.f32.partialorder %v6558, 8.507059e+37
    %v6560 = vand.u32 %v6517, 2147483648
    %v6561 = vor.u32 1.1754944e-38, %v6560
    %v6562 = vsel %vm6559, %v6561, %v6557
    %v6563 = vmul.f32 1.0, %v6562
    %v6564 = vrcp.pop %v6518
    %v6565 = vmul.f32 %v6518, %v6564
    %v6566 = vsub.f32 1.0, %v6565
    %v6567 = vmul.f32 %v6564, %v6566
    %v6568 = vadd.f32 %v6564, %v6567
    %vm6569 = vweird.f32 %v6518
    %vm6570 = vweird.f32 %v6564
    %vm6571 = vmor %vm6569, %vm6570
    %v6572 = vsel %vm6571, %v6564, %v6568
    %v6573 = vand.u32 2147483647, %v6518
    %vm6574 = vcmp.eq.f32.partialorder %v6573, 8.507059e+37
    %v6575 = vand.u32 %v6518, 2147483648
    %v6576 = vor.u32 1.1754944e-38, %v6575
    %v6577 = vsel %vm6574, %v6576, %v6572
    %v6578 = vmul.f32 1.0, %v6577
    %v6579 = vmul.f32 %v6533, 1.0614054
    %v6580 = vmul.f32 %v6548, 1.0614054
    %v6581 = vmul.f32 %v6563, 1.0614054
    %v6582 = vmul.f32 %v6578, 1.0614054
    %v6583 = vadd.f32 %v6579, -1.4531521
    %v6584 = vadd.f32 %v6580, -1.4531521
    %v6585 = vadd.f32 %v6581, -1.4531521
    %v6586 = vadd.f32 %v6582, -1.4531521
    %v6587 = vmul.f32 %v6583, %v6533
    %v6588 = vmul.f32 %v6584, %v6548
    %v6589 = vmul.f32 %v6585, %v6563
    %v6590 = vmul.f32 %v6586, %v6578
    %v6591 = vadd.f32 %v6587, 1.4214138
    %v6592 = vadd.f32 %v6588, 1.4214138
    %v6593 = vadd.f32 %v6589, 1.4214138
    %v6594 = vadd.f32 %v6590, 1.4214138
    %v6595 = vmul.f32 %v6591, %v6533
    %v6596 = vmul.f32 %v6592, %v6548
    %v6597 = vmul.f32 %v6593, %v6563
    %v6598 = vmul.f32 %v6594, %v6578
    %v6599 = vadd.f32 %v6595, -0.28449672
    %v6600 = vadd.f32 %v6596, -0.28449672
    %v6601 = vadd.f32 %v6597, -0.28449672
    %v6602 = vadd.f32 %v6598, -0.28449672
    %v6603 = vmul.f32 %v6599, %v6533
    %v6604 = vmul.f32 %v6600, %v6548
    %v6605 = vmul.f32 %v6601, %v6563
    %v6606 = vmul.f32 %v6602, %v6578
    %v6607 = vadd.f32 %v6603, 0.2548296
    %v6608 = vadd.f32 %v6604, 0.2548296
    %v6609 = vadd.f32 %v6605, 0.2548296
    %v6610 = vadd.f32 %v6606, 0.2548296
    %v6611 = vmul.f32 %v6607, %v6533
    %v6612 = vmul.f32 %v6608, %v6548
    %v6613 = vmul.f32 %v6609, %v6563
    %v6614 = vmul.f32 %v6610, %v6578
    %v6615 = vsub.f32 0.0, %v6507
    %v6616 = vsub.f32 0.0, %v6508
    %v6617 = vsub.f32 0.0, %v6509
    %v6618 = vsub.f32 0.0, %v6510
    %v6619 = vmul.f32 %v6615, %v6507
    %v6620 = vmul.f32 %v6616, %v6508
    %v6621 = vmul.f32 %v6617, %v6509
    %v6622 = vmul.f32 %v6618, %v6510
    %v6623 = vmul.f32 %v6619, 1.442695
    %v6624 = vpow.pop %v6623
    %v6625 = vmul.f32 %v6620, 1.442695
    %v6626 = vpow.pop %v6625
    %v6627 = vmul.f32 %v6621, 1.442695
    %v6628 = vpow.pop %v6627
    %v6629 = vmul.f32 %v6622, 1.442695
    %v6630 = vpow.pop %v6629
    %v6631 = vmul.f32 %v6611, %v6624
    %v6632 = vmul.f32 %v6612, %v6626
    %v6633 = vmul.f32 %v6613, %v6628
    %v6634 = vmul.f32 %v6614, %v6630
    %v6635 = vsub.f32 1.0, %v6631
    %v6636 = vsub.f32 1.0, %v6632
    %v6637 = vsub.f32 1.0, %v6633
    %v6638 = vsub.f32 1.0, %v6634
    %vm6639 = vcmp.lt.f32.partialorder %v6503, 0.0
    %vm6640 = vcmp.lt.f32.partialorder %v6504, 0.0
    %vm6641 = vcmp.lt.f32.partialorder %v6505, 0.0
    %vm6642 = vcmp.lt.f32.partialorder %v6506, 0.0
    %v6643 = vsub.f32 0.0, %v6635
    %v6644 = vsub.f32 0.0, %v6636
    %v6645 = vsub.f32 0.0, %v6637
    %v6646 = vsub.f32 0.0, %v6638
    %v6647 = vsel %vm6639, %v6643, %v6635
    %v6648 = vsel %vm6640, %v6644, %v6636
    %v6649 = vsel %vm6641, %v6645, %v6637
    %v6650 = vsel %vm6642, %v6646, %v6638
    %v6651 = vadd.f32 %v6647, 1.0
    %v6652 = vadd.f32 %v6648, 1.0
    %v6653 = vadd.f32 %v6649, 1.0
    %v6654 = vadd.f32 %v6650, 1.0
    %v6655 = vmul.f32 %v6499, %v6651
    %v6656 = vmul.f32 %v6500, %v6652
    %v6657 = vmul.f32 %v6501, %v6653
    %v6658 = vmul.f32 %v6502, %v6654
    %v6659 = vpack.c.bf16 %v5111, %v5111
    %v6660 = vpack.c.bf16 %v5112, %v5112
    %v6661 = vpack.c.bf16 %v5113, %v5113
    %v6662 = vpack.c.bf16 %v5114, %v5114
    %v6663 = vld [vmem:[#allocation10] sm:$0xff]
    %v6664 = vld [vmem:[#allocation10 + $0x8] sm:$0xff]
    %v6665 = vld [vmem:[#allocation10 + $0x10] sm:$0xff]
    %v6666 = vld [vmem:[#allocation10 + $0x18] sm:$0xff]
    %v6667 = vld [vmem:[#allocation10 + $0x20] sm:$0xff]
    %v6668 = vld [vmem:[#allocation10 + $0x28] sm:$0xff]
    %v6669 = vld [vmem:[#allocation10 + $0x30] sm:$0xff]
    %v6670 = vld [vmem:[#allocation10 + $0x38] sm:$0xff]
    %v6671 = vld [vmem:[#allocation10 + $0x40] sm:$0xff]
    %v6672 = vld [vmem:[#allocation10 + $0x48] sm:$0xff]
    %v6673 = vld [vmem:[#allocation10 + $0x50] sm:$0xff]
    %v6674 = vld [vmem:[#allocation10 + $0x58] sm:$0xff]
    %v6675 = vld [vmem:[#allocation10 + $0x60] sm:$0xff]
    %v6676 = vld [vmem:[#allocation10 + $0x68] sm:$0xff]
    %v6677 = vld [vmem:[#allocation10 + $0x70] sm:$0xff]
    %v6678 = vld [vmem:[#allocation10 + $0x78] sm:$0xff]
    %v6679 = vld [vmem:[#allocation10 + $0x80] sm:$0xff]
    %v6680 = vld [vmem:[#allocation10 + $0x88] sm:$0xff]
    %v6681 = vld [vmem:[#allocation10 + $0x90] sm:$0xff]
    %v6682 = vld [vmem:[#allocation10 + $0x98] sm:$0xff]
    %v6683 = vld [vmem:[#allocation10 + $0xa0] sm:$0xff]
    %v6684 = vld [vmem:[#allocation10 + $0xa8] sm:$0xff]
    %v6685 = vld [vmem:[#allocation10 + $0xb0] sm:$0xff]
    %v6686 = vld [vmem:[#allocation10 + $0xb8] sm:$0xff]
    %v6687 = vld [vmem:[#allocation10 + $0xc0] sm:$0xff]
    %v6688 = vld [vmem:[#allocation10 + $0xc8] sm:$0xff]
    %v6689 = vld [vmem:[#allocation10 + $0xd0] sm:$0xff]
    %v6690 = vld [vmem:[#allocation10 + $0xd8] sm:$0xff]
    %v6691 = vld [vmem:[#allocation10 + $0xe0] sm:$0xff]
    %v6692 = vld [vmem:[#allocation10 + $0xe8] sm:$0xff]
    %v6693 = vld [vmem:[#allocation10 + $0xf0] sm:$0xff]
    %v6694 = vld [vmem:[#allocation10 + $0xf8] sm:$0xff]
    %v6695 = vld [vmem:[#allocation10 + $0x100] sm:$0xff]
    %v6696 = vld [vmem:[#allocation10 + $0x108] sm:$0xff]
    %v6697 = vld [vmem:[#allocation10 + $0x110] sm:$0xff]
    %v6698 = vld [vmem:[#allocation10 + $0x118] sm:$0xff]
    %v6699 = vld [vmem:[#allocation10 + $0x120] sm:$0xff]
    %v6700 = vld [vmem:[#allocation10 + $0x128] sm:$0xff]
    %v6701 = vld [vmem:[#allocation10 + $0x130] sm:$0xff]
    %v6702 = vld [vmem:[#allocation10 + $0x138] sm:$0xff]
    %v6703 = vld [vmem:[#allocation10 + $0x140] sm:$0xff]
    %v6704 = vld [vmem:[#allocation10 + $0x148] sm:$0xff]
    %v6705 = vld [vmem:[#allocation10 + $0x150] sm:$0xff]
    %v6706 = vld [vmem:[#allocation10 + $0x158] sm:$0xff]
    %v6707 = vld [vmem:[#allocation10 + $0x160] sm:$0xff]
    %v6708 = vld [vmem:[#allocation10 + $0x168] sm:$0xff]
    %v6709 = vld [vmem:[#allocation10 + $0x170] sm:$0xff]
    %v6710 = vld [vmem:[#allocation10 + $0x178] sm:$0xff]
    %v6711 = vld [vmem:[#allocation10 + $0x180] sm:$0xff]
    %v6712 = vld [vmem:[#allocation10 + $0x188] sm:$0xff]
    %v6713 = vld [vmem:[#allocation10 + $0x190] sm:$0xff]
    %v6714 = vld [vmem:[#allocation10 + $0x198] sm:$0xff]
    %v6715 = vld [vmem:[#allocation10 + $0x1a0] sm:$0xff]
    %v6716 = vld [vmem:[#allocation10 + $0x1a8] sm:$0xff]
    %v6717 = vld [vmem:[#allocation10 + $0x1b0] sm:$0xff]
    %v6718 = vld [vmem:[#allocation10 + $0x1b8] sm:$0xff]
    %v6719 = vld [vmem:[#allocation10 + $0x1c0] sm:$0xff]
    %v6720 = vld [vmem:[#allocation10 + $0x1c8] sm:$0xff]
    %v6721 = vld [vmem:[#allocation10 + $0x1d0] sm:$0xff]
    %v6722 = vld [vmem:[#allocation10 + $0x1d8] sm:$0xff]
    %v6723 = vld [vmem:[#allocation10 + $0x1e0] sm:$0xff]
    %v6724 = vld [vmem:[#allocation10 + $0x1e8] sm:$0xff]
    %v6725 = vld [vmem:[#allocation10 + $0x1f0] sm:$0xff]
    %v6726 = vld [vmem:[#allocation10 + $0x1f8] sm:$0xff]
    %v6727 = vld [vmem:[#allocation10 + $0x200] sm:$0xff]
    %v6728 = vld [vmem:[#allocation10 + $0x208] sm:$0xff]
    %v6729 = vld [vmem:[#allocation10 + $0x210] sm:$0xff]
    %v6730 = vld [vmem:[#allocation10 + $0x218] sm:$0xff]
    %v6731 = vld [vmem:[#allocation10 + $0x220] sm:$0xff]
    %v6732 = vld [vmem:[#allocation10 + $0x228] sm:$0xff]
    %v6733 = vld [vmem:[#allocation10 + $0x230] sm:$0xff]
    %v6734 = vld [vmem:[#allocation10 + $0x238] sm:$0xff]
    %v6735 = vld [vmem:[#allocation10 + $0x240] sm:$0xff]
    %v6736 = vld [vmem:[#allocation10 + $0x248] sm:$0xff]
    %v6737 = vld [vmem:[#allocation10 + $0x250] sm:$0xff]
    %v6738 = vld [vmem:[#allocation10 + $0x258] sm:$0xff]
    %v6739 = vld [vmem:[#allocation10 + $0x260] sm:$0xff]
    %v6740 = vld [vmem:[#allocation10 + $0x268] sm:$0xff]
    %v6741 = vld [vmem:[#allocation10 + $0x270] sm:$0xff]
    %v6742 = vld [vmem:[#allocation10 + $0x278] sm:$0xff]
    %v6743 = vld [vmem:[#allocation10 + $0x280] sm:$0xff]
    %v6744 = vld [vmem:[#allocation10 + $0x288] sm:$0xff]
    %v6745 = vld [vmem:[#allocation10 + $0x290] sm:$0xff]
    %v6746 = vld [vmem:[#allocation10 + $0x298] sm:$0xff]
    %v6747 = vld [vmem:[#allocation10 + $0x2a0] sm:$0xff]
    %v6748 = vld [vmem:[#allocation10 + $0x2a8] sm:$0xff]
    %v6749 = vld [vmem:[#allocation10 + $0x2b0] sm:$0xff]
    %v6750 = vld [vmem:[#allocation10 + $0x2b8] sm:$0xff]
    %v6751 = vld [vmem:[#allocation10 + $0x2c0] sm:$0xff]
    %v6752 = vld [vmem:[#allocation10 + $0x2c8] sm:$0xff]
    %v6753 = vld [vmem:[#allocation10 + $0x2d0] sm:$0xff]
    %v6754 = vld [vmem:[#allocation10 + $0x2d8] sm:$0xff]
    %v6755 = vld [vmem:[#allocation10 + $0x2e0] sm:$0xff]
    %v6756 = vld [vmem:[#allocation10 + $0x2e8] sm:$0xff]
    %v6757 = vld [vmem:[#allocation10 + $0x2f0] sm:$0xff]
    %v6758 = vld [vmem:[#allocation10 + $0x2f8] sm:$0xff]
    %v6759 = vld [vmem:[#allocation10 + $0x300] sm:$0xff]
    %v6760 = vld [vmem:[#allocation10 + $0x308] sm:$0xff]
    %v6761 = vld [vmem:[#allocation10 + $0x310] sm:$0xff]
    %v6762 = vld [vmem:[#allocation10 + $0x318] sm:$0xff]
    %v6763 = vld [vmem:[#allocation10 + $0x320] sm:$0xff]
    %v6764 = vld [vmem:[#allocation10 + $0x328] sm:$0xff]
    %v6765 = vld [vmem:[#allocation10 + $0x330] sm:$0xff]
    %v6766 = vld [vmem:[#allocation10 + $0x338] sm:$0xff]
    %v6767 = vld [vmem:[#allocation10 + $0x340] sm:$0xff]
    %v6768 = vld [vmem:[#allocation10 + $0x348] sm:$0xff]
    %v6769 = vld [vmem:[#allocation10 + $0x350] sm:$0xff]
    %v6770 = vld [vmem:[#allocation10 + $0x358] sm:$0xff]
    %v6771 = vld [vmem:[#allocation10 + $0x360] sm:$0xff]
    %v6772 = vld [vmem:[#allocation10 + $0x368] sm:$0xff]
    %v6773 = vld [vmem:[#allocation10 + $0x370] sm:$0xff]
    %v6774 = vld [vmem:[#allocation10 + $0x378] sm:$0xff]
    %v6775 = vld [vmem:[#allocation10 + $0x380] sm:$0xff]
    %v6776 = vld [vmem:[#allocation10 + $0x388] sm:$0xff]
    %v6777 = vld [vmem:[#allocation10 + $0x390] sm:$0xff]
    %v6778 = vld [vmem:[#allocation10 + $0x398] sm:$0xff]
    %v6779 = vld [vmem:[#allocation10 + $0x3a0] sm:$0xff]
    %v6780 = vld [vmem:[#allocation10 + $0x3a8] sm:$0xff]
    %v6781 = vld [vmem:[#allocation10 + $0x3b0] sm:$0xff]
    %v6782 = vld [vmem:[#allocation10 + $0x3b8] sm:$0xff]
    %v6783 = vld [vmem:[#allocation10 + $0x3c0] sm:$0xff]
    %v6784 = vld [vmem:[#allocation10 + $0x3c8] sm:$0xff]
    %v6785 = vld [vmem:[#allocation10 + $0x3d0] sm:$0xff]
    %v6786 = vld [vmem:[#allocation10 + $0x3d8] sm:$0xff]
    %v6787 = vld [vmem:[#allocation10 + $0x3e0] sm:$0xff]
    %v6788 = vld [vmem:[#allocation10 + $0x3e8] sm:$0xff]
    %v6789 = vld [vmem:[#allocation10 + $0x3f0] sm:$0xff]
    %v6790 = vld [vmem:[#allocation10 + $0x3f8] sm:$0xff]
    %v6791 = vpack.c.bf16 %v6655, %v6655
    %v6792 = vpack.c.bf16 %v6656, %v6656
    %v6793 = vpack.c.bf16 %v6657, %v6657
    %v6794 = vpack.c.bf16 %v6658, %v6658
    %v6795 = vld [vmem:[#allocation11] sm:$0xff]
    %v6796 = vld [vmem:[#allocation11 + $0x8] sm:$0xff]
    %v6797 = vld [vmem:[#allocation11 + $0x10] sm:$0xff]
    %v6798 = vld [vmem:[#allocation11 + $0x18] sm:$0xff]
    %v6799 = vld [vmem:[#allocation11 + $0x20] sm:$0xff]
    %v6800 = vld [vmem:[#allocation11 + $0x28] sm:$0xff]
    %v6801 = vld [vmem:[#allocation11 + $0x30] sm:$0xff]
    %v6802 = vld [vmem:[#allocation11 + $0x38] sm:$0xff]
    %v6803 = vld [vmem:[#allocation11 + $0x40] sm:$0xff]
    %v6804 = vld [vmem:[#allocation11 + $0x48] sm:$0xff]
    %v6805 = vld [vmem:[#allocation11 + $0x50] sm:$0xff]
    %v6806 = vld [vmem:[#allocation11 + $0x58] sm:$0xff]
    %v6807 = vld [vmem:[#allocation11 + $0x60] sm:$0xff]
    %v6808 = vld [vmem:[#allocation11 + $0x68] sm:$0xff]
    %v6809 = vld [vmem:[#allocation11 + $0x70] sm:$0xff]
    %v6810 = vld [vmem:[#allocation11 + $0x78] sm:$0xff]
    %v6811 = vld [vmem:[#allocation11 + $0x80] sm:$0xff]
    %v6812 = vld [vmem:[#allocation11 + $0x88] sm:$0xff]
    %v6813 = vld [vmem:[#allocation11 + $0x90] sm:$0xff]
    %v6814 = vld [vmem:[#allocation11 + $0x98] sm:$0xff]
    %v6815 = vld [vmem:[#allocation11 + $0xa0] sm:$0xff]
    %v6816 = vld [vmem:[#allocation11 + $0xa8] sm:$0xff]
    %v6817 = vld [vmem:[#allocation11 + $0xb0] sm:$0xff]
    %v6818 = vld [vmem:[#allocation11 + $0xb8] sm:$0xff]
    %v6819 = vld [vmem:[#allocation11 + $0xc0] sm:$0xff]
    %v6820 = vld [vmem:[#allocation11 + $0xc8] sm:$0xff]
    %v6821 = vld [vmem:[#allocation11 + $0xd0] sm:$0xff]
    %v6822 = vld [vmem:[#allocation11 + $0xd8] sm:$0xff]
    %v6823 = vld [vmem:[#allocation11 + $0xe0] sm:$0xff]
    %v6824 = vld [vmem:[#allocation11 + $0xe8] sm:$0xff]
    %v6825 = vld [vmem:[#allocation11 + $0xf0] sm:$0xff]
    %v6826 = vld [vmem:[#allocation11 + $0xf8] sm:$0xff]
    %v6827 = vld [vmem:[#allocation11 + $0x100] sm:$0xff]
    %v6828 = vld [vmem:[#allocation11 + $0x108] sm:$0xff]
    %v6829 = vld [vmem:[#allocation11 + $0x110] sm:$0xff]
    %v6830 = vld [vmem:[#allocation11 + $0x118] sm:$0xff]
    %v6831 = vld [vmem:[#allocation11 + $0x120] sm:$0xff]
    %v6832 = vld [vmem:[#allocation11 + $0x128] sm:$0xff]
    %v6833 = vld [vmem:[#allocation11 + $0x130] sm:$0xff]
    %v6834 = vld [vmem:[#allocation11 + $0x138] sm:$0xff]
    %v6835 = vld [vmem:[#allocation11 + $0x140] sm:$0xff]
    %v6836 = vld [vmem:[#allocation11 + $0x148] sm:$0xff]
    %v6837 = vld [vmem:[#allocation11 + $0x150] sm:$0xff]
    %v6838 = vld [vmem:[#allocation11 + $0x158] sm:$0xff]
    %v6839 = vld [vmem:[#allocation11 + $0x160] sm:$0xff]
    %v6840 = vld [vmem:[#allocation11 + $0x168] sm:$0xff]
    %v6841 = vld [vmem:[#allocation11 + $0x170] sm:$0xff]
    %v6842 = vld [vmem:[#allocation11 + $0x178] sm:$0xff]
    %v6843 = vld [vmem:[#allocation11 + $0x180] sm:$0xff]
    %v6844 = vld [vmem:[#allocation11 + $0x188] sm:$0xff]
    %v6845 = vld [vmem:[#allocation11 + $0x190] sm:$0xff]
    %v6846 = vld [vmem:[#allocation11 + $0x198] sm:$0xff]
    %v6847 = vld [vmem:[#allocation11 + $0x1a0] sm:$0xff]
    %v6848 = vld [vmem:[#allocation11 + $0x1a8] sm:$0xff]
    %v6849 = vld [vmem:[#allocation11 + $0x1b0] sm:$0xff]
    %v6850 = vld [vmem:[#allocation11 + $0x1b8] sm:$0xff]
    %v6851 = vld [vmem:[#allocation11 + $0x1c0] sm:$0xff]
    %v6852 = vld [vmem:[#allocation11 + $0x1c8] sm:$0xff]
    %v6853 = vld [vmem:[#allocation11 + $0x1d0] sm:$0xff]
    %v6854 = vld [vmem:[#allocation11 + $0x1d8] sm:$0xff]
    %v6855 = vld [vmem:[#allocation11 + $0x1e0] sm:$0xff]
    %v6856 = vld [vmem:[#allocation11 + $0x1e8] sm:$0xff]
    %v6857 = vld [vmem:[#allocation11 + $0x1f0] sm:$0xff]
    %v6858 = vld [vmem:[#allocation11 + $0x1f8] sm:$0xff]
    %v6859 = vld [vmem:[#allocation11 + $0x200] sm:$0xff]
    %v6860 = vld [vmem:[#allocation11 + $0x208] sm:$0xff]
    %v6861 = vld [vmem:[#allocation11 + $0x210] sm:$0xff]
    %v6862 = vld [vmem:[#allocation11 + $0x218] sm:$0xff]
    %v6863 = vld [vmem:[#allocation11 + $0x220] sm:$0xff]
    %v6864 = vld [vmem:[#allocation11 + $0x228] sm:$0xff]
    %v6865 = vld [vmem:[#allocation11 + $0x230] sm:$0xff]
    %v6866 = vld [vmem:[#allocation11 + $0x238] sm:$0xff]
    %v6867 = vld [vmem:[#allocation11 + $0x240] sm:$0xff]
    %v6868 = vld [vmem:[#allocation11 + $0x248] sm:$0xff]
    %v6869 = vld [vmem:[#allocation11 + $0x250] sm:$0xff]
    %v6870 = vld [vmem:[#allocation11 + $0x258] sm:$0xff]
    %v6871 = vld [vmem:[#allocation11 + $0x260] sm:$0xff]
    %v6872 = vld [vmem:[#allocation11 + $0x268] sm:$0xff]
    %v6873 = vld [vmem:[#allocation11 + $0x270] sm:$0xff]
    %v6874 = vld [vmem:[#allocation11 + $0x278] sm:$0xff]
    %v6875 = vld [vmem:[#allocation11 + $0x280] sm:$0xff]
    %v6876 = vld [vmem:[#allocation11 + $0x288] sm:$0xff]
    %v6877 = vld [vmem:[#allocation11 + $0x290] sm:$0xff]
    %v6878 = vld [vmem:[#allocation11 + $0x298] sm:$0xff]
    %v6879 = vld [vmem:[#allocation11 + $0x2a0] sm:$0xff]
    %v6880 = vld [vmem:[#allocation11 + $0x2a8] sm:$0xff]
    %v6881 = vld [vmem:[#allocation11 + $0x2b0] sm:$0xff]
    %v6882 = vld [vmem:[#allocation11 + $0x2b8] sm:$0xff]
    %v6883 = vld [vmem:[#allocation11 + $0x2c0] sm:$0xff]
    %v6884 = vld [vmem:[#allocation11 + $0x2c8] sm:$0xff]
    %v6885 = vld [vmem:[#allocation11 + $0x2d0] sm:$0xff]
    %v6886 = vld [vmem:[#allocation11 + $0x2d8] sm:$0xff]
    %v6887 = vld [vmem:[#allocation11 + $0x2e0] sm:$0xff]
    %v6888 = vld [vmem:[#allocation11 + $0x2e8] sm:$0xff]
    %v6889 = vld [vmem:[#allocation11 + $0x2f0] sm:$0xff]
    %v6890 = vld [vmem:[#allocation11 + $0x2f8] sm:$0xff]
    %v6891 = vld [vmem:[#allocation11 + $0x300] sm:$0xff]
    %v6892 = vld [vmem:[#allocation11 + $0x308] sm:$0xff]
    %v6893 = vld [vmem:[#allocation11 + $0x310] sm:$0xff]
    %v6894 = vld [vmem:[#allocation11 + $0x318] sm:$0xff]
    %v6895 = vld [vmem:[#allocation11 + $0x320] sm:$0xff]
    %v6896 = vld [vmem:[#allocation11 + $0x328] sm:$0xff]
    %v6897 = vld [vmem:[#allocation11 + $0x330] sm:$0xff]
    %v6898 = vld [vmem:[#allocation11 + $0x338] sm:$0xff]
    %v6899 = vld [vmem:[#allocation11 + $0x340] sm:$0xff]
    %v6900 = vld [vmem:[#allocation11 + $0x348] sm:$0xff]
    %v6901 = vld [vmem:[#allocation11 + $0x350] sm:$0xff]
    %v6902 = vld [vmem:[#allocation11 + $0x358] sm:$0xff]
    %v6903 = vld [vmem:[#allocation11 + $0x360] sm:$0xff]
    %v6904 = vld [vmem:[#allocation11 + $0x368] sm:$0xff]
    %v6905 = vld [vmem:[#allocation11 + $0x370] sm:$0xff]
    %v6906 = vld [vmem:[#allocation11 + $0x378] sm:$0xff]
    %v6907 = vld [vmem:[#allocation11 + $0x380] sm:$0xff]
    %v6908 = vld [vmem:[#allocation11 + $0x388] sm:$0xff]
    %v6909 = vld [vmem:[#allocation11 + $0x390] sm:$0xff]
    %v6910 = vld [vmem:[#allocation11 + $0x398] sm:$0xff]
    %v6911 = vld [vmem:[#allocation11 + $0x3a0] sm:$0xff]
    %v6912 = vld [vmem:[#allocation11 + $0x3a8] sm:$0xff]
    %v6913 = vld [vmem:[#allocation11 + $0x3b0] sm:$0xff]
    %v6914 = vld [vmem:[#allocation11 + $0x3b8] sm:$0xff]
    %v6915 = vld [vmem:[#allocation11 + $0x3c0] sm:$0xff]
    %v6916 = vld [vmem:[#allocation11 + $0x3c8] sm:$0xff]
    %v6917 = vld [vmem:[#allocation11 + $0x3d0] sm:$0xff]
    %v6918 = vld [vmem:[#allocation11 + $0x3d8] sm:$0xff]
    %v6919 = vld [vmem:[#allocation11 + $0x3e0] sm:$0xff]
    %v6920 = vld [vmem:[#allocation11 + $0x3e8] sm:$0xff]
    %v6921 = vld [vmem:[#allocation11 + $0x3f0] sm:$0xff]
    %v6922 = vld [vmem:[#allocation11 + $0x3f8] sm:$0xff]
    %v7051 = vunpack.c.l.b16 %v6795
    %v7052 = vunpack.c.h.b16 %v6795
    %v7053 = vunpack.c.l.b16 %v6796
    %v7054 = vunpack.c.h.b16 %v6796
    %v7055 = vunpack.c.l.b16 %v6797
    %v7056 = vunpack.c.h.b16 %v6797
    %v7057 = vunpack.c.l.b16 %v6798
    %v7058 = vunpack.c.h.b16 %v6798
    %v7059 = vunpack.c.l.b16 %v6799
    %v7060 = vunpack.c.h.b16 %v6799
    %v7061 = vunpack.c.l.b16 %v6800
    %v7062 = vunpack.c.h.b16 %v6800
    %v7063 = vunpack.c.l.b16 %v6801
    %v7064 = vunpack.c.h.b16 %v6801
    %v7065 = vunpack.c.l.b16 %v6802
    %v7066 = vunpack.c.h.b16 %v6802
    %v7067 = vunpack.c.l.b16 %v6803
    %v7068 = vunpack.c.h.b16 %v6803
    %v7069 = vunpack.c.l.b16 %v6804
    %v7070 = vunpack.c.h.b16 %v6804
    %v7071 = vunpack.c.l.b16 %v6805
    %v7072 = vunpack.c.h.b16 %v6805
    %v7073 = vunpack.c.l.b16 %v6806
    %v7074 = vunpack.c.h.b16 %v6806
    %v7075 = vunpack.c.l.b16 %v6807
    %v7076 = vunpack.c.h.b16 %v6807
    %v7077 = vunpack.c.l.b16 %v6808
    %v7078 = vunpack.c.h.b16 %v6808
    %v7079 = vunpack.c.l.b16 %v6809
    %v7080 = vunpack.c.h.b16 %v6809
    %v7081 = vunpack.c.l.b16 %v6810
    %v7082 = vunpack.c.h.b16 %v6810
    %v7083 = vunpack.c.l.b16 %v6811
    %v7084 = vunpack.c.h.b16 %v6811
    %v7085 = vunpack.c.l.b16 %v6812
    %v7086 = vunpack.c.h.b16 %v6812
    %v7087 = vunpack.c.l.b16 %v6813
    %v7088 = vunpack.c.h.b16 %v6813
    %v7089 = vunpack.c.l.b16 %v6814
    %v7090 = vunpack.c.h.b16 %v6814
    %v7091 = vunpack.c.l.b16 %v6815
    %v7092 = vunpack.c.h.b16 %v6815
    %v7093 = vunpack.c.l.b16 %v6816
    %v7094 = vunpack.c.h.b16 %v6816
    %v7095 = vunpack.c.l.b16 %v6817
    %v7096 = vunpack.c.h.b16 %v6817
    %v7097 = vunpack.c.l.b16 %v6818
    %v7098 = vunpack.c.h.b16 %v6818
    %v7099 = vunpack.c.l.b16 %v6819
    %v7100 = vunpack.c.h.b16 %v6819
    %v7101 = vunpack.c.l.b16 %v6820
    %v7102 = vunpack.c.h.b16 %v6820
    %v7103 = vunpack.c.l.b16 %v6821
    %v7104 = vunpack.c.h.b16 %v6821
    %v7105 = vunpack.c.l.b16 %v6822
    %v7106 = vunpack.c.h.b16 %v6822
    %v7107 = vunpack.c.l.b16 %v6823
    %v7108 = vunpack.c.h.b16 %v6823
    %v7109 = vunpack.c.l.b16 %v6824
    %v7110 = vunpack.c.h.b16 %v6824
    %v7111 = vunpack.c.l.b16 %v6825
    %v7112 = vunpack.c.h.b16 %v6825
    %v7113 = vunpack.c.l.b16 %v6826
    %v7114 = vunpack.c.h.b16 %v6826
    %v7115 = vunpack.c.l.b16 %v6827
    %v7116 = vunpack.c.h.b16 %v6827
    %v7117 = vunpack.c.l.b16 %v6828
    %v7118 = vunpack.c.h.b16 %v6828
    %v7119 = vunpack.c.l.b16 %v6829
    %v7120 = vunpack.c.h.b16 %v6829
    %v7121 = vunpack.c.l.b16 %v6830
    %v7122 = vunpack.c.h.b16 %v6830
    %v7123 = vunpack.c.l.b16 %v6831
    %v7124 = vunpack.c.h.b16 %v6831
    %v7125 = vunpack.c.l.b16 %v6832
    %v7126 = vunpack.c.h.b16 %v6832
    %v7127 = vunpack.c.l.b16 %v6833
    %v7128 = vunpack.c.h.b16 %v6833
    %v7129 = vunpack.c.l.b16 %v6834
    %v7130 = vunpack.c.h.b16 %v6834
    %v7131 = vunpack.c.l.b16 %v6835
    %v7132 = vunpack.c.h.b16 %v6835
    %v7133 = vunpack.c.l.b16 %v6836
    %v7134 = vunpack.c.h.b16 %v6836
    %v7135 = vunpack.c.l.b16 %v6837
    %v7136 = vunpack.c.h.b16 %v6837
    %v7137 = vunpack.c.l.b16 %v6838
    %v7138 = vunpack.c.h.b16 %v6838
    %v7139 = vunpack.c.l.b16 %v6839
    %v7140 = vunpack.c.h.b16 %v6839
    %v7141 = vunpack.c.l.b16 %v6840
    %v7142 = vunpack.c.h.b16 %v6840
    %v7143 = vunpack.c.l.b16 %v6841
    %v7144 = vunpack.c.h.b16 %v6841
    %v7145 = vunpack.c.l.b16 %v6842
    %v7146 = vunpack.c.h.b16 %v6842
    %v7147 = vunpack.c.l.b16 %v6843
    %v7148 = vunpack.c.h.b16 %v6843
    %v7149 = vunpack.c.l.b16 %v6844
    %v7150 = vunpack.c.h.b16 %v6844
    %v7151 = vunpack.c.l.b16 %v6845
    %v7152 = vunpack.c.h.b16 %v6845
    %v7153 = vunpack.c.l.b16 %v6846
    %v7154 = vunpack.c.h.b16 %v6846
    %v7155 = vunpack.c.l.b16 %v6847
    %v7156 = vunpack.c.h.b16 %v6847
    %v7157 = vunpack.c.l.b16 %v6848
    %v7158 = vunpack.c.h.b16 %v6848
    %v7159 = vunpack.c.l.b16 %v6849
    %v7160 = vunpack.c.h.b16 %v6849
    %v7161 = vunpack.c.l.b16 %v6850
    %v7162 = vunpack.c.h.b16 %v6850
    %v7163 = vunpack.c.l.b16 %v6851
    %v7164 = vunpack.c.h.b16 %v6851
    %v7165 = vunpack.c.l.b16 %v6852
    %v7166 = vunpack.c.h.b16 %v6852
    %v7167 = vunpack.c.l.b16 %v6853
    %v7168 = vunpack.c.h.b16 %v6853
    %v7169 = vunpack.c.l.b16 %v6854
    %v7170 = vunpack.c.h.b16 %v6854
    %v7171 = vunpack.c.l.b16 %v6855
    %v7172 = vunpack.c.h.b16 %v6855
    %v7173 = vunpack.c.l.b16 %v6856
    %v7174 = vunpack.c.h.b16 %v6856
    %v7175 = vunpack.c.l.b16 %v6857
    %v7176 = vunpack.c.h.b16 %v6857
    %v7177 = vunpack.c.l.b16 %v6858
    %v7178 = vunpack.c.h.b16 %v6858
    %v7179 = vunpack.c.l.b16 %v6859
    %v7180 = vunpack.c.h.b16 %v6859
    %v7181 = vunpack.c.l.b16 %v6860
    %v7182 = vunpack.c.h.b16 %v6860
    %v7183 = vunpack.c.l.b16 %v6861
    %v7184 = vunpack.c.h.b16 %v6861
    %v7185 = vunpack.c.l.b16 %v6862
    %v7186 = vunpack.c.h.b16 %v6862
    %v7187 = vunpack.c.l.b16 %v6863
    %v7188 = vunpack.c.h.b16 %v6863
    %v7189 = vunpack.c.l.b16 %v6864
    %v7190 = vunpack.c.h.b16 %v6864
    %v7191 = vunpack.c.l.b16 %v6865
    %v7192 = vunpack.c.h.b16 %v6865
    %v7193 = vunpack.c.l.b16 %v6866
    %v7194 = vunpack.c.h.b16 %v6866
    %v7195 = vunpack.c.l.b16 %v6867
    %v7196 = vunpack.c.h.b16 %v6867
    %v7197 = vunpack.c.l.b16 %v6868
    %v7198 = vunpack.c.h.b16 %v6868
    %v7199 = vunpack.c.l.b16 %v6869
    %v7200 = vunpack.c.h.b16 %v6869
    %v7201 = vunpack.c.l.b16 %v6870
    %v7202 = vunpack.c.h.b16 %v6870
    %v7203 = vunpack.c.l.b16 %v6871
    %v7204 = vunpack.c.h.b16 %v6871
    %v7205 = vunpack.c.l.b16 %v6872
    %v7206 = vunpack.c.h.b16 %v6872
    %v7207 = vunpack.c.l.b16 %v6873
    %v7208 = vunpack.c.h.b16 %v6873
    %v7209 = vunpack.c.l.b16 %v6874
    %v7210 = vunpack.c.h.b16 %v6874
    %v7211 = vunpack.c.l.b16 %v6875
    %v7212 = vunpack.c.h.b16 %v6875
    %v7213 = vunpack.c.l.b16 %v6876
    %v7214 = vunpack.c.h.b16 %v6876
    %v7215 = vunpack.c.l.b16 %v6877
    %v7216 = vunpack.c.h.b16 %v6877
    %v7217 = vunpack.c.l.b16 %v6878
    %v7218 = vunpack.c.h.b16 %v6878
    %v7219 = vunpack.c.l.b16 %v6879
    %v7220 = vunpack.c.h.b16 %v6879
    %v7221 = vunpack.c.l.b16 %v6880
    %v7222 = vunpack.c.h.b16 %v6880
    %v7223 = vunpack.c.l.b16 %v6881
    %v7224 = vunpack.c.h.b16 %v6881
    %v7225 = vunpack.c.l.b16 %v6882
    %v7226 = vunpack.c.h.b16 %v6882
    %v7227 = vunpack.c.l.b16 %v6883
    %v7228 = vunpack.c.h.b16 %v6883
    %v7229 = vunpack.c.l.b16 %v6884
    %v7230 = vunpack.c.h.b16 %v6884
    %v7231 = vunpack.c.l.b16 %v6885
    %v7232 = vunpack.c.h.b16 %v6885
    %v7233 = vunpack.c.l.b16 %v6886
    %v7234 = vunpack.c.h.b16 %v6886
    %v7235 = vunpack.c.l.b16 %v6887
    %v7236 = vunpack.c.h.b16 %v6887
    %v7237 = vunpack.c.l.b16 %v6888
    %v7238 = vunpack.c.h.b16 %v6888
    %v7239 = vunpack.c.l.b16 %v6889
    %v7240 = vunpack.c.h.b16 %v6889
    %v7241 = vunpack.c.l.b16 %v6890
    %v7242 = vunpack.c.h.b16 %v6890
    %v7243 = vunpack.c.l.b16 %v6891
    %v7244 = vunpack.c.h.b16 %v6891
    %v7245 = vunpack.c.l.b16 %v6892
    %v7246 = vunpack.c.h.b16 %v6892
    %v7247 = vunpack.c.l.b16 %v6893
    %v7248 = vunpack.c.h.b16 %v6893
    %v7249 = vunpack.c.l.b16 %v6894
    %v7250 = vunpack.c.h.b16 %v6894
    %v7251 = vunpack.c.l.b16 %v6895
    %v7252 = vunpack.c.h.b16 %v6895
    %v7253 = vunpack.c.l.b16 %v6896
    %v7254 = vunpack.c.h.b16 %v6896
    %v7255 = vunpack.c.l.b16 %v6897
    %v7256 = vunpack.c.h.b16 %v6897
    %v7257 = vunpack.c.l.b16 %v6898
    %v7258 = vunpack.c.h.b16 %v6898
    %v7259 = vunpack.c.l.b16 %v6899
    %v7260 = vunpack.c.h.b16 %v6899
    %v7261 = vunpack.c.l.b16 %v6900
    %v7262 = vunpack.c.h.b16 %v6900
    %v7263 = vunpack.c.l.b16 %v6901
    %v7264 = vunpack.c.h.b16 %v6901
    %v7265 = vunpack.c.l.b16 %v6902
    %v7266 = vunpack.c.h.b16 %v6902
    %v7267 = vunpack.c.l.b16 %v6903
    %v7268 = vunpack.c.h.b16 %v6903
    %v7269 = vunpack.c.l.b16 %v6904
    %v7270 = vunpack.c.h.b16 %v6904
    %v7271 = vunpack.c.l.b16 %v6905
    %v7272 = vunpack.c.h.b16 %v6905
    %v7273 = vunpack.c.l.b16 %v6906
    %v7274 = vunpack.c.h.b16 %v6906
    %v7275 = vunpack.c.l.b16 %v6907
    %v7276 = vunpack.c.h.b16 %v6907
    %v7277 = vunpack.c.l.b16 %v6908
    %v7278 = vunpack.c.h.b16 %v6908
    %v7279 = vunpack.c.l.b16 %v6909
    %v7280 = vunpack.c.h.b16 %v6909
    %v7281 = vunpack.c.l.b16 %v6910
    %v7282 = vunpack.c.h.b16 %v6910
    %v7283 = vunpack.c.l.b16 %v6911
    %v7284 = vunpack.c.h.b16 %v6911
    %v7285 = vunpack.c.l.b16 %v6912
    %v7286 = vunpack.c.h.b16 %v6912
    %v7287 = vunpack.c.l.b16 %v6913
    %v7288 = vunpack.c.h.b16 %v6913
    %v7289 = vunpack.c.l.b16 %v6914
    %v7290 = vunpack.c.h.b16 %v6914
    %v7291 = vunpack.c.l.b16 %v6915
    %v7292 = vunpack.c.h.b16 %v6915
    %v7293 = vunpack.c.l.b16 %v6916
    %v7294 = vunpack.c.h.b16 %v6916
    %v7295 = vunpack.c.l.b16 %v6917
    %v7296 = vunpack.c.h.b16 %v6917
    %v7297 = vunpack.c.l.b16 %v6918
    %v7298 = vunpack.c.h.b16 %v6918
    %v7299 = vunpack.c.l.b16 %v6919
    %v7300 = vunpack.c.h.b16 %v6919
    %v7301 = vunpack.c.l.b16 %v6920
    %v7302 = vunpack.c.h.b16 %v6920
    %v7303 = vunpack.c.l.b16 %v6921
    %v7304 = vunpack.c.h.b16 %v6921
    %v7305 = vunpack.c.l.b16 %v6922
    %v7306 = vunpack.c.h.b16 %v6922
    %v7307 = vpack.c.b16 %v7055, %v7051
    %v7308 = vpack.c.b16 %v7056, %v7052
    %v7309 = vpack.c.b16 %v7057, %v7053
    %v7310 = vpack.c.b16 %v7058, %v7054
    %v7311 = vpack.c.b16 %v7063, %v7059
    %v7312 = vpack.c.b16 %v7064, %v7060
    %v7313 = vpack.c.b16 %v7065, %v7061
    %v7314 = vpack.c.b16 %v7066, %v7062
    %v7315 = vpack.c.b16 %v7071, %v7067
    %v7316 = vpack.c.b16 %v7072, %v7068
    %v7317 = vpack.c.b16 %v7073, %v7069
    %v7318 = vpack.c.b16 %v7074, %v7070
    %v7319 = vpack.c.b16 %v7079, %v7075
    %v7320 = vpack.c.b16 %v7080, %v7076
    %v7321 = vpack.c.b16 %v7081, %v7077
    %v7322 = vpack.c.b16 %v7082, %v7078
    %v7323 = vpack.c.b16 %v7087, %v7083
    %v7324 = vpack.c.b16 %v7088, %v7084
    %v7325 = vpack.c.b16 %v7089, %v7085
    %v7326 = vpack.c.b16 %v7090, %v7086
    %v7327 = vpack.c.b16 %v7095, %v7091
    %v7328 = vpack.c.b16 %v7096, %v7092
    %v7329 = vpack.c.b16 %v7097, %v7093
    %v7330 = vpack.c.b16 %v7098, %v7094
    %v7331 = vpack.c.b16 %v7103, %v7099
    %v7332 = vpack.c.b16 %v7104, %v7100
    %v7333 = vpack.c.b16 %v7105, %v7101
    %v7334 = vpack.c.b16 %v7106, %v7102
    %v7335 = vpack.c.b16 %v7111, %v7107
    %v7336 = vpack.c.b16 %v7112, %v7108
    %v7337 = vpack.c.b16 %v7113, %v7109
    %v7338 = vpack.c.b16 %v7114, %v7110
    %v7339 = vpack.c.b16 %v7119, %v7115
    %v7340 = vpack.c.b16 %v7120, %v7116
    %v7341 = vpack.c.b16 %v7121, %v7117
    %v7342 = vpack.c.b16 %v7122, %v7118
    %v7343 = vpack.c.b16 %v7127, %v7123
    %v7344 = vpack.c.b16 %v7128, %v7124
    %v7345 = vpack.c.b16 %v7129, %v7125
    %v7346 = vpack.c.b16 %v7130, %v7126
    %v7347 = vpack.c.b16 %v7135, %v7131
    %v7348 = vpack.c.b16 %v7136, %v7132
    %v7349 = vpack.c.b16 %v7137, %v7133
    %v7350 = vpack.c.b16 %v7138, %v7134
    %v7351 = vpack.c.b16 %v7143, %v7139
    %v7352 = vpack.c.b16 %v7144, %v7140
    %v7353 = vpack.c.b16 %v7145, %v7141
    %v7354 = vpack.c.b16 %v7146, %v7142
    %v7355 = vpack.c.b16 %v7151, %v7147
    %v7356 = vpack.c.b16 %v7152, %v7148
    %v7357 = vpack.c.b16 %v7153, %v7149
    %v7358 = vpack.c.b16 %v7154, %v7150
    %v7359 = vpack.c.b16 %v7159, %v7155
    %v7360 = vpack.c.b16 %v7160, %v7156
    %v7361 = vpack.c.b16 %v7161, %v7157
    %v7362 = vpack.c.b16 %v7162, %v7158
    %v7363 = vpack.c.b16 %v7167, %v7163
    %v7364 = vpack.c.b16 %v7168, %v7164
    %v7365 = vpack.c.b16 %v7169, %v7165
    %v7366 = vpack.c.b16 %v7170, %v7166
    %v7367 = vpack.c.b16 %v7175, %v7171
    %v7368 = vpack.c.b16 %v7176, %v7172
    %v7369 = vpack.c.b16 %v7177, %v7173
    %v7370 = vpack.c.b16 %v7178, %v7174
    %v7371 = vpack.c.b16 %v7183, %v7179
    %v7372 = vpack.c.b16 %v7184, %v7180
    %v7373 = vpack.c.b16 %v7185, %v7181
    %v7374 = vpack.c.b16 %v7186, %v7182
    %v7375 = vpack.c.b16 %v7191, %v7187
    %v7376 = vpack.c.b16 %v7192, %v7188
    %v7377 = vpack.c.b16 %v7193, %v7189
    %v7378 = vpack.c.b16 %v7194, %v7190
    %v7379 = vpack.c.b16 %v7199, %v7195
    %v7380 = vpack.c.b16 %v7200, %v7196
    %v7381 = vpack.c.b16 %v7201, %v7197
    %v7382 = vpack.c.b16 %v7202, %v7198
    %v7383 = vpack.c.b16 %v7207, %v7203
    %v7384 = vpack.c.b16 %v7208, %v7204
    %v7385 = vpack.c.b16 %v7209, %v7205
    %v7386 = vpack.c.b16 %v7210, %v7206
    %v7387 = vpack.c.b16 %v7215, %v7211
    %v7388 = vpack.c.b16 %v7216, %v7212
    %v7389 = vpack.c.b16 %v7217, %v7213
    %v7390 = vpack.c.b16 %v7218, %v7214
    %v7391 = vpack.c.b16 %v7223, %v7219
    %v7392 = vpack.c.b16 %v7224, %v7220
    %v7393 = vpack.c.b16 %v7225, %v7221
    %v7394 = vpack.c.b16 %v7226, %v7222
    %v7395 = vpack.c.b16 %v7231, %v7227
    %v7396 = vpack.c.b16 %v7232, %v7228
    %v7397 = vpack.c.b16 %v7233, %v7229
    %v7398 = vpack.c.b16 %v7234, %v7230
    %v7399 = vpack.c.b16 %v7239, %v7235
    %v7400 = vpack.c.b16 %v7240, %v7236
    %v7401 = vpack.c.b16 %v7241, %v7237
    %v7402 = vpack.c.b16 %v7242, %v7238
    %v7403 = vpack.c.b16 %v7247, %v7243
    %v7404 = vpack.c.b16 %v7248, %v7244
    %v7405 = vpack.c.b16 %v7249, %v7245
    %v7406 = vpack.c.b16 %v7250, %v7246
    %v7407 = vpack.c.b16 %v7255, %v7251
    %v7408 = vpack.c.b16 %v7256, %v7252
    %v7409 = vpack.c.b16 %v7257, %v7253
    %v7410 = vpack.c.b16 %v7258, %v7254
    %v7411 = vpack.c.b16 %v7263, %v7259
    %v7412 = vpack.c.b16 %v7264, %v7260
    %v7413 = vpack.c.b16 %v7265, %v7261
    %v7414 = vpack.c.b16 %v7266, %v7262
    %v7415 = vpack.c.b16 %v7271, %v7267
    %v7416 = vpack.c.b16 %v7272, %v7268
    %v7417 = vpack.c.b16 %v7273, %v7269
    %v7418 = vpack.c.b16 %v7274, %v7270
    %v7419 = vpack.c.b16 %v7279, %v7275
    %v7420 = vpack.c.b16 %v7280, %v7276
    %v7421 = vpack.c.b16 %v7281, %v7277
    %v7422 = vpack.c.b16 %v7282, %v7278
    %v7423 = vpack.c.b16 %v7287, %v7283
    %v7424 = vpack.c.b16 %v7288, %v7284
    %v7425 = vpack.c.b16 %v7289, %v7285
    %v7426 = vpack.c.b16 %v7290, %v7286
    %v7427 = vpack.c.b16 %v7295, %v7291
    %v7428 = vpack.c.b16 %v7296, %v7292
    %v7429 = vpack.c.b16 %v7297, %v7293
    %v7430 = vpack.c.b16 %v7298, %v7294
    %v7431 = vpack.c.b16 %v7303, %v7299
    %v7432 = vpack.c.b16 %v7304, %v7300
    %v7433 = vpack.c.b16 %v7305, %v7301
    %v7434 = vpack.c.b16 %v7306, %v7302
    %7563 = vmatpush.bf16.msra.mxu0 %v7335
    %7564 = vmatpush.bf16.msra.mxu0 %v7331
    %7565 = vmatpush.bf16.msra.mxu0 %v7327
    %7566 = vmatpush.bf16.msra.mxu0 %v7323
    %7567 = vmatpush.bf16.msra.mxu0 %v7319
    %7568 = vmatpush.bf16.msra.mxu0 %v7315
    %7569 = vmatpush.bf16.msra.mxu0 %v7311
    %7570 = vmatpush.bf16.msra.mxu0 %v7307
    %7571 = vmatmul.bf16.gmra.mxu0 %v6791
    %v7572 = vpop.f32.mrf.mxu0
    %v7573 = vadd.f32 0.0, %v7572
    %v7574 = vpop.f32.mrf.mxu0
    %7575 = vdwg.mxu0
    %7576 = vmatpush.bf16.msra.mxu0 %v7367
    %7577 = vmatpush.bf16.msra.mxu0 %v7363
    %7578 = vmatpush.bf16.msra.mxu0 %v7359
    %7579 = vmatpush.bf16.msra.mxu0 %v7355
    %7580 = vmatpush.bf16.msra.mxu0 %v7351
    %7581 = vmatpush.bf16.msra.mxu0 %v7347
    %7582 = vmatpush.bf16.msra.mxu0 %v7343
    %7583 = vmatpush.bf16.msra.mxu0 %v7339
    %7584 = vmatmul.bf16.gmra.mxu0 %v6792
    %v7585 = vpop.f32.mrf.mxu0
    %v7586 = vadd.f32 %v7573, %v7585
    %v7587 = vpop.f32.mrf.mxu0
    %7588 = vdwg.mxu0
    %7589 = vmatpush.bf16.msra.mxu0 %v7399
    %7590 = vmatpush.bf16.msra.mxu0 %v7395
    %7591 = vmatpush.bf16.msra.mxu0 %v7391
    %7592 = vmatpush.bf16.msra.mxu0 %v7387
    %7593 = vmatpush.bf16.msra.mxu0 %v7383
    %7594 = vmatpush.bf16.msra.mxu0 %v7379
    %7595 = vmatpush.bf16.msra.mxu0 %v7375
    %7596 = vmatpush.bf16.msra.mxu0 %v7371
    %7597 = vmatmul.bf16.gmra.mxu0 %v6793
    %v7598 = vpop.f32.mrf.mxu0
    %v7599 = vadd.f32 %v7586, %v7598
    %v7600 = vpop.f32.mrf.mxu0
    %7601 = vdwg.mxu0
    %7602 = vmatpush.bf16.msra.mxu0 %v7431
    %7603 = vmatpush.bf16.msra.mxu0 %v7427
    %7604 = vmatpush.bf16.msra.mxu0 %v7423
    %7605 = vmatpush.bf16.msra.mxu0 %v7419
    %7606 = vmatpush.bf16.msra.mxu0 %v7415
    %7607 = vmatpush.bf16.msra.mxu0 %v7411
    %7608 = vmatpush.bf16.msra.mxu0 %v7407
    %7609 = vmatpush.bf16.msra.mxu0 %v7403
    %7610 = vmatmul.bf16.gmra.mxu0 %v6794
    %v7611 = vpop.f32.mrf.mxu0
    %v7612 = vadd.f32 %v7599, %v7611
    %v7613 = vpop.f32.mrf.mxu0
    %7614 = vdwg.mxu0
    %7615 = vmatpush.bf16.msra.mxu0 %v7336
    %7616 = vmatpush.bf16.msra.mxu0 %v7332
    %7617 = vmatpush.bf16.msra.mxu0 %v7328
    %7618 = vmatpush.bf16.msra.mxu0 %v7324
    %7619 = vmatpush.bf16.msra.mxu0 %v7320
    %7620 = vmatpush.bf16.msra.mxu0 %v7316
    %7621 = vmatpush.bf16.msra.mxu0 %v7312
    %7622 = vmatpush.bf16.msra.mxu0 %v7308
    %7623 = vmatmul.bf16.gmra.mxu0 %v6791
    %v7624 = vpop.f32.mrf.mxu0
    %v7625 = vadd.f32 0.0, %v7624
    %v7626 = vpop.f32.mrf.mxu0
    %7627 = vdwg.mxu0
    %7628 = vmatpush.bf16.msra.mxu0 %v7368
    %7629 = vmatpush.bf16.msra.mxu0 %v7364
    %7630 = vmatpush.bf16.msra.mxu0 %v7360
    %7631 = vmatpush.bf16.msra.mxu0 %v7356
    %7632 = vmatpush.bf16.msra.mxu0 %v7352
    %7633 = vmatpush.bf16.msra.mxu0 %v7348
    %7634 = vmatpush.bf16.msra.mxu0 %v7344
    %7635 = vmatpush.bf16.msra.mxu0 %v7340
    %7636 = vmatmul.bf16.gmra.mxu0 %v6792
    %v7637 = vpop.f32.mrf.mxu0
    %v7638 = vadd.f32 %v7625, %v7637
    %v7639 = vpop.f32.mrf.mxu0
    %7640 = vdwg.mxu0
    %7641 = vmatpush.bf16.msra.mxu0 %v7400
    %7642 = vmatpush.bf16.msra.mxu0 %v7396
    %7643 = vmatpush.bf16.msra.mxu0 %v7392
    %7644 = vmatpush.bf16.msra.mxu0 %v7388
    %7645 = vmatpush.bf16.msra.mxu0 %v7384
    %7646 = vmatpush.bf16.msra.mxu0 %v7380
    %7647 = vmatpush.bf16.msra.mxu0 %v7376
    %7648 = vmatpush.bf16.msra.mxu0 %v7372
    %7649 = vmatmul.bf16.gmra.mxu0 %v6793
    %v7650 = vpop.f32.mrf.mxu0
    %v7651 = vadd.f32 %v7638, %v7650
    %v7652 = vpop.f32.mrf.mxu0
    %7653 = vdwg.mxu0
    %7654 = vmatpush.bf16.msra.mxu0 %v7432
    %7655 = vmatpush.bf16.msra.mxu0 %v7428
    %7656 = vmatpush.bf16.msra.mxu0 %v7424
    %7657 = vmatpush.bf16.msra.mxu0 %v7420
    %7658 = vmatpush.bf16.msra.mxu0 %v7416
    %7659 = vmatpush.bf16.msra.mxu0 %v7412
    %7660 = vmatpush.bf16.msra.mxu0 %v7408
    %7661 = vmatpush.bf16.msra.mxu0 %v7404
    %7662 = vmatmul.bf16.gmra.mxu0 %v6794
    %v7663 = vpop.f32.mrf.mxu0
    %v7664 = vadd.f32 %v7651, %v7663
    %v7665 = vpop.f32.mrf.mxu0
    %7666 = vdwg.mxu0
    %7667 = vmatpush.bf16.msra.mxu0 %v7337
    %7668 = vmatpush.bf16.msra.mxu0 %v7333
    %7669 = vmatpush.bf16.msra.mxu0 %v7329
    %7670 = vmatpush.bf16.msra.mxu0 %v7325
    %7671 = vmatpush.bf16.msra.mxu0 %v7321
    %7672 = vmatpush.bf16.msra.mxu0 %v7317
    %7673 = vmatpush.bf16.msra.mxu0 %v7313
    %7674 = vmatpush.bf16.msra.mxu0 %v7309
    %7675 = vmatmul.bf16.gmra.mxu0 %v6791
    %v7676 = vpop.f32.mrf.mxu0
    %v7677 = vadd.f32 0.0, %v7676
    %v7678 = vpop.f32.mrf.mxu0
    %7679 = vdwg.mxu0
    %7680 = vmatpush.bf16.msra.mxu0 %v7369
    %7681 = vmatpush.bf16.msra.mxu0 %v7365
    %7682 = vmatpush.bf16.msra.mxu0 %v7361
    %7683 = vmatpush.bf16.msra.mxu0 %v7357
    %7684 = vmatpush.bf16.msra.mxu0 %v7353
    %7685 = vmatpush.bf16.msra.mxu0 %v7349
    %7686 = vmatpush.bf16.msra.mxu0 %v7345
    %7687 = vmatpush.bf16.msra.mxu0 %v7341
    %7688 = vmatmul.bf16.gmra.mxu0 %v6792
    %v7689 = vpop.f32.mrf.mxu0
    %v7690 = vadd.f32 %v7677, %v7689
    %v7691 = vpop.f32.mrf.mxu0
    %7692 = vdwg.mxu0
    %7693 = vmatpush.bf16.msra.mxu0 %v7401
    %7694 = vmatpush.bf16.msra.mxu0 %v7397
    %7695 = vmatpush.bf16.msra.mxu0 %v7393
    %7696 = vmatpush.bf16.msra.mxu0 %v7389
    %7697 = vmatpush.bf16.msra.mxu0 %v7385
    %7698 = vmatpush.bf16.msra.mxu0 %v7381
    %7699 = vmatpush.bf16.msra.mxu0 %v7377
    %7700 = vmatpush.bf16.msra.mxu0 %v7373
    %7701 = vmatmul.bf16.gmra.mxu0 %v6793
    %v7702 = vpop.f32.mrf.mxu0
    %v7703 = vadd.f32 %v7690, %v7702
    %v7704 = vpop.f32.mrf.mxu0
    %7705 = vdwg.mxu0
    %7706 = vmatpush.bf16.msra.mxu0 %v7433
    %7707 = vmatpush.bf16.msra.mxu0 %v7429
    %7708 = vmatpush.bf16.msra.mxu0 %v7425
    %7709 = vmatpush.bf16.msra.mxu0 %v7421
    %7710 = vmatpush.bf16.msra.mxu0 %v7417
    %7711 = vmatpush.bf16.msra.mxu0 %v7413
    %7712 = vmatpush.bf16.msra.mxu0 %v7409
    %7713 = vmatpush.bf16.msra.mxu0 %v7405
    %7714 = vmatmul.bf16.gmra.mxu0 %v6794
    %v7715 = vpop.f32.mrf.mxu0
    %v7716 = vadd.f32 %v7703, %v7715
    %v7717 = vpop.f32.mrf.mxu0
    %7718 = vdwg.mxu0
    %7719 = vmatpush.bf16.msra.mxu0 %v7338
    %7720 = vmatpush.bf16.msra.mxu0 %v7334
    %7721 = vmatpush.bf16.msra.mxu0 %v7330
    %7722 = vmatpush.bf16.msra.mxu0 %v7326
    %7723 = vmatpush.bf16.msra.mxu0 %v7322
    %7724 = vmatpush.bf16.msra.mxu0 %v7318
    %7725 = vmatpush.bf16.msra.mxu0 %v7314
    %7726 = vmatpush.bf16.msra.mxu0 %v7310
    %7727 = vmatmul.bf16.gmra.mxu0 %v6791
    %v7728 = vpop.f32.mrf.mxu0
    %v7729 = vadd.f32 0.0, %v7728
    %v7730 = vpop.f32.mrf.mxu0
    %7731 = vdwg.mxu0
    %7732 = vmatpush.bf16.msra.mxu0 %v7370
    %7733 = vmatpush.bf16.msra.mxu0 %v7366
    %7734 = vmatpush.bf16.msra.mxu0 %v7362
    %7735 = vmatpush.bf16.msra.mxu0 %v7358
    %7736 = vmatpush.bf16.msra.mxu0 %v7354
    %7737 = vmatpush.bf16.msra.mxu0 %v7350
    %7738 = vmatpush.bf16.msra.mxu0 %v7346
    %7739 = vmatpush.bf16.msra.mxu0 %v7342
    %7740 = vmatmul.bf16.gmra.mxu0 %v6792
    %v7741 = vpop.f32.mrf.mxu0
    %v7742 = vadd.f32 %v7729, %v7741
    %v7743 = vpop.f32.mrf.mxu0
    %7744 = vdwg.mxu0
    %7745 = vmatpush.bf16.msra.mxu0 %v7402
    %7746 = vmatpush.bf16.msra.mxu0 %v7398
    %7747 = vmatpush.bf16.msra.mxu0 %v7394
    %7748 = vmatpush.bf16.msra.mxu0 %v7390
    %7749 = vmatpush.bf16.msra.mxu0 %v7386
    %7750 = vmatpush.bf16.msra.mxu0 %v7382
    %7751 = vmatpush.bf16.msra.mxu0 %v7378
    %7752 = vmatpush.bf16.msra.mxu0 %v7374
    %7753 = vmatmul.bf16.gmra.mxu0 %v6793
    %v7754 = vpop.f32.mrf.mxu0
    %v7755 = vadd.f32 %v7742, %v7754
    %v7756 = vpop.f32.mrf.mxu0
    %7757 = vdwg.mxu0
    %7758 = vmatpush.bf16.msra.mxu0 %v7434
    %7759 = vmatpush.bf16.msra.mxu0 %v7430
    %7760 = vmatpush.bf16.msra.mxu0 %v7426
    %7761 = vmatpush.bf16.msra.mxu0 %v7422
    %7762 = vmatpush.bf16.msra.mxu0 %v7418
    %7763 = vmatpush.bf16.msra.mxu0 %v7414
    %7764 = vmatpush.bf16.msra.mxu0 %v7410
    %7765 = vmatpush.bf16.msra.mxu0 %v7406
    %7766 = vmatmul.bf16.gmra.mxu0 %v6794
    %v7767 = vpop.f32.mrf.mxu0
    %v7768 = vadd.f32 %v7755, %v7767
    %v7769 = vpop.f32.mrf.mxu0
    %7770 = vdwg.mxu0
    %v7899 = vunpack.c.l.b16 %v6663
    %v7900 = vunpack.c.h.b16 %v6663
    %v7901 = vunpack.c.l.b16 %v6664
    %v7902 = vunpack.c.h.b16 %v6664
    %v7903 = vunpack.c.l.b16 %v6665
    %v7904 = vunpack.c.h.b16 %v6665
    %v7905 = vunpack.c.l.b16 %v6666
    %v7906 = vunpack.c.h.b16 %v6666
    %v7907 = vunpack.c.l.b16 %v6667
    %v7908 = vunpack.c.h.b16 %v6667
    %v7909 = vunpack.c.l.b16 %v6668
    %v7910 = vunpack.c.h.b16 %v6668
    %v7911 = vunpack.c.l.b16 %v6669
    %v7912 = vunpack.c.h.b16 %v6669
    %v7913 = vunpack.c.l.b16 %v6670
    %v7914 = vunpack.c.h.b16 %v6670
    %v7915 = vunpack.c.l.b16 %v6671
    %v7916 = vunpack.c.h.b16 %v6671
    %v7917 = vunpack.c.l.b16 %v6672
    %v7918 = vunpack.c.h.b16 %v6672
    %v7919 = vunpack.c.l.b16 %v6673
    %v7920 = vunpack.c.h.b16 %v6673
    %v7921 = vunpack.c.l.b16 %v6674
    %v7922 = vunpack.c.h.b16 %v6674
    %v7923 = vunpack.c.l.b16 %v6675
    %v7924 = vunpack.c.h.b16 %v6675
    %v7925 = vunpack.c.l.b16 %v6676
    %v7926 = vunpack.c.h.b16 %v6676
    %v7927 = vunpack.c.l.b16 %v6677
    %v7928 = vunpack.c.h.b16 %v6677
    %v7929 = vunpack.c.l.b16 %v6678
    %v7930 = vunpack.c.h.b16 %v6678
    %v7931 = vunpack.c.l.b16 %v6679
    %v7932 = vunpack.c.h.b16 %v6679
    %v7933 = vunpack.c.l.b16 %v6680
    %v7934 = vunpack.c.h.b16 %v6680
    %v7935 = vunpack.c.l.b16 %v6681
    %v7936 = vunpack.c.h.b16 %v6681
    %v7937 = vunpack.c.l.b16 %v6682
    %v7938 = vunpack.c.h.b16 %v6682
    %v7939 = vunpack.c.l.b16 %v6683
    %v7940 = vunpack.c.h.b16 %v6683
    %v7941 = vunpack.c.l.b16 %v6684
    %v7942 = vunpack.c.h.b16 %v6684
    %v7943 = vunpack.c.l.b16 %v6685
    %v7944 = vunpack.c.h.b16 %v6685
    %v7945 = vunpack.c.l.b16 %v6686
    %v7946 = vunpack.c.h.b16 %v6686
    %v7947 = vunpack.c.l.b16 %v6687
    %v7948 = vunpack.c.h.b16 %v6687
    %v7949 = vunpack.c.l.b16 %v6688
    %v7950 = vunpack.c.h.b16 %v6688
    %v7951 = vunpack.c.l.b16 %v6689
    %v7952 = vunpack.c.h.b16 %v6689
    %v7953 = vunpack.c.l.b16 %v6690
    %v7954 = vunpack.c.h.b16 %v6690
    %v7955 = vunpack.c.l.b16 %v6691
    %v7956 = vunpack.c.h.b16 %v6691
    %v7957 = vunpack.c.l.b16 %v6692
    %v7958 = vunpack.c.h.b16 %v6692
    %v7959 = vunpack.c.l.b16 %v6693
    %v7960 = vunpack.c.h.b16 %v6693
    %v7961 = vunpack.c.l.b16 %v6694
    %v7962 = vunpack.c.h.b16 %v6694
    %v7963 = vunpack.c.l.b16 %v6695
    %v7964 = vunpack.c.h.b16 %v6695
    %v7965 = vunpack.c.l.b16 %v6696
    %v7966 = vunpack.c.h.b16 %v6696
    %v7967 = vunpack.c.l.b16 %v6697
    %v7968 = vunpack.c.h.b16 %v6697
    %v7969 = vunpack.c.l.b16 %v6698
    %v7970 = vunpack.c.h.b16 %v6698
    %v7971 = vunpack.c.l.b16 %v6699
    %v7972 = vunpack.c.h.b16 %v6699
    %v7973 = vunpack.c.l.b16 %v6700
    %v7974 = vunpack.c.h.b16 %v6700
    %v7975 = vunpack.c.l.b16 %v6701
    %v7976 = vunpack.c.h.b16 %v6701
    %v7977 = vunpack.c.l.b16 %v6702
    %v7978 = vunpack.c.h.b16 %v6702
    %v7979 = vunpack.c.l.b16 %v6703
    %v7980 = vunpack.c.h.b16 %v6703
    %v7981 = vunpack.c.l.b16 %v6704
    %v7982 = vunpack.c.h.b16 %v6704
    %v7983 = vunpack.c.l.b16 %v6705
    %v7984 = vunpack.c.h.b16 %v6705
    %v7985 = vunpack.c.l.b16 %v6706
    %v7986 = vunpack.c.h.b16 %v6706
    %v7987 = vunpack.c.l.b16 %v6707
    %v7988 = vunpack.c.h.b16 %v6707
    %v7989 = vunpack.c.l.b16 %v6708
    %v7990 = vunpack.c.h.b16 %v6708
    %v7991 = vunpack.c.l.b16 %v6709
    %v7992 = vunpack.c.h.b16 %v6709
    %v7993 = vunpack.c.l.b16 %v6710
    %v7994 = vunpack.c.h.b16 %v6710
    %v7995 = vunpack.c.l.b16 %v6711
    %v7996 = vunpack.c.h.b16 %v6711
    %v7997 = vunpack.c.l.b16 %v6712
    %v7998 = vunpack.c.h.b16 %v6712
    %v7999 = vunpack.c.l.b16 %v6713
    %v8000 = vunpack.c.h.b16 %v6713
    %v8001 = vunpack.c.l.b16 %v6714
    %v8002 = vunpack.c.h.b16 %v6714
    %v8003 = vunpack.c.l.b16 %v6715
    %v8004 = vunpack.c.h.b16 %v6715
    %v8005 = vunpack.c.l.b16 %v6716
    %v8006 = vunpack.c.h.b16 %v6716
    %v8007 = vunpack.c.l.b16 %v6717
    %v8008 = vunpack.c.h.b16 %v6717
    %v8009 = vunpack.c.l.b16 %v6718
    %v8010 = vunpack.c.h.b16 %v6718
    %v8011 = vunpack.c.l.b16 %v6719
    %v8012 = vunpack.c.h.b16 %v6719
    %v8013 = vunpack.c.l.b16 %v6720
    %v8014 = vunpack.c.h.b16 %v6720
    %v8015 = vunpack.c.l.b16 %v6721
    %v8016 = vunpack.c.h.b16 %v6721
    %v8017 = vunpack.c.l.b16 %v6722
    %v8018 = vunpack.c.h.b16 %v6722
    %v8019 = vunpack.c.l.b16 %v6723
    %v8020 = vunpack.c.h.b16 %v6723
    %v8021 = vunpack.c.l.b16 %v6724
    %v8022 = vunpack.c.h.b16 %v6724
    %v8023 = vunpack.c.l.b16 %v6725
    %v8024 = vunpack.c.h.b16 %v6725
    %v8025 = vunpack.c.l.b16 %v6726
    %v8026 = vunpack.c.h.b16 %v6726
    %v8027 = vunpack.c.l.b16 %v6727
    %v8028 = vunpack.c.h.b16 %v6727
    %v8029 = vunpack.c.l.b16 %v6728
    %v8030 = vunpack.c.h.b16 %v6728
    %v8031 = vunpack.c.l.b16 %v6729
    %v8032 = vunpack.c.h.b16 %v6729
    %v8033 = vunpack.c.l.b16 %v6730
    %v8034 = vunpack.c.h.b16 %v6730
    %v8035 = vunpack.c.l.b16 %v6731
    %v8036 = vunpack.c.h.b16 %v6731
    %v8037 = vunpack.c.l.b16 %v6732
    %v8038 = vunpack.c.h.b16 %v6732
    %v8039 = vunpack.c.l.b16 %v6733
    %v8040 = vunpack.c.h.b16 %v6733
    %v8041 = vunpack.c.l.b16 %v6734
    %v8042 = vunpack.c.h.b16 %v6734
    %v8043 = vunpack.c.l.b16 %v6735
    %v8044 = vunpack.c.h.b16 %v6735
    %v8045 = vunpack.c.l.b16 %v6736
    %v8046 = vunpack.c.h.b16 %v6736
    %v8047 = vunpack.c.l.b16 %v6737
    %v8048 = vunpack.c.h.b16 %v6737
    %v8049 = vunpack.c.l.b16 %v6738
    %v8050 = vunpack.c.h.b16 %v6738
    %v8051 = vunpack.c.l.b16 %v6739
    %v8052 = vunpack.c.h.b16 %v6739
    %v8053 = vunpack.c.l.b16 %v6740
    %v8054 = vunpack.c.h.b16 %v6740
    %v8055 = vunpack.c.l.b16 %v6741
    %v8056 = vunpack.c.h.b16 %v6741
    %v8057 = vunpack.c.l.b16 %v6742
    %v8058 = vunpack.c.h.b16 %v6742
    %v8059 = vunpack.c.l.b16 %v6743
    %v8060 = vunpack.c.h.b16 %v6743
    %v8061 = vunpack.c.l.b16 %v6744
    %v8062 = vunpack.c.h.b16 %v6744
    %v8063 = vunpack.c.l.b16 %v6745
    %v8064 = vunpack.c.h.b16 %v6745
    %v8065 = vunpack.c.l.b16 %v6746
    %v8066 = vunpack.c.h.b16 %v6746
    %v8067 = vunpack.c.l.b16 %v6747
    %v8068 = vunpack.c.h.b16 %v6747
    %v8069 = vunpack.c.l.b16 %v6748
    %v8070 = vunpack.c.h.b16 %v6748
    %v8071 = vunpack.c.l.b16 %v6749
    %v8072 = vunpack.c.h.b16 %v6749
    %v8073 = vunpack.c.l.b16 %v6750
    %v8074 = vunpack.c.h.b16 %v6750
    %v8075 = vunpack.c.l.b16 %v6751
    %v8076 = vunpack.c.h.b16 %v6751
    %v8077 = vunpack.c.l.b16 %v6752
    %v8078 = vunpack.c.h.b16 %v6752
    %v8079 = vunpack.c.l.b16 %v6753
    %v8080 = vunpack.c.h.b16 %v6753
    %v8081 = vunpack.c.l.b16 %v6754
    %v8082 = vunpack.c.h.b16 %v6754
    %v8083 = vunpack.c.l.b16 %v6755
    %v8084 = vunpack.c.h.b16 %v6755
    %v8085 = vunpack.c.l.b16 %v6756
    %v8086 = vunpack.c.h.b16 %v6756
    %v8087 = vunpack.c.l.b16 %v6757
    %v8088 = vunpack.c.h.b16 %v6757
    %v8089 = vunpack.c.l.b16 %v6758
    %v8090 = vunpack.c.h.b16 %v6758
    %v8091 = vunpack.c.l.b16 %v6759
    %v8092 = vunpack.c.h.b16 %v6759
    %v8093 = vunpack.c.l.b16 %v6760
    %v8094 = vunpack.c.h.b16 %v6760
    %v8095 = vunpack.c.l.b16 %v6761
    %v8096 = vunpack.c.h.b16 %v6761
    %v8097 = vunpack.c.l.b16 %v6762
    %v8098 = vunpack.c.h.b16 %v6762
    %v8099 = vunpack.c.l.b16 %v6763
    %v8100 = vunpack.c.h.b16 %v6763
    %v8101 = vunpack.c.l.b16 %v6764
    %v8102 = vunpack.c.h.b16 %v6764
    %v8103 = vunpack.c.l.b16 %v6765
    %v8104 = vunpack.c.h.b16 %v6765
    %v8105 = vunpack.c.l.b16 %v6766
    %v8106 = vunpack.c.h.b16 %v6766
    %v8107 = vunpack.c.l.b16 %v6767
    %v8108 = vunpack.c.h.b16 %v6767
    %v8109 = vunpack.c.l.b16 %v6768
    %v8110 = vunpack.c.h.b16 %v6768
    %v8111 = vunpack.c.l.b16 %v6769
    %v8112 = vunpack.c.h.b16 %v6769
    %v8113 = vunpack.c.l.b16 %v6770
    %v8114 = vunpack.c.h.b16 %v6770
    %v8115 = vunpack.c.l.b16 %v6771
    %v8116 = vunpack.c.h.b16 %v6771
    %v8117 = vunpack.c.l.b16 %v6772
    %v8118 = vunpack.c.h.b16 %v6772
    %v8119 = vunpack.c.l.b16 %v6773
    %v8120 = vunpack.c.h.b16 %v6773
    %v8121 = vunpack.c.l.b16 %v6774
    %v8122 = vunpack.c.h.b16 %v6774
    %v8123 = vunpack.c.l.b16 %v6775
    %v8124 = vunpack.c.h.b16 %v6775
    %v8125 = vunpack.c.l.b16 %v6776
    %v8126 = vunpack.c.h.b16 %v6776
    %v8127 = vunpack.c.l.b16 %v6777
    %v8128 = vunpack.c.h.b16 %v6777
    %v8129 = vunpack.c.l.b16 %v6778
    %v8130 = vunpack.c.h.b16 %v6778
    %v8131 = vunpack.c.l.b16 %v6779
    %v8132 = vunpack.c.h.b16 %v6779
    %v8133 = vunpack.c.l.b16 %v6780
    %v8134 = vunpack.c.h.b16 %v6780
    %v8135 = vunpack.c.l.b16 %v6781
    %v8136 = vunpack.c.h.b16 %v6781
    %v8137 = vunpack.c.l.b16 %v6782
    %v8138 = vunpack.c.h.b16 %v6782
    %v8139 = vunpack.c.l.b16 %v6783
    %v8140 = vunpack.c.h.b16 %v6783
    %v8141 = vunpack.c.l.b16 %v6784
    %v8142 = vunpack.c.h.b16 %v6784
    %v8143 = vunpack.c.l.b16 %v6785
    %v8144 = vunpack.c.h.b16 %v6785
    %v8145 = vunpack.c.l.b16 %v6786
    %v8146 = vunpack.c.h.b16 %v6786
    %v8147 = vunpack.c.l.b16 %v6787
    %v8148 = vunpack.c.h.b16 %v6787
    %v8149 = vunpack.c.l.b16 %v6788
    %v8150 = vunpack.c.h.b16 %v6788
    %v8151 = vunpack.c.l.b16 %v6789
    %v8152 = vunpack.c.h.b16 %v6789
    %v8153 = vunpack.c.l.b16 %v6790
    %v8154 = vunpack.c.h.b16 %v6790
    %v8155 = vpack.c.b16 %v7903, %v7899
    %v8156 = vpack.c.b16 %v7904, %v7900
    %v8157 = vpack.c.b16 %v7905, %v7901
    %v8158 = vpack.c.b16 %v7906, %v7902
    %v8159 = vpack.c.b16 %v7911, %v7907
    %v8160 = vpack.c.b16 %v7912, %v7908
    %v8161 = vpack.c.b16 %v7913, %v7909
    %v8162 = vpack.c.b16 %v7914, %v7910
    %v8163 = vpack.c.b16 %v7919, %v7915
    %v8164 = vpack.c.b16 %v7920, %v7916
    %v8165 = vpack.c.b16 %v7921, %v7917
    %v8166 = vpack.c.b16 %v7922, %v7918
    %v8167 = vpack.c.b16 %v7927, %v7923
    %v8168 = vpack.c.b16 %v7928, %v7924
    %v8169 = vpack.c.b16 %v7929, %v7925
    %v8170 = vpack.c.b16 %v7930, %v7926
    %v8171 = vpack.c.b16 %v7935, %v7931
    %v8172 = vpack.c.b16 %v7936, %v7932
    %v8173 = vpack.c.b16 %v7937, %v7933
    %v8174 = vpack.c.b16 %v7938, %v7934
    %v8175 = vpack.c.b16 %v7943, %v7939
    %v8176 = vpack.c.b16 %v7944, %v7940
    %v8177 = vpack.c.b16 %v7945, %v7941
    %v8178 = vpack.c.b16 %v7946, %v7942
    %v8179 = vpack.c.b16 %v7951, %v7947
    %v8180 = vpack.c.b16 %v7952, %v7948
    %v8181 = vpack.c.b16 %v7953, %v7949
    %v8182 = vpack.c.b16 %v7954, %v7950
    %v8183 = vpack.c.b16 %v7959, %v7955
    %v8184 = vpack.c.b16 %v7960, %v7956
    %v8185 = vpack.c.b16 %v7961, %v7957
    %v8186 = vpack.c.b16 %v7962, %v7958
    %v8187 = vpack.c.b16 %v7967, %v7963
    %v8188 = vpack.c.b16 %v7968, %v7964
    %v8189 = vpack.c.b16 %v7969, %v7965
    %v8190 = vpack.c.b16 %v7970, %v7966
    %v8191 = vpack.c.b16 %v7975, %v7971
    %v8192 = vpack.c.b16 %v7976, %v7972
    %v8193 = vpack.c.b16 %v7977, %v7973
    %v8194 = vpack.c.b16 %v7978, %v7974
    %v8195 = vpack.c.b16 %v7983, %v7979
    %v8196 = vpack.c.b16 %v7984, %v7980
    %v8197 = vpack.c.b16 %v7985, %v7981
    %v8198 = vpack.c.b16 %v7986, %v7982
    %v8199 = vpack.c.b16 %v7991, %v7987
    %v8200 = vpack.c.b16 %v7992, %v7988
    %v8201 = vpack.c.b16 %v7993, %v7989
    %v8202 = vpack.c.b16 %v7994, %v7990
    %v8203 = vpack.c.b16 %v7999, %v7995
    %v8204 = vpack.c.b16 %v8000, %v7996
    %v8205 = vpack.c.b16 %v8001, %v7997
    %v8206 = vpack.c.b16 %v8002, %v7998
    %v8207 = vpack.c.b16 %v8007, %v8003
    %v8208 = vpack.c.b16 %v8008, %v8004
    %v8209 = vpack.c.b16 %v8009, %v8005
    %v8210 = vpack.c.b16 %v8010, %v8006
    %v8211 = vpack.c.b16 %v8015, %v8011
    %v8212 = vpack.c.b16 %v8016, %v8012
    %v8213 = vpack.c.b16 %v8017, %v8013
    %v8214 = vpack.c.b16 %v8018, %v8014
    %v8215 = vpack.c.b16 %v8023, %v8019
    %v8216 = vpack.c.b16 %v8024, %v8020
    %v8217 = vpack.c.b16 %v8025, %v8021
    %v8218 = vpack.c.b16 %v8026, %v8022
    %v8219 = vpack.c.b16 %v8031, %v8027
    %v8220 = vpack.c.b16 %v8032, %v8028
    %v8221 = vpack.c.b16 %v8033, %v8029
    %v8222 = vpack.c.b16 %v8034, %v8030
    %v8223 = vpack.c.b16 %v8039, %v8035
    %v8224 = vpack.c.b16 %v8040, %v8036
    %v8225 = vpack.c.b16 %v8041, %v8037
    %v8226 = vpack.c.b16 %v8042, %v8038
    %v8227 = vpack.c.b16 %v8047, %v8043
    %v8228 = vpack.c.b16 %v8048, %v8044
    %v8229 = vpack.c.b16 %v8049, %v8045
    %v8230 = vpack.c.b16 %v8050, %v8046
    %v8231 = vpack.c.b16 %v8055, %v8051
    %v8232 = vpack.c.b16 %v8056, %v8052
    %v8233 = vpack.c.b16 %v8057, %v8053
    %v8234 = vpack.c.b16 %v8058, %v8054
    %v8235 = vpack.c.b16 %v8063, %v8059
    %v8236 = vpack.c.b16 %v8064, %v8060
    %v8237 = vpack.c.b16 %v8065, %v8061
    %v8238 = vpack.c.b16 %v8066, %v8062
    %v8239 = vpack.c.b16 %v8071, %v8067
    %v8240 = vpack.c.b16 %v8072, %v8068
    %v8241 = vpack.c.b16 %v8073, %v8069
    %v8242 = vpack.c.b16 %v8074, %v8070
    %v8243 = vpack.c.b16 %v8079, %v8075
    %v8244 = vpack.c.b16 %v8080, %v8076
    %v8245 = vpack.c.b16 %v8081, %v8077
    %v8246 = vpack.c.b16 %v8082, %v8078
    %v8247 = vpack.c.b16 %v8087, %v8083
    %v8248 = vpack.c.b16 %v8088, %v8084
    %v8249 = vpack.c.b16 %v8089, %v8085
    %v8250 = vpack.c.b16 %v8090, %v8086
    %v8251 = vpack.c.b16 %v8095, %v8091
    %v8252 = vpack.c.b16 %v8096, %v8092
    %v8253 = vpack.c.b16 %v8097, %v8093
    %v8254 = vpack.c.b16 %v8098, %v8094
    %v8255 = vpack.c.b16 %v8103, %v8099
    %v8256 = vpack.c.b16 %v8104, %v8100
    %v8257 = vpack.c.b16 %v8105, %v8101
    %v8258 = vpack.c.b16 %v8106, %v8102
    %v8259 = vpack.c.b16 %v8111, %v8107
    %v8260 = vpack.c.b16 %v8112, %v8108
    %v8261 = vpack.c.b16 %v8113, %v8109
    %v8262 = vpack.c.b16 %v8114, %v8110
    %v8263 = vpack.c.b16 %v8119, %v8115
    %v8264 = vpack.c.b16 %v8120, %v8116
    %v8265 = vpack.c.b16 %v8121, %v8117
    %v8266 = vpack.c.b16 %v8122, %v8118
    %v8267 = vpack.c.b16 %v8127, %v8123
    %v8268 = vpack.c.b16 %v8128, %v8124
    %v8269 = vpack.c.b16 %v8129, %v8125
    %v8270 = vpack.c.b16 %v8130, %v8126
    %v8271 = vpack.c.b16 %v8135, %v8131
    %v8272 = vpack.c.b16 %v8136, %v8132
    %v8273 = vpack.c.b16 %v8137, %v8133
    %v8274 = vpack.c.b16 %v8138, %v8134
    %v8275 = vpack.c.b16 %v8143, %v8139
    %v8276 = vpack.c.b16 %v8144, %v8140
    %v8277 = vpack.c.b16 %v8145, %v8141
    %v8278 = vpack.c.b16 %v8146, %v8142
    %v8279 = vpack.c.b16 %v8151, %v8147
    %v8280 = vpack.c.b16 %v8152, %v8148
    %v8281 = vpack.c.b16 %v8153, %v8149
    %v8282 = vpack.c.b16 %v8154, %v8150
    %8411 = vmatpush.bf16.msra.mxu0 %v8183
    %8412 = vmatpush.bf16.msra.mxu0 %v8179
    %8413 = vmatpush.bf16.msra.mxu0 %v8175
    %8414 = vmatpush.bf16.msra.mxu0 %v8171
    %8415 = vmatpush.bf16.msra.mxu0 %v8167
    %8416 = vmatpush.bf16.msra.mxu0 %v8163
    %8417 = vmatpush.bf16.msra.mxu0 %v8159
    %8418 = vmatpush.bf16.msra.mxu0 %v8155
    %8419 = vmatmul.bf16.gmra.mxu0 %v6659
    %v8420 = vpop.f32.mrf.mxu0
    %v8421 = vadd.f32 %v7612, %v8420
    %v8422 = vpop.f32.mrf.mxu0
    %8423 = vdwg.mxu0
    %8424 = vmatpush.bf16.msra.mxu0 %v8215
    %8425 = vmatpush.bf16.msra.mxu0 %v8211
    %8426 = vmatpush.bf16.msra.mxu0 %v8207
    %8427 = vmatpush.bf16.msra.mxu0 %v8203
    %8428 = vmatpush.bf16.msra.mxu0 %v8199
    %8429 = vmatpush.bf16.msra.mxu0 %v8195
    %8430 = vmatpush.bf16.msra.mxu0 %v8191
    %8431 = vmatpush.bf16.msra.mxu0 %v8187
    %8432 = vmatmul.bf16.gmra.mxu0 %v6660
    %v8433 = vpop.f32.mrf.mxu0
    %v8434 = vadd.f32 %v8421, %v8433
    %v8435 = vpop.f32.mrf.mxu0
    %8436 = vdwg.mxu0
    %8437 = vmatpush.bf16.msra.mxu0 %v8247
    %8438 = vmatpush.bf16.msra.mxu0 %v8243
    %8439 = vmatpush.bf16.msra.mxu0 %v8239
    %8440 = vmatpush.bf16.msra.mxu0 %v8235
    %8441 = vmatpush.bf16.msra.mxu0 %v8231
    %8442 = vmatpush.bf16.msra.mxu0 %v8227
    %8443 = vmatpush.bf16.msra.mxu0 %v8223
    %8444 = vmatpush.bf16.msra.mxu0 %v8219
    %8445 = vmatmul.bf16.gmra.mxu0 %v6661
    %v8446 = vpop.f32.mrf.mxu0
    %v8447 = vadd.f32 %v8434, %v8446
    %v8448 = vpop.f32.mrf.mxu0
    %8449 = vdwg.mxu0
    %8450 = vmatpush.bf16.msra.mxu0 %v8279
    %8451 = vmatpush.bf16.msra.mxu0 %v8275
    %8452 = vmatpush.bf16.msra.mxu0 %v8271
    %8453 = vmatpush.bf16.msra.mxu0 %v8267
    %8454 = vmatpush.bf16.msra.mxu0 %v8263
    %8455 = vmatpush.bf16.msra.mxu0 %v8259
    %8456 = vmatpush.bf16.msra.mxu0 %v8255
    %8457 = vmatpush.bf16.msra.mxu0 %v8251
    %8458 = vmatmul.bf16.gmra.mxu0 %v6662
    %v8459 = vpop.f32.mrf.mxu0
    %v8460 = vadd.f32 %v8447, %v8459
    %v8461 = vpop.f32.mrf.mxu0
    %8462 = vdwg.mxu0
    %8463 = vmatpush.bf16.msra.mxu0 %v8184
    %8464 = vmatpush.bf16.msra.mxu0 %v8180
    %8465 = vmatpush.bf16.msra.mxu0 %v8176
    %8466 = vmatpush.bf16.msra.mxu0 %v8172
    %8467 = vmatpush.bf16.msra.mxu0 %v8168
    %8468 = vmatpush.bf16.msra.mxu0 %v8164
    %8469 = vmatpush.bf16.msra.mxu0 %v8160
    %8470 = vmatpush.bf16.msra.mxu0 %v8156
    %8471 = vmatmul.bf16.gmra.mxu0 %v6659
    %v8472 = vpop.f32.mrf.mxu0
    %v8473 = vadd.f32 %v7664, %v8472
    %v8474 = vpop.f32.mrf.mxu0
    %8475 = vdwg.mxu0
    %8476 = vmatpush.bf16.msra.mxu0 %v8216
    %8477 = vmatpush.bf16.msra.mxu0 %v8212
    %8478 = vmatpush.bf16.msra.mxu0 %v8208
    %8479 = vmatpush.bf16.msra.mxu0 %v8204
    %8480 = vmatpush.bf16.msra.mxu0 %v8200
    %8481 = vmatpush.bf16.msra.mxu0 %v8196
    %8482 = vmatpush.bf16.msra.mxu0 %v8192
    %8483 = vmatpush.bf16.msra.mxu0 %v8188
    %8484 = vmatmul.bf16.gmra.mxu0 %v6660
    %v8485 = vpop.f32.mrf.mxu0
    %v8486 = vadd.f32 %v8473, %v8485
    %v8487 = vpop.f32.mrf.mxu0
    %8488 = vdwg.mxu0
    %8489 = vmatpush.bf16.msra.mxu0 %v8248
    %8490 = vmatpush.bf16.msra.mxu0 %v8244
    %8491 = vmatpush.bf16.msra.mxu0 %v8240
    %8492 = vmatpush.bf16.msra.mxu0 %v8236
    %8493 = vmatpush.bf16.msra.mxu0 %v8232
    %8494 = vmatpush.bf16.msra.mxu0 %v8228
    %8495 = vmatpush.bf16.msra.mxu0 %v8224
    %8496 = vmatpush.bf16.msra.mxu0 %v8220
    %8497 = vmatmul.bf16.gmra.mxu0 %v6661
    %v8498 = vpop.f32.mrf.mxu0
    %v8499 = vadd.f32 %v8486, %v8498
    %v8500 = vpop.f32.mrf.mxu0
    %8501 = vdwg.mxu0
    %8502 = vmatpush.bf16.msra.mxu0 %v8280
    %8503 = vmatpush.bf16.msra.mxu0 %v8276
    %8504 = vmatpush.bf16.msra.mxu0 %v8272
    %8505 = vmatpush.bf16.msra.mxu0 %v8268
    %8506 = vmatpush.bf16.msra.mxu0 %v8264
    %8507 = vmatpush.bf16.msra.mxu0 %v8260
    %8508 = vmatpush.bf16.msra.mxu0 %v8256
    %8509 = vmatpush.bf16.msra.mxu0 %v8252
    %8510 = vmatmul.bf16.gmra.mxu0 %v6662
    %v8511 = vpop.f32.mrf.mxu0
    %v8512 = vadd.f32 %v8499, %v8511
    %v8513 = vpop.f32.mrf.mxu0
    %8514 = vdwg.mxu0
    %8515 = vmatpush.bf16.msra.mxu0 %v8185
    %8516 = vmatpush.bf16.msra.mxu0 %v8181
    %8517 = vmatpush.bf16.msra.mxu0 %v8177
    %8518 = vmatpush.bf16.msra.mxu0 %v8173
    %8519 = vmatpush.bf16.msra.mxu0 %v8169
    %8520 = vmatpush.bf16.msra.mxu0 %v8165
    %8521 = vmatpush.bf16.msra.mxu0 %v8161
    %8522 = vmatpush.bf16.msra.mxu0 %v8157
    %8523 = vmatmul.bf16.gmra.mxu0 %v6659
    %v8524 = vpop.f32.mrf.mxu0
    %v8525 = vadd.f32 %v7716, %v8524
    %v8526 = vpop.f32.mrf.mxu0
    %8527 = vdwg.mxu0
    %8528 = vmatpush.bf16.msra.mxu0 %v8217
    %8529 = vmatpush.bf16.msra.mxu0 %v8213
    %8530 = vmatpush.bf16.msra.mxu0 %v8209
    %8531 = vmatpush.bf16.msra.mxu0 %v8205
    %8532 = vmatpush.bf16.msra.mxu0 %v8201
    %8533 = vmatpush.bf16.msra.mxu0 %v8197
    %8534 = vmatpush.bf16.msra.mxu0 %v8193
    %8535 = vmatpush.bf16.msra.mxu0 %v8189
    %8536 = vmatmul.bf16.gmra.mxu0 %v6660
    %v8537 = vpop.f32.mrf.mxu0
    %v8538 = vadd.f32 %v8525, %v8537
    %v8539 = vpop.f32.mrf.mxu0
    %8540 = vdwg.mxu0
    %8541 = vmatpush.bf16.msra.mxu0 %v8249
    %8542 = vmatpush.bf16.msra.mxu0 %v8245
    %8543 = vmatpush.bf16.msra.mxu0 %v8241
    %8544 = vmatpush.bf16.msra.mxu0 %v8237
    %8545 = vmatpush.bf16.msra.mxu0 %v8233
    %8546 = vmatpush.bf16.msra.mxu0 %v8229
    %8547 = vmatpush.bf16.msra.mxu0 %v8225
    %8548 = vmatpush.bf16.msra.mxu0 %v8221
    %8549 = vmatmul.bf16.gmra.mxu0 %v6661
    %v8550 = vpop.f32.mrf.mxu0
    %v8551 = vadd.f32 %v8538, %v8550
    %v8552 = vpop.f32.mrf.mxu0
    %8553 = vdwg.mxu0
    %8554 = vmatpush.bf16.msra.mxu0 %v8281
    %8555 = vmatpush.bf16.msra.mxu0 %v8277
    %8556 = vmatpush.bf16.msra.mxu0 %v8273
    %8557 = vmatpush.bf16.msra.mxu0 %v8269
    %8558 = vmatpush.bf16.msra.mxu0 %v8265
    %8559 = vmatpush.bf16.msra.mxu0 %v8261
    %8560 = vmatpush.bf16.msra.mxu0 %v8257
    %8561 = vmatpush.bf16.msra.mxu0 %v8253
    %8562 = vmatmul.bf16.gmra.mxu0 %v6662
    %v8563 = vpop.f32.mrf.mxu0
    %v8564 = vadd.f32 %v8551, %v8563
    %v8565 = vpop.f32.mrf.mxu0
    %8566 = vdwg.mxu0
    %8567 = vmatpush.bf16.msra.mxu0 %v8186
    %8568 = vmatpush.bf16.msra.mxu0 %v8182
    %8569 = vmatpush.bf16.msra.mxu0 %v8178
    %8570 = vmatpush.bf16.msra.mxu0 %v8174
    %8571 = vmatpush.bf16.msra.mxu0 %v8170
    %8572 = vmatpush.bf16.msra.mxu0 %v8166
    %8573 = vmatpush.bf16.msra.mxu0 %v8162
    %8574 = vmatpush.bf16.msra.mxu0 %v8158
    %8575 = vmatmul.bf16.gmra.mxu0 %v6659
    %v8576 = vpop.f32.mrf.mxu0
    %v8577 = vadd.f32 %v7768, %v8576
    %v8578 = vpop.f32.mrf.mxu0
    %8579 = vdwg.mxu0
    %8580 = vmatpush.bf16.msra.mxu0 %v8218
    %8581 = vmatpush.bf16.msra.mxu0 %v8214
    %8582 = vmatpush.bf16.msra.mxu0 %v8210
    %8583 = vmatpush.bf16.msra.mxu0 %v8206
    %8584 = vmatpush.bf16.msra.mxu0 %v8202
    %8585 = vmatpush.bf16.msra.mxu0 %v8198
    %8586 = vmatpush.bf16.msra.mxu0 %v8194
    %8587 = vmatpush.bf16.msra.mxu0 %v8190
    %8588 = vmatmul.bf16.gmra.mxu0 %v6660
    %v8589 = vpop.f32.mrf.mxu0
    %v8590 = vadd.f32 %v8577, %v8589
    %v8591 = vpop.f32.mrf.mxu0
    %8592 = vdwg.mxu0
    %8593 = vmatpush.bf16.msra.mxu0 %v8250
    %8594 = vmatpush.bf16.msra.mxu0 %v8246
    %8595 = vmatpush.bf16.msra.mxu0 %v8242
    %8596 = vmatpush.bf16.msra.mxu0 %v8238
    %8597 = vmatpush.bf16.msra.mxu0 %v8234
    %8598 = vmatpush.bf16.msra.mxu0 %v8230
    %8599 = vmatpush.bf16.msra.mxu0 %v8226
    %8600 = vmatpush.bf16.msra.mxu0 %v8222
    %8601 = vmatmul.bf16.gmra.mxu0 %v6661
    %v8602 = vpop.f32.mrf.mxu0
    %v8603 = vadd.f32 %v8590, %v8602
    %v8604 = vpop.f32.mrf.mxu0
    %8605 = vdwg.mxu0
    %8606 = vmatpush.bf16.msra.mxu0 %v8282
    %8607 = vmatpush.bf16.msra.mxu0 %v8278
    %8608 = vmatpush.bf16.msra.mxu0 %v8274
    %8609 = vmatpush.bf16.msra.mxu0 %v8270
    %8610 = vmatpush.bf16.msra.mxu0 %v8266
    %8611 = vmatpush.bf16.msra.mxu0 %v8262
    %8612 = vmatpush.bf16.msra.mxu0 %v8258
    %8613 = vmatpush.bf16.msra.mxu0 %v8254
    %8614 = vmatmul.bf16.gmra.mxu0 %v6662
    %v8615 = vpop.f32.mrf.mxu0
    %v8616 = vadd.f32 %v8603, %v8615
    %v8617 = vpop.f32.mrf.mxu0
    %8618 = vdwg.mxu0
    %v8619 = vld [vmem:[%s22] sm:$0xf]
    %v8621 = vperm.slane %v8619, 0
    %v8622 = vperm.slane %v8619, 1
    %v8623 = vperm.slane %v8619, 2
    %v8624 = vperm.slane %v8619, 3
    %v8629 = vadd.f32 %v8460, %v8621
    %v8630 = vadd.f32 %v8512, %v8622
    %v8631 = vadd.f32 %v8564, %v8623
    %v8632 = vadd.f32 %v8616, %v8624
    %v8633 = vmul.f32 %v8629, 0.5
    %v8634 = vmul.f32 %v8630, 0.5
    %v8635 = vmul.f32 %v8631, 0.5
    %v8636 = vmul.f32 %v8632, 0.5
    %v8637 = vmul.f32 %v8629, 0.70710677
    %v8638 = vmul.f32 %v8630, 0.70710677
    %v8639 = vmul.f32 %v8631, 0.70710677
    %v8640 = vmul.f32 %v8632, 0.70710677
    %v8641 = vand.u32 2147483647, %v8637
    %v8642 = vand.u32 2147483647, %v8638
    %v8643 = vand.u32 2147483647, %v8639
    %v8644 = vand.u32 2147483647, %v8640
    %v8645 = vmul.f32 %v8641, 0.3275911
    %v8646 = vmul.f32 %v8642, 0.3275911
    %v8647 = vmul.f32 %v8643, 0.3275911
    %v8648 = vmul.f32 %v8644, 0.3275911
    %v8649 = vadd.f32 %v8645, 1.0
    %v8650 = vadd.f32 %v8646, 1.0
    %v8651 = vadd.f32 %v8647, 1.0
    %v8652 = vadd.f32 %v8648, 1.0
    %v8653 = vrcp.pop %v8649
    %v8654 = vmul.f32 %v8649, %v8653
    %v8655 = vsub.f32 1.0, %v8654
    %v8656 = vmul.f32 %v8653, %v8655
    %v8657 = vadd.f32 %v8653, %v8656
    %vm8658 = vweird.f32 %v8649
    %vm8659 = vweird.f32 %v8653
    %vm8660 = vmor %vm8658, %vm8659
    %v8661 = vsel %vm8660, %v8653, %v8657
    %v8662 = vand.u32 2147483647, %v8649
    %vm8663 = vcmp.eq.f32.partialorder %v8662, 8.507059e+37
    %v8664 = vand.u32 %v8649, 2147483648
    %v8665 = vor.u32 1.1754944e-38, %v8664
    %v8666 = vsel %vm8663, %v8665, %v8661
    %v8667 = vmul.f32 1.0, %v8666
    %v8668 = vrcp.pop %v8650
    %v8669 = vmul.f32 %v8650, %v8668
    %v8670 = vsub.f32 1.0, %v8669
    %v8671 = vmul.f32 %v8668, %v8670
    %v8672 = vadd.f32 %v8668, %v8671
    %vm8673 = vweird.f32 %v8650
    %vm8674 = vweird.f32 %v8668
    %vm8675 = vmor %vm8673, %vm8674
    %v8676 = vsel %vm8675, %v8668, %v8672
    %v8677 = vand.u32 2147483647, %v8650
    %vm8678 = vcmp.eq.f32.partialorder %v8677, 8.507059e+37
    %v8679 = vand.u32 %v8650, 2147483648
    %v8680 = vor.u32 1.1754944e-38, %v8679
    %v8681 = vsel %vm8678, %v8680, %v8676
    %v8682 = vmul.f32 1.0, %v8681
    %v8683 = vrcp.pop %v8651
    %v8684 = vmul.f32 %v8651, %v8683
    %v8685 = vsub.f32 1.0, %v8684
    %v8686 = vmul.f32 %v8683, %v8685
    %v8687 = vadd.f32 %v8683, %v8686
    %vm8688 = vweird.f32 %v8651
    %vm8689 = vweird.f32 %v8683
    %vm8690 = vmor %vm8688, %vm8689
    %v8691 = vsel %vm8690, %v8683, %v8687
    %v8692 = vand.u32 2147483647, %v8651
    %vm8693 = vcmp.eq.f32.partialorder %v8692, 8.507059e+37
    %v8694 = vand.u32 %v8651, 2147483648
    %v8695 = vor.u32 1.1754944e-38, %v8694
    %v8696 = vsel %vm8693, %v8695, %v8691
    %v8697 = vmul.f32 1.0, %v8696
    %v8698 = vrcp.pop %v8652
    %v8699 = vmul.f32 %v8652, %v8698
    %v8700 = vsub.f32 1.0, %v8699
    %v8701 = vmul.f32 %v8698, %v8700
    %v8702 = vadd.f32 %v8698, %v8701
    %vm8703 = vweird.f32 %v8652
    %vm8704 = vweird.f32 %v8698
    %vm8705 = vmor %vm8703, %vm8704
    %v8706 = vsel %vm8705, %v8698, %v8702
    %v8707 = vand.u32 2147483647, %v8652
    %vm8708 = vcmp.eq.f32.partialorder %v8707, 8.507059e+37
    %v8709 = vand.u32 %v8652, 2147483648
    %v8710 = vor.u32 1.1754944e-38, %v8709
    %v8711 = vsel %vm8708, %v8710, %v8706
    %v8712 = vmul.f32 1.0, %v8711
    %v8713 = vmul.f32 %v8667, 1.0614054
    %v8714 = vmul.f32 %v8682, 1.0614054
    %v8715 = vmul.f32 %v8697, 1.0614054
    %v8716 = vmul.f32 %v8712, 1.0614054
    %v8717 = vadd.f32 %v8713, -1.4531521
    %v8718 = vadd.f32 %v8714, -1.4531521
    %v8719 = vadd.f32 %v8715, -1.4531521
    %v8720 = vadd.f32 %v8716, -1.4531521
    %v8721 = vmul.f32 %v8717, %v8667
    %v8722 = vmul.f32 %v8718, %v8682
    %v8723 = vmul.f32 %v8719, %v8697
    %v8724 = vmul.f32 %v8720, %v8712
    %v8725 = vadd.f32 %v8721, 1.4214138
    %v8726 = vadd.f32 %v8722, 1.4214138
    %v8727 = vadd.f32 %v8723, 1.4214138
    %v8728 = vadd.f32 %v8724, 1.4214138
    %v8729 = vmul.f32 %v8725, %v8667
    %v8730 = vmul.f32 %v8726, %v8682
    %v8731 = vmul.f32 %v8727, %v8697
    %v8732 = vmul.f32 %v8728, %v8712
    %v8733 = vadd.f32 %v8729, -0.28449672
    %v8734 = vadd.f32 %v8730, -0.28449672
    %v8735 = vadd.f32 %v8731, -0.28449672
    %v8736 = vadd.f32 %v8732, -0.28449672
    %v8737 = vmul.f32 %v8733, %v8667
    %v8738 = vmul.f32 %v8734, %v8682
    %v8739 = vmul.f32 %v8735, %v8697
    %v8740 = vmul.f32 %v8736, %v8712
    %v8741 = vadd.f32 %v8737, 0.2548296
    %v8742 = vadd.f32 %v8738, 0.2548296
    %v8743 = vadd.f32 %v8739, 0.2548296
    %v8744 = vadd.f32 %v8740, 0.2548296
    %v8745 = vmul.f32 %v8741, %v8667
    %v8746 = vmul.f32 %v8742, %v8682
    %v8747 = vmul.f32 %v8743, %v8697
    %v8748 = vmul.f32 %v8744, %v8712
    %v8749 = vsub.f32 0.0, %v8641
    %v8750 = vsub.f32 0.0, %v8642
    %v8751 = vsub.f32 0.0, %v8643
    %v8752 = vsub.f32 0.0, %v8644
    %v8753 = vmul.f32 %v8749, %v8641
    %v8754 = vmul.f32 %v8750, %v8642
    %v8755 = vmul.f32 %v8751, %v8643
    %v8756 = vmul.f32 %v8752, %v8644
    %v8757 = vmul.f32 %v8753, 1.442695
    %v8758 = vpow.pop %v8757
    %v8759 = vmul.f32 %v8754, 1.442695
    %v8760 = vpow.pop %v8759
    %v8761 = vmul.f32 %v8755, 1.442695
    %v8762 = vpow.pop %v8761
    %v8763 = vmul.f32 %v8756, 1.442695
    %v8764 = vpow.pop %v8763
    %v8765 = vmul.f32 %v8745, %v8758
    %v8766 = vmul.f32 %v8746, %v8760
    %v8767 = vmul.f32 %v8747, %v8762
    %v8768 = vmul.f32 %v8748, %v8764
    %v8769 = vsub.f32 1.0, %v8765
    %v8770 = vsub.f32 1.0, %v8766
    %v8771 = vsub.f32 1.0, %v8767
    %v8772 = vsub.f32 1.0, %v8768
    %vm8773 = vcmp.lt.f32.partialorder %v8637, 0.0
    %vm8774 = vcmp.lt.f32.partialorder %v8638, 0.0
    %vm8775 = vcmp.lt.f32.partialorder %v8639, 0.0
    %vm8776 = vcmp.lt.f32.partialorder %v8640, 0.0
    %v8777 = vsub.f32 0.0, %v8769
    %v8778 = vsub.f32 0.0, %v8770
    %v8779 = vsub.f32 0.0, %v8771
    %v8780 = vsub.f32 0.0, %v8772
    %v8781 = vsel %vm8773, %v8777, %v8769
    %v8782 = vsel %vm8774, %v8778, %v8770
    %v8783 = vsel %vm8775, %v8779, %v8771
    %v8784 = vsel %vm8776, %v8780, %v8772
    %v8785 = vadd.f32 %v8781, 1.0
    %v8786 = vadd.f32 %v8782, 1.0
    %v8787 = vadd.f32 %v8783, 1.0
    %v8788 = vadd.f32 %v8784, 1.0
    %v8789 = vmul.f32 %v8633, %v8785
    %v8790 = vmul.f32 %v8634, %v8786
    %v8791 = vmul.f32 %v8635, %v8787
    %v8792 = vmul.f32 %v8636, %v8788
    %v8793 = vld [vmem:[%s23] sm:$0xf]
    %v8795 = vperm.slane %v8793, 0
    %v8796 = vperm.slane %v8793, 1
    %v8797 = vperm.slane %v8793, 2
    %v8798 = vperm.slane %v8793, 3
    %v8803 = vmul.f32 %v8789, %v8795
    %v8804 = vmul.f32 %v8790, %v8796
    %v8805 = vmul.f32 %v8791, %v8797
    %v8806 = vmul.f32 %v8792, %v8798
    %v8807 = vadd.f32 %v8803, %v8804
    %v8808 = vadd.f32 %v8807, %v8805
    %v8809 = vadd.f32 %v8808, %v8806
    %8810 = vadd.xlane.f32.xlu0 %v8809
    %v8811 = vpop.xlane.xlu0 %8810
    %v8812 = vld [vmem:[#allocation2] sm:$0x1]
    %v8814 = vperm.slane %v8812, 0
    %v8816 = vadd.f32 %v8811, %v8814
    %v8817 = vrcp.pop 10.0
    %v8818 = vmul.f32 10.0, %v8817
    %v8819 = vsub.f32 1.0, %v8818
    %v8820 = vmul.f32 %v8817, %v8819
    %v8821 = vadd.f32 %v8817, %v8820
    %vm8822 = vweird.f32 %v8817
    %v8823 = vsel %vm8822, %v8817, %v8821
    %v8824 = vmul.f32 %v8816, %v8823
    %v8825 = vand.u32 2147483647, %v8824
    %v8826 = vmul.f32 %v8825, %v8825
    %v8827 = vadd.f32 %v8826, 1.0
    %v8828 = vrsqrt.pop %v8827
    %v8829 = vmul.f32 %v8828, %v8827
    %v8830 = vmul.f32 %v8829, %v8828
    %v8831 = vmul.f32 0.5, %v8830
    %v8832 = vsub.f32 1.5, %v8831
    %v8833 = vmul.f32 %v8828, %v8832
    %v8834 = vmul.f32 %v8827, %v8833
    %vm8835 = vcmp.eq.f32.partialorder %v8827, inf
    %v8836 = vsel %vm8835, %v8827, %v8834
    %vm8837 = vcmp.eq.f32.partialorder %v8827, 0.0
    %v8838 = vand.u32 %v8827, 2147483648
    %v8839 = vsel %vm8837, %v8838, %v8836
    %v8840 = vadd.f32 %v8825, %v8839
    %v8841 = vlog2.pop %v8840
    %v8842 = vmul.f32 %v8841, 0.6931472
    %vm8843 = vcmp.lt.f32.partialorder %v8824, 0.0
    %v8844 = vsub.f32 0.0, %v8842
    %v8845 = vsel %vm8843, %v8844, %v8842
    %v8846 = vmul.f32 %v8845, 10.0
    %vm8847 = vcmask 7168
    %8848 = vst.msk [vmem:[%s25] sm:$0xff] %vm8847, %v8846
    // Predicated region
    $region126: #{discerner_forward.1} parent=1 // pred_check
      _
    $region127: #{discerner_forward.1} parent=1 // pred_check_branch
      %8850 = sbr.rel (0) target = $region129
    $region128: #{discerner_forward.1} parent=1 // pred_region
      _
    $region129: #{discerner_forward.1} parent=1 // pred_fallthru
      _
    // Predicated region
    $region130: #{discerner_forward.1} parent=1 // pred_check
      _
    $region131: #{discerner_forward.1} parent=1 // pred_check_branch
      %8852 = sbr.rel (0) target = $region133
    $region132: #{discerner_forward.1} parent=1 // pred_region
      _
    $region133: #{discerner_forward.1} parent=1 // pred_fallthru
      _
    %8853 = vsyncpa [#allocation4], 1
    %8854 = vsyncpa [#allocation6], 1
    %8855 = vsyncpa [#allocation9], 1
    %8856 = vsyncpa [#allocation12], 1

</llo_original>
